<compile_context>
chip_gen: v5e
topology: v5e:2x2
jax: 0.10.0
libtpu: 0.0.40
codegen_flags: <defaults>
</compile_context>

<pallas_src>
import functools
import math

import numpy as np
import jax
import jax.numpy as jnp
from jax import lax
from jax.experimental import pallas as pl
from jax.experimental.pallas import tpu as pltpu

LEAKY_ALPHA = 0.1
BN_EPS = 1e-5


# -----------------------------------------------------------------------------
# Static tap tables (tr treated as its init-time linspace -> compile-time constants)
# -----------------------------------------------------------------------------
def _tap_table(tr_vals):
    """(floor offset, lerp weight alpha) per tap, as Python constants."""
    taps = []
    for t in tr_vals:
        d = int(math.floor(float(t)))
        taps.append((d, float(d + 1.0 - float(t))))
    return tuple(taps)


# -----------------------------------------------------------------------------
# Single fused Pallas kernel: pw convs + BN + leaky + DeTGC x2 + maxpool + strided pw
# -----------------------------------------------------------------------------
def _fused_kernel(xm_ref, w_all_ref, b_all_ref, g_pw_ref, bt_pw_ref,
                  wd_ref, bd_ref, g_d_ref, bt_d_ref, g_3_ref, bt_3_ref,
                  o_ref, *, NV, Tq, Tout, stride, sc, eta, il, pad_l,
                  taps1, taps2):
    f32 = jnp.float32

    # ---- fused PointWiseTCN 1x1 convs for all four branches (bf16 MXU, f32 acc) ----
    x = xm_ref[...].astype(jnp.bfloat16)                        # cast in-kernel
    y = jnp.dot(x, w_all_ref[...], preferred_element_type=f32) + b_all_ref[...]
    # rows are (parity j, n, v, p2); regroup rows only (lane dim untouched).
    y3 = y.reshape(stride * NV, Tq, 4 * sc)

    def bn_affine(v2d, gamma, beta):
        """Training-mode BN (batch stats) -> per-channel scale/shift, f32."""
        m = jnp.mean(v2d, axis=0, keepdims=True)
        var = jnp.mean(jnp.square(v2d - m), axis=0, keepdims=True)
        s = gamma * lax.rsqrt(var + BN_EPS)
        return s, beta - m * s

    # ---- BatchNorm (stats over the T real frames) + LeakyReLU for branches 1-3 ----
    y123 = y3[:, :, :3 * sc]
    yin = y123[:, il:il + Tout, :].reshape(stride * NV * Tout, 3 * sc)
    s123, t123 = bn_affine(yin, g_pw_ref[...][:, :3 * sc], bt_pw_ref[...][:, :3 * sc])
    a123 = y123 * s123 + t123
    a123 = jnp.where(a123 >= 0, a123, LEAKY_ALPHA * a123)

    def extract(src3, d):
        """Frames t = q*stride + d (clamp emulated by edge padding), q = 0..Tout-1."""
        dp = d + pad_l
        j = dp % stride
        b = dp // stride
        return src3[j * NV:(j + 1) * NV, b:b + Tout, :]          # (NV, Tout, C)

    a1 = a123[:, :, 0 * sc:1 * sc]
    a2 = a123[:, :, 1 * sc:2 * sc]
    a3 = a123[:, :, 2 * sc:3 * sc]

    # ---- DeTGC branches 1 & 2: static-tap lerp + one lane-dense block-diag matmul ----
    xi_parts = []
    for e in range(eta):
        for src, taps in ((a1, taps1), (a2, taps2)):
            d, alpha = taps[e]
            lo = extract(src, d)
            hi = extract(src, d + 1)
            xi_parts.append(alpha * lo + (1.0 - alpha) * hi)     # (NV, Tout, sc) f32
    xi = jnp.concatenate(xi_parts, axis=-1)                      # (NV, Tout, eta*2sc)
    xi2 = xi.reshape(NV * Tout, eta * 2 * sc).astype(jnp.bfloat16)
    y12 = jnp.dot(xi2, wd_ref[...], preferred_element_type=f32) + bd_ref[...]
    s12, t12 = bn_affine(y12, g_d_ref[...], bt_d_ref[...])
    out12 = y12 * s12 + t12                                      # (NV*Tout, 2sc)

    # ---- branch 3: MaxPool(3x1, stride, pad 1) + BatchNorm -------------------------
    p3 = jnp.maximum(jnp.maximum(extract(a3, -1), extract(a3, 0)), extract(a3, 1))
    p3 = p3.reshape(NV * Tout, sc)
    s3, t3 = bn_affine(p3, g_3_ref[...], bt_3_ref[...])
    out3 = p3 * s3 + t3

    # ---- branch 4: strided 1x1 conv + BatchNorm (stats over strided frames) --------
    y4 = extract(y3[:, :, 3 * sc:], 0).reshape(NV * Tout, sc)
    s4, t4 = bn_affine(y4, g_pw_ref[...][:, 3 * sc:], bt_pw_ref[...][:, 3 * sc:])
    out4 = y4 * s4 + t4

    o_ref[...] = jnp.concatenate([out12, out3, out4], axis=-1)   # (NV*Tout, 4sc)


# -----------------------------------------------------------------------------
# Forward wrapper: one transpose/pad in, ONE pallas_call, one transpose out
# -----------------------------------------------------------------------------
def multiscale_forward(params, x, *, stride, eta, num_frame, tr1, tr2):
    """x: (N, Cin, T, V) NCTV -> (N, 4*sc, T//stride, V)."""
    N, Cin, T, V = x.shape
    sc = params['b_all'].shape[-1] // 4
    assert T % stride == 0, "temporal length must be divisible by stride"
    # Reference clamps tap indices into [0, num_frame-1] and gathers from a length-T
    # axis; with num_frame >= T this equals clamping at T-1, emulated here by
    # edge-replicate padding.
    assert num_frame >= T
    Tout = T // stride
    NV = N * V

    taps1, taps2 = _tap_table(tr1), _tap_table(tr2)
    offs = ([d for d, _ in taps1] + [d + 1 for d, _ in taps1] +
            [d for d, _ in taps2] + [d + 1 for d, _ in taps2] +
            [-1, 0, 1])                                   # maxpool window; branch-4 uses 0
    pad_l = max(0, -min(offs))
    pad_l = -(-pad_l // stride) * stride                  # multiple of stride
    il = pad_l // stride
    Tq = max(il + Tout, max((d + pad_l) // stride for d in offs) + Tout)
    Tq = -(-Tq // 8) * 8                                  # sublane-tile aligned groups
    Tpad = Tq * stride
    pad_r = Tpad - pad_l - T

    # Wrapper-side prep on the tiny input: channel-last, edge-pad along T, then
    # parity-major rows (j, n, v, t//stride) so in-kernel selection is static slices.
    xe = jnp.transpose(x, (0, 3, 2, 1))                                   # (N,V,T,C)
    xp = jnp.pad(xe, ((0, 0), (0, 0), (pad_l, pad_r), (0, 0)), mode='edge')
    xps = xp.reshape(N, V, Tq, stride, Cin)
    xm = jnp.transpose(xps, (3, 0, 1, 2, 4)).reshape(stride * NV * Tq, Cin)

    kernel = functools.partial(
        _fused_kernel, NV=NV, Tq=Tq, Tout=Tout, stride=stride, sc=sc, eta=eta,
        il=il, pad_l=pad_l, taps1=taps1, taps2=taps2)

    def full(shape):
        return pl.BlockSpec(shape, lambda i, _n=len(shape): (0,) * _n)

    rows = stride * NV * Tq
    flops = 2 * (rows * Cin * 4 * sc + NV * Tout * (eta * 2 * sc) * (2 * sc))
    bytes_accessed = (rows * Cin * 4 + Cin * 4 * sc * 2 +
                      eta * 2 * sc * 2 * sc * 2 + NV * Tout * 4 * sc * 4)

    out = pl.pallas_call(
        kernel,
        out_shape=jax.ShapeDtypeStruct((NV * Tout, 4 * sc), jnp.float32),
        grid=(1,),
        in_specs=[full((rows, Cin)),
                  full((Cin, 4 * sc)),
                  full((1, 4 * sc)), full((1, 4 * sc)), full((1, 4 * sc)),
                  full((eta * 2 * sc, 2 * sc)),
                  full((1, 2 * sc)), full((1, 2 * sc)), full((1, 2 * sc)),
                  full((1, sc)), full((1, sc))],
        out_specs=full((NV * Tout, 4 * sc)),
        compiler_params=pltpu.CompilerParams(
            dimension_semantics=("arbitrary",),
            vmem_limit_bytes=32 * 1024 * 1024),
        cost_estimate=pl.CostEstimate(flops=flops, transcendentals=0,
                                      bytes_accessed=bytes_accessed),
    )(xm, params['w_all'], params['b_all'], params['g_pw'], params['bt_pw'],
      params['wd'], params['bd'], params['g_d'], params['bt_d'],
      params['g_3'], params['bt_3'])

    out = out.reshape(N, V, Tout, 4 * sc)
    return jnp.transpose(out, (0, 3, 2, 1))               # back to NCTV


# -----------------------------------------------------------------------------
# Deterministic parameter construction (PyTorch-style init).  Weights are fused,
# pre-transposed and bf16-cast ONCE here; the forward does no per-call prep.
# -----------------------------------------------------------------------------
def _uniform(key, shape, fan_in):
    bound = 1.0 / math.sqrt(fan_in)
    return jax.random.uniform(key, shape, jnp.float32, -bound, bound)


def init_params(key, *, in_channels, out_channels, eta, num_scale, kernel_size=5):
    # NOTE: the reference overrides self.num_scale when in_channels == 3, but
    # scale_channels (and hence the forward) only uses the constructor value.
    sc = out_channels // num_scale
    keys = jax.random.split(key, 12)

    w_pw = [_uniform(keys[i], (sc, in_channels), in_channels) for i in range(4)]
    b_pw = [_uniform(keys[4 + i], (sc,), in_channels) for i in range(4)]
    w_d = [_uniform(keys[8 + i], (sc, sc, eta), sc * eta) for i in range(2)]
    b_d = [_uniform(keys[10 + i], (sc,), sc * eta) for i in range(2)]

    def tr_init(dilation):
        ref = (kernel_size + (kernel_size - 1) * (dilation - 1) - 1) // 2
        return np.linspace(float(-ref), float(ref), eta).astype(np.float32)

    tr1, tr2 = tr_init(1), tr_init(2)

    # Block-diagonal DeTGC weight: rows (e, [br1 c | br2 c]) -> cols [br1 o | br2 o].
    wd = np.zeros((eta * 2 * sc, 2 * sc), np.float32)
    wd_np = [np.asarray(w) for w in w_d]
    for e in range(eta):
        r0 = e * 2 * sc
        wd[r0:r0 + sc, :sc] = wd_np[0][:, :, e].T
        wd[r0 + sc:r0 + 2 * sc, sc:] = wd_np[1][:, :, e].T

    params = {
        'w_all': jnp.concatenate([w.T for w in w_pw], axis=1).astype(jnp.bfloat16),
        'b_all': jnp.concatenate(b_pw).reshape(1, 4 * sc),
        'g_pw': jnp.ones((1, 4 * sc), jnp.float32),
        'bt_pw': jnp.zeros((1, 4 * sc), jnp.float32),
        'wd': jnp.asarray(wd, jnp.bfloat16),
        'bd': jnp.concatenate(b_d).reshape(1, 2 * sc),
        'g_d': jnp.ones((1, 2 * sc), jnp.float32),
        'bt_d': jnp.zeros((1, 2 * sc), jnp.float32),
        'g_3': jnp.ones((1, sc), jnp.float32),
        'bt_3': jnp.zeros((1, sc), jnp.float32),
    }
    raw = {'w_pw': w_pw, 'b_pw': b_pw, 'w_d': w_d, 'b_d': b_d,
           'tr': [jnp.asarray(tr1), jnp.asarray(tr2)]}
    static = {'tr1': tuple(float(t) for t in tr1),
              'tr2': tuple(float(t) for t in tr2)}
    return params, raw, static


# -----------------------------------------------------------------------------
# Pure-JAX f32 reference (direct translation of the PyTorch forward) for checking
# -----------------------------------------------------------------------------
def _bn_train_ref(x, gamma, beta, axis=1, eps=BN_EPS):
    axes = tuple(i for i in range(x.ndim) if i != axis)
    m = jnp.mean(x, axis=axes, keepdims=True)
    v = jnp.mean(jnp.square(x - m), axis=axes, keepdims=True)
    shape = [1] * x.ndim
    shape[axis] = x.shape[axis]
    return gamma.reshape(shape) * (x - m) * lax.rsqrt(v + eps) + beta.reshape(shape)


def _conv1x1_ref(x, w, b, stride=1):
    if stride != 1:
        x = x[:, :, ::stride, :]
    return jnp.einsum('oc,nctv->notv', w, x) + b[None, :, None, None]


def _detgc_ref(x, tr, w, b, stride, eta, num_frame):
    N, C, T, V = x.shape
    Tout = T // stride
    t0 = jnp.arange(0, T, stride, dtype=jnp.float32)[:Tout]
    t = (t0[None, :] + tr[:, None]).reshape(-1)              # e-major
    tdn = jnp.floor(t)
    tup = tdn + 1.0
    i1 = jnp.clip(tdn, 0, num_frame - 1).astype(jnp.int32)
    i2 = jnp.clip(tup, 0, num_frame - 1).astype(jnp.int32)
    a = (tup - t)[None, None, :, None]
    x1 = jnp.take(x, i1, axis=2, mode='clip')
    x2 = jnp.take(x, i2, axis=2, mode='clip')
    xi = (x1 * a + x2 * (1.0 - a)).reshape(N, C, eta, Tout, V)
    y = jnp.einsum('oce,ncetv->notv', w, xi) + b[None, :, None, None]
    ones = jnp.ones((w.shape[0],), jnp.float32)
    zeros = jnp.zeros((w.shape[0],), jnp.float32)
    return _bn_train_ref(y, ones, zeros)


def reference_forward(raw, x, *, stride, eta, num_frame):
    sc = raw['w_pw'][0].shape[0]
    ones = jnp.ones((sc,), jnp.float32)
    zeros = jnp.zeros((sc,), jnp.float32)

    def pw(i, s=1):
        return _bn_train_ref(_conv1x1_ref(x, raw['w_pw'][i], raw['b_pw'][i], s),
                             ones, zeros)

    def leaky(z):
        return jnp.where(z >= 0, z, LEAKY_ALPHA * z)

    b1 = _detgc_ref(leaky(pw(0)), raw['tr'][0], raw['w_d'][0], raw['b_d'][0],
                    stride, eta, num_frame)
    b2 = _detgc_ref(leaky(pw(1)), raw['tr'][1], raw['w_d'][1], raw['b_d'][1],
                    stride, eta, num_frame)
    b3 = lax.reduce_window(leaky(pw(2)), -jnp.inf, lax.max,
                           (1, 1, 3, 1), (1, 1, stride, 1),
                           ((0, 0), (0, 0), (1, 1), (0, 0)))
    b3 = _bn_train_ref(b3, ones, zeros)
    b4 = pw(3, stride)
    return jnp.concatenate([b1, b2, b3, b4], axis=1)


# -----------------------------------------------------------------------------
if __name__ == "__main__":
    N, C_IN, T, V = 2, 16, 16, 20
    OUT_CHANNELS, NUM_SCALE, ETA, STRIDE = 64, 1, 4, 2
    NUM_FRAME = T        # DeTGC clamp bound; must cover the input temporal length

    key = jax.random.PRNGKey(0)
    params, raw, static = init_params(jax.random.fold_in(key, 1),
                                      in_channels=C_IN, out_channels=OUT_CHANNELS,
                                      eta=ETA, num_scale=NUM_SCALE)
    x = jax.random.normal(jax.random.fold_in(key, 2), (N, C_IN, T, V), jnp.float32)

    fwd = jax.jit(functools.partial(multiscale_forward,
                                    stride=STRIDE, eta=ETA, num_frame=NUM_FRAME,
                                    tr1=static['tr1'], tr2=static['tr2']))
    out = jax.block_until_ready(fwd(params, x))

    sc = OUT_CHANNELS // NUM_SCALE
    assert out.shape == (N, 4 * sc, T // STRIDE, V), out.shape
    assert bool(jnp.all(jnp.isfinite(out)))

    # Correctness gate: compare against the pure-f32 JAX reference (bf16 MXU inputs
    # in the Pallas path introduce only ~1% relative drift).
    ref = jax.jit(functools.partial(reference_forward,
                                    stride=STRIDE, eta=ETA, num_frame=NUM_FRAME))(raw, x)
    rel_err = float(jnp.linalg.norm(out - ref) / (jnp.linalg.norm(ref) + 1e-6))
    assert rel_err < 5e-2, f"relative L2 error vs reference = {rel_err}"

    print("KERNEL_OK")
</pallas_src>

<mosaic_0001>
module attributes {stable_mosaic.version = 11 : i64} {
  func.func @_fused_kernel(%arg0: i32, %arg1: memref<1280x16xf32, #tpu.memory_space<vmem>>, %arg2: memref<16x256xbf16, #tpu.memory_space<vmem>>, %arg3: memref<1x256xf32, #tpu.memory_space<vmem>>, %arg4: memref<1x256xf32, #tpu.memory_space<vmem>>, %arg5: memref<1x256xf32, #tpu.memory_space<vmem>>, %arg6: memref<512x128xbf16, #tpu.memory_space<vmem>>, %arg7: memref<1x128xf32, #tpu.memory_space<vmem>>, %arg8: memref<1x128xf32, #tpu.memory_space<vmem>>, %arg9: memref<1x128xf32, #tpu.memory_space<vmem>>, %arg10: memref<1x64xf32, #tpu.memory_space<vmem>>, %arg11: memref<1x64xf32, #tpu.memory_space<vmem>>, %arg12: memref<320x256xf32, #tpu.memory_space<vmem>>) attributes {dimension_semantics = [#tpu.dimension_semantics<arbitrary>], iteration_bounds = array<i64: 1>, scalar_prefetch = 0 : i64, scratch_operands = 0 : i64, tpu.core_type = #tpu.core_type<tc>, window_params = [{pipeline_mode = #tpu.pipeline_mode<synchronous>, transform_indices = @transform_0, window_bounds = array<i64: 1280, 16>}, {pipeline_mode = #tpu.pipeline_mode<synchronous>, transform_indices = @transform_1, window_bounds = array<i64: 16, 256>}, {pipeline_mode = #tpu.pipeline_mode<synchronous>, transform_indices = @transform_2, window_bounds = array<i64: 1, 256>}, {pipeline_mode = #tpu.pipeline_mode<synchronous>, transform_indices = @transform_3, window_bounds = array<i64: 1, 256>}, {pipeline_mode = #tpu.pipeline_mode<synchronous>, transform_indices = @transform_4, window_bounds = array<i64: 1, 256>}, {pipeline_mode = #tpu.pipeline_mode<synchronous>, transform_indices = @transform_5, window_bounds = array<i64: 512, 128>}, {pipeline_mode = #tpu.pipeline_mode<synchronous>, transform_indices = @transform_6, window_bounds = array<i64: 1, 128>}, {pipeline_mode = #tpu.pipeline_mode<synchronous>, transform_indices = @transform_7, window_bounds = array<i64: 1, 128>}, {pipeline_mode = #tpu.pipeline_mode<synchronous>, transform_indices = @transform_8, window_bounds = array<i64: 1, 128>}, {pipeline_mode = #tpu.pipeline_mode<synchronous>, transform_indices = @transform_9, window_bounds = array<i64: 1, 64>}, {pipeline_mode = #tpu.pipeline_mode<synchronous>, transform_indices = @transform_10, window_bounds = array<i64: 1, 64>}, {pipeline_mode = #tpu.pipeline_mode<synchronous>, transform_indices = @transform_11, window_bounds = array<i64: 320, 256>}]} {
    %c0 = arith.constant 0 : index
    %c0_0 = arith.constant 0 : index
    %0 = vector.load %arg1[%c0, %c0_0] : memref<1280x16xf32, #tpu.memory_space<vmem>>, vector<1280x16xf32>
    %1 = arith.truncf %0 : vector<1280x16xf32> to vector<1280x16xbf16>
    %c0_1 = arith.constant 0 : index
    %c0_2 = arith.constant 0 : index
    %2 = vector.load %arg2[%c0_1, %c0_2] : memref<16x256xbf16, #tpu.memory_space<vmem>>, vector<16x256xbf16>
    %cst = arith.constant dense<0.000000e+00> : vector<1280x256xf32>
    %3 = tpu.matmul %1, %2, %cst {dimension_numbers = #tpu.dot_dimension_numbers<[1], [0], [0], [1], [0, 0, 1, 1], [], []>} : vector<1280x16xbf16>, vector<16x256xbf16>, vector<1280x256xf32> -> vector<1280x256xf32>
    %c0_3 = arith.constant 0 : index
    %c0_4 = arith.constant 0 : index
    %4 = vector.load %arg3[%c0_3, %c0_4] : memref<1x256xf32, #tpu.memory_space<vmem>>, vector<1x256xf32>
    %5 = vector.broadcast %4 : vector<1x256xf32> to vector<1280x256xf32>
    %6 = arith.addf %3, %5 : vector<1280x256xf32>
    %7 = vector.shape_cast %6 : vector<1280x256xf32> to vector<80x16x256xf32>
    %8 = vector.extract_strided_slice %7 {offsets = [0, 0, 0], sizes = [80, 16, 192], strides = [1, 1, 1]} : vector<80x16x256xf32> to vector<80x16x192xf32>
    %9 = vector.extract_strided_slice %8 {offsets = [0, 2, 0], sizes = [80, 8, 192], strides = [1, 1, 1]} : vector<80x16x192xf32> to vector<80x8x192xf32>
    %10 = vector.shape_cast %9 : vector<80x8x192xf32> to vector<640x192xf32>
    %c0_5 = arith.constant 0 : index
    %c0_6 = arith.constant 0 : index
    %11 = vector.load %arg4[%c0_5, %c0_6] : memref<1x256xf32, #tpu.memory_space<vmem>>, vector<1x256xf32>
    %12 = vector.extract_strided_slice %11 {offsets = [0, 0], sizes = [1, 192], strides = [1, 1]} : vector<1x256xf32> to vector<1x192xf32>
    %c0_7 = arith.constant 0 : index
    %c0_8 = arith.constant 0 : index
    %13 = vector.load %arg5[%c0_7, %c0_8] : memref<1x256xf32, #tpu.memory_space<vmem>>, vector<1x256xf32>
    %14 = vector.extract_strided_slice %13 {offsets = [0, 0], sizes = [1, 192], strides = [1, 1]} : vector<1x256xf32> to vector<1x192xf32>
    %cst_9 = arith.constant dense<0.000000e+00> : vector<192xf32>
    %15 = vector.multi_reduction <add>, %10, %cst_9 [0] : vector<640x192xf32> to vector<192xf32>
    %16 = vector.shape_cast %15 : vector<192xf32> to vector<1x192xf32>
    %cst_10 = arith.constant 6.400000e+02 : f32
    %17 = vector.broadcast %cst_10 : f32 to vector<1x192xf32>
    %18 = arith.divf %16, %17 : vector<1x192xf32>
    %19 = vector.broadcast %18 : vector<1x192xf32> to vector<640x192xf32>
    %20 = arith.subf %10, %19 : vector<640x192xf32>
    %21 = arith.mulf %20, %20 : vector<640x192xf32>
    %cst_11 = arith.constant dense<0.000000e+00> : vector<192xf32>
    %22 = vector.multi_reduction <add>, %21, %cst_11 [0] : vector<640x192xf32> to vector<192xf32>
    %23 = vector.shape_cast %22 : vector<192xf32> to vector<1x192xf32>
    %cst_12 = arith.constant 6.400000e+02 : f32
    %24 = vector.broadcast %cst_12 : f32 to vector<1x192xf32>
    %25 = arith.divf %23, %24 : vector<1x192xf32>
    %cst_13 = arith.constant 9.99999974E-6 : f32
    %26 = vector.broadcast %cst_13 : f32 to vector<1x192xf32>
    %27 = arith.addf %25, %26 : vector<1x192xf32>
    %28 = math.rsqrt %27 : vector<1x192xf32>
    %29 = arith.mulf %12, %28 : vector<1x192xf32>
    %30 = arith.mulf %18, %29 : vector<1x192xf32>
    %31 = arith.subf %14, %30 : vector<1x192xf32>
    %32 = vector.shape_cast %29 : vector<1x192xf32> to vector<1x1x192xf32>
    %33 = vector.broadcast %32 : vector<1x1x192xf32> to vector<80x16x192xf32>
    %34 = arith.mulf %8, %33 : vector<80x16x192xf32>
    %35 = vector.shape_cast %31 : vector<1x192xf32> to vector<1x1x192xf32>
    %36 = vector.broadcast %35 : vector<1x1x192xf32> to vector<80x16x192xf32>
    %37 = arith.addf %34, %36 : vector<80x16x192xf32>
    %cst_14 = arith.constant 0.000000e+00 : f32
    %38 = vector.broadcast %cst_14 : f32 to vector<80x16x192xf32>
    %39 = arith.cmpf oge, %37, %38 : vector<80x16x192xf32>
    %cst_15 = arith.constant 1.000000e-01 : f32
    %40 = vector.broadcast %cst_15 : f32 to vector<80x16x192xf32>
    %41 = arith.mulf %40, %37 : vector<80x16x192xf32>
    %42 = arith.select %39, %37, %41 : vector<80x16x192xi1>, vector<80x16x192xf32>
    %43 = vector.extract_strided_slice %42 {offsets = [0, 0, 0], sizes = [80, 16, 64], strides = [1, 1, 1]} : vector<80x16x192xf32> to vector<80x16x64xf32>
    %44 = vector.extract_strided_slice %42 {offsets = [0, 0, 64], sizes = [80, 16, 64], strides = [1, 1, 1]} : vector<80x16x192xf32> to vector<80x16x64xf32>
    %45 = vector.extract_strided_slice %42 {offsets = [0, 0, 128], sizes = [80, 16, 64], strides = [1, 1, 1]} : vector<80x16x192xf32> to vector<80x16x64xf32>
    %46 = vector.extract_strided_slice %43 {offsets = [0, 1, 0], sizes = [40, 8, 64], strides = [1, 1, 1]} : vector<80x16x64xf32> to vector<40x8x64xf32>
    %47 = vector.extract_strided_slice %43 {offsets = [40, 1, 0], sizes = [40, 8, 64], strides = [1, 1, 1]} : vector<80x16x64xf32> to vector<40x8x64xf32>
    %cst_16 = arith.constant 1.000000e+00 : f32
    %48 = vector.broadcast %cst_16 : f32 to vector<40x8x64xf32>
    %49 = arith.mulf %48, %46 : vector<40x8x64xf32>
    %cst_17 = arith.constant 0.000000e+00 : f32
    %50 = vector.broadcast %cst_17 : f32 to vector<40x8x64xf32>
    %51 = arith.mulf %50, %47 : vector<40x8x64xf32>
    %52 = arith.addf %49, %51 : vector<40x8x64xf32>
    %53 = vector.extract_strided_slice %44 {offsets = [0, 0, 0], sizes = [40, 8, 64], strides = [1, 1, 1]} : vector<80x16x64xf32> to vector<40x8x64xf32>
    %54 = vector.extract_strided_slice %44 {offsets = [40, 0, 0], sizes = [40, 8, 64], strides = [1, 1, 1]} : vector<80x16x64xf32> to vector<40x8x64xf32>
    %cst_18 = arith.constant 1.000000e+00 : f32
    %55 = vector.broadcast %cst_18 : f32 to vector<40x8x64xf32>
    %56 = arith.mulf %55, %53 : vector<40x8x64xf32>
    %cst_19 = arith.constant 0.000000e+00 : f32
    %57 = vector.broadcast %cst_19 : f32 to vector<40x8x64xf32>
    %58 = arith.mulf %57, %54 : vector<40x8x64xf32>
    %59 = arith.addf %56, %58 : vector<40x8x64xf32>
    %60 = vector.extract_strided_slice %43 {offsets = [40, 1, 0], sizes = [40, 8, 64], strides = [1, 1, 1]} : vector<80x16x64xf32> to vector<40x8x64xf32>
    %61 = vector.extract_strided_slice %43 {offsets = [0, 2, 0], sizes = [40, 8, 64], strides = [1, 1, 1]} : vector<80x16x64xf32> to vector<40x8x64xf32>
    %cst_20 = arith.constant 0.666666686 : f32
    %62 = vector.broadcast %cst_20 : f32 to vector<40x8x64xf32>
    %63 = arith.mulf %62, %60 : vector<40x8x64xf32>
    %cst_21 = arith.constant 0.333333313 : f32
    %64 = vector.broadcast %cst_21 : f32 to vector<40x8x64xf32>
    %65 = arith.mulf %64, %61 : vector<40x8x64xf32>
    %66 = arith.addf %63, %65 : vector<40x8x64xf32>
    %67 = vector.extract_strided_slice %44 {offsets = [0, 1, 0], sizes = [40, 8, 64], strides = [1, 1, 1]} : vector<80x16x64xf32> to vector<40x8x64xf32>
    %68 = vector.extract_strided_slice %44 {offsets = [40, 1, 0], sizes = [40, 8, 64], strides = [1, 1, 1]} : vector<80x16x64xf32> to vector<40x8x64xf32>
    %cst_22 = arith.constant 0.333333373 : f32
    %69 = vector.broadcast %cst_22 : f32 to vector<40x8x64xf32>
    %70 = arith.mulf %69, %67 : vector<40x8x64xf32>
    %cst_23 = arith.constant 0.666666627 : f32
    %71 = vector.broadcast %cst_23 : f32 to vector<40x8x64xf32>
    %72 = arith.mulf %71, %68 : vector<40x8x64xf32>
    %73 = arith.addf %70, %72 : vector<40x8x64xf32>
    %74 = vector.extract_strided_slice %43 {offsets = [0, 2, 0], sizes = [40, 8, 64], strides = [1, 1, 1]} : vector<80x16x64xf32> to vector<40x8x64xf32>
    %75 = vector.extract_strided_slice %43 {offsets = [40, 2, 0], sizes = [40, 8, 64], strides = [1, 1, 1]} : vector<80x16x64xf32> to vector<40x8x64xf32>
    %cst_24 = arith.constant 0.333333313 : f32
    %76 = vector.broadcast %cst_24 : f32 to vector<40x8x64xf32>
    %77 = arith.mulf %76, %74 : vector<40x8x64xf32>
    %cst_25 = arith.constant 0.666666686 : f32
    %78 = vector.broadcast %cst_25 : f32 to vector<40x8x64xf32>
    %79 = arith.mulf %78, %75 : vector<40x8x64xf32>
    %80 = arith.addf %77, %79 : vector<40x8x64xf32>
    %81 = vector.extract_strided_slice %44 {offsets = [40, 2, 0], sizes = [40, 8, 64], strides = [1, 1, 1]} : vector<80x16x64xf32> to vector<40x8x64xf32>
    %82 = vector.extract_strided_slice %44 {offsets = [0, 3, 0], sizes = [40, 8, 64], strides = [1, 1, 1]} : vector<80x16x64xf32> to vector<40x8x64xf32>
    %cst_26 = arith.constant 0.666666627 : f32
    %83 = vector.broadcast %cst_26 : f32 to vector<40x8x64xf32>
    %84 = arith.mulf %83, %81 : vector<40x8x64xf32>
    %cst_27 = arith.constant 0.333333373 : f32
    %85 = vector.broadcast %cst_27 : f32 to vector<40x8x64xf32>
    %86 = arith.mulf %85, %82 : vector<40x8x64xf32>
    %87 = arith.addf %84, %86 : vector<40x8x64xf32>
    %88 = vector.extract_strided_slice %43 {offsets = [0, 3, 0], sizes = [40, 8, 64], strides = [1, 1, 1]} : vector<80x16x64xf32> to vector<40x8x64xf32>
    %89 = vector.extract_strided_slice %43 {offsets = [40, 3, 0], sizes = [40, 8, 64], strides = [1, 1, 1]} : vector<80x16x64xf32> to vector<40x8x64xf32>
    %cst_28 = arith.constant 1.000000e+00 : f32
    %90 = vector.broadcast %cst_28 : f32 to vector<40x8x64xf32>
    %91 = arith.mulf %90, %88 : vector<40x8x64xf32>
    %cst_29 = arith.constant 0.000000e+00 : f32
    %92 = vector.broadcast %cst_29 : f32 to vector<40x8x64xf32>
    %93 = arith.mulf %92, %89 : vector<40x8x64xf32>
    %94 = arith.addf %91, %93 : vector<40x8x64xf32>
    %95 = vector.extract_strided_slice %44 {offsets = [0, 4, 0], sizes = [40, 8, 64], strides = [1, 1, 1]} : vector<80x16x64xf32> to vector<40x8x64xf32>
    %96 = vector.extract_strided_slice %44 {offsets = [40, 4, 0], sizes = [40, 8, 64], strides = [1, 1, 1]} : vector<80x16x64xf32> to vector<40x8x64xf32>
    %cst_30 = arith.constant 1.000000e+00 : f32
    %97 = vector.broadcast %cst_30 : f32 to vector<40x8x64xf32>
    %98 = arith.mulf %97, %95 : vector<40x8x64xf32>
    %cst_31 = arith.constant 0.000000e+00 : f32
    %99 = vector.broadcast %cst_31 : f32 to vector<40x8x64xf32>
    %100 = arith.mulf %99, %96 : vector<40x8x64xf32>
    %101 = arith.addf %98, %100 : vector<40x8x64xf32>
    %102 = tpu.concatenate %52, %59, %66, %73, %80, %87, %94, %101 in 2 : vector<40x8x64xf32>, vector<40x8x64xf32>, vector<40x8x64xf32>, vector<40x8x64xf32>, vector<40x8x64xf32>, vector<40x8x64xf32>, vector<40x8x64xf32>, vector<40x8x64xf32> -> vector<40x8x512xf32>
    %103 = vector.shape_cast %102 : vector<40x8x512xf32> to vector<320x512xf32>
    %104 = arith.truncf %103 : vector<320x512xf32> to vector<320x512xbf16>
    %c0_32 = arith.constant 0 : index
    %c0_33 = arith.constant 0 : index
    %105 = vector.load %arg6[%c0_32, %c0_33] : memref<512x128xbf16, #tpu.memory_space<vmem>>, vector<512x128xbf16>
    %cst_34 = arith.constant dense<0.000000e+00> : vector<320x128xf32>
    %106 = tpu.matmul %104, %105, %cst_34 {dimension_numbers = #tpu.dot_dimension_numbers<[1], [0], [0], [1], [0, 0, 1, 1], [], []>} : vector<320x512xbf16>, vector<512x128xbf16>, vector<320x128xf32> -> vector<320x128xf32>
    %c0_35 = arith.constant 0 : index
    %c0_36 = arith.constant 0 : index
    %107 = vector.load %arg7[%c0_35, %c0_36] : memref<1x128xf32, #tpu.memory_space<vmem>>, vector<1x128xf32>
    %108 = vector.broadcast %107 : vector<1x128xf32> to vector<320x128xf32>
    %109 = arith.addf %106, %108 : vector<320x128xf32>
    %c0_37 = arith.constant 0 : index
    %c0_38 = arith.constant 0 : index
    %110 = vector.load %arg8[%c0_37, %c0_38] : memref<1x128xf32, #tpu.memory_space<vmem>>, vector<1x128xf32>
    %c0_39 = arith.constant 0 : index
    %c0_40 = arith.constant 0 : index
    %111 = vector.load %arg9[%c0_39, %c0_40] : memref<1x128xf32, #tpu.memory_space<vmem>>, vector<1x128xf32>
    %cst_41 = arith.constant dense<0.000000e+00> : vector<128xf32>
    %112 = vector.multi_reduction <add>, %109, %cst_41 [0] : vector<320x128xf32> to vector<128xf32>
    %113 = vector.shape_cast %112 : vector<128xf32> to vector<1x128xf32>
    %cst_42 = arith.constant 3.200000e+02 : f32
    %114 = vector.broadcast %cst_42 : f32 to vector<1x128xf32>
    %115 = arith.divf %113, %114 : vector<1x128xf32>
    %116 = vector.broadcast %115 : vector<1x128xf32> to vector<320x128xf32>
    %117 = arith.subf %109, %116 : vector<320x128xf32>
    %118 = arith.mulf %117, %117 : vector<320x128xf32>
    %cst_43 = arith.constant dense<0.000000e+00> : vector<128xf32>
    %119 = vector.multi_reduction <add>, %118, %cst_43 [0] : vector<320x128xf32> to vector<128xf32>
    %120 = vector.shape_cast %119 : vector<128xf32> to vector<1x128xf32>
    %cst_44 = arith.constant 3.200000e+02 : f32
    %121 = vector.broadcast %cst_44 : f32 to vector<1x128xf32>
    %122 = arith.divf %120, %121 : vector<1x128xf32>
    %cst_45 = arith.constant 9.99999974E-6 : f32
    %123 = vector.broadcast %cst_45 : f32 to vector<1x128xf32>
    %124 = arith.addf %122, %123 : vector<1x128xf32>
    %125 = math.rsqrt %124 : vector<1x128xf32>
    %126 = arith.mulf %110, %125 : vector<1x128xf32>
    %127 = arith.mulf %115, %126 : vector<1x128xf32>
    %128 = arith.subf %111, %127 : vector<1x128xf32>
    %129 = vector.broadcast %126 : vector<1x128xf32> to vector<320x128xf32>
    %130 = arith.mulf %109, %129 : vector<320x128xf32>
    %131 = vector.broadcast %128 : vector<1x128xf32> to vector<320x128xf32>
    %132 = arith.addf %130, %131 : vector<320x128xf32>
    %133 = vector.extract_strided_slice %45 {offsets = [40, 1, 0], sizes = [40, 8, 64], strides = [1, 1, 1]} : vector<80x16x64xf32> to vector<40x8x64xf32>
    %134 = vector.extract_strided_slice %45 {offsets = [0, 2, 0], sizes = [40, 8, 64], strides = [1, 1, 1]} : vector<80x16x64xf32> to vector<40x8x64xf32>
    %135 = arith.maximumf %133, %134 : vector<40x8x64xf32>
    %136 = vector.extract_strided_slice %45 {offsets = [40, 2, 0], sizes = [40, 8, 64], strides = [1, 1, 1]} : vector<80x16x64xf32> to vector<40x8x64xf32>
    %137 = arith.maximumf %135, %136 : vector<40x8x64xf32>
    %138 = vector.shape_cast %137 : vector<40x8x64xf32> to vector<320x64xf32>
    %c0_46 = arith.constant 0 : index
    %c0_47 = arith.constant 0 : index
    %139 = vector.load %arg10[%c0_46, %c0_47] : memref<1x64xf32, #tpu.memory_space<vmem>>, vector<1x64xf32>
    %c0_48 = arith.constant 0 : index
    %c0_49 = arith.constant 0 : index
    %140 = vector.load %arg11[%c0_48, %c0_49] : memref<1x64xf32, #tpu.memory_space<vmem>>, vector<1x64xf32>
    %cst_50 = arith.constant dense<0.000000e+00> : vector<64xf32>
    %141 = vector.multi_reduction <add>, %138, %cst_50 [0] : vector<320x64xf32> to vector<64xf32>
    %142 = vector.shape_cast %141 : vector<64xf32> to vector<1x64xf32>
    %cst_51 = arith.constant 3.200000e+02 : f32
    %143 = vector.broadcast %cst_51 : f32 to vector<1x64xf32>
    %144 = arith.divf %142, %143 : vector<1x64xf32>
    %145 = vector.broadcast %144 : vector<1x64xf32> to vector<320x64xf32>
    %146 = arith.subf %138, %145 : vector<320x64xf32>
    %147 = arith.mulf %146, %146 : vector<320x64xf32>
    %cst_52 = arith.constant dense<0.000000e+00> : vector<64xf32>
    %148 = vector.multi_reduction <add>, %147, %cst_52 [0] : vector<320x64xf32> to vector<64xf32>
    %149 = vector.shape_cast %148 : vector<64xf32> to vector<1x64xf32>
    %cst_53 = arith.constant 3.200000e+02 : f32
    %150 = vector.broadcast %cst_53 : f32 to vector<1x64xf32>
    %151 = arith.divf %149, %150 : vector<1x64xf32>
    %cst_54 = arith.constant 9.99999974E-6 : f32
    %152 = vector.broadcast %cst_54 : f32 to vector<1x64xf32>
    %153 = arith.addf %151, %152 : vector<1x64xf32>
    %154 = math.rsqrt %153 : vector<1x64xf32>
    %155 = arith.mulf %139, %154 : vector<1x64xf32>
    %156 = arith.mulf %144, %155 : vector<1x64xf32>
    %157 = arith.subf %140, %156 : vector<1x64xf32>
    %158 = vector.broadcast %155 : vector<1x64xf32> to vector<320x64xf32>
    %159 = arith.mulf %138, %158 : vector<320x64xf32>
    %160 = vector.broadcast %157 : vector<1x64xf32> to vector<320x64xf32>
    %161 = arith.addf %159, %160 : vector<320x64xf32>
    %162 = vector.extract_strided_slice %7 {offsets = [0, 0, 192], sizes = [80, 16, 64], strides = [1, 1, 1]} : vector<80x16x256xf32> to vector<80x16x64xf32>
    %163 = vector.extract_strided_slice %162 {offsets = [0, 2, 0], sizes = [40, 8, 64], strides = [1, 1, 1]} : vector<80x16x64xf32> to vector<40x8x64xf32>
    %164 = vector.shape_cast %163 : vector<40x8x64xf32> to vector<320x64xf32>
    %c0_55 = arith.constant 0 : index
    %c0_56 = arith.constant 0 : index
    %165 = vector.load %arg4[%c0_55, %c0_56] : memref<1x256xf32, #tpu.memory_space<vmem>>, vector<1x256xf32>
    %166 = vector.extract_strided_slice %165 {offsets = [0, 192], sizes = [1, 64], strides = [1, 1]} : vector<1x256xf32> to vector<1x64xf32>
    %c0_57 = arith.constant 0 : index
    %c0_58 = arith.constant 0 : index
    %167 = vector.load %arg5[%c0_57, %c0_58] : memref<1x256xf32, #tpu.memory_space<vmem>>, vector<1x256xf32>
    %168 = vector.extract_strided_slice %167 {offsets = [0, 192], sizes = [1, 64], strides = [1, 1]} : vector<1x256xf32> to vector<1x64xf32>
    %cst_59 = arith.constant dense<0.000000e+00> : vector<64xf32>
    %169 = vector.multi_reduction <add>, %164, %cst_59 [0] : vector<320x64xf32> to vector<64xf32>
    %170 = vector.shape_cast %169 : vector<64xf32> to vector<1x64xf32>
    %cst_60 = arith.constant 3.200000e+02 : f32
    %171 = vector.broadcast %cst_60 : f32 to vector<1x64xf32>
    %172 = arith.divf %170, %171 : vector<1x64xf32>
    %173 = vector.broadcast %172 : vector<1x64xf32> to vector<320x64xf32>
    %174 = arith.subf %164, %173 : vector<320x64xf32>
    %175 = arith.mulf %174, %174 : vector<320x64xf32>
    %cst_61 = arith.constant dense<0.000000e+00> : vector<64xf32>
    %176 = vector.multi_reduction <add>, %175, %cst_61 [0] : vector<320x64xf32> to vector<64xf32>
    %177 = vector.shape_cast %176 : vector<64xf32> to vector<1x64xf32>
    %cst_62 = arith.constant 3.200000e+02 : f32
    %178 = vector.broadcast %cst_62 : f32 to vector<1x64xf32>
    %179 = arith.divf %177, %178 : vector<1x64xf32>
    %cst_63 = arith.constant 9.99999974E-6 : f32
    %180 = vector.broadcast %cst_63 : f32 to vector<1x64xf32>
    %181 = arith.addf %179, %180 : vector<1x64xf32>
    %182 = math.rsqrt %181 : vector<1x64xf32>
    %183 = arith.mulf %166, %182 : vector<1x64xf32>
    %184 = arith.mulf %172, %183 : vector<1x64xf32>
    %185 = arith.subf %168, %184 : vector<1x64xf32>
    %186 = vector.broadcast %183 : vector<1x64xf32> to vector<320x64xf32>
    %187 = arith.mulf %164, %186 : vector<320x64xf32>
    %188 = vector.broadcast %185 : vector<1x64xf32> to vector<320x64xf32>
    %189 = arith.addf %187, %188 : vector<320x64xf32>
    %190 = tpu.concatenate %132, %161, %189 in 1 : vector<320x128xf32>, vector<320x64xf32>, vector<320x64xf32> -> vector<320x256xf32>
    %c0_64 = arith.constant 0 : index
    %c0_65 = arith.constant 0 : index
    %191 = vector.load %arg12[%c0_64, %c0_65] : memref<320x256xf32, #tpu.memory_space<vmem>>, vector<320x256xf32>
    tpu.vector_store %arg12[%c0_64, %c0_65], %190 {strides = array<i32>} : memref<320x256xf32, #tpu.memory_space<vmem>>, vector<320x256xf32>,
    return
  }
  func.func @transform_0(%arg0: i32) -> (i32, i32) {
    %c0_i32 = arith.constant 0 : i32
    %c0_i32_0 = arith.constant 0 : i32
    %c0_i32_1 = arith.constant 0 : i32
    return %c0_i32, %c0_i32_0 : i32, i32
  }
  func.func @transform_1(%arg0: i32) -> (i32, i32) {
    %c0_i32 = arith.constant 0 : i32
    %c0_i32_0 = arith.constant 0 : i32
    %c0_i32_1 = arith.constant 0 : i32
    return %c0_i32, %c0_i32_0 : i32, i32
  }
  func.func @transform_2(%arg0: i32) -> (i32, i32) {
    %c0_i32 = arith.constant 0 : i32
    %c0_i32_0 = arith.constant 0 : i32
    %c0_i32_1 = arith.constant 0 : i32
    return %c0_i32, %c0_i32_0 : i32, i32
  }
  func.func @transform_3(%arg0: i32) -> (i32, i32) {
    %c0_i32 = arith.constant 0 : i32
    %c0_i32_0 = arith.constant 0 : i32
    %c0_i32_1 = arith.constant 0 : i32
    return %c0_i32, %c0_i32_0 : i32, i32
  }
  func.func @transform_4(%arg0: i32) -> (i32, i32) {
    %c0_i32 = arith.constant 0 : i32
    %c0_i32_0 = arith.constant 0 : i32
    %c0_i32_1 = arith.constant 0 : i32
    return %c0_i32, %c0_i32_0 : i32, i32
  }
  func.func @transform_5(%arg0: i32) -> (i32, i32) {
    %c0_i32 = arith.constant 0 : i32
    %c0_i32_0 = arith.constant 0 : i32
    %c0_i32_1 = arith.constant 0 : i32
    return %c0_i32, %c0_i32_0 : i32, i32
  }
  func.func @transform_6(%arg0: i32) -> (i32, i32) {
    %c0_i32 = arith.constant 0 : i32
    %c0_i32_0 = arith.constant 0 : i32
    %c0_i32_1 = arith.constant 0 : i32
    return %c0_i32, %c0_i32_0 : i32, i32
  }
  func.func @transform_7(%arg0: i32) -> (i32, i32) {
    %c0_i32 = arith.constant 0 : i32
    %c0_i32_0 = arith.constant 0 : i32
    %c0_i32_1 = arith.constant 0 : i32
    return %c0_i32, %c0_i32_0 : i32, i32
  }
  func.func @transform_8(%arg0: i32) -> (i32, i32) {
    %c0_i32 = arith.constant 0 : i32
    %c0_i32_0 = arith.constant 0 : i32
    %c0_i32_1 = arith.constant 0 : i32
    return %c0_i32, %c0_i32_0 : i32, i32
  }
  func.func @transform_9(%arg0: i32) -> (i32, i32) {
    %c0_i32 = arith.constant 0 : i32
    %c0_i32_0 = arith.constant 0 : i32
    %c0_i32_1 = arith.constant 0 : i32
    return %c0_i32, %c0_i32_0 : i32, i32
  }
  func.func @transform_10(%arg0: i32) -> (i32, i32) {
    %c0_i32 = arith.constant 0 : i32
    %c0_i32_0 = arith.constant 0 : i32
    %c0_i32_1 = arith.constant 0 : i32
    return %c0_i32, %c0_i32_0 : i32, i32
  }
  func.func @transform_11(%arg0: i32) -> (i32, i32) {
    %c0_i32 = arith.constant 0 : i32
    %c0_i32_0 = arith.constant 0 : i32
    %c0_i32_1 = arith.constant 0 : i32
    return %c0_i32, %c0_i32_0 : i32, i32
  }
}

</mosaic_0001>

<llo_original>
// kernel: multiscale_forward.1
$region0: #{multiscale_forward.1}
  #allocation0 [shape = 'u32[]', space=smem, size = 0x4, offset = 0x4, fixed_abs, tag = 'smem constant byte address 0x4 - core index']
  #allocation1 [shape = 'u32[72,128]{1,0:T(1,128)}', space=vmem, size = 0x9000, scoped, tag = 'internal scratch']
  %s0 = inlined_call_operand.vmem [shape: f32[1280,16], index: 0, kind: input, shape index: {}]
  %s1 = inlined_call_operand.vmem [shape: bf16[16,256], index: 1, kind: input, shape index: {}]
  %s2 = inlined_call_operand.vmem [shape: f32[1,256], index: 2, kind: input, shape index: {}]
  %s3 = inlined_call_operand.vmem [shape: f32[1,256], index: 3, kind: input, shape index: {}]
  %s4 = inlined_call_operand.vmem [shape: f32[1,256], index: 4, kind: input, shape index: {}]
  %s5 = inlined_call_operand.vmem [shape: bf16[512,128], index: 5, kind: input, shape index: {}]
  %s6 = inlined_call_operand.vmem [shape: f32[1,128], index: 6, kind: input, shape index: {}]
  %s7 = inlined_call_operand.vmem [shape: f32[1,128], index: 7, kind: input, shape index: {}]
  %s8 = inlined_call_operand.vmem [shape: f32[1,128], index: 8, kind: input, shape index: {}]
  %s9 = inlined_call_operand.vmem [shape: f32[1,64], index: 9, kind: input, shape index: {}]
  %s10 = inlined_call_operand.vmem [shape: f32[1,64], index: 10, kind: input, shape index: {}]
  %s11 = inlined_call_operand.hbm [shape: f32[320,256], index: 11, kind: output, shape index: {}]
  %s12 = sld [smem:[#allocation0]]
  $region54: #{multiscale_forward.1} parent=0
    _
  %s14 = ssub.s32 1, %s12
  %s15 = scalar_select 0, %s14, %s12
  $region1: #{multiscale_forward.1} parent=0
    #allocation2 [shape = 'u8[327680]{0}', space=vmem, size = 0x50000, scoped, tag = 'output window, operand 0, single buffered']
    #allocation3 [shape = 's32[1]{0}', space=sflag, size = 0x4, scoped, tag = 'scoped memory for multiscale_forward.1']
    %16 = vsyncpa [#allocation3], 0
    // Predicated region
    $region2: #{multiscale_forward.1} parent=1 // pred_check
      _
    $region3: #{multiscale_forward.1} parent=1 // pred_check_branch
      %18 = sbr.rel (0) target = $region5
    $region4: #{multiscale_forward.1} parent=1 // pred_region
      _
    $region5: #{multiscale_forward.1} parent=1 // pred_fallthru
      _
    // Predicated region
    $region6: #{multiscale_forward.1} parent=1 // pred_check
      _
    $region7: #{multiscale_forward.1} parent=1 // pred_check_branch
      %20 = sbr.rel (0) target = $region9
    $region8: #{multiscale_forward.1} parent=1 // pred_region
      _
    $region9: #{multiscale_forward.1} parent=1 // pred_fallthru
      _
    // Predicated region
    $region10: #{multiscale_forward.1} parent=1 // pred_check
      _
    $region11: #{multiscale_forward.1} parent=1 // pred_check_branch
      %22 = sbr.rel (0) target = $region13
    $region12: #{multiscale_forward.1} parent=1 // pred_region
      _
    $region13: #{multiscale_forward.1} parent=1 // pred_fallthru
      _
    // Predicated region
    $region14: #{multiscale_forward.1} parent=1 // pred_check
      _
    $region15: #{multiscale_forward.1} parent=1 // pred_check_branch
      %24 = sbr.rel (0) target = $region17
    $region16: #{multiscale_forward.1} parent=1 // pred_region
      _
    $region17: #{multiscale_forward.1} parent=1 // pred_fallthru
      _
    // Predicated region
    $region18: #{multiscale_forward.1} parent=1 // pred_check
      _
    $region19: #{multiscale_forward.1} parent=1 // pred_check_branch
      %26 = sbr.rel (0) target = $region21
    $region20: #{multiscale_forward.1} parent=1 // pred_region
      _
    $region21: #{multiscale_forward.1} parent=1 // pred_fallthru
      _
    // Predicated region
    $region22: #{multiscale_forward.1} parent=1 // pred_check
      _
    $region23: #{multiscale_forward.1} parent=1 // pred_check_branch
      %28 = sbr.rel (0) target = $region25
    $region24: #{multiscale_forward.1} parent=1 // pred_region
      _
    $region25: #{multiscale_forward.1} parent=1 // pred_fallthru
      _
    // Predicated region
    $region26: #{multiscale_forward.1} parent=1 // pred_check
      _
    $region27: #{multiscale_forward.1} parent=1 // pred_check_branch
      %30 = sbr.rel (0) target = $region29
    $region28: #{multiscale_forward.1} parent=1 // pred_region
      _
    $region29: #{multiscale_forward.1} parent=1 // pred_fallthru
      _
    // Predicated region
    $region30: #{multiscale_forward.1} parent=1 // pred_check
      _
    $region31: #{multiscale_forward.1} parent=1 // pred_check_branch
      %32 = sbr.rel (0) target = $region33
    $region32: #{multiscale_forward.1} parent=1 // pred_region
      _
    $region33: #{multiscale_forward.1} parent=1 // pred_fallthru
      _
    // Predicated region
    $region34: #{multiscale_forward.1} parent=1 // pred_check
      _
    $region35: #{multiscale_forward.1} parent=1 // pred_check_branch
      %34 = sbr.rel (0) target = $region37
    $region36: #{multiscale_forward.1} parent=1 // pred_region
      _
    $region37: #{multiscale_forward.1} parent=1 // pred_fallthru
      _
    // Predicated region
    $region38: #{multiscale_forward.1} parent=1 // pred_check
      _
    $region39: #{multiscale_forward.1} parent=1 // pred_check_branch
      %36 = sbr.rel (0) target = $region41
    $region40: #{multiscale_forward.1} parent=1 // pred_region
      _
    $region41: #{multiscale_forward.1} parent=1 // pred_fallthru
      _
    // Predicated region
    $region42: #{multiscale_forward.1} parent=1 // pred_check
      _
    $region43: #{multiscale_forward.1} parent=1 // pred_check_branch
      %38 = sbr.rel (0) target = $region45
    $region44: #{multiscale_forward.1} parent=1 // pred_region
      _
    $region45: #{multiscale_forward.1} parent=1 // pred_fallthru
      _
    %v40 = vld [vmem:[%s0] sm:$0xff]
    %v41 = vld [vmem:[%s0 + $0x8] sm:$0xff]
    %v42 = vld [vmem:[%s0 + $0x10] sm:$0xff]
    %v43 = vld [vmem:[%s0 + $0x18] sm:$0xff]
    %v44 = vld [vmem:[%s0 + $0x20] sm:$0xff]
    %v45 = vld [vmem:[%s0 + $0x28] sm:$0xff]
    %v46 = vld [vmem:[%s0 + $0x30] sm:$0xff]
    %v47 = vld [vmem:[%s0 + $0x38] sm:$0xff]
    %v48 = vld [vmem:[%s0 + $0x40] sm:$0xff]
    %v49 = vld [vmem:[%s0 + $0x48] sm:$0xff]
    %v50 = vld [vmem:[%s0 + $0x50] sm:$0xff]
    %v51 = vld [vmem:[%s0 + $0x58] sm:$0xff]
    %v52 = vld [vmem:[%s0 + $0x60] sm:$0xff]
    %v53 = vld [vmem:[%s0 + $0x68] sm:$0xff]
    %v54 = vld [vmem:[%s0 + $0x70] sm:$0xff]
    %v55 = vld [vmem:[%s0 + $0x78] sm:$0xff]
    %v56 = vld [vmem:[%s0 + $0x80] sm:$0xff]
    %v57 = vld [vmem:[%s0 + $0x88] sm:$0xff]
    %v58 = vld [vmem:[%s0 + $0x90] sm:$0xff]
    %v59 = vld [vmem:[%s0 + $0x98] sm:$0xff]
    %v60 = vld [vmem:[%s0 + $0xa0] sm:$0xff]
    %v61 = vld [vmem:[%s0 + $0xa8] sm:$0xff]
    %v62 = vld [vmem:[%s0 + $0xb0] sm:$0xff]
    %v63 = vld [vmem:[%s0 + $0xb8] sm:$0xff]
    %v64 = vld [vmem:[%s0 + $0xc0] sm:$0xff]
    %v65 = vld [vmem:[%s0 + $0xc8] sm:$0xff]
    %v66 = vld [vmem:[%s0 + $0xd0] sm:$0xff]
    %v67 = vld [vmem:[%s0 + $0xd8] sm:$0xff]
    %v68 = vld [vmem:[%s0 + $0xe0] sm:$0xff]
    %v69 = vld [vmem:[%s0 + $0xe8] sm:$0xff]
    %v70 = vld [vmem:[%s0 + $0xf0] sm:$0xff]
    %v71 = vld [vmem:[%s0 + $0xf8] sm:$0xff]
    %v72 = vld [vmem:[%s0 + $0x100] sm:$0xff]
    %v73 = vld [vmem:[%s0 + $0x108] sm:$0xff]
    %v74 = vld [vmem:[%s0 + $0x110] sm:$0xff]
    %v75 = vld [vmem:[%s0 + $0x118] sm:$0xff]
    %v76 = vld [vmem:[%s0 + $0x120] sm:$0xff]
    %v77 = vld [vmem:[%s0 + $0x128] sm:$0xff]
    %v78 = vld [vmem:[%s0 + $0x130] sm:$0xff]
    %v79 = vld [vmem:[%s0 + $0x138] sm:$0xff]
    %v80 = vld [vmem:[%s0 + $0x140] sm:$0xff]
    %v81 = vld [vmem:[%s0 + $0x148] sm:$0xff]
    %v82 = vld [vmem:[%s0 + $0x150] sm:$0xff]
    %v83 = vld [vmem:[%s0 + $0x158] sm:$0xff]
    %v84 = vld [vmem:[%s0 + $0x160] sm:$0xff]
    %v85 = vld [vmem:[%s0 + $0x168] sm:$0xff]
    %v86 = vld [vmem:[%s0 + $0x170] sm:$0xff]
    %v87 = vld [vmem:[%s0 + $0x178] sm:$0xff]
    %v88 = vld [vmem:[%s0 + $0x180] sm:$0xff]
    %v89 = vld [vmem:[%s0 + $0x188] sm:$0xff]
    %v90 = vld [vmem:[%s0 + $0x190] sm:$0xff]
    %v91 = vld [vmem:[%s0 + $0x198] sm:$0xff]
    %v92 = vld [vmem:[%s0 + $0x1a0] sm:$0xff]
    %v93 = vld [vmem:[%s0 + $0x1a8] sm:$0xff]
    %v94 = vld [vmem:[%s0 + $0x1b0] sm:$0xff]
    %v95 = vld [vmem:[%s0 + $0x1b8] sm:$0xff]
    %v96 = vld [vmem:[%s0 + $0x1c0] sm:$0xff]
    %v97 = vld [vmem:[%s0 + $0x1c8] sm:$0xff]
    %v98 = vld [vmem:[%s0 + $0x1d0] sm:$0xff]
    %v99 = vld [vmem:[%s0 + $0x1d8] sm:$0xff]
    %v100 = vld [vmem:[%s0 + $0x1e0] sm:$0xff]
    %v101 = vld [vmem:[%s0 + $0x1e8] sm:$0xff]
    %v102 = vld [vmem:[%s0 + $0x1f0] sm:$0xff]
    %v103 = vld [vmem:[%s0 + $0x1f8] sm:$0xff]
    %v104 = vld [vmem:[%s0 + $0x200] sm:$0xff]
    %v105 = vld [vmem:[%s0 + $0x208] sm:$0xff]
    %v106 = vld [vmem:[%s0 + $0x210] sm:$0xff]
    %v107 = vld [vmem:[%s0 + $0x218] sm:$0xff]
    %v108 = vld [vmem:[%s0 + $0x220] sm:$0xff]
    %v109 = vld [vmem:[%s0 + $0x228] sm:$0xff]
    %v110 = vld [vmem:[%s0 + $0x230] sm:$0xff]
    %v111 = vld [vmem:[%s0 + $0x238] sm:$0xff]
    %v112 = vld [vmem:[%s0 + $0x240] sm:$0xff]
    %v113 = vld [vmem:[%s0 + $0x248] sm:$0xff]
    %v114 = vld [vmem:[%s0 + $0x250] sm:$0xff]
    %v115 = vld [vmem:[%s0 + $0x258] sm:$0xff]
    %v116 = vld [vmem:[%s0 + $0x260] sm:$0xff]
    %v117 = vld [vmem:[%s0 + $0x268] sm:$0xff]
    %v118 = vld [vmem:[%s0 + $0x270] sm:$0xff]
    %v119 = vld [vmem:[%s0 + $0x278] sm:$0xff]
    %v120 = vld [vmem:[%s0 + $0x280] sm:$0xff]
    %v121 = vld [vmem:[%s0 + $0x288] sm:$0xff]
    %v122 = vld [vmem:[%s0 + $0x290] sm:$0xff]
    %v123 = vld [vmem:[%s0 + $0x298] sm:$0xff]
    %v124 = vld [vmem:[%s0 + $0x2a0] sm:$0xff]
    %v125 = vld [vmem:[%s0 + $0x2a8] sm:$0xff]
    %v126 = vld [vmem:[%s0 + $0x2b0] sm:$0xff]
    %v127 = vld [vmem:[%s0 + $0x2b8] sm:$0xff]
    %v128 = vld [vmem:[%s0 + $0x2c0] sm:$0xff]
    %v129 = vld [vmem:[%s0 + $0x2c8] sm:$0xff]
    %v130 = vld [vmem:[%s0 + $0x2d0] sm:$0xff]
    %v131 = vld [vmem:[%s0 + $0x2d8] sm:$0xff]
    %v132 = vld [vmem:[%s0 + $0x2e0] sm:$0xff]
    %v133 = vld [vmem:[%s0 + $0x2e8] sm:$0xff]
    %v134 = vld [vmem:[%s0 + $0x2f0] sm:$0xff]
    %v135 = vld [vmem:[%s0 + $0x2f8] sm:$0xff]
    %v136 = vld [vmem:[%s0 + $0x300] sm:$0xff]
    %v137 = vld [vmem:[%s0 + $0x308] sm:$0xff]
    %v138 = vld [vmem:[%s0 + $0x310] sm:$0xff]
    %v139 = vld [vmem:[%s0 + $0x318] sm:$0xff]
    %v140 = vld [vmem:[%s0 + $0x320] sm:$0xff]
    %v141 = vld [vmem:[%s0 + $0x328] sm:$0xff]
    %v142 = vld [vmem:[%s0 + $0x330] sm:$0xff]
    %v143 = vld [vmem:[%s0 + $0x338] sm:$0xff]
    %v144 = vld [vmem:[%s0 + $0x340] sm:$0xff]
    %v145 = vld [vmem:[%s0 + $0x348] sm:$0xff]
    %v146 = vld [vmem:[%s0 + $0x350] sm:$0xff]
    %v147 = vld [vmem:[%s0 + $0x358] sm:$0xff]
    %v148 = vld [vmem:[%s0 + $0x360] sm:$0xff]
    %v149 = vld [vmem:[%s0 + $0x368] sm:$0xff]
    %v150 = vld [vmem:[%s0 + $0x370] sm:$0xff]
    %v151 = vld [vmem:[%s0 + $0x378] sm:$0xff]
    %v152 = vld [vmem:[%s0 + $0x380] sm:$0xff]
    %v153 = vld [vmem:[%s0 + $0x388] sm:$0xff]
    %v154 = vld [vmem:[%s0 + $0x390] sm:$0xff]
    %v155 = vld [vmem:[%s0 + $0x398] sm:$0xff]
    %v156 = vld [vmem:[%s0 + $0x3a0] sm:$0xff]
    %v157 = vld [vmem:[%s0 + $0x3a8] sm:$0xff]
    %v158 = vld [vmem:[%s0 + $0x3b0] sm:$0xff]
    %v159 = vld [vmem:[%s0 + $0x3b8] sm:$0xff]
    %v160 = vld [vmem:[%s0 + $0x3c0] sm:$0xff]
    %v161 = vld [vmem:[%s0 + $0x3c8] sm:$0xff]
    %v162 = vld [vmem:[%s0 + $0x3d0] sm:$0xff]
    %v163 = vld [vmem:[%s0 + $0x3d8] sm:$0xff]
    %v164 = vld [vmem:[%s0 + $0x3e0] sm:$0xff]
    %v165 = vld [vmem:[%s0 + $0x3e8] sm:$0xff]
    %v166 = vld [vmem:[%s0 + $0x3f0] sm:$0xff]
    %v167 = vld [vmem:[%s0 + $0x3f8] sm:$0xff]
    %v168 = vld [vmem:[%s0 + $0x400] sm:$0xff]
    %v169 = vld [vmem:[%s0 + $0x408] sm:$0xff]
    %v170 = vld [vmem:[%s0 + $0x410] sm:$0xff]
    %v171 = vld [vmem:[%s0 + $0x418] sm:$0xff]
    %v172 = vld [vmem:[%s0 + $0x420] sm:$0xff]
    %v173 = vld [vmem:[%s0 + $0x428] sm:$0xff]
    %v174 = vld [vmem:[%s0 + $0x430] sm:$0xff]
    %v175 = vld [vmem:[%s0 + $0x438] sm:$0xff]
    %v176 = vld [vmem:[%s0 + $0x440] sm:$0xff]
    %v177 = vld [vmem:[%s0 + $0x448] sm:$0xff]
    %v178 = vld [vmem:[%s0 + $0x450] sm:$0xff]
    %v179 = vld [vmem:[%s0 + $0x458] sm:$0xff]
    %v180 = vld [vmem:[%s0 + $0x460] sm:$0xff]
    %v181 = vld [vmem:[%s0 + $0x468] sm:$0xff]
    %v182 = vld [vmem:[%s0 + $0x470] sm:$0xff]
    %v183 = vld [vmem:[%s0 + $0x478] sm:$0xff]
    %v184 = vld [vmem:[%s0 + $0x480] sm:$0xff]
    %v185 = vld [vmem:[%s0 + $0x488] sm:$0xff]
    %v186 = vld [vmem:[%s0 + $0x490] sm:$0xff]
    %v187 = vld [vmem:[%s0 + $0x498] sm:$0xff]
    %v188 = vld [vmem:[%s0 + $0x4a0] sm:$0xff]
    %v189 = vld [vmem:[%s0 + $0x4a8] sm:$0xff]
    %v190 = vld [vmem:[%s0 + $0x4b0] sm:$0xff]
    %v191 = vld [vmem:[%s0 + $0x4b8] sm:$0xff]
    %v192 = vld [vmem:[%s0 + $0x4c0] sm:$0xff]
    %v193 = vld [vmem:[%s0 + $0x4c8] sm:$0xff]
    %v194 = vld [vmem:[%s0 + $0x4d0] sm:$0xff]
    %v195 = vld [vmem:[%s0 + $0x4d8] sm:$0xff]
    %v196 = vld [vmem:[%s0 + $0x4e0] sm:$0xff]
    %v197 = vld [vmem:[%s0 + $0x4e8] sm:$0xff]
    %v198 = vld [vmem:[%s0 + $0x4f0] sm:$0xff]
    %v199 = vld [vmem:[%s0 + $0x4f8] sm:$0xff]
    %v200 = vpack.c.bf16 %v41, %v40
    %v201 = vpack.c.bf16 %v43, %v42
    %v202 = vpack.c.bf16 %v45, %v44
    %v203 = vpack.c.bf16 %v47, %v46
    %v204 = vpack.c.bf16 %v49, %v48
    %v205 = vpack.c.bf16 %v51, %v50
    %v206 = vpack.c.bf16 %v53, %v52
    %v207 = vpack.c.bf16 %v55, %v54
    %v208 = vpack.c.bf16 %v57, %v56
    %v209 = vpack.c.bf16 %v59, %v58
    %v210 = vpack.c.bf16 %v61, %v60
    %v211 = vpack.c.bf16 %v63, %v62
    %v212 = vpack.c.bf16 %v65, %v64
    %v213 = vpack.c.bf16 %v67, %v66
    %v214 = vpack.c.bf16 %v69, %v68
    %v215 = vpack.c.bf16 %v71, %v70
    %v216 = vpack.c.bf16 %v73, %v72
    %v217 = vpack.c.bf16 %v75, %v74
    %v218 = vpack.c.bf16 %v77, %v76
    %v219 = vpack.c.bf16 %v79, %v78
    %v220 = vpack.c.bf16 %v81, %v80
    %v221 = vpack.c.bf16 %v83, %v82
    %v222 = vpack.c.bf16 %v85, %v84
    %v223 = vpack.c.bf16 %v87, %v86
    %v224 = vpack.c.bf16 %v89, %v88
    %v225 = vpack.c.bf16 %v91, %v90
    %v226 = vpack.c.bf16 %v93, %v92
    %v227 = vpack.c.bf16 %v95, %v94
    %v228 = vpack.c.bf16 %v97, %v96
    %v229 = vpack.c.bf16 %v99, %v98
    %v230 = vpack.c.bf16 %v101, %v100
    %v231 = vpack.c.bf16 %v103, %v102
    %v232 = vpack.c.bf16 %v105, %v104
    %v233 = vpack.c.bf16 %v107, %v106
    %v234 = vpack.c.bf16 %v109, %v108
    %v235 = vpack.c.bf16 %v111, %v110
    %v236 = vpack.c.bf16 %v113, %v112
    %v237 = vpack.c.bf16 %v115, %v114
    %v238 = vpack.c.bf16 %v117, %v116
    %v239 = vpack.c.bf16 %v119, %v118
    %v240 = vpack.c.bf16 %v121, %v120
    %v241 = vpack.c.bf16 %v123, %v122
    %v242 = vpack.c.bf16 %v125, %v124
    %v243 = vpack.c.bf16 %v127, %v126
    %v244 = vpack.c.bf16 %v129, %v128
    %v245 = vpack.c.bf16 %v131, %v130
    %v246 = vpack.c.bf16 %v133, %v132
    %v247 = vpack.c.bf16 %v135, %v134
    %v248 = vpack.c.bf16 %v137, %v136
    %v249 = vpack.c.bf16 %v139, %v138
    %v250 = vpack.c.bf16 %v141, %v140
    %v251 = vpack.c.bf16 %v143, %v142
    %v252 = vpack.c.bf16 %v145, %v144
    %v253 = vpack.c.bf16 %v147, %v146
    %v254 = vpack.c.bf16 %v149, %v148
    %v255 = vpack.c.bf16 %v151, %v150
    %v256 = vpack.c.bf16 %v153, %v152
    %v257 = vpack.c.bf16 %v155, %v154
    %v258 = vpack.c.bf16 %v157, %v156
    %v259 = vpack.c.bf16 %v159, %v158
    %v260 = vpack.c.bf16 %v161, %v160
    %v261 = vpack.c.bf16 %v163, %v162
    %v262 = vpack.c.bf16 %v165, %v164
    %v263 = vpack.c.bf16 %v167, %v166
    %v264 = vpack.c.bf16 %v169, %v168
    %v265 = vpack.c.bf16 %v171, %v170
    %v266 = vpack.c.bf16 %v173, %v172
    %v267 = vpack.c.bf16 %v175, %v174
    %v268 = vpack.c.bf16 %v177, %v176
    %v269 = vpack.c.bf16 %v179, %v178
    %v270 = vpack.c.bf16 %v181, %v180
    %v271 = vpack.c.bf16 %v183, %v182
    %v272 = vpack.c.bf16 %v185, %v184
    %v273 = vpack.c.bf16 %v187, %v186
    %v274 = vpack.c.bf16 %v189, %v188
    %v275 = vpack.c.bf16 %v191, %v190
    %v276 = vpack.c.bf16 %v193, %v192
    %v277 = vpack.c.bf16 %v195, %v194
    %v278 = vpack.c.bf16 %v197, %v196
    %v279 = vpack.c.bf16 %v199, %v198
    %v280 = vld [vmem:[%s1] sm:$0xff]
    %v281 = vld [vmem:[%s1 + $0x8] sm:$0xff]
    %v282 = vld [vmem:[%s2] sm:$0x3]
    %v284 = vperm.slane %v282, 0
    %v285 = vperm.slane %v282, 1
    %v290 = vunpack.c.l.b16 %v280
    %v291 = vunpack.c.h.b16 %v280
    %v292 = vunpack.c.l.b16 %v281
    %v293 = vunpack.c.h.b16 %v281
    %v294 = vpack.c.b16 %v292, %v290
    %v295 = vpack.c.b16 %v293, %v291
    %vm298 = vcmask 130048
    %v300 = vsel %vm298, %v200, 0
    %v303 = vsel %vm298, %v201, 0
    %v306 = vsel %vm298, %v202, 0
    %v309 = vsel %vm298, %v203, 0
    %v312 = vsel %vm298, %v204, 0
    %v315 = vsel %vm298, %v205, 0
    %v318 = vsel %vm298, %v206, 0
    %v321 = vsel %vm298, %v207, 0
    %v324 = vsel %vm298, %v208, 0
    %v327 = vsel %vm298, %v209, 0
    %v330 = vsel %vm298, %v210, 0
    %v333 = vsel %vm298, %v211, 0
    %v336 = vsel %vm298, %v212, 0
    %v339 = vsel %vm298, %v213, 0
    %v342 = vsel %vm298, %v214, 0
    %v345 = vsel %vm298, %v215, 0
    %v348 = vsel %vm298, %v216, 0
    %v351 = vsel %vm298, %v217, 0
    %v354 = vsel %vm298, %v218, 0
    %v357 = vsel %vm298, %v219, 0
    %v360 = vsel %vm298, %v220, 0
    %v363 = vsel %vm298, %v221, 0
    %v366 = vsel %vm298, %v222, 0
    %v369 = vsel %vm298, %v223, 0
    %v372 = vsel %vm298, %v224, 0
    %v375 = vsel %vm298, %v225, 0
    %v378 = vsel %vm298, %v226, 0
    %v381 = vsel %vm298, %v227, 0
    %v384 = vsel %vm298, %v228, 0
    %v387 = vsel %vm298, %v229, 0
    %v390 = vsel %vm298, %v230, 0
    %v393 = vsel %vm298, %v231, 0
    %v396 = vsel %vm298, %v232, 0
    %v399 = vsel %vm298, %v233, 0
    %v402 = vsel %vm298, %v234, 0
    %v405 = vsel %vm298, %v235, 0
    %v408 = vsel %vm298, %v236, 0
    %v411 = vsel %vm298, %v237, 0
    %v414 = vsel %vm298, %v238, 0
    %v417 = vsel %vm298, %v239, 0
    %v420 = vsel %vm298, %v240, 0
    %v423 = vsel %vm298, %v241, 0
    %v426 = vsel %vm298, %v242, 0
    %v429 = vsel %vm298, %v243, 0
    %v432 = vsel %vm298, %v244, 0
    %v435 = vsel %vm298, %v245, 0
    %v438 = vsel %vm298, %v246, 0
    %v441 = vsel %vm298, %v247, 0
    %v444 = vsel %vm298, %v248, 0
    %v447 = vsel %vm298, %v249, 0
    %v450 = vsel %vm298, %v250, 0
    %v453 = vsel %vm298, %v251, 0
    %v456 = vsel %vm298, %v252, 0
    %v459 = vsel %vm298, %v253, 0
    %v462 = vsel %vm298, %v254, 0
    %v465 = vsel %vm298, %v255, 0
    %v468 = vsel %vm298, %v256, 0
    %v471 = vsel %vm298, %v257, 0
    %v474 = vsel %vm298, %v258, 0
    %v477 = vsel %vm298, %v259, 0
    %v480 = vsel %vm298, %v260, 0
    %v483 = vsel %vm298, %v261, 0
    %v486 = vsel %vm298, %v262, 0
    %v489 = vsel %vm298, %v263, 0
    %v492 = vsel %vm298, %v264, 0
    %v495 = vsel %vm298, %v265, 0
    %v498 = vsel %vm298, %v266, 0
    %v501 = vsel %vm298, %v267, 0
    %v504 = vsel %vm298, %v268, 0
    %v507 = vsel %vm298, %v269, 0
    %v510 = vsel %vm298, %v270, 0
    %v513 = vsel %vm298, %v271, 0
    %v516 = vsel %vm298, %v272, 0
    %v519 = vsel %vm298, %v273, 0
    %v522 = vsel %vm298, %v274, 0
    %v525 = vsel %vm298, %v275, 0
    %v528 = vsel %vm298, %v276, 0
    %v531 = vsel %vm298, %v277, 0
    %v534 = vsel %vm298, %v278, 0
    %v537 = vsel %vm298, %v279, 0
    %539 = vmatpush.bf16.msra.mxu0 0
    %540 = vmatpush.bf16.msra.mxu0 0
    %541 = vmatpush.bf16.msra.mxu0 0
    %542 = vmatpush.bf16.msra.mxu0 0
    %543 = vmatpush.bf16.msra.mxu0 0
    %544 = vmatpush.bf16.msra.mxu0 0
    %545 = vmatpush.bf16.msra.mxu0 0
    %546 = vmatpush.bf16.msra.mxu0 %v294
    %547 = vmatmul.bf16.gmra.mxu0 %v300
    %v548 = vpop.f32.mrf.mxu0
    %v549 = vadd.f32 %v284, %v548
    %v550 = vpop.f32.mrf.mxu0
    %v551 = vadd.f32 %v284, %v550
    %552 = vmatmul.bf16.gmra.mxu0 %v303
    %v553 = vpop.f32.mrf.mxu0
    %v554 = vadd.f32 %v284, %v553
    %v555 = vpop.f32.mrf.mxu0
    %v556 = vadd.f32 %v284, %v555
    %557 = vmatmul.bf16.gmra.mxu0 %v306
    %v558 = vpop.f32.mrf.mxu0
    %v559 = vadd.f32 %v284, %v558
    %v560 = vpop.f32.mrf.mxu0
    %v561 = vadd.f32 %v284, %v560
    %562 = vmatmul.bf16.gmra.mxu0 %v309
    %v563 = vpop.f32.mrf.mxu0
    %v564 = vadd.f32 %v284, %v563
    %v565 = vpop.f32.mrf.mxu0
    %v566 = vadd.f32 %v284, %v565
    %567 = vmatmul.bf16.gmra.mxu0 %v312
    %v568 = vpop.f32.mrf.mxu0
    %v569 = vadd.f32 %v284, %v568
    %v570 = vpop.f32.mrf.mxu0
    %v571 = vadd.f32 %v284, %v570
    %572 = vmatmul.bf16.gmra.mxu0 %v315
    %v573 = vpop.f32.mrf.mxu0
    %v574 = vadd.f32 %v284, %v573
    %v575 = vpop.f32.mrf.mxu0
    %v576 = vadd.f32 %v284, %v575
    %577 = vmatmul.bf16.gmra.mxu0 %v318
    %v578 = vpop.f32.mrf.mxu0
    %v579 = vadd.f32 %v284, %v578
    %v580 = vpop.f32.mrf.mxu0
    %v581 = vadd.f32 %v284, %v580
    %582 = vmatmul.bf16.gmra.mxu0 %v321
    %v583 = vpop.f32.mrf.mxu0
    %v584 = vadd.f32 %v284, %v583
    %v585 = vpop.f32.mrf.mxu0
    %v586 = vadd.f32 %v284, %v585
    %587 = vmatmul.bf16.gmra.mxu0 %v324
    %v588 = vpop.f32.mrf.mxu0
    %v589 = vadd.f32 %v284, %v588
    %v590 = vpop.f32.mrf.mxu0
    %v591 = vadd.f32 %v284, %v590
    %592 = vmatmul.bf16.gmra.mxu0 %v327
    %v593 = vpop.f32.mrf.mxu0
    %v594 = vadd.f32 %v284, %v593
    %v595 = vpop.f32.mrf.mxu0
    %v596 = vadd.f32 %v284, %v595
    %597 = vmatmul.bf16.gmra.mxu0 %v330
    %v598 = vpop.f32.mrf.mxu0
    %v599 = vadd.f32 %v284, %v598
    %v600 = vpop.f32.mrf.mxu0
    %v601 = vadd.f32 %v284, %v600
    %602 = vmatmul.bf16.gmra.mxu0 %v333
    %v603 = vpop.f32.mrf.mxu0
    %v604 = vadd.f32 %v284, %v603
    %v605 = vpop.f32.mrf.mxu0
    %v606 = vadd.f32 %v284, %v605
    %607 = vmatmul.bf16.gmra.mxu0 %v336
    %v608 = vpop.f32.mrf.mxu0
    %v609 = vadd.f32 %v284, %v608
    %v610 = vpop.f32.mrf.mxu0
    %v611 = vadd.f32 %v284, %v610
    %612 = vmatmul.bf16.gmra.mxu0 %v339
    %v613 = vpop.f32.mrf.mxu0
    %v614 = vadd.f32 %v284, %v613
    %v615 = vpop.f32.mrf.mxu0
    %v616 = vadd.f32 %v284, %v615
    %617 = vmatmul.bf16.gmra.mxu0 %v342
    %v618 = vpop.f32.mrf.mxu0
    %v619 = vadd.f32 %v284, %v618
    %v620 = vpop.f32.mrf.mxu0
    %v621 = vadd.f32 %v284, %v620
    %622 = vmatmul.bf16.gmra.mxu0 %v345
    %v623 = vpop.f32.mrf.mxu0
    %v624 = vadd.f32 %v284, %v623
    %v625 = vpop.f32.mrf.mxu0
    %v626 = vadd.f32 %v284, %v625
    %627 = vmatmul.bf16.gmra.mxu0 %v348
    %v628 = vpop.f32.mrf.mxu0
    %v629 = vadd.f32 %v284, %v628
    %v630 = vpop.f32.mrf.mxu0
    %v631 = vadd.f32 %v284, %v630
    %632 = vmatmul.bf16.gmra.mxu0 %v351
    %v633 = vpop.f32.mrf.mxu0
    %v634 = vadd.f32 %v284, %v633
    %v635 = vpop.f32.mrf.mxu0
    %v636 = vadd.f32 %v284, %v635
    %637 = vmatmul.bf16.gmra.mxu0 %v354
    %v638 = vpop.f32.mrf.mxu0
    %v639 = vadd.f32 %v284, %v638
    %v640 = vpop.f32.mrf.mxu0
    %v641 = vadd.f32 %v284, %v640
    %642 = vmatmul.bf16.gmra.mxu0 %v357
    %v643 = vpop.f32.mrf.mxu0
    %v644 = vadd.f32 %v284, %v643
    %v645 = vpop.f32.mrf.mxu0
    %v646 = vadd.f32 %v284, %v645
    %647 = vmatmul.bf16.gmra.mxu0 %v360
    %v648 = vpop.f32.mrf.mxu0
    %v649 = vadd.f32 %v284, %v648
    %v650 = vpop.f32.mrf.mxu0
    %v651 = vadd.f32 %v284, %v650
    %652 = vmatmul.bf16.gmra.mxu0 %v363
    %v653 = vpop.f32.mrf.mxu0
    %v654 = vadd.f32 %v284, %v653
    %v655 = vpop.f32.mrf.mxu0
    %v656 = vadd.f32 %v284, %v655
    %657 = vmatmul.bf16.gmra.mxu0 %v366
    %v658 = vpop.f32.mrf.mxu0
    %v659 = vadd.f32 %v284, %v658
    %v660 = vpop.f32.mrf.mxu0
    %v661 = vadd.f32 %v284, %v660
    %662 = vmatmul.bf16.gmra.mxu0 %v369
    %v663 = vpop.f32.mrf.mxu0
    %v664 = vadd.f32 %v284, %v663
    %v665 = vpop.f32.mrf.mxu0
    %v666 = vadd.f32 %v284, %v665
    %667 = vmatmul.bf16.gmra.mxu0 %v372
    %v668 = vpop.f32.mrf.mxu0
    %v669 = vadd.f32 %v284, %v668
    %v670 = vpop.f32.mrf.mxu0
    %v671 = vadd.f32 %v284, %v670
    %672 = vmatmul.bf16.gmra.mxu0 %v375
    %v673 = vpop.f32.mrf.mxu0
    %v674 = vadd.f32 %v284, %v673
    %v675 = vpop.f32.mrf.mxu0
    %v676 = vadd.f32 %v284, %v675
    %677 = vmatmul.bf16.gmra.mxu0 %v378
    %v678 = vpop.f32.mrf.mxu0
    %v679 = vadd.f32 %v284, %v678
    %v680 = vpop.f32.mrf.mxu0
    %v681 = vadd.f32 %v284, %v680
    %682 = vmatmul.bf16.gmra.mxu0 %v381
    %v683 = vpop.f32.mrf.mxu0
    %v684 = vadd.f32 %v284, %v683
    %v685 = vpop.f32.mrf.mxu0
    %v686 = vadd.f32 %v284, %v685
    %687 = vmatmul.bf16.gmra.mxu0 %v384
    %v688 = vpop.f32.mrf.mxu0
    %v689 = vadd.f32 %v284, %v688
    %v690 = vpop.f32.mrf.mxu0
    %v691 = vadd.f32 %v284, %v690
    %692 = vmatmul.bf16.gmra.mxu0 %v387
    %v693 = vpop.f32.mrf.mxu0
    %v694 = vadd.f32 %v284, %v693
    %v695 = vpop.f32.mrf.mxu0
    %v696 = vadd.f32 %v284, %v695
    %697 = vmatmul.bf16.gmra.mxu0 %v390
    %v698 = vpop.f32.mrf.mxu0
    %v699 = vadd.f32 %v284, %v698
    %v700 = vpop.f32.mrf.mxu0
    %v701 = vadd.f32 %v284, %v700
    %702 = vmatmul.bf16.gmra.mxu0 %v393
    %v703 = vpop.f32.mrf.mxu0
    %v704 = vadd.f32 %v284, %v703
    %v705 = vpop.f32.mrf.mxu0
    %v706 = vadd.f32 %v284, %v705
    %707 = vmatmul.bf16.gmra.mxu0 %v396
    %v708 = vpop.f32.mrf.mxu0
    %v709 = vadd.f32 %v284, %v708
    %v710 = vpop.f32.mrf.mxu0
    %v711 = vadd.f32 %v284, %v710
    %712 = vmatmul.bf16.gmra.mxu0 %v399
    %v713 = vpop.f32.mrf.mxu0
    %v714 = vadd.f32 %v284, %v713
    %v715 = vpop.f32.mrf.mxu0
    %v716 = vadd.f32 %v284, %v715
    %717 = vmatmul.bf16.gmra.mxu0 %v402
    %v718 = vpop.f32.mrf.mxu0
    %v719 = vadd.f32 %v284, %v718
    %v720 = vpop.f32.mrf.mxu0
    %v721 = vadd.f32 %v284, %v720
    %722 = vmatmul.bf16.gmra.mxu0 %v405
    %v723 = vpop.f32.mrf.mxu0
    %v724 = vadd.f32 %v284, %v723
    %v725 = vpop.f32.mrf.mxu0
    %v726 = vadd.f32 %v284, %v725
    %727 = vmatmul.bf16.gmra.mxu0 %v408
    %v728 = vpop.f32.mrf.mxu0
    %v729 = vadd.f32 %v284, %v728
    %v730 = vpop.f32.mrf.mxu0
    %v731 = vadd.f32 %v284, %v730
    %732 = vmatmul.bf16.gmra.mxu0 %v411
    %v733 = vpop.f32.mrf.mxu0
    %v734 = vadd.f32 %v284, %v733
    %v735 = vpop.f32.mrf.mxu0
    %v736 = vadd.f32 %v284, %v735
    %737 = vmatmul.bf16.gmra.mxu0 %v414
    %v738 = vpop.f32.mrf.mxu0
    %v739 = vadd.f32 %v284, %v738
    %v740 = vpop.f32.mrf.mxu0
    %v741 = vadd.f32 %v284, %v740
    %742 = vmatmul.bf16.gmra.mxu0 %v417
    %v743 = vpop.f32.mrf.mxu0
    %v744 = vadd.f32 %v284, %v743
    %v745 = vpop.f32.mrf.mxu0
    %v746 = vadd.f32 %v284, %v745
    %747 = vmatmul.bf16.gmra.mxu0 %v420
    %v748 = vpop.f32.mrf.mxu0
    %v749 = vadd.f32 %v284, %v748
    %v750 = vpop.f32.mrf.mxu0
    %v751 = vadd.f32 %v284, %v750
    %752 = vmatmul.bf16.gmra.mxu0 %v423
    %v753 = vpop.f32.mrf.mxu0
    %v754 = vadd.f32 %v284, %v753
    %v755 = vpop.f32.mrf.mxu0
    %v756 = vadd.f32 %v284, %v755
    %757 = vmatmul.bf16.gmra.mxu0 %v426
    %v758 = vpop.f32.mrf.mxu0
    %v759 = vadd.f32 %v284, %v758
    %v760 = vpop.f32.mrf.mxu0
    %v761 = vadd.f32 %v284, %v760
    %762 = vmatmul.bf16.gmra.mxu0 %v429
    %v763 = vpop.f32.mrf.mxu0
    %v764 = vadd.f32 %v284, %v763
    %v765 = vpop.f32.mrf.mxu0
    %v766 = vadd.f32 %v284, %v765
    %767 = vmatmul.bf16.gmra.mxu0 %v432
    %v768 = vpop.f32.mrf.mxu0
    %v769 = vadd.f32 %v284, %v768
    %v770 = vpop.f32.mrf.mxu0
    %v771 = vadd.f32 %v284, %v770
    %772 = vmatmul.bf16.gmra.mxu0 %v435
    %v773 = vpop.f32.mrf.mxu0
    %v774 = vadd.f32 %v284, %v773
    %v775 = vpop.f32.mrf.mxu0
    %v776 = vadd.f32 %v284, %v775
    %777 = vmatmul.bf16.gmra.mxu0 %v438
    %v778 = vpop.f32.mrf.mxu0
    %v779 = vadd.f32 %v284, %v778
    %v780 = vpop.f32.mrf.mxu0
    %v781 = vadd.f32 %v284, %v780
    %782 = vmatmul.bf16.gmra.mxu0 %v441
    %v783 = vpop.f32.mrf.mxu0
    %v784 = vadd.f32 %v284, %v783
    %v785 = vpop.f32.mrf.mxu0
    %v786 = vadd.f32 %v284, %v785
    %787 = vmatmul.bf16.gmra.mxu0 %v444
    %v788 = vpop.f32.mrf.mxu0
    %v789 = vadd.f32 %v284, %v788
    %v790 = vpop.f32.mrf.mxu0
    %v791 = vadd.f32 %v284, %v790
    %792 = vmatmul.bf16.gmra.mxu0 %v447
    %v793 = vpop.f32.mrf.mxu0
    %v794 = vadd.f32 %v284, %v793
    %v795 = vpop.f32.mrf.mxu0
    %v796 = vadd.f32 %v284, %v795
    %797 = vmatmul.bf16.gmra.mxu0 %v450
    %v798 = vpop.f32.mrf.mxu0
    %v799 = vadd.f32 %v284, %v798
    %v800 = vpop.f32.mrf.mxu0
    %v801 = vadd.f32 %v284, %v800
    %802 = vmatmul.bf16.gmra.mxu0 %v453
    %v803 = vpop.f32.mrf.mxu0
    %v804 = vadd.f32 %v284, %v803
    %v805 = vpop.f32.mrf.mxu0
    %v806 = vadd.f32 %v284, %v805
    %807 = vmatmul.bf16.gmra.mxu0 %v456
    %v808 = vpop.f32.mrf.mxu0
    %v809 = vadd.f32 %v284, %v808
    %v810 = vpop.f32.mrf.mxu0
    %v811 = vadd.f32 %v284, %v810
    %812 = vmatmul.bf16.gmra.mxu0 %v459
    %v813 = vpop.f32.mrf.mxu0
    %v814 = vadd.f32 %v284, %v813
    %v815 = vpop.f32.mrf.mxu0
    %v816 = vadd.f32 %v284, %v815
    %817 = vmatmul.bf16.gmra.mxu0 %v462
    %v818 = vpop.f32.mrf.mxu0
    %v819 = vadd.f32 %v284, %v818
    %v820 = vpop.f32.mrf.mxu0
    %v821 = vadd.f32 %v284, %v820
    %822 = vmatmul.bf16.gmra.mxu0 %v465
    %v823 = vpop.f32.mrf.mxu0
    %v824 = vadd.f32 %v284, %v823
    %v825 = vpop.f32.mrf.mxu0
    %v826 = vadd.f32 %v284, %v825
    %827 = vmatmul.bf16.gmra.mxu0 %v468
    %v828 = vpop.f32.mrf.mxu0
    %v829 = vadd.f32 %v284, %v828
    %v830 = vpop.f32.mrf.mxu0
    %v831 = vadd.f32 %v284, %v830
    %832 = vmatmul.bf16.gmra.mxu0 %v471
    %v833 = vpop.f32.mrf.mxu0
    %v834 = vadd.f32 %v284, %v833
    %v835 = vpop.f32.mrf.mxu0
    %v836 = vadd.f32 %v284, %v835
    %837 = vmatmul.bf16.gmra.mxu0 %v474
    %v838 = vpop.f32.mrf.mxu0
    %v839 = vadd.f32 %v284, %v838
    %v840 = vpop.f32.mrf.mxu0
    %v841 = vadd.f32 %v284, %v840
    %842 = vmatmul.bf16.gmra.mxu0 %v477
    %v843 = vpop.f32.mrf.mxu0
    %v844 = vadd.f32 %v284, %v843
    %v845 = vpop.f32.mrf.mxu0
    %v846 = vadd.f32 %v284, %v845
    %847 = vmatmul.bf16.gmra.mxu0 %v480
    %v848 = vpop.f32.mrf.mxu0
    %v849 = vadd.f32 %v284, %v848
    %v850 = vpop.f32.mrf.mxu0
    %v851 = vadd.f32 %v284, %v850
    %852 = vmatmul.bf16.gmra.mxu0 %v483
    %v853 = vpop.f32.mrf.mxu0
    %v854 = vadd.f32 %v284, %v853
    %v855 = vpop.f32.mrf.mxu0
    %v856 = vadd.f32 %v284, %v855
    %857 = vmatmul.bf16.gmra.mxu0 %v486
    %v858 = vpop.f32.mrf.mxu0
    %v859 = vadd.f32 %v284, %v858
    %v860 = vpop.f32.mrf.mxu0
    %v861 = vadd.f32 %v284, %v860
    %862 = vmatmul.bf16.gmra.mxu0 %v489
    %v863 = vpop.f32.mrf.mxu0
    %v864 = vadd.f32 %v284, %v863
    %v865 = vpop.f32.mrf.mxu0
    %v866 = vadd.f32 %v284, %v865
    %867 = vmatmul.bf16.gmra.mxu0 %v492
    %v868 = vpop.f32.mrf.mxu0
    %v869 = vadd.f32 %v284, %v868
    %v870 = vpop.f32.mrf.mxu0
    %v871 = vadd.f32 %v284, %v870
    %872 = vmatmul.bf16.gmra.mxu0 %v495
    %v873 = vpop.f32.mrf.mxu0
    %v874 = vadd.f32 %v284, %v873
    %v875 = vpop.f32.mrf.mxu0
    %v876 = vadd.f32 %v284, %v875
    %877 = vmatmul.bf16.gmra.mxu0 %v498
    %v878 = vpop.f32.mrf.mxu0
    %v879 = vadd.f32 %v284, %v878
    %v880 = vpop.f32.mrf.mxu0
    %v881 = vadd.f32 %v284, %v880
    %882 = vmatmul.bf16.gmra.mxu0 %v501
    %v883 = vpop.f32.mrf.mxu0
    %v884 = vadd.f32 %v284, %v883
    %v885 = vpop.f32.mrf.mxu0
    %v886 = vadd.f32 %v284, %v885
    %887 = vmatmul.bf16.gmra.mxu0 %v504
    %v888 = vpop.f32.mrf.mxu0
    %v889 = vadd.f32 %v284, %v888
    %v890 = vpop.f32.mrf.mxu0
    %v891 = vadd.f32 %v284, %v890
    %892 = vmatmul.bf16.gmra.mxu0 %v507
    %v893 = vpop.f32.mrf.mxu0
    %v894 = vadd.f32 %v284, %v893
    %v895 = vpop.f32.mrf.mxu0
    %v896 = vadd.f32 %v284, %v895
    %897 = vmatmul.bf16.gmra.mxu0 %v510
    %v898 = vpop.f32.mrf.mxu0
    %v899 = vadd.f32 %v284, %v898
    %v900 = vpop.f32.mrf.mxu0
    %v901 = vadd.f32 %v284, %v900
    %902 = vmatmul.bf16.gmra.mxu0 %v513
    %v903 = vpop.f32.mrf.mxu0
    %v904 = vadd.f32 %v284, %v903
    %v905 = vpop.f32.mrf.mxu0
    %v906 = vadd.f32 %v284, %v905
    %907 = vmatmul.bf16.gmra.mxu0 %v516
    %v908 = vpop.f32.mrf.mxu0
    %v909 = vadd.f32 %v284, %v908
    %v910 = vpop.f32.mrf.mxu0
    %v911 = vadd.f32 %v284, %v910
    %912 = vmatmul.bf16.gmra.mxu0 %v519
    %v913 = vpop.f32.mrf.mxu0
    %v914 = vadd.f32 %v284, %v913
    %v915 = vpop.f32.mrf.mxu0
    %v916 = vadd.f32 %v284, %v915
    %917 = vmatmul.bf16.gmra.mxu0 %v522
    %v918 = vpop.f32.mrf.mxu0
    %v919 = vadd.f32 %v284, %v918
    %v920 = vpop.f32.mrf.mxu0
    %v921 = vadd.f32 %v284, %v920
    %922 = vmatmul.bf16.gmra.mxu0 %v525
    %v923 = vpop.f32.mrf.mxu0
    %v924 = vadd.f32 %v284, %v923
    %v925 = vpop.f32.mrf.mxu0
    %v926 = vadd.f32 %v284, %v925
    %927 = vmatmul.bf16.gmra.mxu0 %v528
    %v928 = vpop.f32.mrf.mxu0
    %v929 = vadd.f32 %v284, %v928
    %v930 = vpop.f32.mrf.mxu0
    %v931 = vadd.f32 %v284, %v930
    %932 = vmatmul.bf16.gmra.mxu0 %v531
    %v933 = vpop.f32.mrf.mxu0
    %v934 = vadd.f32 %v284, %v933
    %v935 = vpop.f32.mrf.mxu0
    %v936 = vadd.f32 %v284, %v935
    %937 = vmatmul.bf16.gmra.mxu0 %v534
    %v938 = vpop.f32.mrf.mxu0
    %v939 = vadd.f32 %v284, %v938
    %v940 = vpop.f32.mrf.mxu0
    %v941 = vadd.f32 %v284, %v940
    %942 = vmatmul.bf16.gmra.mxu0 %v537
    %v943 = vpop.f32.mrf.mxu0
    %v944 = vadd.f32 %v284, %v943
    %v945 = vpop.f32.mrf.mxu0
    %v946 = vadd.f32 %v284, %v945
    %947 = vdwg.mxu0
    %948 = vmatpush.bf16.msra.mxu0 0
    %949 = vmatpush.bf16.msra.mxu0 0
    %950 = vmatpush.bf16.msra.mxu0 0
    %951 = vmatpush.bf16.msra.mxu0 0
    %952 = vmatpush.bf16.msra.mxu0 0
    %953 = vmatpush.bf16.msra.mxu0 0
    %954 = vmatpush.bf16.msra.mxu0 0
    %955 = vmatpush.bf16.msra.mxu0 %v295
    %956 = vmatmul.bf16.gmra.mxu0 %v300
    %v957 = vpop.f32.mrf.mxu0
    %v958 = vadd.f32 %v285, %v957
    %v959 = vpop.f32.mrf.mxu0
    %v960 = vadd.f32 %v285, %v959
    %961 = vmatmul.bf16.gmra.mxu0 %v303
    %v962 = vpop.f32.mrf.mxu0
    %v963 = vadd.f32 %v285, %v962
    %v964 = vpop.f32.mrf.mxu0
    %v965 = vadd.f32 %v285, %v964
    %966 = vmatmul.bf16.gmra.mxu0 %v306
    %v967 = vpop.f32.mrf.mxu0
    %v968 = vadd.f32 %v285, %v967
    %v969 = vpop.f32.mrf.mxu0
    %v970 = vadd.f32 %v285, %v969
    %971 = vmatmul.bf16.gmra.mxu0 %v309
    %v972 = vpop.f32.mrf.mxu0
    %v973 = vadd.f32 %v285, %v972
    %v974 = vpop.f32.mrf.mxu0
    %v975 = vadd.f32 %v285, %v974
    %976 = vmatmul.bf16.gmra.mxu0 %v312
    %v977 = vpop.f32.mrf.mxu0
    %v978 = vadd.f32 %v285, %v977
    %v979 = vpop.f32.mrf.mxu0
    %v980 = vadd.f32 %v285, %v979
    %981 = vmatmul.bf16.gmra.mxu0 %v315
    %v982 = vpop.f32.mrf.mxu0
    %v983 = vadd.f32 %v285, %v982
    %v984 = vpop.f32.mrf.mxu0
    %v985 = vadd.f32 %v285, %v984
    %986 = vmatmul.bf16.gmra.mxu0 %v318
    %v987 = vpop.f32.mrf.mxu0
    %v988 = vadd.f32 %v285, %v987
    %v989 = vpop.f32.mrf.mxu0
    %v990 = vadd.f32 %v285, %v989
    %991 = vmatmul.bf16.gmra.mxu0 %v321
    %v992 = vpop.f32.mrf.mxu0
    %v993 = vadd.f32 %v285, %v992
    %v994 = vpop.f32.mrf.mxu0
    %v995 = vadd.f32 %v285, %v994
    %996 = vmatmul.bf16.gmra.mxu0 %v324
    %v997 = vpop.f32.mrf.mxu0
    %v998 = vadd.f32 %v285, %v997
    %v999 = vpop.f32.mrf.mxu0
    %v1000 = vadd.f32 %v285, %v999
    %1001 = vmatmul.bf16.gmra.mxu0 %v327
    %v1002 = vpop.f32.mrf.mxu0
    %v1003 = vadd.f32 %v285, %v1002
    %v1004 = vpop.f32.mrf.mxu0
    %v1005 = vadd.f32 %v285, %v1004
    %1006 = vmatmul.bf16.gmra.mxu0 %v330
    %v1007 = vpop.f32.mrf.mxu0
    %v1008 = vadd.f32 %v285, %v1007
    %v1009 = vpop.f32.mrf.mxu0
    %v1010 = vadd.f32 %v285, %v1009
    %1011 = vmatmul.bf16.gmra.mxu0 %v333
    %v1012 = vpop.f32.mrf.mxu0
    %v1013 = vadd.f32 %v285, %v1012
    %v1014 = vpop.f32.mrf.mxu0
    %v1015 = vadd.f32 %v285, %v1014
    %1016 = vmatmul.bf16.gmra.mxu0 %v336
    %v1017 = vpop.f32.mrf.mxu0
    %v1018 = vadd.f32 %v285, %v1017
    %v1019 = vpop.f32.mrf.mxu0
    %v1020 = vadd.f32 %v285, %v1019
    %1021 = vmatmul.bf16.gmra.mxu0 %v339
    %v1022 = vpop.f32.mrf.mxu0
    %v1023 = vadd.f32 %v285, %v1022
    %v1024 = vpop.f32.mrf.mxu0
    %v1025 = vadd.f32 %v285, %v1024
    %1026 = vmatmul.bf16.gmra.mxu0 %v342
    %v1027 = vpop.f32.mrf.mxu0
    %v1028 = vadd.f32 %v285, %v1027
    %v1029 = vpop.f32.mrf.mxu0
    %v1030 = vadd.f32 %v285, %v1029
    %1031 = vmatmul.bf16.gmra.mxu0 %v345
    %v1032 = vpop.f32.mrf.mxu0
    %v1033 = vadd.f32 %v285, %v1032
    %v1034 = vpop.f32.mrf.mxu0
    %v1035 = vadd.f32 %v285, %v1034
    %1036 = vmatmul.bf16.gmra.mxu0 %v348
    %v1037 = vpop.f32.mrf.mxu0
    %v1038 = vadd.f32 %v285, %v1037
    %v1039 = vpop.f32.mrf.mxu0
    %v1040 = vadd.f32 %v285, %v1039
    %1041 = vmatmul.bf16.gmra.mxu0 %v351
    %v1042 = vpop.f32.mrf.mxu0
    %v1043 = vadd.f32 %v285, %v1042
    %v1044 = vpop.f32.mrf.mxu0
    %v1045 = vadd.f32 %v285, %v1044
    %1046 = vmatmul.bf16.gmra.mxu0 %v354
    %v1047 = vpop.f32.mrf.mxu0
    %v1048 = vadd.f32 %v285, %v1047
    %v1049 = vpop.f32.mrf.mxu0
    %v1050 = vadd.f32 %v285, %v1049
    %1051 = vmatmul.bf16.gmra.mxu0 %v357
    %v1052 = vpop.f32.mrf.mxu0
    %v1053 = vadd.f32 %v285, %v1052
    %v1054 = vpop.f32.mrf.mxu0
    %v1055 = vadd.f32 %v285, %v1054
    %1056 = vmatmul.bf16.gmra.mxu0 %v360
    %v1057 = vpop.f32.mrf.mxu0
    %v1058 = vadd.f32 %v285, %v1057
    %v1059 = vpop.f32.mrf.mxu0
    %v1060 = vadd.f32 %v285, %v1059
    %1061 = vmatmul.bf16.gmra.mxu0 %v363
    %v1062 = vpop.f32.mrf.mxu0
    %v1063 = vadd.f32 %v285, %v1062
    %v1064 = vpop.f32.mrf.mxu0
    %v1065 = vadd.f32 %v285, %v1064
    %1066 = vmatmul.bf16.gmra.mxu0 %v366
    %v1067 = vpop.f32.mrf.mxu0
    %v1068 = vadd.f32 %v285, %v1067
    %v1069 = vpop.f32.mrf.mxu0
    %v1070 = vadd.f32 %v285, %v1069
    %1071 = vmatmul.bf16.gmra.mxu0 %v369
    %v1072 = vpop.f32.mrf.mxu0
    %v1073 = vadd.f32 %v285, %v1072
    %v1074 = vpop.f32.mrf.mxu0
    %v1075 = vadd.f32 %v285, %v1074
    %1076 = vmatmul.bf16.gmra.mxu0 %v372
    %v1077 = vpop.f32.mrf.mxu0
    %v1078 = vadd.f32 %v285, %v1077
    %v1079 = vpop.f32.mrf.mxu0
    %v1080 = vadd.f32 %v285, %v1079
    %1081 = vmatmul.bf16.gmra.mxu0 %v375
    %v1082 = vpop.f32.mrf.mxu0
    %v1083 = vadd.f32 %v285, %v1082
    %v1084 = vpop.f32.mrf.mxu0
    %v1085 = vadd.f32 %v285, %v1084
    %1086 = vmatmul.bf16.gmra.mxu0 %v378
    %v1087 = vpop.f32.mrf.mxu0
    %v1088 = vadd.f32 %v285, %v1087
    %v1089 = vpop.f32.mrf.mxu0
    %v1090 = vadd.f32 %v285, %v1089
    %1091 = vmatmul.bf16.gmra.mxu0 %v381
    %v1092 = vpop.f32.mrf.mxu0
    %v1093 = vadd.f32 %v285, %v1092
    %v1094 = vpop.f32.mrf.mxu0
    %v1095 = vadd.f32 %v285, %v1094
    %1096 = vmatmul.bf16.gmra.mxu0 %v384
    %v1097 = vpop.f32.mrf.mxu0
    %v1098 = vadd.f32 %v285, %v1097
    %v1099 = vpop.f32.mrf.mxu0
    %v1100 = vadd.f32 %v285, %v1099
    %1101 = vmatmul.bf16.gmra.mxu0 %v387
    %v1102 = vpop.f32.mrf.mxu0
    %v1103 = vadd.f32 %v285, %v1102
    %v1104 = vpop.f32.mrf.mxu0
    %v1105 = vadd.f32 %v285, %v1104
    %1106 = vmatmul.bf16.gmra.mxu0 %v390
    %v1107 = vpop.f32.mrf.mxu0
    %v1108 = vadd.f32 %v285, %v1107
    %v1109 = vpop.f32.mrf.mxu0
    %v1110 = vadd.f32 %v285, %v1109
    %1111 = vmatmul.bf16.gmra.mxu0 %v393
    %v1112 = vpop.f32.mrf.mxu0
    %v1113 = vadd.f32 %v285, %v1112
    %v1114 = vpop.f32.mrf.mxu0
    %v1115 = vadd.f32 %v285, %v1114
    %1116 = vmatmul.bf16.gmra.mxu0 %v396
    %v1117 = vpop.f32.mrf.mxu0
    %v1118 = vadd.f32 %v285, %v1117
    %v1119 = vpop.f32.mrf.mxu0
    %v1120 = vadd.f32 %v285, %v1119
    %1121 = vmatmul.bf16.gmra.mxu0 %v399
    %v1122 = vpop.f32.mrf.mxu0
    %v1123 = vadd.f32 %v285, %v1122
    %v1124 = vpop.f32.mrf.mxu0
    %v1125 = vadd.f32 %v285, %v1124
    %1126 = vmatmul.bf16.gmra.mxu0 %v402
    %v1127 = vpop.f32.mrf.mxu0
    %v1128 = vadd.f32 %v285, %v1127
    %v1129 = vpop.f32.mrf.mxu0
    %v1130 = vadd.f32 %v285, %v1129
    %1131 = vmatmul.bf16.gmra.mxu0 %v405
    %v1132 = vpop.f32.mrf.mxu0
    %v1133 = vadd.f32 %v285, %v1132
    %v1134 = vpop.f32.mrf.mxu0
    %v1135 = vadd.f32 %v285, %v1134
    %1136 = vmatmul.bf16.gmra.mxu0 %v408
    %v1137 = vpop.f32.mrf.mxu0
    %v1138 = vadd.f32 %v285, %v1137
    %v1139 = vpop.f32.mrf.mxu0
    %v1140 = vadd.f32 %v285, %v1139
    %1141 = vmatmul.bf16.gmra.mxu0 %v411
    %v1142 = vpop.f32.mrf.mxu0
    %v1143 = vadd.f32 %v285, %v1142
    %v1144 = vpop.f32.mrf.mxu0
    %v1145 = vadd.f32 %v285, %v1144
    %1146 = vmatmul.bf16.gmra.mxu0 %v414
    %v1147 = vpop.f32.mrf.mxu0
    %v1148 = vadd.f32 %v285, %v1147
    %v1149 = vpop.f32.mrf.mxu0
    %v1150 = vadd.f32 %v285, %v1149
    %1151 = vmatmul.bf16.gmra.mxu0 %v417
    %v1152 = vpop.f32.mrf.mxu0
    %v1153 = vadd.f32 %v285, %v1152
    %v1154 = vpop.f32.mrf.mxu0
    %v1155 = vadd.f32 %v285, %v1154
    %1156 = vmatmul.bf16.gmra.mxu0 %v420
    %v1157 = vpop.f32.mrf.mxu0
    %v1158 = vadd.f32 %v285, %v1157
    %v1159 = vpop.f32.mrf.mxu0
    %v1160 = vadd.f32 %v285, %v1159
    %1161 = vmatmul.bf16.gmra.mxu0 %v423
    %v1162 = vpop.f32.mrf.mxu0
    %v1163 = vadd.f32 %v285, %v1162
    %v1164 = vpop.f32.mrf.mxu0
    %v1165 = vadd.f32 %v285, %v1164
    %1166 = vmatmul.bf16.gmra.mxu0 %v426
    %v1167 = vpop.f32.mrf.mxu0
    %v1168 = vadd.f32 %v285, %v1167
    %v1169 = vpop.f32.mrf.mxu0
    %v1170 = vadd.f32 %v285, %v1169
    %1171 = vmatmul.bf16.gmra.mxu0 %v429
    %v1172 = vpop.f32.mrf.mxu0
    %v1173 = vadd.f32 %v285, %v1172
    %v1174 = vpop.f32.mrf.mxu0
    %v1175 = vadd.f32 %v285, %v1174
    %1176 = vmatmul.bf16.gmra.mxu0 %v432
    %v1177 = vpop.f32.mrf.mxu0
    %v1178 = vadd.f32 %v285, %v1177
    %v1179 = vpop.f32.mrf.mxu0
    %v1180 = vadd.f32 %v285, %v1179
    %1181 = vmatmul.bf16.gmra.mxu0 %v435
    %v1182 = vpop.f32.mrf.mxu0
    %v1183 = vadd.f32 %v285, %v1182
    %v1184 = vpop.f32.mrf.mxu0
    %v1185 = vadd.f32 %v285, %v1184
    %1186 = vmatmul.bf16.gmra.mxu0 %v438
    %v1187 = vpop.f32.mrf.mxu0
    %v1188 = vadd.f32 %v285, %v1187
    %v1189 = vpop.f32.mrf.mxu0
    %v1190 = vadd.f32 %v285, %v1189
    %1191 = vmatmul.bf16.gmra.mxu0 %v441
    %v1192 = vpop.f32.mrf.mxu0
    %v1193 = vadd.f32 %v285, %v1192
    %v1194 = vpop.f32.mrf.mxu0
    %v1195 = vadd.f32 %v285, %v1194
    %1196 = vmatmul.bf16.gmra.mxu0 %v444
    %v1197 = vpop.f32.mrf.mxu0
    %v1198 = vadd.f32 %v285, %v1197
    %v1199 = vpop.f32.mrf.mxu0
    %v1200 = vadd.f32 %v285, %v1199
    %1201 = vmatmul.bf16.gmra.mxu0 %v447
    %v1202 = vpop.f32.mrf.mxu0
    %v1203 = vadd.f32 %v285, %v1202
    %v1204 = vpop.f32.mrf.mxu0
    %v1205 = vadd.f32 %v285, %v1204
    %1206 = vmatmul.bf16.gmra.mxu0 %v450
    %v1207 = vpop.f32.mrf.mxu0
    %v1208 = vadd.f32 %v285, %v1207
    %v1209 = vpop.f32.mrf.mxu0
    %v1210 = vadd.f32 %v285, %v1209
    %1211 = vmatmul.bf16.gmra.mxu0 %v453
    %v1212 = vpop.f32.mrf.mxu0
    %v1213 = vadd.f32 %v285, %v1212
    %v1214 = vpop.f32.mrf.mxu0
    %v1215 = vadd.f32 %v285, %v1214
    %1216 = vmatmul.bf16.gmra.mxu0 %v456
    %v1217 = vpop.f32.mrf.mxu0
    %v1218 = vadd.f32 %v285, %v1217
    %v1219 = vpop.f32.mrf.mxu0
    %v1220 = vadd.f32 %v285, %v1219
    %1221 = vmatmul.bf16.gmra.mxu0 %v459
    %v1222 = vpop.f32.mrf.mxu0
    %v1223 = vadd.f32 %v285, %v1222
    %v1224 = vpop.f32.mrf.mxu0
    %v1225 = vadd.f32 %v285, %v1224
    %1226 = vmatmul.bf16.gmra.mxu0 %v462
    %v1227 = vpop.f32.mrf.mxu0
    %v1228 = vadd.f32 %v285, %v1227
    %v1229 = vpop.f32.mrf.mxu0
    %v1230 = vadd.f32 %v285, %v1229
    %1231 = vmatmul.bf16.gmra.mxu0 %v465
    %v1232 = vpop.f32.mrf.mxu0
    %v1233 = vadd.f32 %v285, %v1232
    %v1234 = vpop.f32.mrf.mxu0
    %v1235 = vadd.f32 %v285, %v1234
    %1236 = vmatmul.bf16.gmra.mxu0 %v468
    %v1237 = vpop.f32.mrf.mxu0
    %v1238 = vadd.f32 %v285, %v1237
    %v1239 = vpop.f32.mrf.mxu0
    %v1240 = vadd.f32 %v285, %v1239
    %1241 = vmatmul.bf16.gmra.mxu0 %v471
    %v1242 = vpop.f32.mrf.mxu0
    %v1243 = vadd.f32 %v285, %v1242
    %v1244 = vpop.f32.mrf.mxu0
    %v1245 = vadd.f32 %v285, %v1244
    %1246 = vmatmul.bf16.gmra.mxu0 %v474
    %v1247 = vpop.f32.mrf.mxu0
    %v1248 = vadd.f32 %v285, %v1247
    %v1249 = vpop.f32.mrf.mxu0
    %v1250 = vadd.f32 %v285, %v1249
    %1251 = vmatmul.bf16.gmra.mxu0 %v477
    %v1252 = vpop.f32.mrf.mxu0
    %v1253 = vadd.f32 %v285, %v1252
    %v1254 = vpop.f32.mrf.mxu0
    %v1255 = vadd.f32 %v285, %v1254
    %1256 = vmatmul.bf16.gmra.mxu0 %v480
    %v1257 = vpop.f32.mrf.mxu0
    %v1258 = vadd.f32 %v285, %v1257
    %v1259 = vpop.f32.mrf.mxu0
    %v1260 = vadd.f32 %v285, %v1259
    %1261 = vmatmul.bf16.gmra.mxu0 %v483
    %v1262 = vpop.f32.mrf.mxu0
    %v1263 = vadd.f32 %v285, %v1262
    %v1264 = vpop.f32.mrf.mxu0
    %v1265 = vadd.f32 %v285, %v1264
    %1266 = vmatmul.bf16.gmra.mxu0 %v486
    %v1267 = vpop.f32.mrf.mxu0
    %v1268 = vadd.f32 %v285, %v1267
    %v1269 = vpop.f32.mrf.mxu0
    %v1270 = vadd.f32 %v285, %v1269
    %1271 = vmatmul.bf16.gmra.mxu0 %v489
    %v1272 = vpop.f32.mrf.mxu0
    %v1273 = vadd.f32 %v285, %v1272
    %v1274 = vpop.f32.mrf.mxu0
    %v1275 = vadd.f32 %v285, %v1274
    %1276 = vmatmul.bf16.gmra.mxu0 %v492
    %v1277 = vpop.f32.mrf.mxu0
    %v1278 = vadd.f32 %v285, %v1277
    %v1279 = vpop.f32.mrf.mxu0
    %v1280 = vadd.f32 %v285, %v1279
    %1281 = vmatmul.bf16.gmra.mxu0 %v495
    %v1282 = vpop.f32.mrf.mxu0
    %v1283 = vadd.f32 %v285, %v1282
    %v1284 = vpop.f32.mrf.mxu0
    %v1285 = vadd.f32 %v285, %v1284
    %1286 = vmatmul.bf16.gmra.mxu0 %v498
    %v1287 = vpop.f32.mrf.mxu0
    %v1288 = vadd.f32 %v285, %v1287
    %v1289 = vpop.f32.mrf.mxu0
    %v1290 = vadd.f32 %v285, %v1289
    %1291 = vmatmul.bf16.gmra.mxu0 %v501
    %v1292 = vpop.f32.mrf.mxu0
    %v1293 = vadd.f32 %v285, %v1292
    %v1294 = vpop.f32.mrf.mxu0
    %v1295 = vadd.f32 %v285, %v1294
    %1296 = vmatmul.bf16.gmra.mxu0 %v504
    %v1297 = vpop.f32.mrf.mxu0
    %v1298 = vadd.f32 %v285, %v1297
    %v1299 = vpop.f32.mrf.mxu0
    %v1300 = vadd.f32 %v285, %v1299
    %1301 = vmatmul.bf16.gmra.mxu0 %v507
    %v1302 = vpop.f32.mrf.mxu0
    %v1303 = vadd.f32 %v285, %v1302
    %v1304 = vpop.f32.mrf.mxu0
    %v1305 = vadd.f32 %v285, %v1304
    %1306 = vmatmul.bf16.gmra.mxu0 %v510
    %v1307 = vpop.f32.mrf.mxu0
    %v1308 = vadd.f32 %v285, %v1307
    %v1309 = vpop.f32.mrf.mxu0
    %v1310 = vadd.f32 %v285, %v1309
    %1311 = vmatmul.bf16.gmra.mxu0 %v513
    %v1312 = vpop.f32.mrf.mxu0
    %v1313 = vadd.f32 %v285, %v1312
    %v1314 = vpop.f32.mrf.mxu0
    %v1315 = vadd.f32 %v285, %v1314
    %1316 = vmatmul.bf16.gmra.mxu0 %v516
    %v1317 = vpop.f32.mrf.mxu0
    %v1318 = vadd.f32 %v285, %v1317
    %v1319 = vpop.f32.mrf.mxu0
    %v1320 = vadd.f32 %v285, %v1319
    %1321 = vmatmul.bf16.gmra.mxu0 %v519
    %v1322 = vpop.f32.mrf.mxu0
    %v1323 = vadd.f32 %v285, %v1322
    %v1324 = vpop.f32.mrf.mxu0
    %v1325 = vadd.f32 %v285, %v1324
    %1326 = vmatmul.bf16.gmra.mxu0 %v522
    %v1327 = vpop.f32.mrf.mxu0
    %v1328 = vadd.f32 %v285, %v1327
    %v1329 = vpop.f32.mrf.mxu0
    %v1330 = vadd.f32 %v285, %v1329
    %1331 = vmatmul.bf16.gmra.mxu0 %v525
    %v1332 = vpop.f32.mrf.mxu0
    %v1333 = vadd.f32 %v285, %v1332
    %v1334 = vpop.f32.mrf.mxu0
    %v1335 = vadd.f32 %v285, %v1334
    %1336 = vmatmul.bf16.gmra.mxu0 %v528
    %v1337 = vpop.f32.mrf.mxu0
    %v1338 = vadd.f32 %v285, %v1337
    %v1339 = vpop.f32.mrf.mxu0
    %v1340 = vadd.f32 %v285, %v1339
    %1341 = vmatmul.bf16.gmra.mxu0 %v531
    %v1342 = vpop.f32.mrf.mxu0
    %v1343 = vadd.f32 %v285, %v1342
    %v1344 = vpop.f32.mrf.mxu0
    %v1345 = vadd.f32 %v285, %v1344
    %1346 = vmatmul.bf16.gmra.mxu0 %v534
    %v1347 = vpop.f32.mrf.mxu0
    %v1348 = vadd.f32 %v285, %v1347
    %v1349 = vpop.f32.mrf.mxu0
    %v1350 = vadd.f32 %v285, %v1349
    %1351 = vmatmul.bf16.gmra.mxu0 %v537
    %v1352 = vpop.f32.mrf.mxu0
    %v1353 = vadd.f32 %v285, %v1352
    %v1354 = vpop.f32.mrf.mxu0
    %v1355 = vadd.f32 %v285, %v1354
    %1356 = vdwg.mxu0
    %vm1677 = vcmask 1045504
    %v1678 = vrot.slane %v549, 2
    %v1679 = vrot.slane %v551, 2
    %v1680 = vsel %vm1677, %v1678, %v1679
    %v1681 = vrot.slane %v958, 2
    %v1682 = vrot.slane %v960, 2
    %v1683 = vsel %vm1677, %v1681, %v1682
    %v1684 = vrot.slane %v554, 2
    %v1685 = vrot.slane %v556, 2
    %v1686 = vsel %vm1677, %v1684, %v1685
    %v1687 = vrot.slane %v963, 2
    %v1688 = vrot.slane %v965, 2
    %v1689 = vsel %vm1677, %v1687, %v1688
    %v1690 = vrot.slane %v559, 2
    %v1691 = vrot.slane %v561, 2
    %v1692 = vsel %vm1677, %v1690, %v1691
    %v1693 = vrot.slane %v968, 2
    %v1694 = vrot.slane %v970, 2
    %v1695 = vsel %vm1677, %v1693, %v1694
    %v1696 = vrot.slane %v564, 2
    %v1697 = vrot.slane %v566, 2
    %v1698 = vsel %vm1677, %v1696, %v1697
    %v1699 = vrot.slane %v973, 2
    %v1700 = vrot.slane %v975, 2
    %v1701 = vsel %vm1677, %v1699, %v1700
    %v1702 = vrot.slane %v569, 2
    %v1703 = vrot.slane %v571, 2
    %v1704 = vsel %vm1677, %v1702, %v1703
    %v1705 = vrot.slane %v978, 2
    %v1706 = vrot.slane %v980, 2
    %v1707 = vsel %vm1677, %v1705, %v1706
    %v1708 = vrot.slane %v574, 2
    %v1709 = vrot.slane %v576, 2
    %v1710 = vsel %vm1677, %v1708, %v1709
    %v1711 = vrot.slane %v983, 2
    %v1712 = vrot.slane %v985, 2
    %v1713 = vsel %vm1677, %v1711, %v1712
    %v1714 = vrot.slane %v579, 2
    %v1715 = vrot.slane %v581, 2
    %v1716 = vsel %vm1677, %v1714, %v1715
    %v1717 = vrot.slane %v988, 2
    %v1718 = vrot.slane %v990, 2
    %v1719 = vsel %vm1677, %v1717, %v1718
    %v1720 = vrot.slane %v584, 2
    %v1721 = vrot.slane %v586, 2
    %v1722 = vsel %vm1677, %v1720, %v1721
    %v1723 = vrot.slane %v993, 2
    %v1724 = vrot.slane %v995, 2
    %v1725 = vsel %vm1677, %v1723, %v1724
    %v1726 = vrot.slane %v589, 2
    %v1727 = vrot.slane %v591, 2
    %v1728 = vsel %vm1677, %v1726, %v1727
    %v1729 = vrot.slane %v998, 2
    %v1730 = vrot.slane %v1000, 2
    %v1731 = vsel %vm1677, %v1729, %v1730
    %v1732 = vrot.slane %v594, 2
    %v1733 = vrot.slane %v596, 2
    %v1734 = vsel %vm1677, %v1732, %v1733
    %v1735 = vrot.slane %v1003, 2
    %v1736 = vrot.slane %v1005, 2
    %v1737 = vsel %vm1677, %v1735, %v1736
    %v1738 = vrot.slane %v599, 2
    %v1739 = vrot.slane %v601, 2
    %v1740 = vsel %vm1677, %v1738, %v1739
    %v1741 = vrot.slane %v1008, 2
    %v1742 = vrot.slane %v1010, 2
    %v1743 = vsel %vm1677, %v1741, %v1742
    %v1744 = vrot.slane %v604, 2
    %v1745 = vrot.slane %v606, 2
    %v1746 = vsel %vm1677, %v1744, %v1745
    %v1747 = vrot.slane %v1013, 2
    %v1748 = vrot.slane %v1015, 2
    %v1749 = vsel %vm1677, %v1747, %v1748
    %v1750 = vrot.slane %v609, 2
    %v1751 = vrot.slane %v611, 2
    %v1752 = vsel %vm1677, %v1750, %v1751
    %v1753 = vrot.slane %v1018, 2
    %v1754 = vrot.slane %v1020, 2
    %v1755 = vsel %vm1677, %v1753, %v1754
    %v1756 = vrot.slane %v614, 2
    %v1757 = vrot.slane %v616, 2
    %v1758 = vsel %vm1677, %v1756, %v1757
    %v1759 = vrot.slane %v1023, 2
    %v1760 = vrot.slane %v1025, 2
    %v1761 = vsel %vm1677, %v1759, %v1760
    %v1762 = vrot.slane %v619, 2
    %v1763 = vrot.slane %v621, 2
    %v1764 = vsel %vm1677, %v1762, %v1763
    %v1765 = vrot.slane %v1028, 2
    %v1766 = vrot.slane %v1030, 2
    %v1767 = vsel %vm1677, %v1765, %v1766
    %v1768 = vrot.slane %v624, 2
    %v1769 = vrot.slane %v626, 2
    %v1770 = vsel %vm1677, %v1768, %v1769
    %v1771 = vrot.slane %v1033, 2
    %v1772 = vrot.slane %v1035, 2
    %v1773 = vsel %vm1677, %v1771, %v1772
    %v1774 = vrot.slane %v629, 2
    %v1775 = vrot.slane %v631, 2
    %v1776 = vsel %vm1677, %v1774, %v1775
    %v1777 = vrot.slane %v1038, 2
    %v1778 = vrot.slane %v1040, 2
    %v1779 = vsel %vm1677, %v1777, %v1778
    %v1780 = vrot.slane %v634, 2
    %v1781 = vrot.slane %v636, 2
    %v1782 = vsel %vm1677, %v1780, %v1781
    %v1783 = vrot.slane %v1043, 2
    %v1784 = vrot.slane %v1045, 2
    %v1785 = vsel %vm1677, %v1783, %v1784
    %v1786 = vrot.slane %v639, 2
    %v1787 = vrot.slane %v641, 2
    %v1788 = vsel %vm1677, %v1786, %v1787
    %v1789 = vrot.slane %v1048, 2
    %v1790 = vrot.slane %v1050, 2
    %v1791 = vsel %vm1677, %v1789, %v1790
    %v1792 = vrot.slane %v644, 2
    %v1793 = vrot.slane %v646, 2
    %v1794 = vsel %vm1677, %v1792, %v1793
    %v1795 = vrot.slane %v1053, 2
    %v1796 = vrot.slane %v1055, 2
    %v1797 = vsel %vm1677, %v1795, %v1796
    %v1798 = vrot.slane %v649, 2
    %v1799 = vrot.slane %v651, 2
    %v1800 = vsel %vm1677, %v1798, %v1799
    %v1801 = vrot.slane %v1058, 2
    %v1802 = vrot.slane %v1060, 2
    %v1803 = vsel %vm1677, %v1801, %v1802
    %v1804 = vrot.slane %v654, 2
    %v1805 = vrot.slane %v656, 2
    %v1806 = vsel %vm1677, %v1804, %v1805
    %v1807 = vrot.slane %v1063, 2
    %v1808 = vrot.slane %v1065, 2
    %v1809 = vsel %vm1677, %v1807, %v1808
    %v1810 = vrot.slane %v659, 2
    %v1811 = vrot.slane %v661, 2
    %v1812 = vsel %vm1677, %v1810, %v1811
    %v1813 = vrot.slane %v1068, 2
    %v1814 = vrot.slane %v1070, 2
    %v1815 = vsel %vm1677, %v1813, %v1814
    %v1816 = vrot.slane %v664, 2
    %v1817 = vrot.slane %v666, 2
    %v1818 = vsel %vm1677, %v1816, %v1817
    %v1819 = vrot.slane %v1073, 2
    %v1820 = vrot.slane %v1075, 2
    %v1821 = vsel %vm1677, %v1819, %v1820
    %v1822 = vrot.slane %v669, 2
    %v1823 = vrot.slane %v671, 2
    %v1824 = vsel %vm1677, %v1822, %v1823
    %v1825 = vrot.slane %v1078, 2
    %v1826 = vrot.slane %v1080, 2
    %v1827 = vsel %vm1677, %v1825, %v1826
    %v1828 = vrot.slane %v674, 2
    %v1829 = vrot.slane %v676, 2
    %v1830 = vsel %vm1677, %v1828, %v1829
    %v1831 = vrot.slane %v1083, 2
    %v1832 = vrot.slane %v1085, 2
    %v1833 = vsel %vm1677, %v1831, %v1832
    %v1834 = vrot.slane %v679, 2
    %v1835 = vrot.slane %v681, 2
    %v1836 = vsel %vm1677, %v1834, %v1835
    %v1837 = vrot.slane %v1088, 2
    %v1838 = vrot.slane %v1090, 2
    %v1839 = vsel %vm1677, %v1837, %v1838
    %v1840 = vrot.slane %v684, 2
    %v1841 = vrot.slane %v686, 2
    %v1842 = vsel %vm1677, %v1840, %v1841
    %v1843 = vrot.slane %v1093, 2
    %v1844 = vrot.slane %v1095, 2
    %v1845 = vsel %vm1677, %v1843, %v1844
    %v1846 = vrot.slane %v689, 2
    %v1847 = vrot.slane %v691, 2
    %v1848 = vsel %vm1677, %v1846, %v1847
    %v1849 = vrot.slane %v1098, 2
    %v1850 = vrot.slane %v1100, 2
    %v1851 = vsel %vm1677, %v1849, %v1850
    %v1852 = vrot.slane %v694, 2
    %v1853 = vrot.slane %v696, 2
    %v1854 = vsel %vm1677, %v1852, %v1853
    %v1855 = vrot.slane %v1103, 2
    %v1856 = vrot.slane %v1105, 2
    %v1857 = vsel %vm1677, %v1855, %v1856
    %v1858 = vrot.slane %v699, 2
    %v1859 = vrot.slane %v701, 2
    %v1860 = vsel %vm1677, %v1858, %v1859
    %v1861 = vrot.slane %v1108, 2
    %v1862 = vrot.slane %v1110, 2
    %v1863 = vsel %vm1677, %v1861, %v1862
    %v1864 = vrot.slane %v704, 2
    %v1865 = vrot.slane %v706, 2
    %v1866 = vsel %vm1677, %v1864, %v1865
    %v1867 = vrot.slane %v1113, 2
    %v1868 = vrot.slane %v1115, 2
    %v1869 = vsel %vm1677, %v1867, %v1868
    %v1870 = vrot.slane %v709, 2
    %v1871 = vrot.slane %v711, 2
    %v1872 = vsel %vm1677, %v1870, %v1871
    %v1873 = vrot.slane %v1118, 2
    %v1874 = vrot.slane %v1120, 2
    %v1875 = vsel %vm1677, %v1873, %v1874
    %v1876 = vrot.slane %v714, 2
    %v1877 = vrot.slane %v716, 2
    %v1878 = vsel %vm1677, %v1876, %v1877
    %v1879 = vrot.slane %v1123, 2
    %v1880 = vrot.slane %v1125, 2
    %v1881 = vsel %vm1677, %v1879, %v1880
    %v1882 = vrot.slane %v719, 2
    %v1883 = vrot.slane %v721, 2
    %v1884 = vsel %vm1677, %v1882, %v1883
    %v1885 = vrot.slane %v1128, 2
    %v1886 = vrot.slane %v1130, 2
    %v1887 = vsel %vm1677, %v1885, %v1886
    %v1888 = vrot.slane %v724, 2
    %v1889 = vrot.slane %v726, 2
    %v1890 = vsel %vm1677, %v1888, %v1889
    %v1891 = vrot.slane %v1133, 2
    %v1892 = vrot.slane %v1135, 2
    %v1893 = vsel %vm1677, %v1891, %v1892
    %v1894 = vrot.slane %v729, 2
    %v1895 = vrot.slane %v731, 2
    %v1896 = vsel %vm1677, %v1894, %v1895
    %v1897 = vrot.slane %v1138, 2
    %v1898 = vrot.slane %v1140, 2
    %v1899 = vsel %vm1677, %v1897, %v1898
    %v1900 = vrot.slane %v734, 2
    %v1901 = vrot.slane %v736, 2
    %v1902 = vsel %vm1677, %v1900, %v1901
    %v1903 = vrot.slane %v1143, 2
    %v1904 = vrot.slane %v1145, 2
    %v1905 = vsel %vm1677, %v1903, %v1904
    %v1906 = vrot.slane %v739, 2
    %v1907 = vrot.slane %v741, 2
    %v1908 = vsel %vm1677, %v1906, %v1907
    %v1909 = vrot.slane %v1148, 2
    %v1910 = vrot.slane %v1150, 2
    %v1911 = vsel %vm1677, %v1909, %v1910
    %v1912 = vrot.slane %v744, 2
    %v1913 = vrot.slane %v746, 2
    %v1914 = vsel %vm1677, %v1912, %v1913
    %v1915 = vrot.slane %v1153, 2
    %v1916 = vrot.slane %v1155, 2
    %v1917 = vsel %vm1677, %v1915, %v1916
    %v1918 = vrot.slane %v749, 2
    %v1919 = vrot.slane %v751, 2
    %v1920 = vsel %vm1677, %v1918, %v1919
    %v1921 = vrot.slane %v1158, 2
    %v1922 = vrot.slane %v1160, 2
    %v1923 = vsel %vm1677, %v1921, %v1922
    %v1924 = vrot.slane %v754, 2
    %v1925 = vrot.slane %v756, 2
    %v1926 = vsel %vm1677, %v1924, %v1925
    %v1927 = vrot.slane %v1163, 2
    %v1928 = vrot.slane %v1165, 2
    %v1929 = vsel %vm1677, %v1927, %v1928
    %v1930 = vrot.slane %v759, 2
    %v1931 = vrot.slane %v761, 2
    %v1932 = vsel %vm1677, %v1930, %v1931
    %v1933 = vrot.slane %v1168, 2
    %v1934 = vrot.slane %v1170, 2
    %v1935 = vsel %vm1677, %v1933, %v1934
    %v1936 = vrot.slane %v764, 2
    %v1937 = vrot.slane %v766, 2
    %v1938 = vsel %vm1677, %v1936, %v1937
    %v1939 = vrot.slane %v1173, 2
    %v1940 = vrot.slane %v1175, 2
    %v1941 = vsel %vm1677, %v1939, %v1940
    %v1942 = vrot.slane %v769, 2
    %v1943 = vrot.slane %v771, 2
    %v1944 = vsel %vm1677, %v1942, %v1943
    %v1945 = vrot.slane %v1178, 2
    %v1946 = vrot.slane %v1180, 2
    %v1947 = vsel %vm1677, %v1945, %v1946
    %v1948 = vrot.slane %v774, 2
    %v1949 = vrot.slane %v776, 2
    %v1950 = vsel %vm1677, %v1948, %v1949
    %v1951 = vrot.slane %v1183, 2
    %v1952 = vrot.slane %v1185, 2
    %v1953 = vsel %vm1677, %v1951, %v1952
    %v1954 = vrot.slane %v779, 2
    %v1955 = vrot.slane %v781, 2
    %v1956 = vsel %vm1677, %v1954, %v1955
    %v1957 = vrot.slane %v1188, 2
    %v1958 = vrot.slane %v1190, 2
    %v1959 = vsel %vm1677, %v1957, %v1958
    %v1960 = vrot.slane %v784, 2
    %v1961 = vrot.slane %v786, 2
    %v1962 = vsel %vm1677, %v1960, %v1961
    %v1963 = vrot.slane %v1193, 2
    %v1964 = vrot.slane %v1195, 2
    %v1965 = vsel %vm1677, %v1963, %v1964
    %v1966 = vrot.slane %v789, 2
    %v1967 = vrot.slane %v791, 2
    %v1968 = vsel %vm1677, %v1966, %v1967
    %v1969 = vrot.slane %v1198, 2
    %v1970 = vrot.slane %v1200, 2
    %v1971 = vsel %vm1677, %v1969, %v1970
    %v1972 = vrot.slane %v794, 2
    %v1973 = vrot.slane %v796, 2
    %v1974 = vsel %vm1677, %v1972, %v1973
    %v1975 = vrot.slane %v1203, 2
    %v1976 = vrot.slane %v1205, 2
    %v1977 = vsel %vm1677, %v1975, %v1976
    %v1978 = vrot.slane %v799, 2
    %v1979 = vrot.slane %v801, 2
    %v1980 = vsel %vm1677, %v1978, %v1979
    %v1981 = vrot.slane %v1208, 2
    %v1982 = vrot.slane %v1210, 2
    %v1983 = vsel %vm1677, %v1981, %v1982
    %v1984 = vrot.slane %v804, 2
    %v1985 = vrot.slane %v806, 2
    %v1986 = vsel %vm1677, %v1984, %v1985
    %v1987 = vrot.slane %v1213, 2
    %v1988 = vrot.slane %v1215, 2
    %v1989 = vsel %vm1677, %v1987, %v1988
    %v1990 = vrot.slane %v809, 2
    %v1991 = vrot.slane %v811, 2
    %v1992 = vsel %vm1677, %v1990, %v1991
    %v1993 = vrot.slane %v1218, 2
    %v1994 = vrot.slane %v1220, 2
    %v1995 = vsel %vm1677, %v1993, %v1994
    %v1996 = vrot.slane %v814, 2
    %v1997 = vrot.slane %v816, 2
    %v1998 = vsel %vm1677, %v1996, %v1997
    %v1999 = vrot.slane %v1223, 2
    %v2000 = vrot.slane %v1225, 2
    %v2001 = vsel %vm1677, %v1999, %v2000
    %v2002 = vrot.slane %v819, 2
    %v2003 = vrot.slane %v821, 2
    %v2004 = vsel %vm1677, %v2002, %v2003
    %v2005 = vrot.slane %v1228, 2
    %v2006 = vrot.slane %v1230, 2
    %v2007 = vsel %vm1677, %v2005, %v2006
    %v2008 = vrot.slane %v824, 2
    %v2009 = vrot.slane %v826, 2
    %v2010 = vsel %vm1677, %v2008, %v2009
    %v2011 = vrot.slane %v1233, 2
    %v2012 = vrot.slane %v1235, 2
    %v2013 = vsel %vm1677, %v2011, %v2012
    %v2014 = vrot.slane %v829, 2
    %v2015 = vrot.slane %v831, 2
    %v2016 = vsel %vm1677, %v2014, %v2015
    %v2017 = vrot.slane %v1238, 2
    %v2018 = vrot.slane %v1240, 2
    %v2019 = vsel %vm1677, %v2017, %v2018
    %v2020 = vrot.slane %v834, 2
    %v2021 = vrot.slane %v836, 2
    %v2022 = vsel %vm1677, %v2020, %v2021
    %v2023 = vrot.slane %v1243, 2
    %v2024 = vrot.slane %v1245, 2
    %v2025 = vsel %vm1677, %v2023, %v2024
    %v2026 = vrot.slane %v839, 2
    %v2027 = vrot.slane %v841, 2
    %v2028 = vsel %vm1677, %v2026, %v2027
    %v2029 = vrot.slane %v1248, 2
    %v2030 = vrot.slane %v1250, 2
    %v2031 = vsel %vm1677, %v2029, %v2030
    %v2032 = vrot.slane %v844, 2
    %v2033 = vrot.slane %v846, 2
    %v2034 = vsel %vm1677, %v2032, %v2033
    %v2035 = vrot.slane %v1253, 2
    %v2036 = vrot.slane %v1255, 2
    %v2037 = vsel %vm1677, %v2035, %v2036
    %v2038 = vrot.slane %v849, 2
    %v2039 = vrot.slane %v851, 2
    %v2040 = vsel %vm1677, %v2038, %v2039
    %v2041 = vrot.slane %v1258, 2
    %v2042 = vrot.slane %v1260, 2
    %v2043 = vsel %vm1677, %v2041, %v2042
    %v2044 = vrot.slane %v854, 2
    %v2045 = vrot.slane %v856, 2
    %v2046 = vsel %vm1677, %v2044, %v2045
    %v2047 = vrot.slane %v1263, 2
    %v2048 = vrot.slane %v1265, 2
    %v2049 = vsel %vm1677, %v2047, %v2048
    %v2050 = vrot.slane %v859, 2
    %v2051 = vrot.slane %v861, 2
    %v2052 = vsel %vm1677, %v2050, %v2051
    %v2053 = vrot.slane %v1268, 2
    %v2054 = vrot.slane %v1270, 2
    %v2055 = vsel %vm1677, %v2053, %v2054
    %v2056 = vrot.slane %v864, 2
    %v2057 = vrot.slane %v866, 2
    %v2058 = vsel %vm1677, %v2056, %v2057
    %v2059 = vrot.slane %v1273, 2
    %v2060 = vrot.slane %v1275, 2
    %v2061 = vsel %vm1677, %v2059, %v2060
    %v2062 = vrot.slane %v869, 2
    %v2063 = vrot.slane %v871, 2
    %v2064 = vsel %vm1677, %v2062, %v2063
    %v2065 = vrot.slane %v1278, 2
    %v2066 = vrot.slane %v1280, 2
    %v2067 = vsel %vm1677, %v2065, %v2066
    %v2068 = vrot.slane %v874, 2
    %v2069 = vrot.slane %v876, 2
    %v2070 = vsel %vm1677, %v2068, %v2069
    %v2071 = vrot.slane %v1283, 2
    %v2072 = vrot.slane %v1285, 2
    %v2073 = vsel %vm1677, %v2071, %v2072
    %v2074 = vrot.slane %v879, 2
    %v2075 = vrot.slane %v881, 2
    %v2076 = vsel %vm1677, %v2074, %v2075
    %v2077 = vrot.slane %v1288, 2
    %v2078 = vrot.slane %v1290, 2
    %v2079 = vsel %vm1677, %v2077, %v2078
    %v2080 = vrot.slane %v884, 2
    %v2081 = vrot.slane %v886, 2
    %v2082 = vsel %vm1677, %v2080, %v2081
    %v2083 = vrot.slane %v1293, 2
    %v2084 = vrot.slane %v1295, 2
    %v2085 = vsel %vm1677, %v2083, %v2084
    %v2086 = vrot.slane %v889, 2
    %v2087 = vrot.slane %v891, 2
    %v2088 = vsel %vm1677, %v2086, %v2087
    %v2089 = vrot.slane %v1298, 2
    %v2090 = vrot.slane %v1300, 2
    %v2091 = vsel %vm1677, %v2089, %v2090
    %v2092 = vrot.slane %v894, 2
    %v2093 = vrot.slane %v896, 2
    %v2094 = vsel %vm1677, %v2092, %v2093
    %v2095 = vrot.slane %v1303, 2
    %v2096 = vrot.slane %v1305, 2
    %v2097 = vsel %vm1677, %v2095, %v2096
    %v2098 = vrot.slane %v899, 2
    %v2099 = vrot.slane %v901, 2
    %v2100 = vsel %vm1677, %v2098, %v2099
    %v2101 = vrot.slane %v1308, 2
    %v2102 = vrot.slane %v1310, 2
    %v2103 = vsel %vm1677, %v2101, %v2102
    %v2104 = vrot.slane %v904, 2
    %v2105 = vrot.slane %v906, 2
    %v2106 = vsel %vm1677, %v2104, %v2105
    %v2107 = vrot.slane %v1313, 2
    %v2108 = vrot.slane %v1315, 2
    %v2109 = vsel %vm1677, %v2107, %v2108
    %v2110 = vrot.slane %v909, 2
    %v2111 = vrot.slane %v911, 2
    %v2112 = vsel %vm1677, %v2110, %v2111
    %v2113 = vrot.slane %v1318, 2
    %v2114 = vrot.slane %v1320, 2
    %v2115 = vsel %vm1677, %v2113, %v2114
    %v2116 = vrot.slane %v914, 2
    %v2117 = vrot.slane %v916, 2
    %v2118 = vsel %vm1677, %v2116, %v2117
    %v2119 = vrot.slane %v1323, 2
    %v2120 = vrot.slane %v1325, 2
    %v2121 = vsel %vm1677, %v2119, %v2120
    %v2122 = vrot.slane %v919, 2
    %v2123 = vrot.slane %v921, 2
    %v2124 = vsel %vm1677, %v2122, %v2123
    %v2125 = vrot.slane %v1328, 2
    %v2126 = vrot.slane %v1330, 2
    %v2127 = vsel %vm1677, %v2125, %v2126
    %v2128 = vrot.slane %v924, 2
    %v2129 = vrot.slane %v926, 2
    %v2130 = vsel %vm1677, %v2128, %v2129
    %v2131 = vrot.slane %v1333, 2
    %v2132 = vrot.slane %v1335, 2
    %v2133 = vsel %vm1677, %v2131, %v2132
    %v2134 = vrot.slane %v929, 2
    %v2135 = vrot.slane %v931, 2
    %v2136 = vsel %vm1677, %v2134, %v2135
    %v2137 = vrot.slane %v1338, 2
    %v2138 = vrot.slane %v1340, 2
    %v2139 = vsel %vm1677, %v2137, %v2138
    %v2140 = vrot.slane %v934, 2
    %v2141 = vrot.slane %v936, 2
    %v2142 = vsel %vm1677, %v2140, %v2141
    %v2143 = vrot.slane %v1343, 2
    %v2144 = vrot.slane %v1345, 2
    %v2145 = vsel %vm1677, %v2143, %v2144
    %v2146 = vrot.slane %v939, 2
    %v2147 = vrot.slane %v941, 2
    %v2148 = vsel %vm1677, %v2146, %v2147
    %v2149 = vrot.slane %v1348, 2
    %v2150 = vrot.slane %v1350, 2
    %v2151 = vsel %vm1677, %v2149, %v2150
    %v2152 = vrot.slane %v944, 2
    %v2153 = vrot.slane %v946, 2
    %v2154 = vsel %vm1677, %v2152, %v2153
    %v2155 = vrot.slane %v1353, 2
    %v2156 = vrot.slane %v1355, 2
    %v2157 = vsel %vm1677, %v2155, %v2156
    %v2318 = vld [vmem:[%s3] sm:$0x3]
    %v2319 = vld [vmem:[%s4] sm:$0x3]
    %v2320 = vadd.f32 %v1680, %v1686
    %v2321 = vadd.f32 %v2320, %v1692
    %v2322 = vadd.f32 %v2321, %v1698
    %v2323 = vadd.f32 %v2322, %v1704
    %v2324 = vadd.f32 %v2323, %v1710
    %v2325 = vadd.f32 %v2324, %v1716
    %v2326 = vadd.f32 %v2325, %v1722
    %v2327 = vadd.f32 %v2326, %v1728
    %v2328 = vadd.f32 %v2327, %v1734
    %v2329 = vadd.f32 %v2328, %v1740
    %v2330 = vadd.f32 %v2329, %v1746
    %v2331 = vadd.f32 %v2330, %v1752
    %v2332 = vadd.f32 %v2331, %v1758
    %v2333 = vadd.f32 %v2332, %v1764
    %v2334 = vadd.f32 %v2333, %v1770
    %v2335 = vadd.f32 %v2334, %v1776
    %v2336 = vadd.f32 %v2335, %v1782
    %v2337 = vadd.f32 %v2336, %v1788
    %v2338 = vadd.f32 %v2337, %v1794
    %v2339 = vadd.f32 %v2338, %v1800
    %v2340 = vadd.f32 %v2339, %v1806
    %v2341 = vadd.f32 %v2340, %v1812
    %v2342 = vadd.f32 %v2341, %v1818
    %v2343 = vadd.f32 %v2342, %v1824
    %v2344 = vadd.f32 %v2343, %v1830
    %v2345 = vadd.f32 %v2344, %v1836
    %v2346 = vadd.f32 %v2345, %v1842
    %v2347 = vadd.f32 %v2346, %v1848
    %v2348 = vadd.f32 %v2347, %v1854
    %v2349 = vadd.f32 %v2348, %v1860
    %v2350 = vadd.f32 %v2349, %v1866
    %v2351 = vadd.f32 %v2350, %v1872
    %v2352 = vadd.f32 %v2351, %v1878
    %v2353 = vadd.f32 %v2352, %v1884
    %v2354 = vadd.f32 %v2353, %v1890
    %v2355 = vadd.f32 %v2354, %v1896
    %v2356 = vadd.f32 %v2355, %v1902
    %v2357 = vadd.f32 %v2356, %v1908
    %v2358 = vadd.f32 %v2357, %v1914
    %v2359 = vadd.f32 %v2358, %v1920
    %v2360 = vadd.f32 %v2359, %v1926
    %v2361 = vadd.f32 %v2360, %v1932
    %v2362 = vadd.f32 %v2361, %v1938
    %v2363 = vadd.f32 %v2362, %v1944
    %v2364 = vadd.f32 %v2363, %v1950
    %v2365 = vadd.f32 %v2364, %v1956
    %v2366 = vadd.f32 %v2365, %v1962
    %v2367 = vadd.f32 %v2366, %v1968
    %v2368 = vadd.f32 %v2367, %v1974
    %v2369 = vadd.f32 %v2368, %v1980
    %v2370 = vadd.f32 %v2369, %v1986
    %v2371 = vadd.f32 %v2370, %v1992
    %v2372 = vadd.f32 %v2371, %v1998
    %v2373 = vadd.f32 %v2372, %v2004
    %v2374 = vadd.f32 %v2373, %v2010
    %v2375 = vadd.f32 %v2374, %v2016
    %v2376 = vadd.f32 %v2375, %v2022
    %v2377 = vadd.f32 %v2376, %v2028
    %v2378 = vadd.f32 %v2377, %v2034
    %v2379 = vadd.f32 %v2378, %v2040
    %v2380 = vadd.f32 %v2379, %v2046
    %v2381 = vadd.f32 %v2380, %v2052
    %v2382 = vadd.f32 %v2381, %v2058
    %v2383 = vadd.f32 %v2382, %v2064
    %v2384 = vadd.f32 %v2383, %v2070
    %v2385 = vadd.f32 %v2384, %v2076
    %v2386 = vadd.f32 %v2385, %v2082
    %v2387 = vadd.f32 %v2386, %v2088
    %v2388 = vadd.f32 %v2387, %v2094
    %v2389 = vadd.f32 %v2388, %v2100
    %v2390 = vadd.f32 %v2389, %v2106
    %v2391 = vadd.f32 %v2390, %v2112
    %v2392 = vadd.f32 %v2391, %v2118
    %v2393 = vadd.f32 %v2392, %v2124
    %v2394 = vadd.f32 %v2393, %v2130
    %v2395 = vadd.f32 %v2394, %v2136
    %v2396 = vadd.f32 %v2395, %v2142
    %v2397 = vadd.f32 %v2396, %v2148
    %v2398 = vadd.f32 %v2397, %v2154
    %v2399 = vrot.slane %v2398, 4
    %v2400 = vadd.f32 %v2398, %v2399
    %v2401 = vrot.slane %v2400, 2
    %v2402 = vadd.f32 %v2400, %v2401
    %v2403 = vrot.slane %v2402, 1
    %v2404 = vadd.f32 %v2402, %v2403
    %vm2405 = vcmask 523264
    %v2406 = vsel %vm2405, %v1683, 0.0
    %v2407 = vsel %vm2405, %v1689, 0.0
    %v2408 = vadd.f32 %v2406, %v2407
    %v2409 = vsel %vm2405, %v1695, 0.0
    %v2410 = vadd.f32 %v2408, %v2409
    %v2411 = vsel %vm2405, %v1701, 0.0
    %v2412 = vadd.f32 %v2410, %v2411
    %v2413 = vsel %vm2405, %v1707, 0.0
    %v2414 = vadd.f32 %v2412, %v2413
    %v2415 = vsel %vm2405, %v1713, 0.0
    %v2416 = vadd.f32 %v2414, %v2415
    %v2417 = vsel %vm2405, %v1719, 0.0
    %v2418 = vadd.f32 %v2416, %v2417
    %v2419 = vsel %vm2405, %v1725, 0.0
    %v2420 = vadd.f32 %v2418, %v2419
    %v2421 = vsel %vm2405, %v1731, 0.0
    %v2422 = vadd.f32 %v2420, %v2421
    %v2423 = vsel %vm2405, %v1737, 0.0
    %v2424 = vadd.f32 %v2422, %v2423
    %v2425 = vsel %vm2405, %v1743, 0.0
    %v2426 = vadd.f32 %v2424, %v2425
    %v2427 = vsel %vm2405, %v1749, 0.0
    %v2428 = vadd.f32 %v2426, %v2427
    %v2429 = vsel %vm2405, %v1755, 0.0
    %v2430 = vadd.f32 %v2428, %v2429
    %v2431 = vsel %vm2405, %v1761, 0.0
    %v2432 = vadd.f32 %v2430, %v2431
    %v2433 = vsel %vm2405, %v1767, 0.0
    %v2434 = vadd.f32 %v2432, %v2433
    %v2435 = vsel %vm2405, %v1773, 0.0
    %v2436 = vadd.f32 %v2434, %v2435
    %v2437 = vsel %vm2405, %v1779, 0.0
    %v2438 = vadd.f32 %v2436, %v2437
    %v2439 = vsel %vm2405, %v1785, 0.0
    %v2440 = vadd.f32 %v2438, %v2439
    %v2441 = vsel %vm2405, %v1791, 0.0
    %v2442 = vadd.f32 %v2440, %v2441
    %v2443 = vsel %vm2405, %v1797, 0.0
    %v2444 = vadd.f32 %v2442, %v2443
    %v2445 = vsel %vm2405, %v1803, 0.0
    %v2446 = vadd.f32 %v2444, %v2445
    %v2447 = vsel %vm2405, %v1809, 0.0
    %v2448 = vadd.f32 %v2446, %v2447
    %v2449 = vsel %vm2405, %v1815, 0.0
    %v2450 = vadd.f32 %v2448, %v2449
    %v2451 = vsel %vm2405, %v1821, 0.0
    %v2452 = vadd.f32 %v2450, %v2451
    %v2453 = vsel %vm2405, %v1827, 0.0
    %v2454 = vadd.f32 %v2452, %v2453
    %v2455 = vsel %vm2405, %v1833, 0.0
    %v2456 = vadd.f32 %v2454, %v2455
    %v2457 = vsel %vm2405, %v1839, 0.0
    %v2458 = vadd.f32 %v2456, %v2457
    %v2459 = vsel %vm2405, %v1845, 0.0
    %v2460 = vadd.f32 %v2458, %v2459
    %v2461 = vsel %vm2405, %v1851, 0.0
    %v2462 = vadd.f32 %v2460, %v2461
    %v2463 = vsel %vm2405, %v1857, 0.0
    %v2464 = vadd.f32 %v2462, %v2463
    %v2465 = vsel %vm2405, %v1863, 0.0
    %v2466 = vadd.f32 %v2464, %v2465
    %v2467 = vsel %vm2405, %v1869, 0.0
    %v2468 = vadd.f32 %v2466, %v2467
    %v2469 = vsel %vm2405, %v1875, 0.0
    %v2470 = vadd.f32 %v2468, %v2469
    %v2471 = vsel %vm2405, %v1881, 0.0
    %v2472 = vadd.f32 %v2470, %v2471
    %v2473 = vsel %vm2405, %v1887, 0.0
    %v2474 = vadd.f32 %v2472, %v2473
    %v2475 = vsel %vm2405, %v1893, 0.0
    %v2476 = vadd.f32 %v2474, %v2475
    %v2477 = vsel %vm2405, %v1899, 0.0
    %v2478 = vadd.f32 %v2476, %v2477
    %v2479 = vsel %vm2405, %v1905, 0.0
    %v2480 = vadd.f32 %v2478, %v2479
    %v2481 = vsel %vm2405, %v1911, 0.0
    %v2482 = vadd.f32 %v2480, %v2481
    %v2483 = vsel %vm2405, %v1917, 0.0
    %v2484 = vadd.f32 %v2482, %v2483
    %v2485 = vsel %vm2405, %v1923, 0.0
    %v2486 = vadd.f32 %v2484, %v2485
    %v2487 = vsel %vm2405, %v1929, 0.0
    %v2488 = vadd.f32 %v2486, %v2487
    %v2489 = vsel %vm2405, %v1935, 0.0
    %v2490 = vadd.f32 %v2488, %v2489
    %v2491 = vsel %vm2405, %v1941, 0.0
    %v2492 = vadd.f32 %v2490, %v2491
    %v2493 = vsel %vm2405, %v1947, 0.0
    %v2494 = vadd.f32 %v2492, %v2493
    %v2495 = vsel %vm2405, %v1953, 0.0
    %v2496 = vadd.f32 %v2494, %v2495
    %v2497 = vsel %vm2405, %v1959, 0.0
    %v2498 = vadd.f32 %v2496, %v2497
    %v2499 = vsel %vm2405, %v1965, 0.0
    %v2500 = vadd.f32 %v2498, %v2499
    %v2501 = vsel %vm2405, %v1971, 0.0
    %v2502 = vadd.f32 %v2500, %v2501
    %v2503 = vsel %vm2405, %v1977, 0.0
    %v2504 = vadd.f32 %v2502, %v2503
    %v2505 = vsel %vm2405, %v1983, 0.0
    %v2506 = vadd.f32 %v2504, %v2505
    %v2507 = vsel %vm2405, %v1989, 0.0
    %v2508 = vadd.f32 %v2506, %v2507
    %v2509 = vsel %vm2405, %v1995, 0.0
    %v2510 = vadd.f32 %v2508, %v2509
    %v2511 = vsel %vm2405, %v2001, 0.0
    %v2512 = vadd.f32 %v2510, %v2511
    %v2513 = vsel %vm2405, %v2007, 0.0
    %v2514 = vadd.f32 %v2512, %v2513
    %v2515 = vsel %vm2405, %v2013, 0.0
    %v2516 = vadd.f32 %v2514, %v2515
    %v2517 = vsel %vm2405, %v2019, 0.0
    %v2518 = vadd.f32 %v2516, %v2517
    %v2519 = vsel %vm2405, %v2025, 0.0
    %v2520 = vadd.f32 %v2518, %v2519
    %v2521 = vsel %vm2405, %v2031, 0.0
    %v2522 = vadd.f32 %v2520, %v2521
    %v2523 = vsel %vm2405, %v2037, 0.0
    %v2524 = vadd.f32 %v2522, %v2523
    %v2525 = vsel %vm2405, %v2043, 0.0
    %v2526 = vadd.f32 %v2524, %v2525
    %v2527 = vsel %vm2405, %v2049, 0.0
    %v2528 = vadd.f32 %v2526, %v2527
    %v2529 = vsel %vm2405, %v2055, 0.0
    %v2530 = vadd.f32 %v2528, %v2529
    %v2531 = vsel %vm2405, %v2061, 0.0
    %v2532 = vadd.f32 %v2530, %v2531
    %v2533 = vsel %vm2405, %v2067, 0.0
    %v2534 = vadd.f32 %v2532, %v2533
    %v2535 = vsel %vm2405, %v2073, 0.0
    %v2536 = vadd.f32 %v2534, %v2535
    %v2537 = vsel %vm2405, %v2079, 0.0
    %v2538 = vadd.f32 %v2536, %v2537
    %v2539 = vsel %vm2405, %v2085, 0.0
    %v2540 = vadd.f32 %v2538, %v2539
    %v2541 = vsel %vm2405, %v2091, 0.0
    %v2542 = vadd.f32 %v2540, %v2541
    %v2543 = vsel %vm2405, %v2097, 0.0
    %v2544 = vadd.f32 %v2542, %v2543
    %v2545 = vsel %vm2405, %v2103, 0.0
    %v2546 = vadd.f32 %v2544, %v2545
    %v2547 = vsel %vm2405, %v2109, 0.0
    %v2548 = vadd.f32 %v2546, %v2547
    %v2549 = vsel %vm2405, %v2115, 0.0
    %v2550 = vadd.f32 %v2548, %v2549
    %v2551 = vsel %vm2405, %v2121, 0.0
    %v2552 = vadd.f32 %v2550, %v2551
    %v2553 = vsel %vm2405, %v2127, 0.0
    %v2554 = vadd.f32 %v2552, %v2553
    %v2555 = vsel %vm2405, %v2133, 0.0
    %v2556 = vadd.f32 %v2554, %v2555
    %v2557 = vsel %vm2405, %v2139, 0.0
    %v2558 = vadd.f32 %v2556, %v2557
    %v2559 = vsel %vm2405, %v2145, 0.0
    %v2560 = vadd.f32 %v2558, %v2559
    %v2561 = vsel %vm2405, %v2151, 0.0
    %v2562 = vadd.f32 %v2560, %v2561
    %v2563 = vsel %vm2405, %v2157, 0.0
    %v2564 = vadd.f32 %v2562, %v2563
    %v2565 = vrot.slane %v2564, 4
    %v2566 = vadd.f32 %v2564, %v2565
    %v2567 = vrot.slane %v2566, 2
    %v2568 = vadd.f32 %v2566, %v2567
    %v2569 = vrot.slane %v2568, 1
    %v2570 = vadd.f32 %v2568, %v2569
    %v2571 = vrcp.pop 640.0
    %v2572 = vmul.f32 640.0, %v2571
    %v2573 = vsub.f32 1.0, %v2572
    %v2574 = vmul.f32 %v2571, %v2573
    %v2575 = vadd.f32 %v2571, %v2574
    %vm2576 = vweird.f32 %v2571
    %v2577 = vsel %vm2576, %v2571, %v2575
    %v2578 = vmul.f32 %v2404, %v2577
    %v2579 = vmul.f32 %v2570, %v2577
    %v2580 = vsub.f32 %v1680, %v2578
    %v2581 = vsub.f32 %v1683, %v2579
    %v2582 = vsub.f32 %v1686, %v2578
    %v2583 = vsub.f32 %v1689, %v2579
    %v2584 = vsub.f32 %v1692, %v2578
    %v2585 = vsub.f32 %v1695, %v2579
    %v2586 = vsub.f32 %v1698, %v2578
    %v2587 = vsub.f32 %v1701, %v2579
    %v2588 = vsub.f32 %v1704, %v2578
    %v2589 = vsub.f32 %v1707, %v2579
    %v2590 = vsub.f32 %v1710, %v2578
    %v2591 = vsub.f32 %v1713, %v2579
    %v2592 = vsub.f32 %v1716, %v2578
    %v2593 = vsub.f32 %v1719, %v2579
    %v2594 = vsub.f32 %v1722, %v2578
    %v2595 = vsub.f32 %v1725, %v2579
    %v2596 = vsub.f32 %v1728, %v2578
    %v2597 = vsub.f32 %v1731, %v2579
    %v2598 = vsub.f32 %v1734, %v2578
    %v2599 = vsub.f32 %v1737, %v2579
    %v2600 = vsub.f32 %v1740, %v2578
    %v2601 = vsub.f32 %v1743, %v2579
    %v2602 = vsub.f32 %v1746, %v2578
    %v2603 = vsub.f32 %v1749, %v2579
    %v2604 = vsub.f32 %v1752, %v2578
    %v2605 = vsub.f32 %v1755, %v2579
    %v2606 = vsub.f32 %v1758, %v2578
    %v2607 = vsub.f32 %v1761, %v2579
    %v2608 = vsub.f32 %v1764, %v2578
    %v2609 = vsub.f32 %v1767, %v2579
    %v2610 = vsub.f32 %v1770, %v2578
    %v2611 = vsub.f32 %v1773, %v2579
    %v2612 = vsub.f32 %v1776, %v2578
    %v2613 = vsub.f32 %v1779, %v2579
    %v2614 = vsub.f32 %v1782, %v2578
    %v2615 = vsub.f32 %v1785, %v2579
    %v2616 = vsub.f32 %v1788, %v2578
    %v2617 = vsub.f32 %v1791, %v2579
    %v2618 = vsub.f32 %v1794, %v2578
    %v2619 = vsub.f32 %v1797, %v2579
    %v2620 = vsub.f32 %v1800, %v2578
    %v2621 = vsub.f32 %v1803, %v2579
    %v2622 = vsub.f32 %v1806, %v2578
    %v2623 = vsub.f32 %v1809, %v2579
    %v2624 = vsub.f32 %v1812, %v2578
    %v2625 = vsub.f32 %v1815, %v2579
    %v2626 = vsub.f32 %v1818, %v2578
    %v2627 = vsub.f32 %v1821, %v2579
    %v2628 = vsub.f32 %v1824, %v2578
    %v2629 = vsub.f32 %v1827, %v2579
    %v2630 = vsub.f32 %v1830, %v2578
    %v2631 = vsub.f32 %v1833, %v2579
    %v2632 = vsub.f32 %v1836, %v2578
    %v2633 = vsub.f32 %v1839, %v2579
    %v2634 = vsub.f32 %v1842, %v2578
    %v2635 = vsub.f32 %v1845, %v2579
    %v2636 = vsub.f32 %v1848, %v2578
    %v2637 = vsub.f32 %v1851, %v2579
    %v2638 = vsub.f32 %v1854, %v2578
    %v2639 = vsub.f32 %v1857, %v2579
    %v2640 = vsub.f32 %v1860, %v2578
    %v2641 = vsub.f32 %v1863, %v2579
    %v2642 = vsub.f32 %v1866, %v2578
    %v2643 = vsub.f32 %v1869, %v2579
    %v2644 = vsub.f32 %v1872, %v2578
    %v2645 = vsub.f32 %v1875, %v2579
    %v2646 = vsub.f32 %v1878, %v2578
    %v2647 = vsub.f32 %v1881, %v2579
    %v2648 = vsub.f32 %v1884, %v2578
    %v2649 = vsub.f32 %v1887, %v2579
    %v2650 = vsub.f32 %v1890, %v2578
    %v2651 = vsub.f32 %v1893, %v2579
    %v2652 = vsub.f32 %v1896, %v2578
    %v2653 = vsub.f32 %v1899, %v2579
    %v2654 = vsub.f32 %v1902, %v2578
    %v2655 = vsub.f32 %v1905, %v2579
    %v2656 = vsub.f32 %v1908, %v2578
    %v2657 = vsub.f32 %v1911, %v2579
    %v2658 = vsub.f32 %v1914, %v2578
    %v2659 = vsub.f32 %v1917, %v2579
    %v2660 = vsub.f32 %v1920, %v2578
    %v2661 = vsub.f32 %v1923, %v2579
    %v2662 = vsub.f32 %v1926, %v2578
    %v2663 = vsub.f32 %v1929, %v2579
    %v2664 = vsub.f32 %v1932, %v2578
    %v2665 = vsub.f32 %v1935, %v2579
    %v2666 = vsub.f32 %v1938, %v2578
    %v2667 = vsub.f32 %v1941, %v2579
    %v2668 = vsub.f32 %v1944, %v2578
    %v2669 = vsub.f32 %v1947, %v2579
    %v2670 = vsub.f32 %v1950, %v2578
    %v2671 = vsub.f32 %v1953, %v2579
    %v2672 = vsub.f32 %v1956, %v2578
    %v2673 = vsub.f32 %v1959, %v2579
    %v2674 = vsub.f32 %v1962, %v2578
    %v2675 = vsub.f32 %v1965, %v2579
    %v2676 = vsub.f32 %v1968, %v2578
    %v2677 = vsub.f32 %v1971, %v2579
    %v2678 = vsub.f32 %v1974, %v2578
    %v2679 = vsub.f32 %v1977, %v2579
    %v2680 = vsub.f32 %v1980, %v2578
    %v2681 = vsub.f32 %v1983, %v2579
    %v2682 = vsub.f32 %v1986, %v2578
    %v2683 = vsub.f32 %v1989, %v2579
    %v2684 = vsub.f32 %v1992, %v2578
    %v2685 = vsub.f32 %v1995, %v2579
    %v2686 = vsub.f32 %v1998, %v2578
    %v2687 = vsub.f32 %v2001, %v2579
    %v2688 = vsub.f32 %v2004, %v2578
    %v2689 = vsub.f32 %v2007, %v2579
    %v2690 = vsub.f32 %v2010, %v2578
    %v2691 = vsub.f32 %v2013, %v2579
    %v2692 = vsub.f32 %v2016, %v2578
    %v2693 = vsub.f32 %v2019, %v2579
    %v2694 = vsub.f32 %v2022, %v2578
    %v2695 = vsub.f32 %v2025, %v2579
    %v2696 = vsub.f32 %v2028, %v2578
    %v2697 = vsub.f32 %v2031, %v2579
    %v2698 = vsub.f32 %v2034, %v2578
    %v2699 = vsub.f32 %v2037, %v2579
    %v2700 = vsub.f32 %v2040, %v2578
    %v2701 = vsub.f32 %v2043, %v2579
    %v2702 = vsub.f32 %v2046, %v2578
    %v2703 = vsub.f32 %v2049, %v2579
    %v2704 = vsub.f32 %v2052, %v2578
    %v2705 = vsub.f32 %v2055, %v2579
    %v2706 = vsub.f32 %v2058, %v2578
    %v2707 = vsub.f32 %v2061, %v2579
    %v2708 = vsub.f32 %v2064, %v2578
    %v2709 = vsub.f32 %v2067, %v2579
    %v2710 = vsub.f32 %v2070, %v2578
    %v2711 = vsub.f32 %v2073, %v2579
    %v2712 = vsub.f32 %v2076, %v2578
    %v2713 = vsub.f32 %v2079, %v2579
    %v2714 = vsub.f32 %v2082, %v2578
    %v2715 = vsub.f32 %v2085, %v2579
    %v2716 = vsub.f32 %v2088, %v2578
    %v2717 = vsub.f32 %v2091, %v2579
    %v2718 = vsub.f32 %v2094, %v2578
    %v2719 = vsub.f32 %v2097, %v2579
    %v2720 = vsub.f32 %v2100, %v2578
    %v2721 = vsub.f32 %v2103, %v2579
    %v2722 = vsub.f32 %v2106, %v2578
    %v2723 = vsub.f32 %v2109, %v2579
    %v2724 = vsub.f32 %v2112, %v2578
    %v2725 = vsub.f32 %v2115, %v2579
    %v2726 = vsub.f32 %v2118, %v2578
    %v2727 = vsub.f32 %v2121, %v2579
    %v2728 = vsub.f32 %v2124, %v2578
    %v2729 = vsub.f32 %v2127, %v2579
    %v2730 = vsub.f32 %v2130, %v2578
    %v2731 = vsub.f32 %v2133, %v2579
    %v2732 = vsub.f32 %v2136, %v2578
    %v2733 = vsub.f32 %v2139, %v2579
    %v2734 = vsub.f32 %v2142, %v2578
    %v2735 = vsub.f32 %v2145, %v2579
    %v2736 = vsub.f32 %v2148, %v2578
    %v2737 = vsub.f32 %v2151, %v2579
    %v2738 = vsub.f32 %v2154, %v2578
    %v2739 = vsub.f32 %v2157, %v2579
    %v2740 = vmul.f32 %v2580, %v2580
    %v2741 = vmul.f32 %v2581, %v2581
    %v2742 = vmul.f32 %v2582, %v2582
    %v2743 = vmul.f32 %v2583, %v2583
    %v2744 = vmul.f32 %v2584, %v2584
    %v2745 = vmul.f32 %v2585, %v2585
    %v2746 = vmul.f32 %v2586, %v2586
    %v2747 = vmul.f32 %v2587, %v2587
    %v2748 = vmul.f32 %v2588, %v2588
    %v2749 = vmul.f32 %v2589, %v2589
    %v2750 = vmul.f32 %v2590, %v2590
    %v2751 = vmul.f32 %v2591, %v2591
    %v2752 = vmul.f32 %v2592, %v2592
    %v2753 = vmul.f32 %v2593, %v2593
    %v2754 = vmul.f32 %v2594, %v2594
    %v2755 = vmul.f32 %v2595, %v2595
    %v2756 = vmul.f32 %v2596, %v2596
    %v2757 = vmul.f32 %v2597, %v2597
    %v2758 = vmul.f32 %v2598, %v2598
    %v2759 = vmul.f32 %v2599, %v2599
    %v2760 = vmul.f32 %v2600, %v2600
    %v2761 = vmul.f32 %v2601, %v2601
    %v2762 = vmul.f32 %v2602, %v2602
    %v2763 = vmul.f32 %v2603, %v2603
    %v2764 = vmul.f32 %v2604, %v2604
    %v2765 = vmul.f32 %v2605, %v2605
    %v2766 = vmul.f32 %v2606, %v2606
    %v2767 = vmul.f32 %v2607, %v2607
    %v2768 = vmul.f32 %v2608, %v2608
    %v2769 = vmul.f32 %v2609, %v2609
    %v2770 = vmul.f32 %v2610, %v2610
    %v2771 = vmul.f32 %v2611, %v2611
    %v2772 = vmul.f32 %v2612, %v2612
    %v2773 = vmul.f32 %v2613, %v2613
    %v2774 = vmul.f32 %v2614, %v2614
    %v2775 = vmul.f32 %v2615, %v2615
    %v2776 = vmul.f32 %v2616, %v2616
    %v2777 = vmul.f32 %v2617, %v2617
    %v2778 = vmul.f32 %v2618, %v2618
    %v2779 = vmul.f32 %v2619, %v2619
    %v2780 = vmul.f32 %v2620, %v2620
    %v2781 = vmul.f32 %v2621, %v2621
    %v2782 = vmul.f32 %v2622, %v2622
    %v2783 = vmul.f32 %v2623, %v2623
    %v2784 = vmul.f32 %v2624, %v2624
    %v2785 = vmul.f32 %v2625, %v2625
    %v2786 = vmul.f32 %v2626, %v2626
    %v2787 = vmul.f32 %v2627, %v2627
    %v2788 = vmul.f32 %v2628, %v2628
    %v2789 = vmul.f32 %v2629, %v2629
    %v2790 = vmul.f32 %v2630, %v2630
    %v2791 = vmul.f32 %v2631, %v2631
    %v2792 = vmul.f32 %v2632, %v2632
    %v2793 = vmul.f32 %v2633, %v2633
    %v2794 = vmul.f32 %v2634, %v2634
    %v2795 = vmul.f32 %v2635, %v2635
    %v2796 = vmul.f32 %v2636, %v2636
    %v2797 = vmul.f32 %v2637, %v2637
    %v2798 = vmul.f32 %v2638, %v2638
    %v2799 = vmul.f32 %v2639, %v2639
    %v2800 = vmul.f32 %v2640, %v2640
    %v2801 = vmul.f32 %v2641, %v2641
    %v2802 = vmul.f32 %v2642, %v2642
    %v2803 = vmul.f32 %v2643, %v2643
    %v2804 = vmul.f32 %v2644, %v2644
    %v2805 = vmul.f32 %v2645, %v2645
    %v2806 = vmul.f32 %v2646, %v2646
    %v2807 = vmul.f32 %v2647, %v2647
    %v2808 = vmul.f32 %v2648, %v2648
    %v2809 = vmul.f32 %v2649, %v2649
    %v2810 = vmul.f32 %v2650, %v2650
    %v2811 = vmul.f32 %v2651, %v2651
    %v2812 = vmul.f32 %v2652, %v2652
    %v2813 = vmul.f32 %v2653, %v2653
    %v2814 = vmul.f32 %v2654, %v2654
    %v2815 = vmul.f32 %v2655, %v2655
    %v2816 = vmul.f32 %v2656, %v2656
    %v2817 = vmul.f32 %v2657, %v2657
    %v2818 = vmul.f32 %v2658, %v2658
    %v2819 = vmul.f32 %v2659, %v2659
    %v2820 = vmul.f32 %v2660, %v2660
    %v2821 = vmul.f32 %v2661, %v2661
    %v2822 = vmul.f32 %v2662, %v2662
    %v2823 = vmul.f32 %v2663, %v2663
    %v2824 = vmul.f32 %v2664, %v2664
    %v2825 = vmul.f32 %v2665, %v2665
    %v2826 = vmul.f32 %v2666, %v2666
    %v2827 = vmul.f32 %v2667, %v2667
    %v2828 = vmul.f32 %v2668, %v2668
    %v2829 = vmul.f32 %v2669, %v2669
    %v2830 = vmul.f32 %v2670, %v2670
    %v2831 = vmul.f32 %v2671, %v2671
    %v2832 = vmul.f32 %v2672, %v2672
    %v2833 = vmul.f32 %v2673, %v2673
    %v2834 = vmul.f32 %v2674, %v2674
    %v2835 = vmul.f32 %v2675, %v2675
    %v2836 = vmul.f32 %v2676, %v2676
    %v2837 = vmul.f32 %v2677, %v2677
    %v2838 = vmul.f32 %v2678, %v2678
    %v2839 = vmul.f32 %v2679, %v2679
    %v2840 = vmul.f32 %v2680, %v2680
    %v2841 = vmul.f32 %v2681, %v2681
    %v2842 = vmul.f32 %v2682, %v2682
    %v2843 = vmul.f32 %v2683, %v2683
    %v2844 = vmul.f32 %v2684, %v2684
    %v2845 = vmul.f32 %v2685, %v2685
    %v2846 = vmul.f32 %v2686, %v2686
    %v2847 = vmul.f32 %v2687, %v2687
    %v2848 = vmul.f32 %v2688, %v2688
    %v2849 = vmul.f32 %v2689, %v2689
    %v2850 = vmul.f32 %v2690, %v2690
    %v2851 = vmul.f32 %v2691, %v2691
    %v2852 = vmul.f32 %v2692, %v2692
    %v2853 = vmul.f32 %v2693, %v2693
    %v2854 = vmul.f32 %v2694, %v2694
    %v2855 = vmul.f32 %v2695, %v2695
    %v2856 = vmul.f32 %v2696, %v2696
    %v2857 = vmul.f32 %v2697, %v2697
    %v2858 = vmul.f32 %v2698, %v2698
    %v2859 = vmul.f32 %v2699, %v2699
    %v2860 = vmul.f32 %v2700, %v2700
    %v2861 = vmul.f32 %v2701, %v2701
    %v2862 = vmul.f32 %v2702, %v2702
    %v2863 = vmul.f32 %v2703, %v2703
    %v2864 = vmul.f32 %v2704, %v2704
    %v2865 = vmul.f32 %v2705, %v2705
    %v2866 = vmul.f32 %v2706, %v2706
    %v2867 = vmul.f32 %v2707, %v2707
    %v2868 = vmul.f32 %v2708, %v2708
    %v2869 = vmul.f32 %v2709, %v2709
    %v2870 = vmul.f32 %v2710, %v2710
    %v2871 = vmul.f32 %v2711, %v2711
    %v2872 = vmul.f32 %v2712, %v2712
    %v2873 = vmul.f32 %v2713, %v2713
    %v2874 = vmul.f32 %v2714, %v2714
    %v2875 = vmul.f32 %v2715, %v2715
    %v2876 = vmul.f32 %v2716, %v2716
    %v2877 = vmul.f32 %v2717, %v2717
    %v2878 = vmul.f32 %v2718, %v2718
    %v2879 = vmul.f32 %v2719, %v2719
    %v2880 = vmul.f32 %v2720, %v2720
    %v2881 = vmul.f32 %v2721, %v2721
    %v2882 = vmul.f32 %v2722, %v2722
    %v2883 = vmul.f32 %v2723, %v2723
    %v2884 = vmul.f32 %v2724, %v2724
    %v2885 = vmul.f32 %v2725, %v2725
    %v2886 = vmul.f32 %v2726, %v2726
    %v2887 = vmul.f32 %v2727, %v2727
    %v2888 = vmul.f32 %v2728, %v2728
    %v2889 = vmul.f32 %v2729, %v2729
    %v2890 = vmul.f32 %v2730, %v2730
    %v2891 = vmul.f32 %v2731, %v2731
    %v2892 = vmul.f32 %v2732, %v2732
    %v2893 = vmul.f32 %v2733, %v2733
    %v2894 = vmul.f32 %v2734, %v2734
    %v2895 = vmul.f32 %v2735, %v2735
    %v2896 = vmul.f32 %v2736, %v2736
    %v2897 = vmul.f32 %v2737, %v2737
    %v2898 = vmul.f32 %v2738, %v2738
    %v2899 = vmul.f32 %v2739, %v2739
    %v2900 = vadd.f32 %v2740, %v2742
    %v2901 = vadd.f32 %v2900, %v2744
    %v2902 = vadd.f32 %v2901, %v2746
    %v2903 = vadd.f32 %v2902, %v2748
    %v2904 = vadd.f32 %v2903, %v2750
    %v2905 = vadd.f32 %v2904, %v2752
    %v2906 = vadd.f32 %v2905, %v2754
    %v2907 = vadd.f32 %v2906, %v2756
    %v2908 = vadd.f32 %v2907, %v2758
    %v2909 = vadd.f32 %v2908, %v2760
    %v2910 = vadd.f32 %v2909, %v2762
    %v2911 = vadd.f32 %v2910, %v2764
    %v2912 = vadd.f32 %v2911, %v2766
    %v2913 = vadd.f32 %v2912, %v2768
    %v2914 = vadd.f32 %v2913, %v2770
    %v2915 = vadd.f32 %v2914, %v2772
    %v2916 = vadd.f32 %v2915, %v2774
    %v2917 = vadd.f32 %v2916, %v2776
    %v2918 = vadd.f32 %v2917, %v2778
    %v2919 = vadd.f32 %v2918, %v2780
    %v2920 = vadd.f32 %v2919, %v2782
    %v2921 = vadd.f32 %v2920, %v2784
    %v2922 = vadd.f32 %v2921, %v2786
    %v2923 = vadd.f32 %v2922, %v2788
    %v2924 = vadd.f32 %v2923, %v2790
    %v2925 = vadd.f32 %v2924, %v2792
    %v2926 = vadd.f32 %v2925, %v2794
    %v2927 = vadd.f32 %v2926, %v2796
    %v2928 = vadd.f32 %v2927, %v2798
    %v2929 = vadd.f32 %v2928, %v2800
    %v2930 = vadd.f32 %v2929, %v2802
    %v2931 = vadd.f32 %v2930, %v2804
    %v2932 = vadd.f32 %v2931, %v2806
    %v2933 = vadd.f32 %v2932, %v2808
    %v2934 = vadd.f32 %v2933, %v2810
    %v2935 = vadd.f32 %v2934, %v2812
    %v2936 = vadd.f32 %v2935, %v2814
    %v2937 = vadd.f32 %v2936, %v2816
    %v2938 = vadd.f32 %v2937, %v2818
    %v2939 = vadd.f32 %v2938, %v2820
    %v2940 = vadd.f32 %v2939, %v2822
    %v2941 = vadd.f32 %v2940, %v2824
    %v2942 = vadd.f32 %v2941, %v2826
    %v2943 = vadd.f32 %v2942, %v2828
    %v2944 = vadd.f32 %v2943, %v2830
    %v2945 = vadd.f32 %v2944, %v2832
    %v2946 = vadd.f32 %v2945, %v2834
    %v2947 = vadd.f32 %v2946, %v2836
    %v2948 = vadd.f32 %v2947, %v2838
    %v2949 = vadd.f32 %v2948, %v2840
    %v2950 = vadd.f32 %v2949, %v2842
    %v2951 = vadd.f32 %v2950, %v2844
    %v2952 = vadd.f32 %v2951, %v2846
    %v2953 = vadd.f32 %v2952, %v2848
    %v2954 = vadd.f32 %v2953, %v2850
    %v2955 = vadd.f32 %v2954, %v2852
    %v2956 = vadd.f32 %v2955, %v2854
    %v2957 = vadd.f32 %v2956, %v2856
    %v2958 = vadd.f32 %v2957, %v2858
    %v2959 = vadd.f32 %v2958, %v2860
    %v2960 = vadd.f32 %v2959, %v2862
    %v2961 = vadd.f32 %v2960, %v2864
    %v2962 = vadd.f32 %v2961, %v2866
    %v2963 = vadd.f32 %v2962, %v2868
    %v2964 = vadd.f32 %v2963, %v2870
    %v2965 = vadd.f32 %v2964, %v2872
    %v2966 = vadd.f32 %v2965, %v2874
    %v2967 = vadd.f32 %v2966, %v2876
    %v2968 = vadd.f32 %v2967, %v2878
    %v2969 = vadd.f32 %v2968, %v2880
    %v2970 = vadd.f32 %v2969, %v2882
    %v2971 = vadd.f32 %v2970, %v2884
    %v2972 = vadd.f32 %v2971, %v2886
    %v2973 = vadd.f32 %v2972, %v2888
    %v2974 = vadd.f32 %v2973, %v2890
    %v2975 = vadd.f32 %v2974, %v2892
    %v2976 = vadd.f32 %v2975, %v2894
    %v2977 = vadd.f32 %v2976, %v2896
    %v2978 = vadd.f32 %v2977, %v2898
    %v2979 = vrot.slane %v2978, 4
    %v2980 = vadd.f32 %v2978, %v2979
    %v2981 = vrot.slane %v2980, 2
    %v2982 = vadd.f32 %v2980, %v2981
    %v2983 = vrot.slane %v2982, 1
    %v2984 = vadd.f32 %v2982, %v2983
    %v2985 = vsel %vm2405, %v2741, 0.0
    %v2986 = vsel %vm2405, %v2743, 0.0
    %v2987 = vadd.f32 %v2985, %v2986
    %v2988 = vsel %vm2405, %v2745, 0.0
    %v2989 = vadd.f32 %v2987, %v2988
    %v2990 = vsel %vm2405, %v2747, 0.0
    %v2991 = vadd.f32 %v2989, %v2990
    %v2992 = vsel %vm2405, %v2749, 0.0
    %v2993 = vadd.f32 %v2991, %v2992
    %v2994 = vsel %vm2405, %v2751, 0.0
    %v2995 = vadd.f32 %v2993, %v2994
    %v2996 = vsel %vm2405, %v2753, 0.0
    %v2997 = vadd.f32 %v2995, %v2996
    %v2998 = vsel %vm2405, %v2755, 0.0
    %v2999 = vadd.f32 %v2997, %v2998
    %v3000 = vsel %vm2405, %v2757, 0.0
    %v3001 = vadd.f32 %v2999, %v3000
    %v3002 = vsel %vm2405, %v2759, 0.0
    %v3003 = vadd.f32 %v3001, %v3002
    %v3004 = vsel %vm2405, %v2761, 0.0
    %v3005 = vadd.f32 %v3003, %v3004
    %v3006 = vsel %vm2405, %v2763, 0.0
    %v3007 = vadd.f32 %v3005, %v3006
    %v3008 = vsel %vm2405, %v2765, 0.0
    %v3009 = vadd.f32 %v3007, %v3008
    %v3010 = vsel %vm2405, %v2767, 0.0
    %v3011 = vadd.f32 %v3009, %v3010
    %v3012 = vsel %vm2405, %v2769, 0.0
    %v3013 = vadd.f32 %v3011, %v3012
    %v3014 = vsel %vm2405, %v2771, 0.0
    %v3015 = vadd.f32 %v3013, %v3014
    %v3016 = vsel %vm2405, %v2773, 0.0
    %v3017 = vadd.f32 %v3015, %v3016
    %v3018 = vsel %vm2405, %v2775, 0.0
    %v3019 = vadd.f32 %v3017, %v3018
    %v3020 = vsel %vm2405, %v2777, 0.0
    %v3021 = vadd.f32 %v3019, %v3020
    %v3022 = vsel %vm2405, %v2779, 0.0
    %v3023 = vadd.f32 %v3021, %v3022
    %v3024 = vsel %vm2405, %v2781, 0.0
    %v3025 = vadd.f32 %v3023, %v3024
    %v3026 = vsel %vm2405, %v2783, 0.0
    %v3027 = vadd.f32 %v3025, %v3026
    %v3028 = vsel %vm2405, %v2785, 0.0
    %v3029 = vadd.f32 %v3027, %v3028
    %v3030 = vsel %vm2405, %v2787, 0.0
    %v3031 = vadd.f32 %v3029, %v3030
    %v3032 = vsel %vm2405, %v2789, 0.0
    %v3033 = vadd.f32 %v3031, %v3032
    %v3034 = vsel %vm2405, %v2791, 0.0
    %v3035 = vadd.f32 %v3033, %v3034
    %v3036 = vsel %vm2405, %v2793, 0.0
    %v3037 = vadd.f32 %v3035, %v3036
    %v3038 = vsel %vm2405, %v2795, 0.0
    %v3039 = vadd.f32 %v3037, %v3038
    %v3040 = vsel %vm2405, %v2797, 0.0
    %v3041 = vadd.f32 %v3039, %v3040
    %v3042 = vsel %vm2405, %v2799, 0.0
    %v3043 = vadd.f32 %v3041, %v3042
    %v3044 = vsel %vm2405, %v2801, 0.0
    %v3045 = vadd.f32 %v3043, %v3044
    %v3046 = vsel %vm2405, %v2803, 0.0
    %v3047 = vadd.f32 %v3045, %v3046
    %v3048 = vsel %vm2405, %v2805, 0.0
    %v3049 = vadd.f32 %v3047, %v3048
    %v3050 = vsel %vm2405, %v2807, 0.0
    %v3051 = vadd.f32 %v3049, %v3050
    %v3052 = vsel %vm2405, %v2809, 0.0
    %v3053 = vadd.f32 %v3051, %v3052
    %v3054 = vsel %vm2405, %v2811, 0.0
    %v3055 = vadd.f32 %v3053, %v3054
    %v3056 = vsel %vm2405, %v2813, 0.0
    %v3057 = vadd.f32 %v3055, %v3056
    %v3058 = vsel %vm2405, %v2815, 0.0
    %v3059 = vadd.f32 %v3057, %v3058
    %v3060 = vsel %vm2405, %v2817, 0.0
    %v3061 = vadd.f32 %v3059, %v3060
    %v3062 = vsel %vm2405, %v2819, 0.0
    %v3063 = vadd.f32 %v3061, %v3062
    %v3064 = vsel %vm2405, %v2821, 0.0
    %v3065 = vadd.f32 %v3063, %v3064
    %v3066 = vsel %vm2405, %v2823, 0.0
    %v3067 = vadd.f32 %v3065, %v3066
    %v3068 = vsel %vm2405, %v2825, 0.0
    %v3069 = vadd.f32 %v3067, %v3068
    %v3070 = vsel %vm2405, %v2827, 0.0
    %v3071 = vadd.f32 %v3069, %v3070
    %v3072 = vsel %vm2405, %v2829, 0.0
    %v3073 = vadd.f32 %v3071, %v3072
    %v3074 = vsel %vm2405, %v2831, 0.0
    %v3075 = vadd.f32 %v3073, %v3074
    %v3076 = vsel %vm2405, %v2833, 0.0
    %v3077 = vadd.f32 %v3075, %v3076
    %v3078 = vsel %vm2405, %v2835, 0.0
    %v3079 = vadd.f32 %v3077, %v3078
    %v3080 = vsel %vm2405, %v2837, 0.0
    %v3081 = vadd.f32 %v3079, %v3080
    %v3082 = vsel %vm2405, %v2839, 0.0
    %v3083 = vadd.f32 %v3081, %v3082
    %v3084 = vsel %vm2405, %v2841, 0.0
    %v3085 = vadd.f32 %v3083, %v3084
    %v3086 = vsel %vm2405, %v2843, 0.0
    %v3087 = vadd.f32 %v3085, %v3086
    %v3088 = vsel %vm2405, %v2845, 0.0
    %v3089 = vadd.f32 %v3087, %v3088
    %v3090 = vsel %vm2405, %v2847, 0.0
    %v3091 = vadd.f32 %v3089, %v3090
    %v3092 = vsel %vm2405, %v2849, 0.0
    %v3093 = vadd.f32 %v3091, %v3092
    %v3094 = vsel %vm2405, %v2851, 0.0
    %v3095 = vadd.f32 %v3093, %v3094
    %v3096 = vsel %vm2405, %v2853, 0.0
    %v3097 = vadd.f32 %v3095, %v3096
    %v3098 = vsel %vm2405, %v2855, 0.0
    %v3099 = vadd.f32 %v3097, %v3098
    %v3100 = vsel %vm2405, %v2857, 0.0
    %v3101 = vadd.f32 %v3099, %v3100
    %v3102 = vsel %vm2405, %v2859, 0.0
    %v3103 = vadd.f32 %v3101, %v3102
    %v3104 = vsel %vm2405, %v2861, 0.0
    %v3105 = vadd.f32 %v3103, %v3104
    %v3106 = vsel %vm2405, %v2863, 0.0
    %v3107 = vadd.f32 %v3105, %v3106
    %v3108 = vsel %vm2405, %v2865, 0.0
    %v3109 = vadd.f32 %v3107, %v3108
    %v3110 = vsel %vm2405, %v2867, 0.0
    %v3111 = vadd.f32 %v3109, %v3110
    %v3112 = vsel %vm2405, %v2869, 0.0
    %v3113 = vadd.f32 %v3111, %v3112
    %v3114 = vsel %vm2405, %v2871, 0.0
    %v3115 = vadd.f32 %v3113, %v3114
    %v3116 = vsel %vm2405, %v2873, 0.0
    %v3117 = vadd.f32 %v3115, %v3116
    %v3118 = vsel %vm2405, %v2875, 0.0
    %v3119 = vadd.f32 %v3117, %v3118
    %v3120 = vsel %vm2405, %v2877, 0.0
    %v3121 = vadd.f32 %v3119, %v3120
    %v3122 = vsel %vm2405, %v2879, 0.0
    %v3123 = vadd.f32 %v3121, %v3122
    %v3124 = vsel %vm2405, %v2881, 0.0
    %v3125 = vadd.f32 %v3123, %v3124
    %v3126 = vsel %vm2405, %v2883, 0.0
    %v3127 = vadd.f32 %v3125, %v3126
    %v3128 = vsel %vm2405, %v2885, 0.0
    %v3129 = vadd.f32 %v3127, %v3128
    %v3130 = vsel %vm2405, %v2887, 0.0
    %v3131 = vadd.f32 %v3129, %v3130
    %v3132 = vsel %vm2405, %v2889, 0.0
    %v3133 = vadd.f32 %v3131, %v3132
    %v3134 = vsel %vm2405, %v2891, 0.0
    %v3135 = vadd.f32 %v3133, %v3134
    %v3136 = vsel %vm2405, %v2893, 0.0
    %v3137 = vadd.f32 %v3135, %v3136
    %v3138 = vsel %vm2405, %v2895, 0.0
    %v3139 = vadd.f32 %v3137, %v3138
    %v3140 = vsel %vm2405, %v2897, 0.0
    %v3141 = vadd.f32 %v3139, %v3140
    %v3142 = vsel %vm2405, %v2899, 0.0
    %v3143 = vadd.f32 %v3141, %v3142
    %v3144 = vrot.slane %v3143, 4
    %v3145 = vadd.f32 %v3143, %v3144
    %v3146 = vrot.slane %v3145, 2
    %v3147 = vadd.f32 %v3145, %v3146
    %v3148 = vrot.slane %v3147, 1
    %v3149 = vadd.f32 %v3147, %v3148
    %v3150 = vmul.f32 %v2984, %v2577
    %v3151 = vmul.f32 %v3149, %v2577
    %v3152 = vadd.f32 %v3150, 1e-05
    %v3153 = vadd.f32 %v3151, 1e-05
    %v3154 = vrsqrt.pop %v3152
    %v3155 = vmul.f32 %v3154, %v3152
    %v3156 = vmul.f32 %v3155, %v3154
    %v3157 = vmul.f32 0.5, %v3156
    %v3158 = vsub.f32 1.5, %v3157
    %v3159 = vmul.f32 %v3154, %v3158
    %vm3160 = vweird.f32 %v3152
    %vm3161 = vweird.f32 %v3154
    %vm3162 = vmor %vm3160, %vm3161
    %v3163 = vsel %vm3162, %v3154, %v3159
    %v3164 = vrsqrt.pop %v3153
    %v3165 = vmul.f32 %v3164, %v3153
    %v3166 = vmul.f32 %v3165, %v3164
    %v3167 = vmul.f32 0.5, %v3166
    %v3168 = vsub.f32 1.5, %v3167
    %v3169 = vmul.f32 %v3164, %v3168
    %vm3170 = vweird.f32 %v3153
    %vm3171 = vweird.f32 %v3164
    %vm3172 = vmor %vm3170, %vm3171
    %v3173 = vsel %vm3172, %v3164, %v3169
    %v3176 = vrot.slane %v3173, 7
    %vm3177 = vcmask 1040384
    %v3178 = vsel %vm3177, %v3163, %v3176
    %v3180 = vmul.f32 %v2318, %v3178
    %v3182 = vperm.slane %v3180, 0
    %v3183 = vperm.slane %v3180, 1
    %v3186 = vmul.f32 %v2578, %v3182
    %v3187 = vmul.f32 %v2579, %v3183
    %v3190 = vrot.slane %v3187, 7
    %v3191 = vsel %vm3177, %v3186, %v3190
    %v3193 = vsub.f32 %v2319, %v3191
    %v3194 = vmul.f32 %v549, %v3182
    %v3195 = vmul.f32 %v958, %v3183
    %v3196 = vmul.f32 %v551, %v3182
    %v3197 = vmul.f32 %v960, %v3183
    %v3198 = vmul.f32 %v554, %v3182
    %v3199 = vmul.f32 %v963, %v3183
    %v3200 = vmul.f32 %v556, %v3182
    %v3201 = vmul.f32 %v965, %v3183
    %v3202 = vmul.f32 %v559, %v3182
    %v3203 = vmul.f32 %v968, %v3183
    %v3204 = vmul.f32 %v561, %v3182
    %v3205 = vmul.f32 %v970, %v3183
    %v3206 = vmul.f32 %v564, %v3182
    %v3207 = vmul.f32 %v973, %v3183
    %v3208 = vmul.f32 %v566, %v3182
    %v3209 = vmul.f32 %v975, %v3183
    %v3210 = vmul.f32 %v569, %v3182
    %v3211 = vmul.f32 %v978, %v3183
    %v3212 = vmul.f32 %v571, %v3182
    %v3213 = vmul.f32 %v980, %v3183
    %v3214 = vmul.f32 %v574, %v3182
    %v3215 = vmul.f32 %v983, %v3183
    %v3216 = vmul.f32 %v576, %v3182
    %v3217 = vmul.f32 %v985, %v3183
    %v3218 = vmul.f32 %v579, %v3182
    %v3219 = vmul.f32 %v988, %v3183
    %v3220 = vmul.f32 %v581, %v3182
    %v3221 = vmul.f32 %v990, %v3183
    %v3222 = vmul.f32 %v584, %v3182
    %v3223 = vmul.f32 %v993, %v3183
    %v3224 = vmul.f32 %v586, %v3182
    %v3225 = vmul.f32 %v995, %v3183
    %v3226 = vmul.f32 %v589, %v3182
    %v3227 = vmul.f32 %v998, %v3183
    %v3228 = vmul.f32 %v591, %v3182
    %v3229 = vmul.f32 %v1000, %v3183
    %v3230 = vmul.f32 %v594, %v3182
    %v3231 = vmul.f32 %v1003, %v3183
    %v3232 = vmul.f32 %v596, %v3182
    %v3233 = vmul.f32 %v1005, %v3183
    %v3234 = vmul.f32 %v599, %v3182
    %v3235 = vmul.f32 %v1008, %v3183
    %v3236 = vmul.f32 %v601, %v3182
    %v3237 = vmul.f32 %v1010, %v3183
    %v3238 = vmul.f32 %v604, %v3182
    %v3239 = vmul.f32 %v1013, %v3183
    %v3240 = vmul.f32 %v606, %v3182
    %v3241 = vmul.f32 %v1015, %v3183
    %v3242 = vmul.f32 %v609, %v3182
    %v3243 = vmul.f32 %v1018, %v3183
    %v3244 = vmul.f32 %v611, %v3182
    %v3245 = vmul.f32 %v1020, %v3183
    %v3246 = vmul.f32 %v614, %v3182
    %v3247 = vmul.f32 %v1023, %v3183
    %v3248 = vmul.f32 %v616, %v3182
    %v3249 = vmul.f32 %v1025, %v3183
    %v3250 = vmul.f32 %v619, %v3182
    %v3251 = vmul.f32 %v1028, %v3183
    %v3252 = vmul.f32 %v621, %v3182
    %v3253 = vmul.f32 %v1030, %v3183
    %v3254 = vmul.f32 %v624, %v3182
    %v3255 = vmul.f32 %v1033, %v3183
    %v3256 = vmul.f32 %v626, %v3182
    %v3257 = vmul.f32 %v1035, %v3183
    %v3258 = vmul.f32 %v629, %v3182
    %v3259 = vmul.f32 %v1038, %v3183
    %v3260 = vmul.f32 %v631, %v3182
    %v3261 = vmul.f32 %v1040, %v3183
    %v3262 = vmul.f32 %v634, %v3182
    %v3263 = vmul.f32 %v1043, %v3183
    %v3264 = vmul.f32 %v636, %v3182
    %v3265 = vmul.f32 %v1045, %v3183
    %v3266 = vmul.f32 %v639, %v3182
    %v3267 = vmul.f32 %v1048, %v3183
    %v3268 = vmul.f32 %v641, %v3182
    %v3269 = vmul.f32 %v1050, %v3183
    %v3270 = vmul.f32 %v644, %v3182
    %v3271 = vmul.f32 %v1053, %v3183
    %v3272 = vmul.f32 %v646, %v3182
    %v3273 = vmul.f32 %v1055, %v3183
    %v3274 = vmul.f32 %v649, %v3182
    %v3275 = vmul.f32 %v1058, %v3183
    %v3276 = vmul.f32 %v651, %v3182
    %v3277 = vmul.f32 %v1060, %v3183
    %v3278 = vmul.f32 %v654, %v3182
    %v3279 = vmul.f32 %v1063, %v3183
    %v3280 = vmul.f32 %v656, %v3182
    %v3281 = vmul.f32 %v1065, %v3183
    %v3282 = vmul.f32 %v659, %v3182
    %v3283 = vmul.f32 %v1068, %v3183
    %v3284 = vmul.f32 %v661, %v3182
    %v3285 = vmul.f32 %v1070, %v3183
    %v3286 = vmul.f32 %v664, %v3182
    %v3287 = vmul.f32 %v1073, %v3183
    %v3288 = vmul.f32 %v666, %v3182
    %v3289 = vmul.f32 %v1075, %v3183
    %v3290 = vmul.f32 %v669, %v3182
    %v3291 = vmul.f32 %v1078, %v3183
    %v3292 = vmul.f32 %v671, %v3182
    %v3293 = vmul.f32 %v1080, %v3183
    %v3294 = vmul.f32 %v674, %v3182
    %v3295 = vmul.f32 %v1083, %v3183
    %v3296 = vmul.f32 %v676, %v3182
    %v3297 = vmul.f32 %v1085, %v3183
    %v3298 = vmul.f32 %v679, %v3182
    %v3299 = vmul.f32 %v1088, %v3183
    %v3300 = vmul.f32 %v681, %v3182
    %v3301 = vmul.f32 %v1090, %v3183
    %v3302 = vmul.f32 %v684, %v3182
    %v3303 = vmul.f32 %v1093, %v3183
    %v3304 = vmul.f32 %v686, %v3182
    %v3305 = vmul.f32 %v1095, %v3183
    %v3306 = vmul.f32 %v689, %v3182
    %v3307 = vmul.f32 %v1098, %v3183
    %v3308 = vmul.f32 %v691, %v3182
    %v3309 = vmul.f32 %v1100, %v3183
    %v3310 = vmul.f32 %v694, %v3182
    %v3311 = vmul.f32 %v1103, %v3183
    %v3312 = vmul.f32 %v696, %v3182
    %v3313 = vmul.f32 %v1105, %v3183
    %v3314 = vmul.f32 %v699, %v3182
    %v3315 = vmul.f32 %v1108, %v3183
    %v3316 = vmul.f32 %v701, %v3182
    %v3317 = vmul.f32 %v1110, %v3183
    %v3318 = vmul.f32 %v704, %v3182
    %v3319 = vmul.f32 %v1113, %v3183
    %v3320 = vmul.f32 %v706, %v3182
    %v3321 = vmul.f32 %v1115, %v3183
    %v3322 = vmul.f32 %v709, %v3182
    %v3323 = vmul.f32 %v1118, %v3183
    %v3324 = vmul.f32 %v711, %v3182
    %v3325 = vmul.f32 %v1120, %v3183
    %v3326 = vmul.f32 %v714, %v3182
    %v3327 = vmul.f32 %v1123, %v3183
    %v3328 = vmul.f32 %v716, %v3182
    %v3329 = vmul.f32 %v1125, %v3183
    %v3330 = vmul.f32 %v719, %v3182
    %v3331 = vmul.f32 %v1128, %v3183
    %v3332 = vmul.f32 %v721, %v3182
    %v3333 = vmul.f32 %v1130, %v3183
    %v3334 = vmul.f32 %v724, %v3182
    %v3335 = vmul.f32 %v1133, %v3183
    %v3336 = vmul.f32 %v726, %v3182
    %v3337 = vmul.f32 %v1135, %v3183
    %v3338 = vmul.f32 %v729, %v3182
    %v3339 = vmul.f32 %v1138, %v3183
    %v3340 = vmul.f32 %v731, %v3182
    %v3341 = vmul.f32 %v1140, %v3183
    %v3342 = vmul.f32 %v734, %v3182
    %v3343 = vmul.f32 %v1143, %v3183
    %v3344 = vmul.f32 %v736, %v3182
    %v3345 = vmul.f32 %v1145, %v3183
    %v3346 = vmul.f32 %v739, %v3182
    %v3347 = vmul.f32 %v1148, %v3183
    %v3348 = vmul.f32 %v741, %v3182
    %v3349 = vmul.f32 %v1150, %v3183
    %v3350 = vmul.f32 %v744, %v3182
    %v3351 = vmul.f32 %v1153, %v3183
    %v3352 = vmul.f32 %v746, %v3182
    %v3353 = vmul.f32 %v1155, %v3183
    %v3354 = vmul.f32 %v749, %v3182
    %v3355 = vmul.f32 %v1158, %v3183
    %v3356 = vmul.f32 %v751, %v3182
    %v3357 = vmul.f32 %v1160, %v3183
    %v3358 = vmul.f32 %v754, %v3182
    %v3359 = vmul.f32 %v1163, %v3183
    %v3360 = vmul.f32 %v756, %v3182
    %v3361 = vmul.f32 %v1165, %v3183
    %v3362 = vmul.f32 %v759, %v3182
    %v3363 = vmul.f32 %v1168, %v3183
    %v3364 = vmul.f32 %v761, %v3182
    %v3365 = vmul.f32 %v1170, %v3183
    %v3366 = vmul.f32 %v764, %v3182
    %v3367 = vmul.f32 %v1173, %v3183
    %v3368 = vmul.f32 %v766, %v3182
    %v3369 = vmul.f32 %v1175, %v3183
    %v3370 = vmul.f32 %v769, %v3182
    %v3371 = vmul.f32 %v1178, %v3183
    %v3372 = vmul.f32 %v771, %v3182
    %v3373 = vmul.f32 %v1180, %v3183
    %v3374 = vmul.f32 %v774, %v3182
    %v3375 = vmul.f32 %v1183, %v3183
    %v3376 = vmul.f32 %v776, %v3182
    %v3377 = vmul.f32 %v1185, %v3183
    %v3378 = vmul.f32 %v779, %v3182
    %v3379 = vmul.f32 %v1188, %v3183
    %v3380 = vmul.f32 %v781, %v3182
    %v3381 = vmul.f32 %v1190, %v3183
    %v3382 = vmul.f32 %v784, %v3182
    %v3383 = vmul.f32 %v1193, %v3183
    %v3384 = vmul.f32 %v786, %v3182
    %v3385 = vmul.f32 %v1195, %v3183
    %v3386 = vmul.f32 %v789, %v3182
    %v3387 = vmul.f32 %v1198, %v3183
    %v3388 = vmul.f32 %v791, %v3182
    %v3389 = vmul.f32 %v1200, %v3183
    %v3390 = vmul.f32 %v794, %v3182
    %v3391 = vmul.f32 %v1203, %v3183
    %v3392 = vmul.f32 %v796, %v3182
    %v3393 = vmul.f32 %v1205, %v3183
    %v3394 = vmul.f32 %v799, %v3182
    %v3395 = vmul.f32 %v1208, %v3183
    %v3396 = vmul.f32 %v801, %v3182
    %v3397 = vmul.f32 %v1210, %v3183
    %v3398 = vmul.f32 %v804, %v3182
    %v3399 = vmul.f32 %v1213, %v3183
    %v3400 = vmul.f32 %v806, %v3182
    %v3401 = vmul.f32 %v1215, %v3183
    %v3402 = vmul.f32 %v809, %v3182
    %v3403 = vmul.f32 %v1218, %v3183
    %v3404 = vmul.f32 %v811, %v3182
    %v3405 = vmul.f32 %v1220, %v3183
    %v3406 = vmul.f32 %v814, %v3182
    %v3407 = vmul.f32 %v1223, %v3183
    %v3408 = vmul.f32 %v816, %v3182
    %v3409 = vmul.f32 %v1225, %v3183
    %v3410 = vmul.f32 %v819, %v3182
    %v3411 = vmul.f32 %v1228, %v3183
    %v3412 = vmul.f32 %v821, %v3182
    %v3413 = vmul.f32 %v1230, %v3183
    %v3414 = vmul.f32 %v824, %v3182
    %v3415 = vmul.f32 %v1233, %v3183
    %v3416 = vmul.f32 %v826, %v3182
    %v3417 = vmul.f32 %v1235, %v3183
    %v3418 = vmul.f32 %v829, %v3182
    %v3419 = vmul.f32 %v1238, %v3183
    %v3420 = vmul.f32 %v831, %v3182
    %v3421 = vmul.f32 %v1240, %v3183
    %v3422 = vmul.f32 %v834, %v3182
    %v3423 = vmul.f32 %v1243, %v3183
    %v3424 = vmul.f32 %v836, %v3182
    %v3425 = vmul.f32 %v1245, %v3183
    %v3426 = vmul.f32 %v839, %v3182
    %v3427 = vmul.f32 %v1248, %v3183
    %v3428 = vmul.f32 %v841, %v3182
    %v3429 = vmul.f32 %v1250, %v3183
    %v3430 = vmul.f32 %v844, %v3182
    %v3431 = vmul.f32 %v1253, %v3183
    %v3432 = vmul.f32 %v846, %v3182
    %v3433 = vmul.f32 %v1255, %v3183
    %v3434 = vmul.f32 %v849, %v3182
    %v3435 = vmul.f32 %v1258, %v3183
    %v3436 = vmul.f32 %v851, %v3182
    %v3437 = vmul.f32 %v1260, %v3183
    %v3438 = vmul.f32 %v854, %v3182
    %v3439 = vmul.f32 %v1263, %v3183
    %v3440 = vmul.f32 %v856, %v3182
    %v3441 = vmul.f32 %v1265, %v3183
    %v3442 = vmul.f32 %v859, %v3182
    %v3443 = vmul.f32 %v1268, %v3183
    %v3444 = vmul.f32 %v861, %v3182
    %v3445 = vmul.f32 %v1270, %v3183
    %v3446 = vmul.f32 %v864, %v3182
    %v3447 = vmul.f32 %v1273, %v3183
    %v3448 = vmul.f32 %v866, %v3182
    %v3449 = vmul.f32 %v1275, %v3183
    %v3450 = vmul.f32 %v869, %v3182
    %v3451 = vmul.f32 %v1278, %v3183
    %v3452 = vmul.f32 %v871, %v3182
    %v3453 = vmul.f32 %v1280, %v3183
    %v3454 = vmul.f32 %v874, %v3182
    %v3455 = vmul.f32 %v1283, %v3183
    %v3456 = vmul.f32 %v876, %v3182
    %v3457 = vmul.f32 %v1285, %v3183
    %v3458 = vmul.f32 %v879, %v3182
    %v3459 = vmul.f32 %v1288, %v3183
    %v3460 = vmul.f32 %v881, %v3182
    %v3461 = vmul.f32 %v1290, %v3183
    %v3462 = vmul.f32 %v884, %v3182
    %v3463 = vmul.f32 %v1293, %v3183
    %v3464 = vmul.f32 %v886, %v3182
    %v3465 = vmul.f32 %v1295, %v3183
    %v3466 = vmul.f32 %v889, %v3182
    %v3467 = vmul.f32 %v1298, %v3183
    %v3468 = vmul.f32 %v891, %v3182
    %v3469 = vmul.f32 %v1300, %v3183
    %v3470 = vmul.f32 %v894, %v3182
    %v3471 = vmul.f32 %v1303, %v3183
    %v3472 = vmul.f32 %v896, %v3182
    %v3473 = vmul.f32 %v1305, %v3183
    %v3474 = vmul.f32 %v899, %v3182
    %v3475 = vmul.f32 %v1308, %v3183
    %v3476 = vmul.f32 %v901, %v3182
    %v3477 = vmul.f32 %v1310, %v3183
    %v3478 = vmul.f32 %v904, %v3182
    %v3479 = vmul.f32 %v1313, %v3183
    %v3480 = vmul.f32 %v906, %v3182
    %v3481 = vmul.f32 %v1315, %v3183
    %v3482 = vmul.f32 %v909, %v3182
    %v3483 = vmul.f32 %v1318, %v3183
    %v3484 = vmul.f32 %v911, %v3182
    %v3485 = vmul.f32 %v1320, %v3183
    %v3486 = vmul.f32 %v914, %v3182
    %v3487 = vmul.f32 %v1323, %v3183
    %v3488 = vmul.f32 %v916, %v3182
    %v3489 = vmul.f32 %v1325, %v3183
    %v3490 = vmul.f32 %v919, %v3182
    %v3491 = vmul.f32 %v1328, %v3183
    %v3492 = vmul.f32 %v921, %v3182
    %v3493 = vmul.f32 %v1330, %v3183
    %v3494 = vmul.f32 %v924, %v3182
    %v3495 = vmul.f32 %v1333, %v3183
    %v3496 = vmul.f32 %v926, %v3182
    %v3497 = vmul.f32 %v1335, %v3183
    %v3498 = vmul.f32 %v929, %v3182
    %v3499 = vmul.f32 %v1338, %v3183
    %v3500 = vmul.f32 %v931, %v3182
    %v3501 = vmul.f32 %v1340, %v3183
    %v3502 = vmul.f32 %v934, %v3182
    %v3503 = vmul.f32 %v1343, %v3183
    %v3504 = vmul.f32 %v936, %v3182
    %v3505 = vmul.f32 %v1345, %v3183
    %v3506 = vmul.f32 %v939, %v3182
    %v3507 = vmul.f32 %v1348, %v3183
    %v3508 = vmul.f32 %v941, %v3182
    %v3509 = vmul.f32 %v1350, %v3183
    %v3510 = vmul.f32 %v944, %v3182
    %v3511 = vmul.f32 %v1353, %v3183
    %v3512 = vmul.f32 %v946, %v3182
    %v3513 = vmul.f32 %v1355, %v3183
    %v3515 = vperm.slane %v3193, 0
    %v3516 = vperm.slane %v3193, 1
    %v3519 = vadd.f32 %v3194, %v3515
    %v3520 = vadd.f32 %v3195, %v3516
    %v3521 = vadd.f32 %v3196, %v3515
    %v3522 = vadd.f32 %v3197, %v3516
    %v3523 = vadd.f32 %v3198, %v3515
    %v3524 = vadd.f32 %v3199, %v3516
    %v3525 = vadd.f32 %v3200, %v3515
    %v3526 = vadd.f32 %v3201, %v3516
    %v3527 = vadd.f32 %v3202, %v3515
    %v3528 = vadd.f32 %v3203, %v3516
    %v3529 = vadd.f32 %v3204, %v3515
    %v3530 = vadd.f32 %v3205, %v3516
    %v3531 = vadd.f32 %v3206, %v3515
    %v3532 = vadd.f32 %v3207, %v3516
    %v3533 = vadd.f32 %v3208, %v3515
    %v3534 = vadd.f32 %v3209, %v3516
    %v3535 = vadd.f32 %v3210, %v3515
    %v3536 = vadd.f32 %v3211, %v3516
    %v3537 = vadd.f32 %v3212, %v3515
    %v3538 = vadd.f32 %v3213, %v3516
    %v3539 = vadd.f32 %v3214, %v3515
    %v3540 = vadd.f32 %v3215, %v3516
    %v3541 = vadd.f32 %v3216, %v3515
    %v3542 = vadd.f32 %v3217, %v3516
    %v3543 = vadd.f32 %v3218, %v3515
    %v3544 = vadd.f32 %v3219, %v3516
    %v3545 = vadd.f32 %v3220, %v3515
    %v3546 = vadd.f32 %v3221, %v3516
    %v3547 = vadd.f32 %v3222, %v3515
    %v3548 = vadd.f32 %v3223, %v3516
    %v3549 = vadd.f32 %v3224, %v3515
    %v3550 = vadd.f32 %v3225, %v3516
    %v3551 = vadd.f32 %v3226, %v3515
    %v3552 = vadd.f32 %v3227, %v3516
    %v3553 = vadd.f32 %v3228, %v3515
    %v3554 = vadd.f32 %v3229, %v3516
    %v3555 = vadd.f32 %v3230, %v3515
    %v3556 = vadd.f32 %v3231, %v3516
    %v3557 = vadd.f32 %v3232, %v3515
    %v3558 = vadd.f32 %v3233, %v3516
    %v3559 = vadd.f32 %v3234, %v3515
    %v3560 = vadd.f32 %v3235, %v3516
    %v3561 = vadd.f32 %v3236, %v3515
    %v3562 = vadd.f32 %v3237, %v3516
    %v3563 = vadd.f32 %v3238, %v3515
    %v3564 = vadd.f32 %v3239, %v3516
    %v3565 = vadd.f32 %v3240, %v3515
    %v3566 = vadd.f32 %v3241, %v3516
    %v3567 = vadd.f32 %v3242, %v3515
    %v3568 = vadd.f32 %v3243, %v3516
    %v3569 = vadd.f32 %v3244, %v3515
    %v3570 = vadd.f32 %v3245, %v3516
    %v3571 = vadd.f32 %v3246, %v3515
    %v3572 = vadd.f32 %v3247, %v3516
    %v3573 = vadd.f32 %v3248, %v3515
    %v3574 = vadd.f32 %v3249, %v3516
    %v3575 = vadd.f32 %v3250, %v3515
    %v3576 = vadd.f32 %v3251, %v3516
    %v3577 = vadd.f32 %v3252, %v3515
    %v3578 = vadd.f32 %v3253, %v3516
    %v3579 = vadd.f32 %v3254, %v3515
    %v3580 = vadd.f32 %v3255, %v3516
    %v3581 = vadd.f32 %v3256, %v3515
    %v3582 = vadd.f32 %v3257, %v3516
    %v3583 = vadd.f32 %v3258, %v3515
    %v3584 = vadd.f32 %v3259, %v3516
    %v3585 = vadd.f32 %v3260, %v3515
    %v3586 = vadd.f32 %v3261, %v3516
    %v3587 = vadd.f32 %v3262, %v3515
    %v3588 = vadd.f32 %v3263, %v3516
    %v3589 = vadd.f32 %v3264, %v3515
    %v3590 = vadd.f32 %v3265, %v3516
    %v3591 = vadd.f32 %v3266, %v3515
    %v3592 = vadd.f32 %v3267, %v3516
    %v3593 = vadd.f32 %v3268, %v3515
    %v3594 = vadd.f32 %v3269, %v3516
    %v3595 = vadd.f32 %v3270, %v3515
    %v3596 = vadd.f32 %v3271, %v3516
    %v3597 = vadd.f32 %v3272, %v3515
    %v3598 = vadd.f32 %v3273, %v3516
    %v3599 = vadd.f32 %v3274, %v3515
    %v3600 = vadd.f32 %v3275, %v3516
    %v3601 = vadd.f32 %v3276, %v3515
    %v3602 = vadd.f32 %v3277, %v3516
    %v3603 = vadd.f32 %v3278, %v3515
    %v3604 = vadd.f32 %v3279, %v3516
    %v3605 = vadd.f32 %v3280, %v3515
    %v3606 = vadd.f32 %v3281, %v3516
    %v3607 = vadd.f32 %v3282, %v3515
    %v3608 = vadd.f32 %v3283, %v3516
    %v3609 = vadd.f32 %v3284, %v3515
    %v3610 = vadd.f32 %v3285, %v3516
    %v3611 = vadd.f32 %v3286, %v3515
    %v3612 = vadd.f32 %v3287, %v3516
    %v3613 = vadd.f32 %v3288, %v3515
    %v3614 = vadd.f32 %v3289, %v3516
    %v3615 = vadd.f32 %v3290, %v3515
    %v3616 = vadd.f32 %v3291, %v3516
    %v3617 = vadd.f32 %v3292, %v3515
    %v3618 = vadd.f32 %v3293, %v3516
    %v3619 = vadd.f32 %v3294, %v3515
    %v3620 = vadd.f32 %v3295, %v3516
    %v3621 = vadd.f32 %v3296, %v3515
    %v3622 = vadd.f32 %v3297, %v3516
    %v3623 = vadd.f32 %v3298, %v3515
    %v3624 = vadd.f32 %v3299, %v3516
    %v3625 = vadd.f32 %v3300, %v3515
    %v3626 = vadd.f32 %v3301, %v3516
    %v3627 = vadd.f32 %v3302, %v3515
    %v3628 = vadd.f32 %v3303, %v3516
    %v3629 = vadd.f32 %v3304, %v3515
    %v3630 = vadd.f32 %v3305, %v3516
    %v3631 = vadd.f32 %v3306, %v3515
    %v3632 = vadd.f32 %v3307, %v3516
    %v3633 = vadd.f32 %v3308, %v3515
    %v3634 = vadd.f32 %v3309, %v3516
    %v3635 = vadd.f32 %v3310, %v3515
    %v3636 = vadd.f32 %v3311, %v3516
    %v3637 = vadd.f32 %v3312, %v3515
    %v3638 = vadd.f32 %v3313, %v3516
    %v3639 = vadd.f32 %v3314, %v3515
    %v3640 = vadd.f32 %v3315, %v3516
    %v3641 = vadd.f32 %v3316, %v3515
    %v3642 = vadd.f32 %v3317, %v3516
    %v3643 = vadd.f32 %v3318, %v3515
    %v3644 = vadd.f32 %v3319, %v3516
    %v3645 = vadd.f32 %v3320, %v3515
    %v3646 = vadd.f32 %v3321, %v3516
    %v3647 = vadd.f32 %v3322, %v3515
    %v3648 = vadd.f32 %v3323, %v3516
    %v3649 = vadd.f32 %v3324, %v3515
    %v3650 = vadd.f32 %v3325, %v3516
    %v3651 = vadd.f32 %v3326, %v3515
    %v3652 = vadd.f32 %v3327, %v3516
    %v3653 = vadd.f32 %v3328, %v3515
    %v3654 = vadd.f32 %v3329, %v3516
    %v3655 = vadd.f32 %v3330, %v3515
    %v3656 = vadd.f32 %v3331, %v3516
    %v3657 = vadd.f32 %v3332, %v3515
    %v3658 = vadd.f32 %v3333, %v3516
    %v3659 = vadd.f32 %v3334, %v3515
    %v3660 = vadd.f32 %v3335, %v3516
    %v3661 = vadd.f32 %v3336, %v3515
    %v3662 = vadd.f32 %v3337, %v3516
    %v3663 = vadd.f32 %v3338, %v3515
    %v3664 = vadd.f32 %v3339, %v3516
    %v3665 = vadd.f32 %v3340, %v3515
    %v3666 = vadd.f32 %v3341, %v3516
    %v3667 = vadd.f32 %v3342, %v3515
    %v3668 = vadd.f32 %v3343, %v3516
    %v3669 = vadd.f32 %v3344, %v3515
    %v3670 = vadd.f32 %v3345, %v3516
    %v3671 = vadd.f32 %v3346, %v3515
    %v3672 = vadd.f32 %v3347, %v3516
    %v3673 = vadd.f32 %v3348, %v3515
    %v3674 = vadd.f32 %v3349, %v3516
    %v3675 = vadd.f32 %v3350, %v3515
    %v3676 = vadd.f32 %v3351, %v3516
    %v3677 = vadd.f32 %v3352, %v3515
    %v3678 = vadd.f32 %v3353, %v3516
    %v3679 = vadd.f32 %v3354, %v3515
    %v3680 = vadd.f32 %v3355, %v3516
    %v3681 = vadd.f32 %v3356, %v3515
    %v3682 = vadd.f32 %v3357, %v3516
    %v3683 = vadd.f32 %v3358, %v3515
    %v3684 = vadd.f32 %v3359, %v3516
    %v3685 = vadd.f32 %v3360, %v3515
    %v3686 = vadd.f32 %v3361, %v3516
    %v3687 = vadd.f32 %v3362, %v3515
    %v3688 = vadd.f32 %v3363, %v3516
    %v3689 = vadd.f32 %v3364, %v3515
    %v3690 = vadd.f32 %v3365, %v3516
    %v3691 = vadd.f32 %v3366, %v3515
    %v3692 = vadd.f32 %v3367, %v3516
    %v3693 = vadd.f32 %v3368, %v3515
    %v3694 = vadd.f32 %v3369, %v3516
    %v3695 = vadd.f32 %v3370, %v3515
    %v3696 = vadd.f32 %v3371, %v3516
    %v3697 = vadd.f32 %v3372, %v3515
    %v3698 = vadd.f32 %v3373, %v3516
    %v3699 = vadd.f32 %v3374, %v3515
    %v3700 = vadd.f32 %v3375, %v3516
    %v3701 = vadd.f32 %v3376, %v3515
    %v3702 = vadd.f32 %v3377, %v3516
    %v3703 = vadd.f32 %v3378, %v3515
    %v3704 = vadd.f32 %v3379, %v3516
    %v3705 = vadd.f32 %v3380, %v3515
    %v3706 = vadd.f32 %v3381, %v3516
    %v3707 = vadd.f32 %v3382, %v3515
    %v3708 = vadd.f32 %v3383, %v3516
    %v3709 = vadd.f32 %v3384, %v3515
    %v3710 = vadd.f32 %v3385, %v3516
    %v3711 = vadd.f32 %v3386, %v3515
    %v3712 = vadd.f32 %v3387, %v3516
    %v3713 = vadd.f32 %v3388, %v3515
    %v3714 = vadd.f32 %v3389, %v3516
    %v3715 = vadd.f32 %v3390, %v3515
    %v3716 = vadd.f32 %v3391, %v3516
    %v3717 = vadd.f32 %v3392, %v3515
    %v3718 = vadd.f32 %v3393, %v3516
    %v3719 = vadd.f32 %v3394, %v3515
    %v3720 = vadd.f32 %v3395, %v3516
    %v3721 = vadd.f32 %v3396, %v3515
    %v3722 = vadd.f32 %v3397, %v3516
    %v3723 = vadd.f32 %v3398, %v3515
    %v3724 = vadd.f32 %v3399, %v3516
    %v3725 = vadd.f32 %v3400, %v3515
    %v3726 = vadd.f32 %v3401, %v3516
    %v3727 = vadd.f32 %v3402, %v3515
    %v3728 = vadd.f32 %v3403, %v3516
    %v3729 = vadd.f32 %v3404, %v3515
    %v3730 = vadd.f32 %v3405, %v3516
    %v3731 = vadd.f32 %v3406, %v3515
    %v3732 = vadd.f32 %v3407, %v3516
    %v3733 = vadd.f32 %v3408, %v3515
    %v3734 = vadd.f32 %v3409, %v3516
    %v3735 = vadd.f32 %v3410, %v3515
    %v3736 = vadd.f32 %v3411, %v3516
    %v3737 = vadd.f32 %v3412, %v3515
    %v3738 = vadd.f32 %v3413, %v3516
    %v3739 = vadd.f32 %v3414, %v3515
    %v3740 = vadd.f32 %v3415, %v3516
    %v3741 = vadd.f32 %v3416, %v3515
    %v3742 = vadd.f32 %v3417, %v3516
    %v3743 = vadd.f32 %v3418, %v3515
    %v3744 = vadd.f32 %v3419, %v3516
    %v3745 = vadd.f32 %v3420, %v3515
    %v3746 = vadd.f32 %v3421, %v3516
    %v3747 = vadd.f32 %v3422, %v3515
    %v3748 = vadd.f32 %v3423, %v3516
    %v3749 = vadd.f32 %v3424, %v3515
    %v3750 = vadd.f32 %v3425, %v3516
    %v3751 = vadd.f32 %v3426, %v3515
    %v3752 = vadd.f32 %v3427, %v3516
    %v3753 = vadd.f32 %v3428, %v3515
    %v3754 = vadd.f32 %v3429, %v3516
    %v3755 = vadd.f32 %v3430, %v3515
    %v3756 = vadd.f32 %v3431, %v3516
    %v3757 = vadd.f32 %v3432, %v3515
    %v3758 = vadd.f32 %v3433, %v3516
    %v3759 = vadd.f32 %v3434, %v3515
    %v3760 = vadd.f32 %v3435, %v3516
    %v3761 = vadd.f32 %v3436, %v3515
    %v3762 = vadd.f32 %v3437, %v3516
    %v3763 = vadd.f32 %v3438, %v3515
    %v3764 = vadd.f32 %v3439, %v3516
    %v3765 = vadd.f32 %v3440, %v3515
    %v3766 = vadd.f32 %v3441, %v3516
    %v3767 = vadd.f32 %v3442, %v3515
    %v3768 = vadd.f32 %v3443, %v3516
    %v3769 = vadd.f32 %v3444, %v3515
    %v3770 = vadd.f32 %v3445, %v3516
    %v3771 = vadd.f32 %v3446, %v3515
    %v3772 = vadd.f32 %v3447, %v3516
    %v3773 = vadd.f32 %v3448, %v3515
    %v3774 = vadd.f32 %v3449, %v3516
    %v3775 = vadd.f32 %v3450, %v3515
    %v3776 = vadd.f32 %v3451, %v3516
    %v3777 = vadd.f32 %v3452, %v3515
    %v3778 = vadd.f32 %v3453, %v3516
    %v3779 = vadd.f32 %v3454, %v3515
    %v3780 = vadd.f32 %v3455, %v3516
    %v3781 = vadd.f32 %v3456, %v3515
    %v3782 = vadd.f32 %v3457, %v3516
    %v3783 = vadd.f32 %v3458, %v3515
    %v3784 = vadd.f32 %v3459, %v3516
    %v3785 = vadd.f32 %v3460, %v3515
    %v3786 = vadd.f32 %v3461, %v3516
    %v3787 = vadd.f32 %v3462, %v3515
    %v3788 = vadd.f32 %v3463, %v3516
    %v3789 = vadd.f32 %v3464, %v3515
    %v3790 = vadd.f32 %v3465, %v3516
    %v3791 = vadd.f32 %v3466, %v3515
    %v3792 = vadd.f32 %v3467, %v3516
    %v3793 = vadd.f32 %v3468, %v3515
    %v3794 = vadd.f32 %v3469, %v3516
    %v3795 = vadd.f32 %v3470, %v3515
    %v3796 = vadd.f32 %v3471, %v3516
    %v3797 = vadd.f32 %v3472, %v3515
    %v3798 = vadd.f32 %v3473, %v3516
    %v3799 = vadd.f32 %v3474, %v3515
    %v3800 = vadd.f32 %v3475, %v3516
    %v3801 = vadd.f32 %v3476, %v3515
    %v3802 = vadd.f32 %v3477, %v3516
    %v3803 = vadd.f32 %v3478, %v3515
    %v3804 = vadd.f32 %v3479, %v3516
    %v3805 = vadd.f32 %v3480, %v3515
    %v3806 = vadd.f32 %v3481, %v3516
    %v3807 = vadd.f32 %v3482, %v3515
    %v3808 = vadd.f32 %v3483, %v3516
    %v3809 = vadd.f32 %v3484, %v3515
    %v3810 = vadd.f32 %v3485, %v3516
    %v3811 = vadd.f32 %v3486, %v3515
    %v3812 = vadd.f32 %v3487, %v3516
    %v3813 = vadd.f32 %v3488, %v3515
    %v3814 = vadd.f32 %v3489, %v3516
    %v3815 = vadd.f32 %v3490, %v3515
    %v3816 = vadd.f32 %v3491, %v3516
    %v3817 = vadd.f32 %v3492, %v3515
    %v3818 = vadd.f32 %v3493, %v3516
    %v3819 = vadd.f32 %v3494, %v3515
    %v3820 = vadd.f32 %v3495, %v3516
    %v3821 = vadd.f32 %v3496, %v3515
    %v3822 = vadd.f32 %v3497, %v3516
    %v3823 = vadd.f32 %v3498, %v3515
    %v3824 = vadd.f32 %v3499, %v3516
    %v3825 = vadd.f32 %v3500, %v3515
    %v3826 = vadd.f32 %v3501, %v3516
    %v3827 = vadd.f32 %v3502, %v3515
    %v3828 = vadd.f32 %v3503, %v3516
    %v3829 = vadd.f32 %v3504, %v3515
    %v3830 = vadd.f32 %v3505, %v3516
    %v3831 = vadd.f32 %v3506, %v3515
    %v3832 = vadd.f32 %v3507, %v3516
    %v3833 = vadd.f32 %v3508, %v3515
    %v3834 = vadd.f32 %v3509, %v3516
    %v3835 = vadd.f32 %v3510, %v3515
    %v3836 = vadd.f32 %v3511, %v3516
    %v3837 = vadd.f32 %v3512, %v3515
    %v3838 = vadd.f32 %v3513, %v3516
    %vm3839 = vcmp.ge.f32.partialorder %v3519, 0.0
    %vm3840 = vcmp.ge.f32.partialorder %v3520, 0.0
    %vm3841 = vcmp.ge.f32.partialorder %v3521, 0.0
    %vm3842 = vcmp.ge.f32.partialorder %v3522, 0.0
    %vm3843 = vcmp.ge.f32.partialorder %v3523, 0.0
    %vm3844 = vcmp.ge.f32.partialorder %v3524, 0.0
    %vm3845 = vcmp.ge.f32.partialorder %v3525, 0.0
    %vm3846 = vcmp.ge.f32.partialorder %v3526, 0.0
    %vm3847 = vcmp.ge.f32.partialorder %v3527, 0.0
    %vm3848 = vcmp.ge.f32.partialorder %v3528, 0.0
    %vm3849 = vcmp.ge.f32.partialorder %v3529, 0.0
    %vm3850 = vcmp.ge.f32.partialorder %v3530, 0.0
    %vm3851 = vcmp.ge.f32.partialorder %v3531, 0.0
    %vm3852 = vcmp.ge.f32.partialorder %v3532, 0.0
    %vm3853 = vcmp.ge.f32.partialorder %v3533, 0.0
    %vm3854 = vcmp.ge.f32.partialorder %v3534, 0.0
    %vm3855 = vcmp.ge.f32.partialorder %v3535, 0.0
    %vm3856 = vcmp.ge.f32.partialorder %v3536, 0.0
    %vm3857 = vcmp.ge.f32.partialorder %v3537, 0.0
    %vm3858 = vcmp.ge.f32.partialorder %v3538, 0.0
    %vm3859 = vcmp.ge.f32.partialorder %v3539, 0.0
    %vm3860 = vcmp.ge.f32.partialorder %v3540, 0.0
    %vm3861 = vcmp.ge.f32.partialorder %v3541, 0.0
    %vm3862 = vcmp.ge.f32.partialorder %v3542, 0.0
    %vm3863 = vcmp.ge.f32.partialorder %v3543, 0.0
    %vm3864 = vcmp.ge.f32.partialorder %v3544, 0.0
    %vm3865 = vcmp.ge.f32.partialorder %v3545, 0.0
    %vm3866 = vcmp.ge.f32.partialorder %v3546, 0.0
    %vm3867 = vcmp.ge.f32.partialorder %v3547, 0.0
    %vm3868 = vcmp.ge.f32.partialorder %v3548, 0.0
    %vm3869 = vcmp.ge.f32.partialorder %v3549, 0.0
    %vm3870 = vcmp.ge.f32.partialorder %v3550, 0.0
    %vm3871 = vcmp.ge.f32.partialorder %v3551, 0.0
    %vm3872 = vcmp.ge.f32.partialorder %v3552, 0.0
    %vm3873 = vcmp.ge.f32.partialorder %v3553, 0.0
    %vm3874 = vcmp.ge.f32.partialorder %v3554, 0.0
    %vm3875 = vcmp.ge.f32.partialorder %v3555, 0.0
    %vm3876 = vcmp.ge.f32.partialorder %v3556, 0.0
    %vm3877 = vcmp.ge.f32.partialorder %v3557, 0.0
    %vm3878 = vcmp.ge.f32.partialorder %v3558, 0.0
    %vm3879 = vcmp.ge.f32.partialorder %v3559, 0.0
    %vm3880 = vcmp.ge.f32.partialorder %v3560, 0.0
    %vm3881 = vcmp.ge.f32.partialorder %v3561, 0.0
    %vm3882 = vcmp.ge.f32.partialorder %v3562, 0.0
    %vm3883 = vcmp.ge.f32.partialorder %v3563, 0.0
    %vm3884 = vcmp.ge.f32.partialorder %v3564, 0.0
    %vm3885 = vcmp.ge.f32.partialorder %v3565, 0.0
    %vm3886 = vcmp.ge.f32.partialorder %v3566, 0.0
    %vm3887 = vcmp.ge.f32.partialorder %v3567, 0.0
    %vm3888 = vcmp.ge.f32.partialorder %v3568, 0.0
    %vm3889 = vcmp.ge.f32.partialorder %v3569, 0.0
    %vm3890 = vcmp.ge.f32.partialorder %v3570, 0.0
    %vm3891 = vcmp.ge.f32.partialorder %v3571, 0.0
    %vm3892 = vcmp.ge.f32.partialorder %v3572, 0.0
    %vm3893 = vcmp.ge.f32.partialorder %v3573, 0.0
    %vm3894 = vcmp.ge.f32.partialorder %v3574, 0.0
    %vm3895 = vcmp.ge.f32.partialorder %v3575, 0.0
    %vm3896 = vcmp.ge.f32.partialorder %v3576, 0.0
    %vm3897 = vcmp.ge.f32.partialorder %v3577, 0.0
    %vm3898 = vcmp.ge.f32.partialorder %v3578, 0.0
    %vm3899 = vcmp.ge.f32.partialorder %v3579, 0.0
    %vm3900 = vcmp.ge.f32.partialorder %v3580, 0.0
    %vm3901 = vcmp.ge.f32.partialorder %v3581, 0.0
    %vm3902 = vcmp.ge.f32.partialorder %v3582, 0.0
    %vm3903 = vcmp.ge.f32.partialorder %v3583, 0.0
    %vm3904 = vcmp.ge.f32.partialorder %v3584, 0.0
    %vm3905 = vcmp.ge.f32.partialorder %v3585, 0.0
    %vm3906 = vcmp.ge.f32.partialorder %v3586, 0.0
    %vm3907 = vcmp.ge.f32.partialorder %v3587, 0.0
    %vm3908 = vcmp.ge.f32.partialorder %v3588, 0.0
    %vm3909 = vcmp.ge.f32.partialorder %v3589, 0.0
    %vm3910 = vcmp.ge.f32.partialorder %v3590, 0.0
    %vm3911 = vcmp.ge.f32.partialorder %v3591, 0.0
    %vm3912 = vcmp.ge.f32.partialorder %v3592, 0.0
    %vm3913 = vcmp.ge.f32.partialorder %v3593, 0.0
    %vm3914 = vcmp.ge.f32.partialorder %v3594, 0.0
    %vm3915 = vcmp.ge.f32.partialorder %v3595, 0.0
    %vm3916 = vcmp.ge.f32.partialorder %v3596, 0.0
    %vm3917 = vcmp.ge.f32.partialorder %v3597, 0.0
    %vm3918 = vcmp.ge.f32.partialorder %v3598, 0.0
    %vm3919 = vcmp.ge.f32.partialorder %v3599, 0.0
    %vm3920 = vcmp.ge.f32.partialorder %v3600, 0.0
    %vm3921 = vcmp.ge.f32.partialorder %v3601, 0.0
    %vm3922 = vcmp.ge.f32.partialorder %v3602, 0.0
    %vm3923 = vcmp.ge.f32.partialorder %v3603, 0.0
    %vm3924 = vcmp.ge.f32.partialorder %v3604, 0.0
    %vm3925 = vcmp.ge.f32.partialorder %v3605, 0.0
    %vm3926 = vcmp.ge.f32.partialorder %v3606, 0.0
    %vm3927 = vcmp.ge.f32.partialorder %v3607, 0.0
    %vm3928 = vcmp.ge.f32.partialorder %v3608, 0.0
    %vm3929 = vcmp.ge.f32.partialorder %v3609, 0.0
    %vm3930 = vcmp.ge.f32.partialorder %v3610, 0.0
    %vm3931 = vcmp.ge.f32.partialorder %v3611, 0.0
    %vm3932 = vcmp.ge.f32.partialorder %v3612, 0.0
    %vm3933 = vcmp.ge.f32.partialorder %v3613, 0.0
    %vm3934 = vcmp.ge.f32.partialorder %v3614, 0.0
    %vm3935 = vcmp.ge.f32.partialorder %v3615, 0.0
    %vm3936 = vcmp.ge.f32.partialorder %v3616, 0.0
    %vm3937 = vcmp.ge.f32.partialorder %v3617, 0.0
    %vm3938 = vcmp.ge.f32.partialorder %v3618, 0.0
    %vm3939 = vcmp.ge.f32.partialorder %v3619, 0.0
    %vm3940 = vcmp.ge.f32.partialorder %v3620, 0.0
    %vm3941 = vcmp.ge.f32.partialorder %v3621, 0.0
    %vm3942 = vcmp.ge.f32.partialorder %v3622, 0.0
    %vm3943 = vcmp.ge.f32.partialorder %v3623, 0.0
    %vm3944 = vcmp.ge.f32.partialorder %v3624, 0.0
    %vm3945 = vcmp.ge.f32.partialorder %v3625, 0.0
    %vm3946 = vcmp.ge.f32.partialorder %v3626, 0.0
    %vm3947 = vcmp.ge.f32.partialorder %v3627, 0.0
    %vm3948 = vcmp.ge.f32.partialorder %v3628, 0.0
    %vm3949 = vcmp.ge.f32.partialorder %v3629, 0.0
    %vm3950 = vcmp.ge.f32.partialorder %v3630, 0.0
    %vm3951 = vcmp.ge.f32.partialorder %v3631, 0.0
    %vm3952 = vcmp.ge.f32.partialorder %v3632, 0.0
    %vm3953 = vcmp.ge.f32.partialorder %v3633, 0.0
    %vm3954 = vcmp.ge.f32.partialorder %v3634, 0.0
    %vm3955 = vcmp.ge.f32.partialorder %v3635, 0.0
    %vm3956 = vcmp.ge.f32.partialorder %v3636, 0.0
    %vm3957 = vcmp.ge.f32.partialorder %v3637, 0.0
    %vm3958 = vcmp.ge.f32.partialorder %v3638, 0.0
    %vm3959 = vcmp.ge.f32.partialorder %v3639, 0.0
    %vm3960 = vcmp.ge.f32.partialorder %v3640, 0.0
    %vm3961 = vcmp.ge.f32.partialorder %v3641, 0.0
    %vm3962 = vcmp.ge.f32.partialorder %v3642, 0.0
    %vm3963 = vcmp.ge.f32.partialorder %v3643, 0.0
    %vm3964 = vcmp.ge.f32.partialorder %v3644, 0.0
    %vm3965 = vcmp.ge.f32.partialorder %v3645, 0.0
    %vm3966 = vcmp.ge.f32.partialorder %v3646, 0.0
    %vm3967 = vcmp.ge.f32.partialorder %v3647, 0.0
    %vm3968 = vcmp.ge.f32.partialorder %v3648, 0.0
    %vm3969 = vcmp.ge.f32.partialorder %v3649, 0.0
    %vm3970 = vcmp.ge.f32.partialorder %v3650, 0.0
    %vm3971 = vcmp.ge.f32.partialorder %v3651, 0.0
    %vm3972 = vcmp.ge.f32.partialorder %v3652, 0.0
    %vm3973 = vcmp.ge.f32.partialorder %v3653, 0.0
    %vm3974 = vcmp.ge.f32.partialorder %v3654, 0.0
    %vm3975 = vcmp.ge.f32.partialorder %v3655, 0.0
    %vm3976 = vcmp.ge.f32.partialorder %v3656, 0.0
    %vm3977 = vcmp.ge.f32.partialorder %v3657, 0.0
    %vm3978 = vcmp.ge.f32.partialorder %v3658, 0.0
    %vm3979 = vcmp.ge.f32.partialorder %v3659, 0.0
    %vm3980 = vcmp.ge.f32.partialorder %v3660, 0.0
    %vm3981 = vcmp.ge.f32.partialorder %v3661, 0.0
    %vm3982 = vcmp.ge.f32.partialorder %v3662, 0.0
    %vm3983 = vcmp.ge.f32.partialorder %v3663, 0.0
    %vm3984 = vcmp.ge.f32.partialorder %v3664, 0.0
    %vm3985 = vcmp.ge.f32.partialorder %v3665, 0.0
    %vm3986 = vcmp.ge.f32.partialorder %v3666, 0.0
    %vm3987 = vcmp.ge.f32.partialorder %v3667, 0.0
    %vm3988 = vcmp.ge.f32.partialorder %v3668, 0.0
    %vm3989 = vcmp.ge.f32.partialorder %v3669, 0.0
    %vm3990 = vcmp.ge.f32.partialorder %v3670, 0.0
    %vm3991 = vcmp.ge.f32.partialorder %v3671, 0.0
    %vm3992 = vcmp.ge.f32.partialorder %v3672, 0.0
    %vm3993 = vcmp.ge.f32.partialorder %v3673, 0.0
    %vm3994 = vcmp.ge.f32.partialorder %v3674, 0.0
    %vm3995 = vcmp.ge.f32.partialorder %v3675, 0.0
    %vm3996 = vcmp.ge.f32.partialorder %v3676, 0.0
    %vm3997 = vcmp.ge.f32.partialorder %v3677, 0.0
    %vm3998 = vcmp.ge.f32.partialorder %v3678, 0.0
    %vm3999 = vcmp.ge.f32.partialorder %v3679, 0.0
    %vm4000 = vcmp.ge.f32.partialorder %v3680, 0.0
    %vm4001 = vcmp.ge.f32.partialorder %v3681, 0.0
    %vm4002 = vcmp.ge.f32.partialorder %v3682, 0.0
    %vm4003 = vcmp.ge.f32.partialorder %v3683, 0.0
    %vm4004 = vcmp.ge.f32.partialorder %v3684, 0.0
    %vm4005 = vcmp.ge.f32.partialorder %v3685, 0.0
    %vm4006 = vcmp.ge.f32.partialorder %v3686, 0.0
    %vm4007 = vcmp.ge.f32.partialorder %v3687, 0.0
    %vm4008 = vcmp.ge.f32.partialorder %v3688, 0.0
    %vm4009 = vcmp.ge.f32.partialorder %v3689, 0.0
    %vm4010 = vcmp.ge.f32.partialorder %v3690, 0.0
    %vm4011 = vcmp.ge.f32.partialorder %v3691, 0.0
    %vm4012 = vcmp.ge.f32.partialorder %v3692, 0.0
    %vm4013 = vcmp.ge.f32.partialorder %v3693, 0.0
    %vm4014 = vcmp.ge.f32.partialorder %v3694, 0.0
    %vm4015 = vcmp.ge.f32.partialorder %v3695, 0.0
    %vm4016 = vcmp.ge.f32.partialorder %v3696, 0.0
    %vm4017 = vcmp.ge.f32.partialorder %v3697, 0.0
    %vm4018 = vcmp.ge.f32.partialorder %v3698, 0.0
    %vm4019 = vcmp.ge.f32.partialorder %v3699, 0.0
    %vm4020 = vcmp.ge.f32.partialorder %v3700, 0.0
    %vm4021 = vcmp.ge.f32.partialorder %v3701, 0.0
    %vm4022 = vcmp.ge.f32.partialorder %v3702, 0.0
    %vm4023 = vcmp.ge.f32.partialorder %v3703, 0.0
    %vm4024 = vcmp.ge.f32.partialorder %v3704, 0.0
    %vm4025 = vcmp.ge.f32.partialorder %v3705, 0.0
    %vm4026 = vcmp.ge.f32.partialorder %v3706, 0.0
    %vm4027 = vcmp.ge.f32.partialorder %v3707, 0.0
    %vm4028 = vcmp.ge.f32.partialorder %v3708, 0.0
    %vm4029 = vcmp.ge.f32.partialorder %v3709, 0.0
    %vm4030 = vcmp.ge.f32.partialorder %v3710, 0.0
    %vm4031 = vcmp.ge.f32.partialorder %v3711, 0.0
    %vm4032 = vcmp.ge.f32.partialorder %v3712, 0.0
    %vm4033 = vcmp.ge.f32.partialorder %v3713, 0.0
    %vm4034 = vcmp.ge.f32.partialorder %v3714, 0.0
    %vm4035 = vcmp.ge.f32.partialorder %v3715, 0.0
    %vm4036 = vcmp.ge.f32.partialorder %v3716, 0.0
    %vm4037 = vcmp.ge.f32.partialorder %v3717, 0.0
    %vm4038 = vcmp.ge.f32.partialorder %v3718, 0.0
    %vm4039 = vcmp.ge.f32.partialorder %v3719, 0.0
    %vm4040 = vcmp.ge.f32.partialorder %v3720, 0.0
    %vm4041 = vcmp.ge.f32.partialorder %v3721, 0.0
    %vm4042 = vcmp.ge.f32.partialorder %v3722, 0.0
    %vm4043 = vcmp.ge.f32.partialorder %v3723, 0.0
    %vm4044 = vcmp.ge.f32.partialorder %v3724, 0.0
    %vm4045 = vcmp.ge.f32.partialorder %v3725, 0.0
    %vm4046 = vcmp.ge.f32.partialorder %v3726, 0.0
    %vm4047 = vcmp.ge.f32.partialorder %v3727, 0.0
    %vm4048 = vcmp.ge.f32.partialorder %v3728, 0.0
    %vm4049 = vcmp.ge.f32.partialorder %v3729, 0.0
    %vm4050 = vcmp.ge.f32.partialorder %v3730, 0.0
    %vm4051 = vcmp.ge.f32.partialorder %v3731, 0.0
    %vm4052 = vcmp.ge.f32.partialorder %v3732, 0.0
    %vm4053 = vcmp.ge.f32.partialorder %v3733, 0.0
    %vm4054 = vcmp.ge.f32.partialorder %v3734, 0.0
    %vm4055 = vcmp.ge.f32.partialorder %v3735, 0.0
    %vm4056 = vcmp.ge.f32.partialorder %v3736, 0.0
    %vm4057 = vcmp.ge.f32.partialorder %v3737, 0.0
    %vm4058 = vcmp.ge.f32.partialorder %v3738, 0.0
    %vm4059 = vcmp.ge.f32.partialorder %v3739, 0.0
    %vm4060 = vcmp.ge.f32.partialorder %v3740, 0.0
    %vm4061 = vcmp.ge.f32.partialorder %v3741, 0.0
    %vm4062 = vcmp.ge.f32.partialorder %v3742, 0.0
    %vm4063 = vcmp.ge.f32.partialorder %v3743, 0.0
    %vm4064 = vcmp.ge.f32.partialorder %v3744, 0.0
    %vm4065 = vcmp.ge.f32.partialorder %v3745, 0.0
    %vm4066 = vcmp.ge.f32.partialorder %v3746, 0.0
    %vm4067 = vcmp.ge.f32.partialorder %v3747, 0.0
    %vm4068 = vcmp.ge.f32.partialorder %v3748, 0.0
    %vm4069 = vcmp.ge.f32.partialorder %v3749, 0.0
    %vm4070 = vcmp.ge.f32.partialorder %v3750, 0.0
    %vm4071 = vcmp.ge.f32.partialorder %v3751, 0.0
    %vm4072 = vcmp.ge.f32.partialorder %v3752, 0.0
    %vm4073 = vcmp.ge.f32.partialorder %v3753, 0.0
    %vm4074 = vcmp.ge.f32.partialorder %v3754, 0.0
    %vm4075 = vcmp.ge.f32.partialorder %v3755, 0.0
    %vm4076 = vcmp.ge.f32.partialorder %v3756, 0.0
    %vm4077 = vcmp.ge.f32.partialorder %v3757, 0.0
    %vm4078 = vcmp.ge.f32.partialorder %v3758, 0.0
    %vm4079 = vcmp.ge.f32.partialorder %v3759, 0.0
    %vm4080 = vcmp.ge.f32.partialorder %v3760, 0.0
    %vm4081 = vcmp.ge.f32.partialorder %v3761, 0.0
    %vm4082 = vcmp.ge.f32.partialorder %v3762, 0.0
    %vm4083 = vcmp.ge.f32.partialorder %v3763, 0.0
    %vm4084 = vcmp.ge.f32.partialorder %v3764, 0.0
    %vm4085 = vcmp.ge.f32.partialorder %v3765, 0.0
    %vm4086 = vcmp.ge.f32.partialorder %v3766, 0.0
    %vm4087 = vcmp.ge.f32.partialorder %v3767, 0.0
    %vm4088 = vcmp.ge.f32.partialorder %v3768, 0.0
    %vm4089 = vcmp.ge.f32.partialorder %v3769, 0.0
    %vm4090 = vcmp.ge.f32.partialorder %v3770, 0.0
    %vm4091 = vcmp.ge.f32.partialorder %v3771, 0.0
    %vm4092 = vcmp.ge.f32.partialorder %v3772, 0.0
    %vm4093 = vcmp.ge.f32.partialorder %v3773, 0.0
    %vm4094 = vcmp.ge.f32.partialorder %v3774, 0.0
    %vm4095 = vcmp.ge.f32.partialorder %v3775, 0.0
    %vm4096 = vcmp.ge.f32.partialorder %v3776, 0.0
    %vm4097 = vcmp.ge.f32.partialorder %v3777, 0.0
    %vm4098 = vcmp.ge.f32.partialorder %v3778, 0.0
    %vm4099 = vcmp.ge.f32.partialorder %v3779, 0.0
    %vm4100 = vcmp.ge.f32.partialorder %v3780, 0.0
    %vm4101 = vcmp.ge.f32.partialorder %v3781, 0.0
    %vm4102 = vcmp.ge.f32.partialorder %v3782, 0.0
    %vm4103 = vcmp.ge.f32.partialorder %v3783, 0.0
    %vm4104 = vcmp.ge.f32.partialorder %v3784, 0.0
    %vm4105 = vcmp.ge.f32.partialorder %v3785, 0.0
    %vm4106 = vcmp.ge.f32.partialorder %v3786, 0.0
    %vm4107 = vcmp.ge.f32.partialorder %v3787, 0.0
    %vm4108 = vcmp.ge.f32.partialorder %v3788, 0.0
    %vm4109 = vcmp.ge.f32.partialorder %v3789, 0.0
    %vm4110 = vcmp.ge.f32.partialorder %v3790, 0.0
    %vm4111 = vcmp.ge.f32.partialorder %v3791, 0.0
    %vm4112 = vcmp.ge.f32.partialorder %v3792, 0.0
    %vm4113 = vcmp.ge.f32.partialorder %v3793, 0.0
    %vm4114 = vcmp.ge.f32.partialorder %v3794, 0.0
    %vm4115 = vcmp.ge.f32.partialorder %v3795, 0.0
    %vm4116 = vcmp.ge.f32.partialorder %v3796, 0.0
    %vm4117 = vcmp.ge.f32.partialorder %v3797, 0.0
    %vm4118 = vcmp.ge.f32.partialorder %v3798, 0.0
    %vm4119 = vcmp.ge.f32.partialorder %v3799, 0.0
    %vm4120 = vcmp.ge.f32.partialorder %v3800, 0.0
    %vm4121 = vcmp.ge.f32.partialorder %v3801, 0.0
    %vm4122 = vcmp.ge.f32.partialorder %v3802, 0.0
    %vm4123 = vcmp.ge.f32.partialorder %v3803, 0.0
    %vm4124 = vcmp.ge.f32.partialorder %v3804, 0.0
    %vm4125 = vcmp.ge.f32.partialorder %v3805, 0.0
    %vm4126 = vcmp.ge.f32.partialorder %v3806, 0.0
    %vm4127 = vcmp.ge.f32.partialorder %v3807, 0.0
    %vm4128 = vcmp.ge.f32.partialorder %v3808, 0.0
    %vm4129 = vcmp.ge.f32.partialorder %v3809, 0.0
    %vm4130 = vcmp.ge.f32.partialorder %v3810, 0.0
    %vm4131 = vcmp.ge.f32.partialorder %v3811, 0.0
    %vm4132 = vcmp.ge.f32.partialorder %v3812, 0.0
    %vm4133 = vcmp.ge.f32.partialorder %v3813, 0.0
    %vm4134 = vcmp.ge.f32.partialorder %v3814, 0.0
    %vm4135 = vcmp.ge.f32.partialorder %v3815, 0.0
    %vm4136 = vcmp.ge.f32.partialorder %v3816, 0.0
    %vm4137 = vcmp.ge.f32.partialorder %v3817, 0.0
    %vm4138 = vcmp.ge.f32.partialorder %v3818, 0.0
    %vm4139 = vcmp.ge.f32.partialorder %v3819, 0.0
    %vm4140 = vcmp.ge.f32.partialorder %v3820, 0.0
    %vm4141 = vcmp.ge.f32.partialorder %v3821, 0.0
    %vm4142 = vcmp.ge.f32.partialorder %v3822, 0.0
    %vm4143 = vcmp.ge.f32.partialorder %v3823, 0.0
    %vm4144 = vcmp.ge.f32.partialorder %v3824, 0.0
    %vm4145 = vcmp.ge.f32.partialorder %v3825, 0.0
    %vm4146 = vcmp.ge.f32.partialorder %v3826, 0.0
    %vm4147 = vcmp.ge.f32.partialorder %v3827, 0.0
    %vm4148 = vcmp.ge.f32.partialorder %v3828, 0.0
    %vm4149 = vcmp.ge.f32.partialorder %v3829, 0.0
    %vm4150 = vcmp.ge.f32.partialorder %v3830, 0.0
    %vm4151 = vcmp.ge.f32.partialorder %v3831, 0.0
    %vm4152 = vcmp.ge.f32.partialorder %v3832, 0.0
    %vm4153 = vcmp.ge.f32.partialorder %v3833, 0.0
    %vm4154 = vcmp.ge.f32.partialorder %v3834, 0.0
    %vm4155 = vcmp.ge.f32.partialorder %v3835, 0.0
    %vm4156 = vcmp.ge.f32.partialorder %v3836, 0.0
    %vm4157 = vcmp.ge.f32.partialorder %v3837, 0.0
    %vm4158 = vcmp.ge.f32.partialorder %v3838, 0.0
    %v4159 = vmul.f32 %v3519, 0.1
    %v4160 = vmul.f32 %v3520, 0.1
    %v4161 = vmul.f32 %v3521, 0.1
    %v4162 = vmul.f32 %v3522, 0.1
    %v4163 = vmul.f32 %v3523, 0.1
    %v4164 = vmul.f32 %v3524, 0.1
    %v4165 = vmul.f32 %v3525, 0.1
    %v4166 = vmul.f32 %v3526, 0.1
    %v4167 = vmul.f32 %v3527, 0.1
    %v4168 = vmul.f32 %v3528, 0.1
    %v4169 = vmul.f32 %v3529, 0.1
    %v4170 = vmul.f32 %v3530, 0.1
    %v4171 = vmul.f32 %v3531, 0.1
    %v4172 = vmul.f32 %v3532, 0.1
    %v4173 = vmul.f32 %v3533, 0.1
    %v4174 = vmul.f32 %v3534, 0.1
    %v4175 = vmul.f32 %v3535, 0.1
    %v4176 = vmul.f32 %v3536, 0.1
    %v4177 = vmul.f32 %v3537, 0.1
    %v4178 = vmul.f32 %v3538, 0.1
    %v4179 = vmul.f32 %v3539, 0.1
    %v4180 = vmul.f32 %v3540, 0.1
    %v4181 = vmul.f32 %v3541, 0.1
    %v4182 = vmul.f32 %v3542, 0.1
    %v4183 = vmul.f32 %v3543, 0.1
    %v4184 = vmul.f32 %v3544, 0.1
    %v4185 = vmul.f32 %v3545, 0.1
    %v4186 = vmul.f32 %v3546, 0.1
    %v4187 = vmul.f32 %v3547, 0.1
    %v4188 = vmul.f32 %v3548, 0.1
    %v4189 = vmul.f32 %v3549, 0.1
    %v4190 = vmul.f32 %v3550, 0.1
    %v4191 = vmul.f32 %v3551, 0.1
    %v4192 = vmul.f32 %v3552, 0.1
    %v4193 = vmul.f32 %v3553, 0.1
    %v4194 = vmul.f32 %v3554, 0.1
    %v4195 = vmul.f32 %v3555, 0.1
    %v4196 = vmul.f32 %v3556, 0.1
    %v4197 = vmul.f32 %v3557, 0.1
    %v4198 = vmul.f32 %v3558, 0.1
    %v4199 = vmul.f32 %v3559, 0.1
    %v4200 = vmul.f32 %v3560, 0.1
    %v4201 = vmul.f32 %v3561, 0.1
    %v4202 = vmul.f32 %v3562, 0.1
    %v4203 = vmul.f32 %v3563, 0.1
    %v4204 = vmul.f32 %v3564, 0.1
    %v4205 = vmul.f32 %v3565, 0.1
    %v4206 = vmul.f32 %v3566, 0.1
    %v4207 = vmul.f32 %v3567, 0.1
    %v4208 = vmul.f32 %v3568, 0.1
    %v4209 = vmul.f32 %v3569, 0.1
    %v4210 = vmul.f32 %v3570, 0.1
    %v4211 = vmul.f32 %v3571, 0.1
    %v4212 = vmul.f32 %v3572, 0.1
    %v4213 = vmul.f32 %v3573, 0.1
    %v4214 = vmul.f32 %v3574, 0.1
    %v4215 = vmul.f32 %v3575, 0.1
    %v4216 = vmul.f32 %v3576, 0.1
    %v4217 = vmul.f32 %v3577, 0.1
    %v4218 = vmul.f32 %v3578, 0.1
    %v4219 = vmul.f32 %v3579, 0.1
    %v4220 = vmul.f32 %v3580, 0.1
    %v4221 = vmul.f32 %v3581, 0.1
    %v4222 = vmul.f32 %v3582, 0.1
    %v4223 = vmul.f32 %v3583, 0.1
    %v4224 = vmul.f32 %v3584, 0.1
    %v4225 = vmul.f32 %v3585, 0.1
    %v4226 = vmul.f32 %v3586, 0.1
    %v4227 = vmul.f32 %v3587, 0.1
    %v4228 = vmul.f32 %v3588, 0.1
    %v4229 = vmul.f32 %v3589, 0.1
    %v4230 = vmul.f32 %v3590, 0.1
    %v4231 = vmul.f32 %v3591, 0.1
    %v4232 = vmul.f32 %v3592, 0.1
    %v4233 = vmul.f32 %v3593, 0.1
    %v4234 = vmul.f32 %v3594, 0.1
    %v4235 = vmul.f32 %v3595, 0.1
    %v4236 = vmul.f32 %v3596, 0.1
    %v4237 = vmul.f32 %v3597, 0.1
    %v4238 = vmul.f32 %v3598, 0.1
    %v4239 = vmul.f32 %v3599, 0.1
    %v4240 = vmul.f32 %v3600, 0.1
    %v4241 = vmul.f32 %v3601, 0.1
    %v4242 = vmul.f32 %v3602, 0.1
    %v4243 = vmul.f32 %v3603, 0.1
    %v4244 = vmul.f32 %v3604, 0.1
    %v4245 = vmul.f32 %v3605, 0.1
    %v4246 = vmul.f32 %v3606, 0.1
    %v4247 = vmul.f32 %v3607, 0.1
    %v4248 = vmul.f32 %v3608, 0.1
    %v4249 = vmul.f32 %v3609, 0.1
    %v4250 = vmul.f32 %v3610, 0.1
    %v4251 = vmul.f32 %v3611, 0.1
    %v4252 = vmul.f32 %v3612, 0.1
    %v4253 = vmul.f32 %v3613, 0.1
    %v4254 = vmul.f32 %v3614, 0.1
    %v4255 = vmul.f32 %v3615, 0.1
    %v4256 = vmul.f32 %v3616, 0.1
    %v4257 = vmul.f32 %v3617, 0.1
    %v4258 = vmul.f32 %v3618, 0.1
    %v4259 = vmul.f32 %v3619, 0.1
    %v4260 = vmul.f32 %v3620, 0.1
    %v4261 = vmul.f32 %v3621, 0.1
    %v4262 = vmul.f32 %v3622, 0.1
    %v4263 = vmul.f32 %v3623, 0.1
    %v4264 = vmul.f32 %v3624, 0.1
    %v4265 = vmul.f32 %v3625, 0.1
    %v4266 = vmul.f32 %v3626, 0.1
    %v4267 = vmul.f32 %v3627, 0.1
    %v4268 = vmul.f32 %v3628, 0.1
    %v4269 = vmul.f32 %v3629, 0.1
    %v4270 = vmul.f32 %v3630, 0.1
    %v4271 = vmul.f32 %v3631, 0.1
    %v4272 = vmul.f32 %v3632, 0.1
    %v4273 = vmul.f32 %v3633, 0.1
    %v4274 = vmul.f32 %v3634, 0.1
    %v4275 = vmul.f32 %v3635, 0.1
    %v4276 = vmul.f32 %v3636, 0.1
    %v4277 = vmul.f32 %v3637, 0.1
    %v4278 = vmul.f32 %v3638, 0.1
    %v4279 = vmul.f32 %v3639, 0.1
    %v4280 = vmul.f32 %v3640, 0.1
    %v4281 = vmul.f32 %v3641, 0.1
    %v4282 = vmul.f32 %v3642, 0.1
    %v4283 = vmul.f32 %v3643, 0.1
    %v4284 = vmul.f32 %v3644, 0.1
    %v4285 = vmul.f32 %v3645, 0.1
    %v4286 = vmul.f32 %v3646, 0.1
    %v4287 = vmul.f32 %v3647, 0.1
    %v4288 = vmul.f32 %v3648, 0.1
    %v4289 = vmul.f32 %v3649, 0.1
    %v4290 = vmul.f32 %v3650, 0.1
    %v4291 = vmul.f32 %v3651, 0.1
    %v4292 = vmul.f32 %v3652, 0.1
    %v4293 = vmul.f32 %v3653, 0.1
    %v4294 = vmul.f32 %v3654, 0.1
    %v4295 = vmul.f32 %v3655, 0.1
    %v4296 = vmul.f32 %v3656, 0.1
    %v4297 = vmul.f32 %v3657, 0.1
    %v4298 = vmul.f32 %v3658, 0.1
    %v4299 = vmul.f32 %v3659, 0.1
    %v4300 = vmul.f32 %v3660, 0.1
    %v4301 = vmul.f32 %v3661, 0.1
    %v4302 = vmul.f32 %v3662, 0.1
    %v4303 = vmul.f32 %v3663, 0.1
    %v4304 = vmul.f32 %v3664, 0.1
    %v4305 = vmul.f32 %v3665, 0.1
    %v4306 = vmul.f32 %v3666, 0.1
    %v4307 = vmul.f32 %v3667, 0.1
    %v4308 = vmul.f32 %v3668, 0.1
    %v4309 = vmul.f32 %v3669, 0.1
    %v4310 = vmul.f32 %v3670, 0.1
    %v4311 = vmul.f32 %v3671, 0.1
    %v4312 = vmul.f32 %v3672, 0.1
    %v4313 = vmul.f32 %v3673, 0.1
    %v4314 = vmul.f32 %v3674, 0.1
    %v4315 = vmul.f32 %v3675, 0.1
    %v4316 = vmul.f32 %v3676, 0.1
    %v4317 = vmul.f32 %v3677, 0.1
    %v4318 = vmul.f32 %v3678, 0.1
    %v4319 = vmul.f32 %v3679, 0.1
    %v4320 = vmul.f32 %v3680, 0.1
    %v4321 = vmul.f32 %v3681, 0.1
    %v4322 = vmul.f32 %v3682, 0.1
    %v4323 = vmul.f32 %v3683, 0.1
    %v4324 = vmul.f32 %v3684, 0.1
    %v4325 = vmul.f32 %v3685, 0.1
    %v4326 = vmul.f32 %v3686, 0.1
    %v4327 = vmul.f32 %v3687, 0.1
    %v4328 = vmul.f32 %v3688, 0.1
    %v4329 = vmul.f32 %v3689, 0.1
    %v4330 = vmul.f32 %v3690, 0.1
    %v4331 = vmul.f32 %v3691, 0.1
    %v4332 = vmul.f32 %v3692, 0.1
    %v4333 = vmul.f32 %v3693, 0.1
    %v4334 = vmul.f32 %v3694, 0.1
    %v4335 = vmul.f32 %v3695, 0.1
    %v4336 = vmul.f32 %v3696, 0.1
    %v4337 = vmul.f32 %v3697, 0.1
    %v4338 = vmul.f32 %v3698, 0.1
    %v4339 = vmul.f32 %v3699, 0.1
    %v4340 = vmul.f32 %v3700, 0.1
    %v4341 = vmul.f32 %v3701, 0.1
    %v4342 = vmul.f32 %v3702, 0.1
    %v4343 = vmul.f32 %v3703, 0.1
    %v4344 = vmul.f32 %v3704, 0.1
    %v4345 = vmul.f32 %v3705, 0.1
    %v4346 = vmul.f32 %v3706, 0.1
    %v4347 = vmul.f32 %v3707, 0.1
    %v4348 = vmul.f32 %v3708, 0.1
    %v4349 = vmul.f32 %v3709, 0.1
    %v4350 = vmul.f32 %v3710, 0.1
    %v4351 = vmul.f32 %v3711, 0.1
    %v4352 = vmul.f32 %v3712, 0.1
    %v4353 = vmul.f32 %v3713, 0.1
    %v4354 = vmul.f32 %v3714, 0.1
    %v4355 = vmul.f32 %v3715, 0.1
    %v4356 = vmul.f32 %v3716, 0.1
    %v4357 = vmul.f32 %v3717, 0.1
    %v4358 = vmul.f32 %v3718, 0.1
    %v4359 = vmul.f32 %v3719, 0.1
    %v4360 = vmul.f32 %v3720, 0.1
    %v4361 = vmul.f32 %v3721, 0.1
    %v4362 = vmul.f32 %v3722, 0.1
    %v4363 = vmul.f32 %v3723, 0.1
    %v4364 = vmul.f32 %v3724, 0.1
    %v4365 = vmul.f32 %v3725, 0.1
    %v4366 = vmul.f32 %v3726, 0.1
    %v4367 = vmul.f32 %v3727, 0.1
    %v4368 = vmul.f32 %v3728, 0.1
    %v4369 = vmul.f32 %v3729, 0.1
    %v4370 = vmul.f32 %v3730, 0.1
    %v4371 = vmul.f32 %v3731, 0.1
    %v4372 = vmul.f32 %v3732, 0.1
    %v4373 = vmul.f32 %v3733, 0.1
    %v4374 = vmul.f32 %v3734, 0.1
    %v4375 = vmul.f32 %v3735, 0.1
    %v4376 = vmul.f32 %v3736, 0.1
    %v4377 = vmul.f32 %v3737, 0.1
    %v4378 = vmul.f32 %v3738, 0.1
    %v4379 = vmul.f32 %v3739, 0.1
    %v4380 = vmul.f32 %v3740, 0.1
    %v4381 = vmul.f32 %v3741, 0.1
    %v4382 = vmul.f32 %v3742, 0.1
    %v4383 = vmul.f32 %v3743, 0.1
    %v4384 = vmul.f32 %v3744, 0.1
    %v4385 = vmul.f32 %v3745, 0.1
    %v4386 = vmul.f32 %v3746, 0.1
    %v4387 = vmul.f32 %v3747, 0.1
    %v4388 = vmul.f32 %v3748, 0.1
    %v4389 = vmul.f32 %v3749, 0.1
    %v4390 = vmul.f32 %v3750, 0.1
    %v4391 = vmul.f32 %v3751, 0.1
    %v4392 = vmul.f32 %v3752, 0.1
    %v4393 = vmul.f32 %v3753, 0.1
    %v4394 = vmul.f32 %v3754, 0.1
    %v4395 = vmul.f32 %v3755, 0.1
    %v4396 = vmul.f32 %v3756, 0.1
    %v4397 = vmul.f32 %v3757, 0.1
    %v4398 = vmul.f32 %v3758, 0.1
    %v4399 = vmul.f32 %v3759, 0.1
    %v4400 = vmul.f32 %v3760, 0.1
    %v4401 = vmul.f32 %v3761, 0.1
    %v4402 = vmul.f32 %v3762, 0.1
    %v4403 = vmul.f32 %v3763, 0.1
    %v4404 = vmul.f32 %v3764, 0.1
    %v4405 = vmul.f32 %v3765, 0.1
    %v4406 = vmul.f32 %v3766, 0.1
    %v4407 = vmul.f32 %v3767, 0.1
    %v4408 = vmul.f32 %v3768, 0.1
    %v4409 = vmul.f32 %v3769, 0.1
    %v4410 = vmul.f32 %v3770, 0.1
    %v4411 = vmul.f32 %v3771, 0.1
    %v4412 = vmul.f32 %v3772, 0.1
    %v4413 = vmul.f32 %v3773, 0.1
    %v4414 = vmul.f32 %v3774, 0.1
    %v4415 = vmul.f32 %v3775, 0.1
    %v4416 = vmul.f32 %v3776, 0.1
    %v4417 = vmul.f32 %v3777, 0.1
    %v4418 = vmul.f32 %v3778, 0.1
    %v4419 = vmul.f32 %v3779, 0.1
    %v4420 = vmul.f32 %v3780, 0.1
    %v4421 = vmul.f32 %v3781, 0.1
    %v4422 = vmul.f32 %v3782, 0.1
    %v4423 = vmul.f32 %v3783, 0.1
    %v4424 = vmul.f32 %v3784, 0.1
    %v4425 = vmul.f32 %v3785, 0.1
    %v4426 = vmul.f32 %v3786, 0.1
    %v4427 = vmul.f32 %v3787, 0.1
    %v4428 = vmul.f32 %v3788, 0.1
    %v4429 = vmul.f32 %v3789, 0.1
    %v4430 = vmul.f32 %v3790, 0.1
    %v4431 = vmul.f32 %v3791, 0.1
    %v4432 = vmul.f32 %v3792, 0.1
    %v4433 = vmul.f32 %v3793, 0.1
    %v4434 = vmul.f32 %v3794, 0.1
    %v4435 = vmul.f32 %v3795, 0.1
    %v4436 = vmul.f32 %v3796, 0.1
    %v4437 = vmul.f32 %v3797, 0.1
    %v4438 = vmul.f32 %v3798, 0.1
    %v4439 = vmul.f32 %v3799, 0.1
    %v4440 = vmul.f32 %v3800, 0.1
    %v4441 = vmul.f32 %v3801, 0.1
    %v4442 = vmul.f32 %v3802, 0.1
    %v4443 = vmul.f32 %v3803, 0.1
    %v4444 = vmul.f32 %v3804, 0.1
    %v4445 = vmul.f32 %v3805, 0.1
    %v4446 = vmul.f32 %v3806, 0.1
    %v4447 = vmul.f32 %v3807, 0.1
    %v4448 = vmul.f32 %v3808, 0.1
    %v4449 = vmul.f32 %v3809, 0.1
    %v4450 = vmul.f32 %v3810, 0.1
    %v4451 = vmul.f32 %v3811, 0.1
    %v4452 = vmul.f32 %v3812, 0.1
    %v4453 = vmul.f32 %v3813, 0.1
    %v4454 = vmul.f32 %v3814, 0.1
    %v4455 = vmul.f32 %v3815, 0.1
    %v4456 = vmul.f32 %v3816, 0.1
    %v4457 = vmul.f32 %v3817, 0.1
    %v4458 = vmul.f32 %v3818, 0.1
    %v4459 = vmul.f32 %v3819, 0.1
    %v4460 = vmul.f32 %v3820, 0.1
    %v4461 = vmul.f32 %v3821, 0.1
    %v4462 = vmul.f32 %v3822, 0.1
    %v4463 = vmul.f32 %v3823, 0.1
    %v4464 = vmul.f32 %v3824, 0.1
    %v4465 = vmul.f32 %v3825, 0.1
    %v4466 = vmul.f32 %v3826, 0.1
    %v4467 = vmul.f32 %v3827, 0.1
    %v4468 = vmul.f32 %v3828, 0.1
    %v4469 = vmul.f32 %v3829, 0.1
    %v4470 = vmul.f32 %v3830, 0.1
    %v4471 = vmul.f32 %v3831, 0.1
    %v4472 = vmul.f32 %v3832, 0.1
    %v4473 = vmul.f32 %v3833, 0.1
    %v4474 = vmul.f32 %v3834, 0.1
    %v4475 = vmul.f32 %v3835, 0.1
    %v4476 = vmul.f32 %v3836, 0.1
    %v4477 = vmul.f32 %v3837, 0.1
    %v4478 = vmul.f32 %v3838, 0.1
    %v4479 = vsel %vm3839, %v3519, %v4159
    %v4480 = vsel %vm3840, %v3520, %v4160
    %v4481 = vsel %vm3841, %v3521, %v4161
    %v4482 = vsel %vm3842, %v3522, %v4162
    %v4483 = vsel %vm3843, %v3523, %v4163
    %v4484 = vsel %vm3844, %v3524, %v4164
    %v4485 = vsel %vm3845, %v3525, %v4165
    %v4486 = vsel %vm3846, %v3526, %v4166
    %v4487 = vsel %vm3847, %v3527, %v4167
    %v4488 = vsel %vm3848, %v3528, %v4168
    %v4489 = vsel %vm3849, %v3529, %v4169
    %v4490 = vsel %vm3850, %v3530, %v4170
    %v4491 = vsel %vm3851, %v3531, %v4171
    %v4492 = vsel %vm3852, %v3532, %v4172
    %v4493 = vsel %vm3853, %v3533, %v4173
    %v4494 = vsel %vm3854, %v3534, %v4174
    %v4495 = vsel %vm3855, %v3535, %v4175
    %v4496 = vsel %vm3856, %v3536, %v4176
    %v4497 = vsel %vm3857, %v3537, %v4177
    %v4498 = vsel %vm3858, %v3538, %v4178
    %v4499 = vsel %vm3859, %v3539, %v4179
    %v4500 = vsel %vm3860, %v3540, %v4180
    %v4501 = vsel %vm3861, %v3541, %v4181
    %v4502 = vsel %vm3862, %v3542, %v4182
    %v4503 = vsel %vm3863, %v3543, %v4183
    %v4504 = vsel %vm3864, %v3544, %v4184
    %v4505 = vsel %vm3865, %v3545, %v4185
    %v4506 = vsel %vm3866, %v3546, %v4186
    %v4507 = vsel %vm3867, %v3547, %v4187
    %v4508 = vsel %vm3868, %v3548, %v4188
    %v4509 = vsel %vm3869, %v3549, %v4189
    %v4510 = vsel %vm3870, %v3550, %v4190
    %v4511 = vsel %vm3871, %v3551, %v4191
    %v4512 = vsel %vm3872, %v3552, %v4192
    %v4513 = vsel %vm3873, %v3553, %v4193
    %v4514 = vsel %vm3874, %v3554, %v4194
    %v4515 = vsel %vm3875, %v3555, %v4195
    %v4516 = vsel %vm3876, %v3556, %v4196
    %v4517 = vsel %vm3877, %v3557, %v4197
    %v4518 = vsel %vm3878, %v3558, %v4198
    %v4519 = vsel %vm3879, %v3559, %v4199
    %v4520 = vsel %vm3880, %v3560, %v4200
    %v4521 = vsel %vm3881, %v3561, %v4201
    %v4522 = vsel %vm3882, %v3562, %v4202
    %v4523 = vsel %vm3883, %v3563, %v4203
    %v4524 = vsel %vm3884, %v3564, %v4204
    %v4525 = vsel %vm3885, %v3565, %v4205
    %v4526 = vsel %vm3886, %v3566, %v4206
    %v4527 = vsel %vm3887, %v3567, %v4207
    %v4528 = vsel %vm3888, %v3568, %v4208
    %v4529 = vsel %vm3889, %v3569, %v4209
    %v4530 = vsel %vm3890, %v3570, %v4210
    %v4531 = vsel %vm3891, %v3571, %v4211
    %v4532 = vsel %vm3892, %v3572, %v4212
    %v4533 = vsel %vm3893, %v3573, %v4213
    %v4534 = vsel %vm3894, %v3574, %v4214
    %v4535 = vsel %vm3895, %v3575, %v4215
    %v4536 = vsel %vm3896, %v3576, %v4216
    %v4537 = vsel %vm3897, %v3577, %v4217
    %v4538 = vsel %vm3898, %v3578, %v4218
    %v4539 = vsel %vm3899, %v3579, %v4219
    %v4540 = vsel %vm3900, %v3580, %v4220
    %v4541 = vsel %vm3901, %v3581, %v4221
    %v4542 = vsel %vm3902, %v3582, %v4222
    %v4543 = vsel %vm3903, %v3583, %v4223
    %v4544 = vsel %vm3904, %v3584, %v4224
    %v4545 = vsel %vm3905, %v3585, %v4225
    %v4546 = vsel %vm3906, %v3586, %v4226
    %v4547 = vsel %vm3907, %v3587, %v4227
    %v4548 = vsel %vm3908, %v3588, %v4228
    %v4549 = vsel %vm3909, %v3589, %v4229
    %v4550 = vsel %vm3910, %v3590, %v4230
    %v4551 = vsel %vm3911, %v3591, %v4231
    %v4552 = vsel %vm3912, %v3592, %v4232
    %v4553 = vsel %vm3913, %v3593, %v4233
    %v4554 = vsel %vm3914, %v3594, %v4234
    %v4555 = vsel %vm3915, %v3595, %v4235
    %v4556 = vsel %vm3916, %v3596, %v4236
    %v4557 = vsel %vm3917, %v3597, %v4237
    %v4558 = vsel %vm3918, %v3598, %v4238
    %v4559 = vsel %vm3919, %v3599, %v4239
    %v4560 = vsel %vm3920, %v3600, %v4240
    %v4561 = vsel %vm3921, %v3601, %v4241
    %v4562 = vsel %vm3922, %v3602, %v4242
    %v4563 = vsel %vm3923, %v3603, %v4243
    %v4564 = vsel %vm3924, %v3604, %v4244
    %v4565 = vsel %vm3925, %v3605, %v4245
    %v4566 = vsel %vm3926, %v3606, %v4246
    %v4567 = vsel %vm3927, %v3607, %v4247
    %v4568 = vsel %vm3928, %v3608, %v4248
    %v4569 = vsel %vm3929, %v3609, %v4249
    %v4570 = vsel %vm3930, %v3610, %v4250
    %v4571 = vsel %vm3931, %v3611, %v4251
    %v4572 = vsel %vm3932, %v3612, %v4252
    %v4573 = vsel %vm3933, %v3613, %v4253
    %v4574 = vsel %vm3934, %v3614, %v4254
    %v4575 = vsel %vm3935, %v3615, %v4255
    %v4576 = vsel %vm3936, %v3616, %v4256
    %v4577 = vsel %vm3937, %v3617, %v4257
    %v4578 = vsel %vm3938, %v3618, %v4258
    %v4579 = vsel %vm3939, %v3619, %v4259
    %v4580 = vsel %vm3940, %v3620, %v4260
    %v4581 = vsel %vm3941, %v3621, %v4261
    %v4582 = vsel %vm3942, %v3622, %v4262
    %v4583 = vsel %vm3943, %v3623, %v4263
    %v4584 = vsel %vm3944, %v3624, %v4264
    %v4585 = vsel %vm3945, %v3625, %v4265
    %v4586 = vsel %vm3946, %v3626, %v4266
    %v4587 = vsel %vm3947, %v3627, %v4267
    %v4588 = vsel %vm3948, %v3628, %v4268
    %v4589 = vsel %vm3949, %v3629, %v4269
    %v4590 = vsel %vm3950, %v3630, %v4270
    %v4591 = vsel %vm3951, %v3631, %v4271
    %v4592 = vsel %vm3952, %v3632, %v4272
    %v4593 = vsel %vm3953, %v3633, %v4273
    %v4594 = vsel %vm3954, %v3634, %v4274
    %v4595 = vsel %vm3955, %v3635, %v4275
    %v4596 = vsel %vm3956, %v3636, %v4276
    %v4597 = vsel %vm3957, %v3637, %v4277
    %v4598 = vsel %vm3958, %v3638, %v4278
    %v4599 = vsel %vm3959, %v3639, %v4279
    %v4600 = vsel %vm3960, %v3640, %v4280
    %v4601 = vsel %vm3961, %v3641, %v4281
    %v4602 = vsel %vm3962, %v3642, %v4282
    %v4603 = vsel %vm3963, %v3643, %v4283
    %v4604 = vsel %vm3964, %v3644, %v4284
    %v4605 = vsel %vm3965, %v3645, %v4285
    %v4606 = vsel %vm3966, %v3646, %v4286
    %v4607 = vsel %vm3967, %v3647, %v4287
    %v4608 = vsel %vm3968, %v3648, %v4288
    %v4609 = vsel %vm3969, %v3649, %v4289
    %v4610 = vsel %vm3970, %v3650, %v4290
    %v4611 = vsel %vm3971, %v3651, %v4291
    %v4612 = vsel %vm3972, %v3652, %v4292
    %v4613 = vsel %vm3973, %v3653, %v4293
    %v4614 = vsel %vm3974, %v3654, %v4294
    %v4615 = vsel %vm3975, %v3655, %v4295
    %v4616 = vsel %vm3976, %v3656, %v4296
    %v4617 = vsel %vm3977, %v3657, %v4297
    %v4618 = vsel %vm3978, %v3658, %v4298
    %v4619 = vsel %vm3979, %v3659, %v4299
    %v4620 = vsel %vm3980, %v3660, %v4300
    %v4621 = vsel %vm3981, %v3661, %v4301
    %v4622 = vsel %vm3982, %v3662, %v4302
    %v4623 = vsel %vm3983, %v3663, %v4303
    %v4624 = vsel %vm3984, %v3664, %v4304
    %v4625 = vsel %vm3985, %v3665, %v4305
    %v4626 = vsel %vm3986, %v3666, %v4306
    %v4627 = vsel %vm3987, %v3667, %v4307
    %v4628 = vsel %vm3988, %v3668, %v4308
    %v4629 = vsel %vm3989, %v3669, %v4309
    %v4630 = vsel %vm3990, %v3670, %v4310
    %v4631 = vsel %vm3991, %v3671, %v4311
    %v4632 = vsel %vm3992, %v3672, %v4312
    %v4633 = vsel %vm3993, %v3673, %v4313
    %v4634 = vsel %vm3994, %v3674, %v4314
    %v4635 = vsel %vm3995, %v3675, %v4315
    %v4636 = vsel %vm3996, %v3676, %v4316
    %v4637 = vsel %vm3997, %v3677, %v4317
    %v4638 = vsel %vm3998, %v3678, %v4318
    %v4639 = vsel %vm3999, %v3679, %v4319
    %v4640 = vsel %vm4000, %v3680, %v4320
    %v4641 = vsel %vm4001, %v3681, %v4321
    %v4642 = vsel %vm4002, %v3682, %v4322
    %v4643 = vsel %vm4003, %v3683, %v4323
    %v4644 = vsel %vm4004, %v3684, %v4324
    %v4645 = vsel %vm4005, %v3685, %v4325
    %v4646 = vsel %vm4006, %v3686, %v4326
    %v4647 = vsel %vm4007, %v3687, %v4327
    %v4648 = vsel %vm4008, %v3688, %v4328
    %v4649 = vsel %vm4009, %v3689, %v4329
    %v4650 = vsel %vm4010, %v3690, %v4330
    %v4651 = vsel %vm4011, %v3691, %v4331
    %v4652 = vsel %vm4012, %v3692, %v4332
    %v4653 = vsel %vm4013, %v3693, %v4333
    %v4654 = vsel %vm4014, %v3694, %v4334
    %v4655 = vsel %vm4015, %v3695, %v4335
    %v4656 = vsel %vm4016, %v3696, %v4336
    %v4657 = vsel %vm4017, %v3697, %v4337
    %v4658 = vsel %vm4018, %v3698, %v4338
    %v4659 = vsel %vm4019, %v3699, %v4339
    %v4660 = vsel %vm4020, %v3700, %v4340
    %v4661 = vsel %vm4021, %v3701, %v4341
    %v4662 = vsel %vm4022, %v3702, %v4342
    %v4663 = vsel %vm4023, %v3703, %v4343
    %v4664 = vsel %vm4024, %v3704, %v4344
    %v4665 = vsel %vm4025, %v3705, %v4345
    %v4666 = vsel %vm4026, %v3706, %v4346
    %v4667 = vsel %vm4027, %v3707, %v4347
    %v4668 = vsel %vm4028, %v3708, %v4348
    %v4669 = vsel %vm4029, %v3709, %v4349
    %v4670 = vsel %vm4030, %v3710, %v4350
    %v4671 = vsel %vm4031, %v3711, %v4351
    %v4672 = vsel %vm4032, %v3712, %v4352
    %v4673 = vsel %vm4033, %v3713, %v4353
    %v4674 = vsel %vm4034, %v3714, %v4354
    %v4675 = vsel %vm4035, %v3715, %v4355
    %v4676 = vsel %vm4036, %v3716, %v4356
    %v4677 = vsel %vm4037, %v3717, %v4357
    %v4678 = vsel %vm4038, %v3718, %v4358
    %v4679 = vsel %vm4039, %v3719, %v4359
    %v4680 = vsel %vm4040, %v3720, %v4360
    %v4681 = vsel %vm4041, %v3721, %v4361
    %v4682 = vsel %vm4042, %v3722, %v4362
    %v4683 = vsel %vm4043, %v3723, %v4363
    %v4684 = vsel %vm4044, %v3724, %v4364
    %v4685 = vsel %vm4045, %v3725, %v4365
    %v4686 = vsel %vm4046, %v3726, %v4366
    %v4687 = vsel %vm4047, %v3727, %v4367
    %v4688 = vsel %vm4048, %v3728, %v4368
    %v4689 = vsel %vm4049, %v3729, %v4369
    %v4690 = vsel %vm4050, %v3730, %v4370
    %v4691 = vsel %vm4051, %v3731, %v4371
    %v4692 = vsel %vm4052, %v3732, %v4372
    %v4693 = vsel %vm4053, %v3733, %v4373
    %v4694 = vsel %vm4054, %v3734, %v4374
    %v4695 = vsel %vm4055, %v3735, %v4375
    %v4696 = vsel %vm4056, %v3736, %v4376
    %v4697 = vsel %vm4057, %v3737, %v4377
    %v4698 = vsel %vm4058, %v3738, %v4378
    %v4699 = vsel %vm4059, %v3739, %v4379
    %v4700 = vsel %vm4060, %v3740, %v4380
    %v4701 = vsel %vm4061, %v3741, %v4381
    %v4702 = vsel %vm4062, %v3742, %v4382
    %v4703 = vsel %vm4063, %v3743, %v4383
    %v4704 = vsel %vm4064, %v3744, %v4384
    %v4705 = vsel %vm4065, %v3745, %v4385
    %v4706 = vsel %vm4066, %v3746, %v4386
    %v4707 = vsel %vm4067, %v3747, %v4387
    %v4708 = vsel %vm4068, %v3748, %v4388
    %v4709 = vsel %vm4069, %v3749, %v4389
    %v4710 = vsel %vm4070, %v3750, %v4390
    %v4711 = vsel %vm4071, %v3751, %v4391
    %v4712 = vsel %vm4072, %v3752, %v4392
    %v4713 = vsel %vm4073, %v3753, %v4393
    %v4714 = vsel %vm4074, %v3754, %v4394
    %v4715 = vsel %vm4075, %v3755, %v4395
    %v4716 = vsel %vm4076, %v3756, %v4396
    %v4717 = vsel %vm4077, %v3757, %v4397
    %v4718 = vsel %vm4078, %v3758, %v4398
    %v4719 = vsel %vm4079, %v3759, %v4399
    %v4720 = vsel %vm4080, %v3760, %v4400
    %v4721 = vsel %vm4081, %v3761, %v4401
    %v4722 = vsel %vm4082, %v3762, %v4402
    %v4723 = vsel %vm4083, %v3763, %v4403
    %v4724 = vsel %vm4084, %v3764, %v4404
    %v4725 = vsel %vm4085, %v3765, %v4405
    %v4726 = vsel %vm4086, %v3766, %v4406
    %v4727 = vsel %vm4087, %v3767, %v4407
    %v4728 = vsel %vm4088, %v3768, %v4408
    %v4729 = vsel %vm4089, %v3769, %v4409
    %v4730 = vsel %vm4090, %v3770, %v4410
    %v4731 = vsel %vm4091, %v3771, %v4411
    %v4732 = vsel %vm4092, %v3772, %v4412
    %v4733 = vsel %vm4093, %v3773, %v4413
    %v4734 = vsel %vm4094, %v3774, %v4414
    %v4735 = vsel %vm4095, %v3775, %v4415
    %v4736 = vsel %vm4096, %v3776, %v4416
    %v4737 = vsel %vm4097, %v3777, %v4417
    %v4738 = vsel %vm4098, %v3778, %v4418
    %v4739 = vsel %vm4099, %v3779, %v4419
    %v4740 = vsel %vm4100, %v3780, %v4420
    %v4741 = vsel %vm4101, %v3781, %v4421
    %v4742 = vsel %vm4102, %v3782, %v4422
    %v4743 = vsel %vm4103, %v3783, %v4423
    %v4744 = vsel %vm4104, %v3784, %v4424
    %v4745 = vsel %vm4105, %v3785, %v4425
    %v4746 = vsel %vm4106, %v3786, %v4426
    %v4747 = vsel %vm4107, %v3787, %v4427
    %v4748 = vsel %vm4108, %v3788, %v4428
    %v4749 = vsel %vm4109, %v3789, %v4429
    %v4750 = vsel %vm4110, %v3790, %v4430
    %v4751 = vsel %vm4111, %v3791, %v4431
    %v4752 = vsel %vm4112, %v3792, %v4432
    %v4753 = vsel %vm4113, %v3793, %v4433
    %v4754 = vsel %vm4114, %v3794, %v4434
    %v4755 = vsel %vm4115, %v3795, %v4435
    %v4756 = vsel %vm4116, %v3796, %v4436
    %v4757 = vsel %vm4117, %v3797, %v4437
    %v4758 = vsel %vm4118, %v3798, %v4438
    %v4759 = vsel %vm4119, %v3799, %v4439
    %v4760 = vsel %vm4120, %v3800, %v4440
    %v4761 = vsel %vm4121, %v3801, %v4441
    %v4762 = vsel %vm4122, %v3802, %v4442
    %v4763 = vsel %vm4123, %v3803, %v4443
    %v4764 = vsel %vm4124, %v3804, %v4444
    %v4765 = vsel %vm4125, %v3805, %v4445
    %v4766 = vsel %vm4126, %v3806, %v4446
    %v4767 = vsel %vm4127, %v3807, %v4447
    %v4768 = vsel %vm4128, %v3808, %v4448
    %v4769 = vsel %vm4129, %v3809, %v4449
    %v4770 = vsel %vm4130, %v3810, %v4450
    %v4771 = vsel %vm4131, %v3811, %v4451
    %v4772 = vsel %vm4132, %v3812, %v4452
    %v4773 = vsel %vm4133, %v3813, %v4453
    %v4774 = vsel %vm4134, %v3814, %v4454
    %v4775 = vsel %vm4135, %v3815, %v4455
    %v4776 = vsel %vm4136, %v3816, %v4456
    %v4777 = vsel %vm4137, %v3817, %v4457
    %v4778 = vsel %vm4138, %v3818, %v4458
    %v4779 = vsel %vm4139, %v3819, %v4459
    %v4780 = vsel %vm4140, %v3820, %v4460
    %v4781 = vsel %vm4141, %v3821, %v4461
    %v4782 = vsel %vm4142, %v3822, %v4462
    %v4783 = vsel %vm4143, %v3823, %v4463
    %v4784 = vsel %vm4144, %v3824, %v4464
    %v4785 = vsel %vm4145, %v3825, %v4465
    %v4786 = vsel %vm4146, %v3826, %v4466
    %v4787 = vsel %vm4147, %v3827, %v4467
    %v4788 = vsel %vm4148, %v3828, %v4468
    %v4789 = vsel %vm4149, %v3829, %v4469
    %v4790 = vsel %vm4150, %v3830, %v4470
    %v4791 = vsel %vm4151, %v3831, %v4471
    %v4792 = vsel %vm4152, %v3832, %v4472
    %v4793 = vsel %vm4153, %v3833, %v4473
    %v4794 = vsel %vm4154, %v3834, %v4474
    %v4795 = vsel %vm4155, %v3835, %v4475
    %v4796 = vsel %vm4156, %v3836, %v4476
    %v4797 = vsel %vm4157, %v3837, %v4477
    %v4798 = vsel %vm4158, %v3838, %v4478
    %v4799 = vmul.f32 %v4639, 0.0
    %v4800 = vmul.f32 %v4641, 0.0
    %v4801 = vmul.f32 %v4643, 0.0
    %v4802 = vmul.f32 %v4645, 0.0
    %v4803 = vmul.f32 %v4647, 0.0
    %v4804 = vmul.f32 %v4649, 0.0
    %v4805 = vmul.f32 %v4651, 0.0
    %v4806 = vmul.f32 %v4653, 0.0
    %v4807 = vmul.f32 %v4655, 0.0
    %v4808 = vmul.f32 %v4657, 0.0
    %v4809 = vmul.f32 %v4659, 0.0
    %v4810 = vmul.f32 %v4661, 0.0
    %v4811 = vmul.f32 %v4663, 0.0
    %v4812 = vmul.f32 %v4665, 0.0
    %v4813 = vmul.f32 %v4667, 0.0
    %v4814 = vmul.f32 %v4669, 0.0
    %v4815 = vmul.f32 %v4671, 0.0
    %v4816 = vmul.f32 %v4673, 0.0
    %v4817 = vmul.f32 %v4675, 0.0
    %v4818 = vmul.f32 %v4677, 0.0
    %v4819 = vmul.f32 %v4679, 0.0
    %v4820 = vmul.f32 %v4681, 0.0
    %v4821 = vmul.f32 %v4683, 0.0
    %v4822 = vmul.f32 %v4685, 0.0
    %v4823 = vmul.f32 %v4687, 0.0
    %v4824 = vmul.f32 %v4689, 0.0
    %v4825 = vmul.f32 %v4691, 0.0
    %v4826 = vmul.f32 %v4693, 0.0
    %v4827 = vmul.f32 %v4695, 0.0
    %v4828 = vmul.f32 %v4697, 0.0
    %v4829 = vmul.f32 %v4699, 0.0
    %v4830 = vmul.f32 %v4701, 0.0
    %v4831 = vmul.f32 %v4703, 0.0
    %v4832 = vmul.f32 %v4705, 0.0
    %v4833 = vmul.f32 %v4707, 0.0
    %v4834 = vmul.f32 %v4709, 0.0
    %v4835 = vmul.f32 %v4711, 0.0
    %v4836 = vmul.f32 %v4713, 0.0
    %v4837 = vmul.f32 %v4715, 0.0
    %v4838 = vmul.f32 %v4717, 0.0
    %v4839 = vmul.f32 %v4719, 0.0
    %v4840 = vmul.f32 %v4721, 0.0
    %v4841 = vmul.f32 %v4723, 0.0
    %v4842 = vmul.f32 %v4725, 0.0
    %v4843 = vmul.f32 %v4727, 0.0
    %v4844 = vmul.f32 %v4729, 0.0
    %v4845 = vmul.f32 %v4731, 0.0
    %v4846 = vmul.f32 %v4733, 0.0
    %v4847 = vmul.f32 %v4735, 0.0
    %v4848 = vmul.f32 %v4737, 0.0
    %v4849 = vmul.f32 %v4739, 0.0
    %v4850 = vmul.f32 %v4741, 0.0
    %v4851 = vmul.f32 %v4743, 0.0
    %v4852 = vmul.f32 %v4745, 0.0
    %v4853 = vmul.f32 %v4747, 0.0
    %v4854 = vmul.f32 %v4749, 0.0
    %v4855 = vmul.f32 %v4751, 0.0
    %v4856 = vmul.f32 %v4753, 0.0
    %v4857 = vmul.f32 %v4755, 0.0
    %v4858 = vmul.f32 %v4757, 0.0
    %v4859 = vmul.f32 %v4759, 0.0
    %v4860 = vmul.f32 %v4761, 0.0
    %v4861 = vmul.f32 %v4763, 0.0
    %v4862 = vmul.f32 %v4765, 0.0
    %v4863 = vmul.f32 %v4767, 0.0
    %v4864 = vmul.f32 %v4769, 0.0
    %v4865 = vmul.f32 %v4771, 0.0
    %v4866 = vmul.f32 %v4773, 0.0
    %v4867 = vmul.f32 %v4775, 0.0
    %v4868 = vmul.f32 %v4777, 0.0
    %v4869 = vmul.f32 %v4779, 0.0
    %v4870 = vmul.f32 %v4781, 0.0
    %v4871 = vmul.f32 %v4783, 0.0
    %v4872 = vmul.f32 %v4785, 0.0
    %v4873 = vmul.f32 %v4787, 0.0
    %v4874 = vmul.f32 %v4789, 0.0
    %v4875 = vmul.f32 %v4791, 0.0
    %v4876 = vmul.f32 %v4793, 0.0
    %v4877 = vmul.f32 %v4795, 0.0
    %v4878 = vmul.f32 %v4797, 0.0
    %v4879 = vadd.f32 %v4479, %v4799
    %v4880 = vadd.f32 %v4481, %v4800
    %v4881 = vadd.f32 %v4483, %v4801
    %v4882 = vadd.f32 %v4485, %v4802
    %v4883 = vadd.f32 %v4487, %v4803
    %v4884 = vadd.f32 %v4489, %v4804
    %v4885 = vadd.f32 %v4491, %v4805
    %v4886 = vadd.f32 %v4493, %v4806
    %v4887 = vadd.f32 %v4495, %v4807
    %v4888 = vadd.f32 %v4497, %v4808
    %v4889 = vadd.f32 %v4499, %v4809
    %v4890 = vadd.f32 %v4501, %v4810
    %v4891 = vadd.f32 %v4503, %v4811
    %v4892 = vadd.f32 %v4505, %v4812
    %v4893 = vadd.f32 %v4507, %v4813
    %v4894 = vadd.f32 %v4509, %v4814
    %v4895 = vadd.f32 %v4511, %v4815
    %v4896 = vadd.f32 %v4513, %v4816
    %v4897 = vadd.f32 %v4515, %v4817
    %v4898 = vadd.f32 %v4517, %v4818
    %v4899 = vadd.f32 %v4519, %v4819
    %v4900 = vadd.f32 %v4521, %v4820
    %v4901 = vadd.f32 %v4523, %v4821
    %v4902 = vadd.f32 %v4525, %v4822
    %v4903 = vadd.f32 %v4527, %v4823
    %v4904 = vadd.f32 %v4529, %v4824
    %v4905 = vadd.f32 %v4531, %v4825
    %v4906 = vadd.f32 %v4533, %v4826
    %v4907 = vadd.f32 %v4535, %v4827
    %v4908 = vadd.f32 %v4537, %v4828
    %v4909 = vadd.f32 %v4539, %v4829
    %v4910 = vadd.f32 %v4541, %v4830
    %v4911 = vadd.f32 %v4543, %v4831
    %v4912 = vadd.f32 %v4545, %v4832
    %v4913 = vadd.f32 %v4547, %v4833
    %v4914 = vadd.f32 %v4549, %v4834
    %v4915 = vadd.f32 %v4551, %v4835
    %v4916 = vadd.f32 %v4553, %v4836
    %v4917 = vadd.f32 %v4555, %v4837
    %v4918 = vadd.f32 %v4557, %v4838
    %v4919 = vadd.f32 %v4559, %v4839
    %v4920 = vadd.f32 %v4561, %v4840
    %v4921 = vadd.f32 %v4563, %v4841
    %v4922 = vadd.f32 %v4565, %v4842
    %v4923 = vadd.f32 %v4567, %v4843
    %v4924 = vadd.f32 %v4569, %v4844
    %v4925 = vadd.f32 %v4571, %v4845
    %v4926 = vadd.f32 %v4573, %v4846
    %v4927 = vadd.f32 %v4575, %v4847
    %v4928 = vadd.f32 %v4577, %v4848
    %v4929 = vadd.f32 %v4579, %v4849
    %v4930 = vadd.f32 %v4581, %v4850
    %v4931 = vadd.f32 %v4583, %v4851
    %v4932 = vadd.f32 %v4585, %v4852
    %v4933 = vadd.f32 %v4587, %v4853
    %v4934 = vadd.f32 %v4589, %v4854
    %v4935 = vadd.f32 %v4591, %v4855
    %v4936 = vadd.f32 %v4593, %v4856
    %v4937 = vadd.f32 %v4595, %v4857
    %v4938 = vadd.f32 %v4597, %v4858
    %v4939 = vadd.f32 %v4599, %v4859
    %v4940 = vadd.f32 %v4601, %v4860
    %v4941 = vadd.f32 %v4603, %v4861
    %v4942 = vadd.f32 %v4605, %v4862
    %v4943 = vadd.f32 %v4607, %v4863
    %v4944 = vadd.f32 %v4609, %v4864
    %v4945 = vadd.f32 %v4611, %v4865
    %v4946 = vadd.f32 %v4613, %v4866
    %v4947 = vadd.f32 %v4615, %v4867
    %v4948 = vadd.f32 %v4617, %v4868
    %v4949 = vadd.f32 %v4619, %v4869
    %v4950 = vadd.f32 %v4621, %v4870
    %v4951 = vadd.f32 %v4623, %v4871
    %v4952 = vadd.f32 %v4625, %v4872
    %v4953 = vadd.f32 %v4627, %v4873
    %v4954 = vadd.f32 %v4629, %v4874
    %v4955 = vadd.f32 %v4631, %v4875
    %v4956 = vadd.f32 %v4633, %v4876
    %v4957 = vadd.f32 %v4635, %v4877
    %v4958 = vadd.f32 %v4637, %v4878
    %v4959 = vmul.f32 %v4639, 0.6666667
    %v4960 = vmul.f32 %v4641, 0.6666667
    %v4961 = vmul.f32 %v4643, 0.6666667
    %v4962 = vmul.f32 %v4645, 0.6666667
    %v4963 = vmul.f32 %v4647, 0.6666667
    %v4964 = vmul.f32 %v4649, 0.6666667
    %v4965 = vmul.f32 %v4651, 0.6666667
    %v4966 = vmul.f32 %v4653, 0.6666667
    %v4967 = vmul.f32 %v4655, 0.6666667
    %v4968 = vmul.f32 %v4657, 0.6666667
    %v4969 = vmul.f32 %v4659, 0.6666667
    %v4970 = vmul.f32 %v4661, 0.6666667
    %v4971 = vmul.f32 %v4663, 0.6666667
    %v4972 = vmul.f32 %v4665, 0.6666667
    %v4973 = vmul.f32 %v4667, 0.6666667
    %v4974 = vmul.f32 %v4669, 0.6666667
    %v4975 = vmul.f32 %v4671, 0.6666667
    %v4976 = vmul.f32 %v4673, 0.6666667
    %v4977 = vmul.f32 %v4675, 0.6666667
    %v4978 = vmul.f32 %v4677, 0.6666667
    %v4979 = vmul.f32 %v4679, 0.6666667
    %v4980 = vmul.f32 %v4681, 0.6666667
    %v4981 = vmul.f32 %v4683, 0.6666667
    %v4982 = vmul.f32 %v4685, 0.6666667
    %v4983 = vmul.f32 %v4687, 0.6666667
    %v4984 = vmul.f32 %v4689, 0.6666667
    %v4985 = vmul.f32 %v4691, 0.6666667
    %v4986 = vmul.f32 %v4693, 0.6666667
    %v4987 = vmul.f32 %v4695, 0.6666667
    %v4988 = vmul.f32 %v4697, 0.6666667
    %v4989 = vmul.f32 %v4699, 0.6666667
    %v4990 = vmul.f32 %v4701, 0.6666667
    %v4991 = vmul.f32 %v4703, 0.6666667
    %v4992 = vmul.f32 %v4705, 0.6666667
    %v4993 = vmul.f32 %v4707, 0.6666667
    %v4994 = vmul.f32 %v4709, 0.6666667
    %v4995 = vmul.f32 %v4711, 0.6666667
    %v4996 = vmul.f32 %v4713, 0.6666667
    %v4997 = vmul.f32 %v4715, 0.6666667
    %v4998 = vmul.f32 %v4717, 0.6666667
    %v4999 = vmul.f32 %v4719, 0.6666667
    %v5000 = vmul.f32 %v4721, 0.6666667
    %v5001 = vmul.f32 %v4723, 0.6666667
    %v5002 = vmul.f32 %v4725, 0.6666667
    %v5003 = vmul.f32 %v4727, 0.6666667
    %v5004 = vmul.f32 %v4729, 0.6666667
    %v5005 = vmul.f32 %v4731, 0.6666667
    %v5006 = vmul.f32 %v4733, 0.6666667
    %v5007 = vmul.f32 %v4735, 0.6666667
    %v5008 = vmul.f32 %v4737, 0.6666667
    %v5009 = vmul.f32 %v4739, 0.6666667
    %v5010 = vmul.f32 %v4741, 0.6666667
    %v5011 = vmul.f32 %v4743, 0.6666667
    %v5012 = vmul.f32 %v4745, 0.6666667
    %v5013 = vmul.f32 %v4747, 0.6666667
    %v5014 = vmul.f32 %v4749, 0.6666667
    %v5015 = vmul.f32 %v4751, 0.6666667
    %v5016 = vmul.f32 %v4753, 0.6666667
    %v5017 = vmul.f32 %v4755, 0.6666667
    %v5018 = vmul.f32 %v4757, 0.6666667
    %v5019 = vmul.f32 %v4759, 0.6666667
    %v5020 = vmul.f32 %v4761, 0.6666667
    %v5021 = vmul.f32 %v4763, 0.6666667
    %v5022 = vmul.f32 %v4765, 0.6666667
    %v5023 = vmul.f32 %v4767, 0.6666667
    %v5024 = vmul.f32 %v4769, 0.6666667
    %v5025 = vmul.f32 %v4771, 0.6666667
    %v5026 = vmul.f32 %v4773, 0.6666667
    %v5027 = vmul.f32 %v4775, 0.6666667
    %v5028 = vmul.f32 %v4777, 0.6666667
    %v5029 = vmul.f32 %v4779, 0.6666667
    %v5030 = vmul.f32 %v4781, 0.6666667
    %v5031 = vmul.f32 %v4783, 0.6666667
    %v5032 = vmul.f32 %v4785, 0.6666667
    %v5033 = vmul.f32 %v4787, 0.6666667
    %v5034 = vmul.f32 %v4789, 0.6666667
    %v5035 = vmul.f32 %v4791, 0.6666667
    %v5036 = vmul.f32 %v4793, 0.6666667
    %v5037 = vmul.f32 %v4795, 0.6666667
    %v5038 = vmul.f32 %v4797, 0.6666667
    %v5039 = vmul.f32 %v4479, 0.3333333
    %v5040 = vmul.f32 %v4481, 0.3333333
    %v5041 = vmul.f32 %v4483, 0.3333333
    %v5042 = vmul.f32 %v4485, 0.3333333
    %v5043 = vmul.f32 %v4487, 0.3333333
    %v5044 = vmul.f32 %v4489, 0.3333333
    %v5045 = vmul.f32 %v4491, 0.3333333
    %v5046 = vmul.f32 %v4493, 0.3333333
    %v5047 = vmul.f32 %v4495, 0.3333333
    %v5048 = vmul.f32 %v4497, 0.3333333
    %v5049 = vmul.f32 %v4499, 0.3333333
    %v5050 = vmul.f32 %v4501, 0.3333333
    %v5051 = vmul.f32 %v4503, 0.3333333
    %v5052 = vmul.f32 %v4505, 0.3333333
    %v5053 = vmul.f32 %v4507, 0.3333333
    %v5054 = vmul.f32 %v4509, 0.3333333
    %v5055 = vmul.f32 %v4511, 0.3333333
    %v5056 = vmul.f32 %v4513, 0.3333333
    %v5057 = vmul.f32 %v4515, 0.3333333
    %v5058 = vmul.f32 %v4517, 0.3333333
    %v5059 = vmul.f32 %v4519, 0.3333333
    %v5060 = vmul.f32 %v4521, 0.3333333
    %v5061 = vmul.f32 %v4523, 0.3333333
    %v5062 = vmul.f32 %v4525, 0.3333333
    %v5063 = vmul.f32 %v4527, 0.3333333
    %v5064 = vmul.f32 %v4529, 0.3333333
    %v5065 = vmul.f32 %v4531, 0.3333333
    %v5066 = vmul.f32 %v4533, 0.3333333
    %v5067 = vmul.f32 %v4535, 0.3333333
    %v5068 = vmul.f32 %v4537, 0.3333333
    %v5069 = vmul.f32 %v4539, 0.3333333
    %v5070 = vmul.f32 %v4541, 0.3333333
    %v5071 = vmul.f32 %v4543, 0.3333333
    %v5072 = vmul.f32 %v4545, 0.3333333
    %v5073 = vmul.f32 %v4547, 0.3333333
    %v5074 = vmul.f32 %v4549, 0.3333333
    %v5075 = vmul.f32 %v4551, 0.3333333
    %v5076 = vmul.f32 %v4553, 0.3333333
    %v5077 = vmul.f32 %v4555, 0.3333333
    %v5078 = vmul.f32 %v4557, 0.3333333
    %v5079 = vmul.f32 %v4559, 0.3333333
    %v5080 = vmul.f32 %v4561, 0.3333333
    %v5081 = vmul.f32 %v4563, 0.3333333
    %v5082 = vmul.f32 %v4565, 0.3333333
    %v5083 = vmul.f32 %v4567, 0.3333333
    %v5084 = vmul.f32 %v4569, 0.3333333
    %v5085 = vmul.f32 %v4571, 0.3333333
    %v5086 = vmul.f32 %v4573, 0.3333333
    %v5087 = vmul.f32 %v4575, 0.3333333
    %v5088 = vmul.f32 %v4577, 0.3333333
    %v5089 = vmul.f32 %v4579, 0.3333333
    %v5090 = vmul.f32 %v4581, 0.3333333
    %v5091 = vmul.f32 %v4583, 0.3333333
    %v5092 = vmul.f32 %v4585, 0.3333333
    %v5093 = vmul.f32 %v4587, 0.3333333
    %v5094 = vmul.f32 %v4589, 0.3333333
    %v5095 = vmul.f32 %v4591, 0.3333333
    %v5096 = vmul.f32 %v4593, 0.3333333
    %v5097 = vmul.f32 %v4595, 0.3333333
    %v5098 = vmul.f32 %v4597, 0.3333333
    %v5099 = vmul.f32 %v4599, 0.3333333
    %v5100 = vmul.f32 %v4601, 0.3333333
    %v5101 = vmul.f32 %v4603, 0.3333333
    %v5102 = vmul.f32 %v4605, 0.3333333
    %v5103 = vmul.f32 %v4607, 0.3333333
    %v5104 = vmul.f32 %v4609, 0.3333333
    %v5105 = vmul.f32 %v4611, 0.3333333
    %v5106 = vmul.f32 %v4613, 0.3333333
    %v5107 = vmul.f32 %v4615, 0.3333333
    %v5108 = vmul.f32 %v4617, 0.3333333
    %v5109 = vmul.f32 %v4619, 0.3333333
    %v5110 = vmul.f32 %v4621, 0.3333333
    %v5111 = vmul.f32 %v4623, 0.3333333
    %v5112 = vmul.f32 %v4625, 0.3333333
    %v5113 = vmul.f32 %v4627, 0.3333333
    %v5114 = vmul.f32 %v4629, 0.3333333
    %v5115 = vmul.f32 %v4631, 0.3333333
    %v5116 = vmul.f32 %v4633, 0.3333333
    %v5117 = vmul.f32 %v4635, 0.3333333
    %v5118 = vmul.f32 %v4637, 0.3333333
    %vm5199 = vcmask 1046528
    %v5200 = vrot.slane %v5039, 1
    %v5201 = vrot.slane %v5040, 1
    %v5202 = vsel %vm5199, %v5200, %v5201
    %v5203 = vrot.slane %v5041, 1
    %v5204 = vrot.slane %v5042, 1
    %v5205 = vsel %vm5199, %v5203, %v5204
    %v5206 = vrot.slane %v5043, 1
    %v5207 = vrot.slane %v5044, 1
    %v5208 = vsel %vm5199, %v5206, %v5207
    %v5209 = vrot.slane %v5045, 1
    %v5210 = vrot.slane %v5046, 1
    %v5211 = vsel %vm5199, %v5209, %v5210
    %v5212 = vrot.slane %v5047, 1
    %v5213 = vrot.slane %v5048, 1
    %v5214 = vsel %vm5199, %v5212, %v5213
    %v5215 = vrot.slane %v5049, 1
    %v5216 = vrot.slane %v5050, 1
    %v5217 = vsel %vm5199, %v5215, %v5216
    %v5218 = vrot.slane %v5051, 1
    %v5219 = vrot.slane %v5052, 1
    %v5220 = vsel %vm5199, %v5218, %v5219
    %v5221 = vrot.slane %v5053, 1
    %v5222 = vrot.slane %v5054, 1
    %v5223 = vsel %vm5199, %v5221, %v5222
    %v5224 = vrot.slane %v5055, 1
    %v5225 = vrot.slane %v5056, 1
    %v5226 = vsel %vm5199, %v5224, %v5225
    %v5227 = vrot.slane %v5057, 1
    %v5228 = vrot.slane %v5058, 1
    %v5229 = vsel %vm5199, %v5227, %v5228
    %v5230 = vrot.slane %v5059, 1
    %v5231 = vrot.slane %v5060, 1
    %v5232 = vsel %vm5199, %v5230, %v5231
    %v5233 = vrot.slane %v5061, 1
    %v5234 = vrot.slane %v5062, 1
    %v5235 = vsel %vm5199, %v5233, %v5234
    %v5236 = vrot.slane %v5063, 1
    %v5237 = vrot.slane %v5064, 1
    %v5238 = vsel %vm5199, %v5236, %v5237
    %v5239 = vrot.slane %v5065, 1
    %v5240 = vrot.slane %v5066, 1
    %v5241 = vsel %vm5199, %v5239, %v5240
    %v5242 = vrot.slane %v5067, 1
    %v5243 = vrot.slane %v5068, 1
    %v5244 = vsel %vm5199, %v5242, %v5243
    %v5245 = vrot.slane %v5069, 1
    %v5246 = vrot.slane %v5070, 1
    %v5247 = vsel %vm5199, %v5245, %v5246
    %v5248 = vrot.slane %v5071, 1
    %v5249 = vrot.slane %v5072, 1
    %v5250 = vsel %vm5199, %v5248, %v5249
    %v5251 = vrot.slane %v5073, 1
    %v5252 = vrot.slane %v5074, 1
    %v5253 = vsel %vm5199, %v5251, %v5252
    %v5254 = vrot.slane %v5075, 1
    %v5255 = vrot.slane %v5076, 1
    %v5256 = vsel %vm5199, %v5254, %v5255
    %v5257 = vrot.slane %v5077, 1
    %v5258 = vrot.slane %v5078, 1
    %v5259 = vsel %vm5199, %v5257, %v5258
    %v5260 = vrot.slane %v5079, 1
    %v5261 = vrot.slane %v5080, 1
    %v5262 = vsel %vm5199, %v5260, %v5261
    %v5263 = vrot.slane %v5081, 1
    %v5264 = vrot.slane %v5082, 1
    %v5265 = vsel %vm5199, %v5263, %v5264
    %v5266 = vrot.slane %v5083, 1
    %v5267 = vrot.slane %v5084, 1
    %v5268 = vsel %vm5199, %v5266, %v5267
    %v5269 = vrot.slane %v5085, 1
    %v5270 = vrot.slane %v5086, 1
    %v5271 = vsel %vm5199, %v5269, %v5270
    %v5272 = vrot.slane %v5087, 1
    %v5273 = vrot.slane %v5088, 1
    %v5274 = vsel %vm5199, %v5272, %v5273
    %v5275 = vrot.slane %v5089, 1
    %v5276 = vrot.slane %v5090, 1
    %v5277 = vsel %vm5199, %v5275, %v5276
    %v5278 = vrot.slane %v5091, 1
    %v5279 = vrot.slane %v5092, 1
    %v5280 = vsel %vm5199, %v5278, %v5279
    %v5281 = vrot.slane %v5093, 1
    %v5282 = vrot.slane %v5094, 1
    %v5283 = vsel %vm5199, %v5281, %v5282
    %v5284 = vrot.slane %v5095, 1
    %v5285 = vrot.slane %v5096, 1
    %v5286 = vsel %vm5199, %v5284, %v5285
    %v5287 = vrot.slane %v5097, 1
    %v5288 = vrot.slane %v5098, 1
    %v5289 = vsel %vm5199, %v5287, %v5288
    %v5290 = vrot.slane %v5099, 1
    %v5291 = vrot.slane %v5100, 1
    %v5292 = vsel %vm5199, %v5290, %v5291
    %v5293 = vrot.slane %v5101, 1
    %v5294 = vrot.slane %v5102, 1
    %v5295 = vsel %vm5199, %v5293, %v5294
    %v5296 = vrot.slane %v5103, 1
    %v5297 = vrot.slane %v5104, 1
    %v5298 = vsel %vm5199, %v5296, %v5297
    %v5299 = vrot.slane %v5105, 1
    %v5300 = vrot.slane %v5106, 1
    %v5301 = vsel %vm5199, %v5299, %v5300
    %v5302 = vrot.slane %v5107, 1
    %v5303 = vrot.slane %v5108, 1
    %v5304 = vsel %vm5199, %v5302, %v5303
    %v5305 = vrot.slane %v5109, 1
    %v5306 = vrot.slane %v5110, 1
    %v5307 = vsel %vm5199, %v5305, %v5306
    %v5308 = vrot.slane %v5111, 1
    %v5309 = vrot.slane %v5112, 1
    %v5310 = vsel %vm5199, %v5308, %v5309
    %v5311 = vrot.slane %v5113, 1
    %v5312 = vrot.slane %v5114, 1
    %v5313 = vsel %vm5199, %v5311, %v5312
    %v5314 = vrot.slane %v5115, 1
    %v5315 = vrot.slane %v5116, 1
    %v5316 = vsel %vm5199, %v5314, %v5315
    %v5317 = vrot.slane %v5117, 1
    %v5318 = vrot.slane %v5118, 1
    %v5319 = vsel %vm5199, %v5317, %v5318
    %v5400 = vadd.f32 %v4959, %v5202
    %v5401 = vadd.f32 %v4960, %v5201
    %v5402 = vadd.f32 %v4961, %v5205
    %v5403 = vadd.f32 %v4962, %v5204
    %v5404 = vadd.f32 %v4963, %v5208
    %v5405 = vadd.f32 %v4964, %v5207
    %v5406 = vadd.f32 %v4965, %v5211
    %v5407 = vadd.f32 %v4966, %v5210
    %v5408 = vadd.f32 %v4967, %v5214
    %v5409 = vadd.f32 %v4968, %v5213
    %v5410 = vadd.f32 %v4969, %v5217
    %v5411 = vadd.f32 %v4970, %v5216
    %v5412 = vadd.f32 %v4971, %v5220
    %v5413 = vadd.f32 %v4972, %v5219
    %v5414 = vadd.f32 %v4973, %v5223
    %v5415 = vadd.f32 %v4974, %v5222
    %v5416 = vadd.f32 %v4975, %v5226
    %v5417 = vadd.f32 %v4976, %v5225
    %v5418 = vadd.f32 %v4977, %v5229
    %v5419 = vadd.f32 %v4978, %v5228
    %v5420 = vadd.f32 %v4979, %v5232
    %v5421 = vadd.f32 %v4980, %v5231
    %v5422 = vadd.f32 %v4981, %v5235
    %v5423 = vadd.f32 %v4982, %v5234
    %v5424 = vadd.f32 %v4983, %v5238
    %v5425 = vadd.f32 %v4984, %v5237
    %v5426 = vadd.f32 %v4985, %v5241
    %v5427 = vadd.f32 %v4986, %v5240
    %v5428 = vadd.f32 %v4987, %v5244
    %v5429 = vadd.f32 %v4988, %v5243
    %v5430 = vadd.f32 %v4989, %v5247
    %v5431 = vadd.f32 %v4990, %v5246
    %v5432 = vadd.f32 %v4991, %v5250
    %v5433 = vadd.f32 %v4992, %v5249
    %v5434 = vadd.f32 %v4993, %v5253
    %v5435 = vadd.f32 %v4994, %v5252
    %v5436 = vadd.f32 %v4995, %v5256
    %v5437 = vadd.f32 %v4996, %v5255
    %v5438 = vadd.f32 %v4997, %v5259
    %v5439 = vadd.f32 %v4998, %v5258
    %v5440 = vadd.f32 %v4999, %v5262
    %v5441 = vadd.f32 %v5000, %v5261
    %v5442 = vadd.f32 %v5001, %v5265
    %v5443 = vadd.f32 %v5002, %v5264
    %v5444 = vadd.f32 %v5003, %v5268
    %v5445 = vadd.f32 %v5004, %v5267
    %v5446 = vadd.f32 %v5005, %v5271
    %v5447 = vadd.f32 %v5006, %v5270
    %v5448 = vadd.f32 %v5007, %v5274
    %v5449 = vadd.f32 %v5008, %v5273
    %v5450 = vadd.f32 %v5009, %v5277
    %v5451 = vadd.f32 %v5010, %v5276
    %v5452 = vadd.f32 %v5011, %v5280
    %v5453 = vadd.f32 %v5012, %v5279
    %v5454 = vadd.f32 %v5013, %v5283
    %v5455 = vadd.f32 %v5014, %v5282
    %v5456 = vadd.f32 %v5015, %v5286
    %v5457 = vadd.f32 %v5016, %v5285
    %v5458 = vadd.f32 %v5017, %v5289
    %v5459 = vadd.f32 %v5018, %v5288
    %v5460 = vadd.f32 %v5019, %v5292
    %v5461 = vadd.f32 %v5020, %v5291
    %v5462 = vadd.f32 %v5021, %v5295
    %v5463 = vadd.f32 %v5022, %v5294
    %v5464 = vadd.f32 %v5023, %v5298
    %v5465 = vadd.f32 %v5024, %v5297
    %v5466 = vadd.f32 %v5025, %v5301
    %v5467 = vadd.f32 %v5026, %v5300
    %v5468 = vadd.f32 %v5027, %v5304
    %v5469 = vadd.f32 %v5028, %v5303
    %v5470 = vadd.f32 %v5029, %v5307
    %v5471 = vadd.f32 %v5030, %v5306
    %v5472 = vadd.f32 %v5031, %v5310
    %v5473 = vadd.f32 %v5032, %v5309
    %v5474 = vadd.f32 %v5033, %v5313
    %v5475 = vadd.f32 %v5034, %v5312
    %v5476 = vadd.f32 %v5035, %v5316
    %v5477 = vadd.f32 %v5036, %v5315
    %v5478 = vadd.f32 %v5037, %v5319
    %v5479 = vadd.f32 %v5038, %v5318
    %v5480 = vmul.f32 %v4479, 0.33333337
    %v5481 = vmul.f32 %v4481, 0.33333337
    %v5482 = vmul.f32 %v4483, 0.33333337
    %v5483 = vmul.f32 %v4485, 0.33333337
    %v5484 = vmul.f32 %v4487, 0.33333337
    %v5485 = vmul.f32 %v4489, 0.33333337
    %v5486 = vmul.f32 %v4491, 0.33333337
    %v5487 = vmul.f32 %v4493, 0.33333337
    %v5488 = vmul.f32 %v4495, 0.33333337
    %v5489 = vmul.f32 %v4497, 0.33333337
    %v5490 = vmul.f32 %v4499, 0.33333337
    %v5491 = vmul.f32 %v4501, 0.33333337
    %v5492 = vmul.f32 %v4503, 0.33333337
    %v5493 = vmul.f32 %v4505, 0.33333337
    %v5494 = vmul.f32 %v4507, 0.33333337
    %v5495 = vmul.f32 %v4509, 0.33333337
    %v5496 = vmul.f32 %v4511, 0.33333337
    %v5497 = vmul.f32 %v4513, 0.33333337
    %v5498 = vmul.f32 %v4515, 0.33333337
    %v5499 = vmul.f32 %v4517, 0.33333337
    %v5500 = vmul.f32 %v4519, 0.33333337
    %v5501 = vmul.f32 %v4521, 0.33333337
    %v5502 = vmul.f32 %v4523, 0.33333337
    %v5503 = vmul.f32 %v4525, 0.33333337
    %v5504 = vmul.f32 %v4527, 0.33333337
    %v5505 = vmul.f32 %v4529, 0.33333337
    %v5506 = vmul.f32 %v4531, 0.33333337
    %v5507 = vmul.f32 %v4533, 0.33333337
    %v5508 = vmul.f32 %v4535, 0.33333337
    %v5509 = vmul.f32 %v4537, 0.33333337
    %v5510 = vmul.f32 %v4539, 0.33333337
    %v5511 = vmul.f32 %v4541, 0.33333337
    %v5512 = vmul.f32 %v4543, 0.33333337
    %v5513 = vmul.f32 %v4545, 0.33333337
    %v5514 = vmul.f32 %v4547, 0.33333337
    %v5515 = vmul.f32 %v4549, 0.33333337
    %v5516 = vmul.f32 %v4551, 0.33333337
    %v5517 = vmul.f32 %v4553, 0.33333337
    %v5518 = vmul.f32 %v4555, 0.33333337
    %v5519 = vmul.f32 %v4557, 0.33333337
    %v5520 = vmul.f32 %v4559, 0.33333337
    %v5521 = vmul.f32 %v4561, 0.33333337
    %v5522 = vmul.f32 %v4563, 0.33333337
    %v5523 = vmul.f32 %v4565, 0.33333337
    %v5524 = vmul.f32 %v4567, 0.33333337
    %v5525 = vmul.f32 %v4569, 0.33333337
    %v5526 = vmul.f32 %v4571, 0.33333337
    %v5527 = vmul.f32 %v4573, 0.33333337
    %v5528 = vmul.f32 %v4575, 0.33333337
    %v5529 = vmul.f32 %v4577, 0.33333337
    %v5530 = vmul.f32 %v4579, 0.33333337
    %v5531 = vmul.f32 %v4581, 0.33333337
    %v5532 = vmul.f32 %v4583, 0.33333337
    %v5533 = vmul.f32 %v4585, 0.33333337
    %v5534 = vmul.f32 %v4587, 0.33333337
    %v5535 = vmul.f32 %v4589, 0.33333337
    %v5536 = vmul.f32 %v4591, 0.33333337
    %v5537 = vmul.f32 %v4593, 0.33333337
    %v5538 = vmul.f32 %v4595, 0.33333337
    %v5539 = vmul.f32 %v4597, 0.33333337
    %v5540 = vmul.f32 %v4599, 0.33333337
    %v5541 = vmul.f32 %v4601, 0.33333337
    %v5542 = vmul.f32 %v4603, 0.33333337
    %v5543 = vmul.f32 %v4605, 0.33333337
    %v5544 = vmul.f32 %v4607, 0.33333337
    %v5545 = vmul.f32 %v4609, 0.33333337
    %v5546 = vmul.f32 %v4611, 0.33333337
    %v5547 = vmul.f32 %v4613, 0.33333337
    %v5548 = vmul.f32 %v4615, 0.33333337
    %v5549 = vmul.f32 %v4617, 0.33333337
    %v5550 = vmul.f32 %v4619, 0.33333337
    %v5551 = vmul.f32 %v4621, 0.33333337
    %v5552 = vmul.f32 %v4623, 0.33333337
    %v5553 = vmul.f32 %v4625, 0.33333337
    %v5554 = vmul.f32 %v4627, 0.33333337
    %v5555 = vmul.f32 %v4629, 0.33333337
    %v5556 = vmul.f32 %v4631, 0.33333337
    %v5557 = vmul.f32 %v4633, 0.33333337
    %v5558 = vmul.f32 %v4635, 0.33333337
    %v5559 = vmul.f32 %v4637, 0.33333337
    %v5560 = vmul.f32 %v4639, 0.6666666
    %v5561 = vmul.f32 %v4641, 0.6666666
    %v5562 = vmul.f32 %v4643, 0.6666666
    %v5563 = vmul.f32 %v4645, 0.6666666
    %v5564 = vmul.f32 %v4647, 0.6666666
    %v5565 = vmul.f32 %v4649, 0.6666666
    %v5566 = vmul.f32 %v4651, 0.6666666
    %v5567 = vmul.f32 %v4653, 0.6666666
    %v5568 = vmul.f32 %v4655, 0.6666666
    %v5569 = vmul.f32 %v4657, 0.6666666
    %v5570 = vmul.f32 %v4659, 0.6666666
    %v5571 = vmul.f32 %v4661, 0.6666666
    %v5572 = vmul.f32 %v4663, 0.6666666
    %v5573 = vmul.f32 %v4665, 0.6666666
    %v5574 = vmul.f32 %v4667, 0.6666666
    %v5575 = vmul.f32 %v4669, 0.6666666
    %v5576 = vmul.f32 %v4671, 0.6666666
    %v5577 = vmul.f32 %v4673, 0.6666666
    %v5578 = vmul.f32 %v4675, 0.6666666
    %v5579 = vmul.f32 %v4677, 0.6666666
    %v5580 = vmul.f32 %v4679, 0.6666666
    %v5581 = vmul.f32 %v4681, 0.6666666
    %v5582 = vmul.f32 %v4683, 0.6666666
    %v5583 = vmul.f32 %v4685, 0.6666666
    %v5584 = vmul.f32 %v4687, 0.6666666
    %v5585 = vmul.f32 %v4689, 0.6666666
    %v5586 = vmul.f32 %v4691, 0.6666666
    %v5587 = vmul.f32 %v4693, 0.6666666
    %v5588 = vmul.f32 %v4695, 0.6666666
    %v5589 = vmul.f32 %v4697, 0.6666666
    %v5590 = vmul.f32 %v4699, 0.6666666
    %v5591 = vmul.f32 %v4701, 0.6666666
    %v5592 = vmul.f32 %v4703, 0.6666666
    %v5593 = vmul.f32 %v4705, 0.6666666
    %v5594 = vmul.f32 %v4707, 0.6666666
    %v5595 = vmul.f32 %v4709, 0.6666666
    %v5596 = vmul.f32 %v4711, 0.6666666
    %v5597 = vmul.f32 %v4713, 0.6666666
    %v5598 = vmul.f32 %v4715, 0.6666666
    %v5599 = vmul.f32 %v4717, 0.6666666
    %v5600 = vmul.f32 %v4719, 0.6666666
    %v5601 = vmul.f32 %v4721, 0.6666666
    %v5602 = vmul.f32 %v4723, 0.6666666
    %v5603 = vmul.f32 %v4725, 0.6666666
    %v5604 = vmul.f32 %v4727, 0.6666666
    %v5605 = vmul.f32 %v4729, 0.6666666
    %v5606 = vmul.f32 %v4731, 0.6666666
    %v5607 = vmul.f32 %v4733, 0.6666666
    %v5608 = vmul.f32 %v4735, 0.6666666
    %v5609 = vmul.f32 %v4737, 0.6666666
    %v5610 = vmul.f32 %v4739, 0.6666666
    %v5611 = vmul.f32 %v4741, 0.6666666
    %v5612 = vmul.f32 %v4743, 0.6666666
    %v5613 = vmul.f32 %v4745, 0.6666666
    %v5614 = vmul.f32 %v4747, 0.6666666
    %v5615 = vmul.f32 %v4749, 0.6666666
    %v5616 = vmul.f32 %v4751, 0.6666666
    %v5617 = vmul.f32 %v4753, 0.6666666
    %v5618 = vmul.f32 %v4755, 0.6666666
    %v5619 = vmul.f32 %v4757, 0.6666666
    %v5620 = vmul.f32 %v4759, 0.6666666
    %v5621 = vmul.f32 %v4761, 0.6666666
    %v5622 = vmul.f32 %v4763, 0.6666666
    %v5623 = vmul.f32 %v4765, 0.6666666
    %v5624 = vmul.f32 %v4767, 0.6666666
    %v5625 = vmul.f32 %v4769, 0.6666666
    %v5626 = vmul.f32 %v4771, 0.6666666
    %v5627 = vmul.f32 %v4773, 0.6666666
    %v5628 = vmul.f32 %v4775, 0.6666666
    %v5629 = vmul.f32 %v4777, 0.6666666
    %v5630 = vmul.f32 %v4779, 0.6666666
    %v5631 = vmul.f32 %v4781, 0.6666666
    %v5632 = vmul.f32 %v4783, 0.6666666
    %v5633 = vmul.f32 %v4785, 0.6666666
    %v5634 = vmul.f32 %v4787, 0.6666666
    %v5635 = vmul.f32 %v4789, 0.6666666
    %v5636 = vmul.f32 %v4791, 0.6666666
    %v5637 = vmul.f32 %v4793, 0.6666666
    %v5638 = vmul.f32 %v4795, 0.6666666
    %v5639 = vmul.f32 %v4797, 0.6666666
    %v5640 = vadd.f32 %v5480, %v5560
    %v5641 = vadd.f32 %v5481, %v5561
    %v5642 = vadd.f32 %v5482, %v5562
    %v5643 = vadd.f32 %v5483, %v5563
    %v5644 = vadd.f32 %v5484, %v5564
    %v5645 = vadd.f32 %v5485, %v5565
    %v5646 = vadd.f32 %v5486, %v5566
    %v5647 = vadd.f32 %v5487, %v5567
    %v5648 = vadd.f32 %v5488, %v5568
    %v5649 = vadd.f32 %v5489, %v5569
    %v5650 = vadd.f32 %v5490, %v5570
    %v5651 = vadd.f32 %v5491, %v5571
    %v5652 = vadd.f32 %v5492, %v5572
    %v5653 = vadd.f32 %v5493, %v5573
    %v5654 = vadd.f32 %v5494, %v5574
    %v5655 = vadd.f32 %v5495, %v5575
    %v5656 = vadd.f32 %v5496, %v5576
    %v5657 = vadd.f32 %v5497, %v5577
    %v5658 = vadd.f32 %v5498, %v5578
    %v5659 = vadd.f32 %v5499, %v5579
    %v5660 = vadd.f32 %v5500, %v5580
    %v5661 = vadd.f32 %v5501, %v5581
    %v5662 = vadd.f32 %v5502, %v5582
    %v5663 = vadd.f32 %v5503, %v5583
    %v5664 = vadd.f32 %v5504, %v5584
    %v5665 = vadd.f32 %v5505, %v5585
    %v5666 = vadd.f32 %v5506, %v5586
    %v5667 = vadd.f32 %v5507, %v5587
    %v5668 = vadd.f32 %v5508, %v5588
    %v5669 = vadd.f32 %v5509, %v5589
    %v5670 = vadd.f32 %v5510, %v5590
    %v5671 = vadd.f32 %v5511, %v5591
    %v5672 = vadd.f32 %v5512, %v5592
    %v5673 = vadd.f32 %v5513, %v5593
    %v5674 = vadd.f32 %v5514, %v5594
    %v5675 = vadd.f32 %v5515, %v5595
    %v5676 = vadd.f32 %v5516, %v5596
    %v5677 = vadd.f32 %v5517, %v5597
    %v5678 = vadd.f32 %v5518, %v5598
    %v5679 = vadd.f32 %v5519, %v5599
    %v5680 = vadd.f32 %v5520, %v5600
    %v5681 = vadd.f32 %v5521, %v5601
    %v5682 = vadd.f32 %v5522, %v5602
    %v5683 = vadd.f32 %v5523, %v5603
    %v5684 = vadd.f32 %v5524, %v5604
    %v5685 = vadd.f32 %v5525, %v5605
    %v5686 = vadd.f32 %v5526, %v5606
    %v5687 = vadd.f32 %v5527, %v5607
    %v5688 = vadd.f32 %v5528, %v5608
    %v5689 = vadd.f32 %v5529, %v5609
    %v5690 = vadd.f32 %v5530, %v5610
    %v5691 = vadd.f32 %v5531, %v5611
    %v5692 = vadd.f32 %v5532, %v5612
    %v5693 = vadd.f32 %v5533, %v5613
    %v5694 = vadd.f32 %v5534, %v5614
    %v5695 = vadd.f32 %v5535, %v5615
    %v5696 = vadd.f32 %v5536, %v5616
    %v5697 = vadd.f32 %v5537, %v5617
    %v5698 = vadd.f32 %v5538, %v5618
    %v5699 = vadd.f32 %v5539, %v5619
    %v5700 = vadd.f32 %v5540, %v5620
    %v5701 = vadd.f32 %v5541, %v5621
    %v5702 = vadd.f32 %v5542, %v5622
    %v5703 = vadd.f32 %v5543, %v5623
    %v5704 = vadd.f32 %v5544, %v5624
    %v5705 = vadd.f32 %v5545, %v5625
    %v5706 = vadd.f32 %v5546, %v5626
    %v5707 = vadd.f32 %v5547, %v5627
    %v5708 = vadd.f32 %v5548, %v5628
    %v5709 = vadd.f32 %v5549, %v5629
    %v5710 = vadd.f32 %v5550, %v5630
    %v5711 = vadd.f32 %v5551, %v5631
    %v5712 = vadd.f32 %v5552, %v5632
    %v5713 = vadd.f32 %v5553, %v5633
    %v5714 = vadd.f32 %v5554, %v5634
    %v5715 = vadd.f32 %v5555, %v5635
    %v5716 = vadd.f32 %v5556, %v5636
    %v5717 = vadd.f32 %v5557, %v5637
    %v5718 = vadd.f32 %v5558, %v5638
    %v5719 = vadd.f32 %v5559, %v5639
    %v5720 = vadd.f32 %v5039, %v4959
    %v5721 = vadd.f32 %v5040, %v4960
    %v5722 = vadd.f32 %v5041, %v4961
    %v5723 = vadd.f32 %v5042, %v4962
    %v5724 = vadd.f32 %v5043, %v4963
    %v5725 = vadd.f32 %v5044, %v4964
    %v5726 = vadd.f32 %v5045, %v4965
    %v5727 = vadd.f32 %v5046, %v4966
    %v5728 = vadd.f32 %v5047, %v4967
    %v5729 = vadd.f32 %v5048, %v4968
    %v5730 = vadd.f32 %v5049, %v4969
    %v5731 = vadd.f32 %v5050, %v4970
    %v5732 = vadd.f32 %v5051, %v4971
    %v5733 = vadd.f32 %v5052, %v4972
    %v5734 = vadd.f32 %v5053, %v4973
    %v5735 = vadd.f32 %v5054, %v4974
    %v5736 = vadd.f32 %v5055, %v4975
    %v5737 = vadd.f32 %v5056, %v4976
    %v5738 = vadd.f32 %v5057, %v4977
    %v5739 = vadd.f32 %v5058, %v4978
    %v5740 = vadd.f32 %v5059, %v4979
    %v5741 = vadd.f32 %v5060, %v4980
    %v5742 = vadd.f32 %v5061, %v4981
    %v5743 = vadd.f32 %v5062, %v4982
    %v5744 = vadd.f32 %v5063, %v4983
    %v5745 = vadd.f32 %v5064, %v4984
    %v5746 = vadd.f32 %v5065, %v4985
    %v5747 = vadd.f32 %v5066, %v4986
    %v5748 = vadd.f32 %v5067, %v4987
    %v5749 = vadd.f32 %v5068, %v4988
    %v5750 = vadd.f32 %v5069, %v4989
    %v5751 = vadd.f32 %v5070, %v4990
    %v5752 = vadd.f32 %v5071, %v4991
    %v5753 = vadd.f32 %v5072, %v4992
    %v5754 = vadd.f32 %v5073, %v4993
    %v5755 = vadd.f32 %v5074, %v4994
    %v5756 = vadd.f32 %v5075, %v4995
    %v5757 = vadd.f32 %v5076, %v4996
    %v5758 = vadd.f32 %v5077, %v4997
    %v5759 = vadd.f32 %v5078, %v4998
    %v5760 = vadd.f32 %v5079, %v4999
    %v5761 = vadd.f32 %v5080, %v5000
    %v5762 = vadd.f32 %v5081, %v5001
    %v5763 = vadd.f32 %v5082, %v5002
    %v5764 = vadd.f32 %v5083, %v5003
    %v5765 = vadd.f32 %v5084, %v5004
    %v5766 = vadd.f32 %v5085, %v5005
    %v5767 = vadd.f32 %v5086, %v5006
    %v5768 = vadd.f32 %v5087, %v5007
    %v5769 = vadd.f32 %v5088, %v5008
    %v5770 = vadd.f32 %v5089, %v5009
    %v5771 = vadd.f32 %v5090, %v5010
    %v5772 = vadd.f32 %v5091, %v5011
    %v5773 = vadd.f32 %v5092, %v5012
    %v5774 = vadd.f32 %v5093, %v5013
    %v5775 = vadd.f32 %v5094, %v5014
    %v5776 = vadd.f32 %v5095, %v5015
    %v5777 = vadd.f32 %v5096, %v5016
    %v5778 = vadd.f32 %v5097, %v5017
    %v5779 = vadd.f32 %v5098, %v5018
    %v5780 = vadd.f32 %v5099, %v5019
    %v5781 = vadd.f32 %v5100, %v5020
    %v5782 = vadd.f32 %v5101, %v5021
    %v5783 = vadd.f32 %v5102, %v5022
    %v5784 = vadd.f32 %v5103, %v5023
    %v5785 = vadd.f32 %v5104, %v5024
    %v5786 = vadd.f32 %v5105, %v5025
    %v5787 = vadd.f32 %v5106, %v5026
    %v5788 = vadd.f32 %v5107, %v5027
    %v5789 = vadd.f32 %v5108, %v5028
    %v5790 = vadd.f32 %v5109, %v5029
    %v5791 = vadd.f32 %v5110, %v5030
    %v5792 = vadd.f32 %v5111, %v5031
    %v5793 = vadd.f32 %v5112, %v5032
    %v5794 = vadd.f32 %v5113, %v5033
    %v5795 = vadd.f32 %v5114, %v5034
    %v5796 = vadd.f32 %v5115, %v5035
    %v5797 = vadd.f32 %v5116, %v5036
    %v5798 = vadd.f32 %v5117, %v5037
    %v5799 = vadd.f32 %v5118, %v5038
    %v5880 = vrot.slane %v5480, 1
    %v5881 = vrot.slane %v5481, 1
    %v5882 = vsel %vm5199, %v5880, %v5881
    %v5883 = vrot.slane %v5482, 1
    %v5884 = vrot.slane %v5483, 1
    %v5885 = vsel %vm5199, %v5883, %v5884
    %v5886 = vrot.slane %v5484, 1
    %v5887 = vrot.slane %v5485, 1
    %v5888 = vsel %vm5199, %v5886, %v5887
    %v5889 = vrot.slane %v5486, 1
    %v5890 = vrot.slane %v5487, 1
    %v5891 = vsel %vm5199, %v5889, %v5890
    %v5892 = vrot.slane %v5488, 1
    %v5893 = vrot.slane %v5489, 1
    %v5894 = vsel %vm5199, %v5892, %v5893
    %v5895 = vrot.slane %v5490, 1
    %v5896 = vrot.slane %v5491, 1
    %v5897 = vsel %vm5199, %v5895, %v5896
    %v5898 = vrot.slane %v5492, 1
    %v5899 = vrot.slane %v5493, 1
    %v5900 = vsel %vm5199, %v5898, %v5899
    %v5901 = vrot.slane %v5494, 1
    %v5902 = vrot.slane %v5495, 1
    %v5903 = vsel %vm5199, %v5901, %v5902
    %v5904 = vrot.slane %v5496, 1
    %v5905 = vrot.slane %v5497, 1
    %v5906 = vsel %vm5199, %v5904, %v5905
    %v5907 = vrot.slane %v5498, 1
    %v5908 = vrot.slane %v5499, 1
    %v5909 = vsel %vm5199, %v5907, %v5908
    %v5910 = vrot.slane %v5500, 1
    %v5911 = vrot.slane %v5501, 1
    %v5912 = vsel %vm5199, %v5910, %v5911
    %v5913 = vrot.slane %v5502, 1
    %v5914 = vrot.slane %v5503, 1
    %v5915 = vsel %vm5199, %v5913, %v5914
    %v5916 = vrot.slane %v5504, 1
    %v5917 = vrot.slane %v5505, 1
    %v5918 = vsel %vm5199, %v5916, %v5917
    %v5919 = vrot.slane %v5506, 1
    %v5920 = vrot.slane %v5507, 1
    %v5921 = vsel %vm5199, %v5919, %v5920
    %v5922 = vrot.slane %v5508, 1
    %v5923 = vrot.slane %v5509, 1
    %v5924 = vsel %vm5199, %v5922, %v5923
    %v5925 = vrot.slane %v5510, 1
    %v5926 = vrot.slane %v5511, 1
    %v5927 = vsel %vm5199, %v5925, %v5926
    %v5928 = vrot.slane %v5512, 1
    %v5929 = vrot.slane %v5513, 1
    %v5930 = vsel %vm5199, %v5928, %v5929
    %v5931 = vrot.slane %v5514, 1
    %v5932 = vrot.slane %v5515, 1
    %v5933 = vsel %vm5199, %v5931, %v5932
    %v5934 = vrot.slane %v5516, 1
    %v5935 = vrot.slane %v5517, 1
    %v5936 = vsel %vm5199, %v5934, %v5935
    %v5937 = vrot.slane %v5518, 1
    %v5938 = vrot.slane %v5519, 1
    %v5939 = vsel %vm5199, %v5937, %v5938
    %v5940 = vrot.slane %v5520, 1
    %v5941 = vrot.slane %v5521, 1
    %v5942 = vsel %vm5199, %v5940, %v5941
    %v5943 = vrot.slane %v5522, 1
    %v5944 = vrot.slane %v5523, 1
    %v5945 = vsel %vm5199, %v5943, %v5944
    %v5946 = vrot.slane %v5524, 1
    %v5947 = vrot.slane %v5525, 1
    %v5948 = vsel %vm5199, %v5946, %v5947
    %v5949 = vrot.slane %v5526, 1
    %v5950 = vrot.slane %v5527, 1
    %v5951 = vsel %vm5199, %v5949, %v5950
    %v5952 = vrot.slane %v5528, 1
    %v5953 = vrot.slane %v5529, 1
    %v5954 = vsel %vm5199, %v5952, %v5953
    %v5955 = vrot.slane %v5530, 1
    %v5956 = vrot.slane %v5531, 1
    %v5957 = vsel %vm5199, %v5955, %v5956
    %v5958 = vrot.slane %v5532, 1
    %v5959 = vrot.slane %v5533, 1
    %v5960 = vsel %vm5199, %v5958, %v5959
    %v5961 = vrot.slane %v5534, 1
    %v5962 = vrot.slane %v5535, 1
    %v5963 = vsel %vm5199, %v5961, %v5962
    %v5964 = vrot.slane %v5536, 1
    %v5965 = vrot.slane %v5537, 1
    %v5966 = vsel %vm5199, %v5964, %v5965
    %v5967 = vrot.slane %v5538, 1
    %v5968 = vrot.slane %v5539, 1
    %v5969 = vsel %vm5199, %v5967, %v5968
    %v5970 = vrot.slane %v5540, 1
    %v5971 = vrot.slane %v5541, 1
    %v5972 = vsel %vm5199, %v5970, %v5971
    %v5973 = vrot.slane %v5542, 1
    %v5974 = vrot.slane %v5543, 1
    %v5975 = vsel %vm5199, %v5973, %v5974
    %v5976 = vrot.slane %v5544, 1
    %v5977 = vrot.slane %v5545, 1
    %v5978 = vsel %vm5199, %v5976, %v5977
    %v5979 = vrot.slane %v5546, 1
    %v5980 = vrot.slane %v5547, 1
    %v5981 = vsel %vm5199, %v5979, %v5980
    %v5982 = vrot.slane %v5548, 1
    %v5983 = vrot.slane %v5549, 1
    %v5984 = vsel %vm5199, %v5982, %v5983
    %v5985 = vrot.slane %v5550, 1
    %v5986 = vrot.slane %v5551, 1
    %v5987 = vsel %vm5199, %v5985, %v5986
    %v5988 = vrot.slane %v5552, 1
    %v5989 = vrot.slane %v5553, 1
    %v5990 = vsel %vm5199, %v5988, %v5989
    %v5991 = vrot.slane %v5554, 1
    %v5992 = vrot.slane %v5555, 1
    %v5993 = vsel %vm5199, %v5991, %v5992
    %v5994 = vrot.slane %v5556, 1
    %v5995 = vrot.slane %v5557, 1
    %v5996 = vsel %vm5199, %v5994, %v5995
    %v5997 = vrot.slane %v5558, 1
    %v5998 = vrot.slane %v5559, 1
    %v5999 = vsel %vm5199, %v5997, %v5998
    %v6080 = vadd.f32 %v5560, %v5882
    %v6081 = vadd.f32 %v5561, %v5881
    %v6082 = vadd.f32 %v5562, %v5885
    %v6083 = vadd.f32 %v5563, %v5884
    %v6084 = vadd.f32 %v5564, %v5888
    %v6085 = vadd.f32 %v5565, %v5887
    %v6086 = vadd.f32 %v5566, %v5891
    %v6087 = vadd.f32 %v5567, %v5890
    %v6088 = vadd.f32 %v5568, %v5894
    %v6089 = vadd.f32 %v5569, %v5893
    %v6090 = vadd.f32 %v5570, %v5897
    %v6091 = vadd.f32 %v5571, %v5896
    %v6092 = vadd.f32 %v5572, %v5900
    %v6093 = vadd.f32 %v5573, %v5899
    %v6094 = vadd.f32 %v5574, %v5903
    %v6095 = vadd.f32 %v5575, %v5902
    %v6096 = vadd.f32 %v5576, %v5906
    %v6097 = vadd.f32 %v5577, %v5905
    %v6098 = vadd.f32 %v5578, %v5909
    %v6099 = vadd.f32 %v5579, %v5908
    %v6100 = vadd.f32 %v5580, %v5912
    %v6101 = vadd.f32 %v5581, %v5911
    %v6102 = vadd.f32 %v5582, %v5915
    %v6103 = vadd.f32 %v5583, %v5914
    %v6104 = vadd.f32 %v5584, %v5918
    %v6105 = vadd.f32 %v5585, %v5917
    %v6106 = vadd.f32 %v5586, %v5921
    %v6107 = vadd.f32 %v5587, %v5920
    %v6108 = vadd.f32 %v5588, %v5924
    %v6109 = vadd.f32 %v5589, %v5923
    %v6110 = vadd.f32 %v5590, %v5927
    %v6111 = vadd.f32 %v5591, %v5926
    %v6112 = vadd.f32 %v5592, %v5930
    %v6113 = vadd.f32 %v5593, %v5929
    %v6114 = vadd.f32 %v5594, %v5933
    %v6115 = vadd.f32 %v5595, %v5932
    %v6116 = vadd.f32 %v5596, %v5936
    %v6117 = vadd.f32 %v5597, %v5935
    %v6118 = vadd.f32 %v5598, %v5939
    %v6119 = vadd.f32 %v5599, %v5938
    %v6120 = vadd.f32 %v5600, %v5942
    %v6121 = vadd.f32 %v5601, %v5941
    %v6122 = vadd.f32 %v5602, %v5945
    %v6123 = vadd.f32 %v5603, %v5944
    %v6124 = vadd.f32 %v5604, %v5948
    %v6125 = vadd.f32 %v5605, %v5947
    %v6126 = vadd.f32 %v5606, %v5951
    %v6127 = vadd.f32 %v5607, %v5950
    %v6128 = vadd.f32 %v5608, %v5954
    %v6129 = vadd.f32 %v5609, %v5953
    %v6130 = vadd.f32 %v5610, %v5957
    %v6131 = vadd.f32 %v5611, %v5956
    %v6132 = vadd.f32 %v5612, %v5960
    %v6133 = vadd.f32 %v5613, %v5959
    %v6134 = vadd.f32 %v5614, %v5963
    %v6135 = vadd.f32 %v5615, %v5962
    %v6136 = vadd.f32 %v5616, %v5966
    %v6137 = vadd.f32 %v5617, %v5965
    %v6138 = vadd.f32 %v5618, %v5969
    %v6139 = vadd.f32 %v5619, %v5968
    %v6140 = vadd.f32 %v5620, %v5972
    %v6141 = vadd.f32 %v5621, %v5971
    %v6142 = vadd.f32 %v5622, %v5975
    %v6143 = vadd.f32 %v5623, %v5974
    %v6144 = vadd.f32 %v5624, %v5978
    %v6145 = vadd.f32 %v5625, %v5977
    %v6146 = vadd.f32 %v5626, %v5981
    %v6147 = vadd.f32 %v5627, %v5980
    %v6148 = vadd.f32 %v5628, %v5984
    %v6149 = vadd.f32 %v5629, %v5983
    %v6150 = vadd.f32 %v5630, %v5987
    %v6151 = vadd.f32 %v5631, %v5986
    %v6152 = vadd.f32 %v5632, %v5990
    %v6153 = vadd.f32 %v5633, %v5989
    %v6154 = vadd.f32 %v5634, %v5993
    %v6155 = vadd.f32 %v5635, %v5992
    %v6156 = vadd.f32 %v5636, %v5996
    %v6157 = vadd.f32 %v5637, %v5995
    %v6158 = vadd.f32 %v5638, %v5999
    %v6159 = vadd.f32 %v5639, %v5998
    %v6200 = vrot.slane %v4879, 7
    %v6201 = vrot.slane %v4881, 7
    %v6202 = vrot.slane %v4883, 7
    %v6203 = vrot.slane %v4885, 7
    %v6204 = vrot.slane %v4887, 7
    %v6205 = vrot.slane %v4889, 7
    %v6206 = vrot.slane %v4891, 7
    %v6207 = vrot.slane %v4893, 7
    %v6208 = vrot.slane %v4895, 7
    %v6209 = vrot.slane %v4897, 7
    %v6210 = vrot.slane %v4899, 7
    %v6211 = vrot.slane %v4901, 7
    %v6212 = vrot.slane %v4903, 7
    %v6213 = vrot.slane %v4905, 7
    %v6214 = vrot.slane %v4907, 7
    %v6215 = vrot.slane %v4909, 7
    %v6216 = vrot.slane %v4911, 7
    %v6217 = vrot.slane %v4913, 7
    %v6218 = vrot.slane %v4915, 7
    %v6219 = vrot.slane %v4917, 7
    %v6220 = vrot.slane %v4919, 7
    %v6221 = vrot.slane %v4921, 7
    %v6222 = vrot.slane %v4923, 7
    %v6223 = vrot.slane %v4925, 7
    %v6224 = vrot.slane %v4927, 7
    %v6225 = vrot.slane %v4929, 7
    %v6226 = vrot.slane %v4931, 7
    %v6227 = vrot.slane %v4933, 7
    %v6228 = vrot.slane %v4935, 7
    %v6229 = vrot.slane %v4937, 7
    %v6230 = vrot.slane %v4939, 7
    %v6231 = vrot.slane %v4941, 7
    %v6232 = vrot.slane %v4943, 7
    %v6233 = vrot.slane %v4945, 7
    %v6234 = vrot.slane %v4947, 7
    %v6235 = vrot.slane %v4949, 7
    %v6236 = vrot.slane %v4951, 7
    %v6237 = vrot.slane %v4953, 7
    %v6238 = vrot.slane %v4955, 7
    %v6239 = vrot.slane %v4957, 7
    %v6360 = vrot.slane %v5720, 1
    %v6361 = vrot.slane %v5721, 1
    %v6362 = vsel %vm5199, %v6360, %v6361
    %v6363 = vrot.slane %v5722, 1
    %v6364 = vrot.slane %v5723, 1
    %v6365 = vsel %vm5199, %v6363, %v6364
    %v6366 = vrot.slane %v5724, 1
    %v6367 = vrot.slane %v5725, 1
    %v6368 = vsel %vm5199, %v6366, %v6367
    %v6369 = vrot.slane %v5726, 1
    %v6370 = vrot.slane %v5727, 1
    %v6371 = vsel %vm5199, %v6369, %v6370
    %v6372 = vrot.slane %v5728, 1
    %v6373 = vrot.slane %v5729, 1
    %v6374 = vsel %vm5199, %v6372, %v6373
    %v6375 = vrot.slane %v5730, 1
    %v6376 = vrot.slane %v5731, 1
    %v6377 = vsel %vm5199, %v6375, %v6376
    %v6378 = vrot.slane %v5732, 1
    %v6379 = vrot.slane %v5733, 1
    %v6380 = vsel %vm5199, %v6378, %v6379
    %v6381 = vrot.slane %v5734, 1
    %v6382 = vrot.slane %v5735, 1
    %v6383 = vsel %vm5199, %v6381, %v6382
    %v6384 = vrot.slane %v5736, 1
    %v6385 = vrot.slane %v5737, 1
    %v6386 = vsel %vm5199, %v6384, %v6385
    %v6387 = vrot.slane %v5738, 1
    %v6388 = vrot.slane %v5739, 1
    %v6389 = vsel %vm5199, %v6387, %v6388
    %v6390 = vrot.slane %v5740, 1
    %v6391 = vrot.slane %v5741, 1
    %v6392 = vsel %vm5199, %v6390, %v6391
    %v6393 = vrot.slane %v5742, 1
    %v6394 = vrot.slane %v5743, 1
    %v6395 = vsel %vm5199, %v6393, %v6394
    %v6396 = vrot.slane %v5744, 1
    %v6397 = vrot.slane %v5745, 1
    %v6398 = vsel %vm5199, %v6396, %v6397
    %v6399 = vrot.slane %v5746, 1
    %v6400 = vrot.slane %v5747, 1
    %v6401 = vsel %vm5199, %v6399, %v6400
    %v6402 = vrot.slane %v5748, 1
    %v6403 = vrot.slane %v5749, 1
    %v6404 = vsel %vm5199, %v6402, %v6403
    %v6405 = vrot.slane %v5750, 1
    %v6406 = vrot.slane %v5751, 1
    %v6407 = vsel %vm5199, %v6405, %v6406
    %v6408 = vrot.slane %v5752, 1
    %v6409 = vrot.slane %v5753, 1
    %v6410 = vsel %vm5199, %v6408, %v6409
    %v6411 = vrot.slane %v5754, 1
    %v6412 = vrot.slane %v5755, 1
    %v6413 = vsel %vm5199, %v6411, %v6412
    %v6414 = vrot.slane %v5756, 1
    %v6415 = vrot.slane %v5757, 1
    %v6416 = vsel %vm5199, %v6414, %v6415
    %v6417 = vrot.slane %v5758, 1
    %v6418 = vrot.slane %v5759, 1
    %v6419 = vsel %vm5199, %v6417, %v6418
    %v6420 = vrot.slane %v5760, 1
    %v6421 = vrot.slane %v5761, 1
    %v6422 = vsel %vm5199, %v6420, %v6421
    %v6423 = vrot.slane %v5762, 1
    %v6424 = vrot.slane %v5763, 1
    %v6425 = vsel %vm5199, %v6423, %v6424
    %v6426 = vrot.slane %v5764, 1
    %v6427 = vrot.slane %v5765, 1
    %v6428 = vsel %vm5199, %v6426, %v6427
    %v6429 = vrot.slane %v5766, 1
    %v6430 = vrot.slane %v5767, 1
    %v6431 = vsel %vm5199, %v6429, %v6430
    %v6432 = vrot.slane %v5768, 1
    %v6433 = vrot.slane %v5769, 1
    %v6434 = vsel %vm5199, %v6432, %v6433
    %v6435 = vrot.slane %v5770, 1
    %v6436 = vrot.slane %v5771, 1
    %v6437 = vsel %vm5199, %v6435, %v6436
    %v6438 = vrot.slane %v5772, 1
    %v6439 = vrot.slane %v5773, 1
    %v6440 = vsel %vm5199, %v6438, %v6439
    %v6441 = vrot.slane %v5774, 1
    %v6442 = vrot.slane %v5775, 1
    %v6443 = vsel %vm5199, %v6441, %v6442
    %v6444 = vrot.slane %v5776, 1
    %v6445 = vrot.slane %v5777, 1
    %v6446 = vsel %vm5199, %v6444, %v6445
    %v6447 = vrot.slane %v5778, 1
    %v6448 = vrot.slane %v5779, 1
    %v6449 = vsel %vm5199, %v6447, %v6448
    %v6450 = vrot.slane %v5780, 1
    %v6451 = vrot.slane %v5781, 1
    %v6452 = vsel %vm5199, %v6450, %v6451
    %v6453 = vrot.slane %v5782, 1
    %v6454 = vrot.slane %v5783, 1
    %v6455 = vsel %vm5199, %v6453, %v6454
    %v6456 = vrot.slane %v5784, 1
    %v6457 = vrot.slane %v5785, 1
    %v6458 = vsel %vm5199, %v6456, %v6457
    %v6459 = vrot.slane %v5786, 1
    %v6460 = vrot.slane %v5787, 1
    %v6461 = vsel %vm5199, %v6459, %v6460
    %v6462 = vrot.slane %v5788, 1
    %v6463 = vrot.slane %v5789, 1
    %v6464 = vsel %vm5199, %v6462, %v6463
    %v6465 = vrot.slane %v5790, 1
    %v6466 = vrot.slane %v5791, 1
    %v6467 = vsel %vm5199, %v6465, %v6466
    %v6468 = vrot.slane %v5792, 1
    %v6469 = vrot.slane %v5793, 1
    %v6470 = vsel %vm5199, %v6468, %v6469
    %v6471 = vrot.slane %v5794, 1
    %v6472 = vrot.slane %v5795, 1
    %v6473 = vsel %vm5199, %v6471, %v6472
    %v6474 = vrot.slane %v5796, 1
    %v6475 = vrot.slane %v5797, 1
    %v6476 = vsel %vm5199, %v6474, %v6475
    %v6477 = vrot.slane %v5798, 1
    %v6478 = vrot.slane %v5799, 1
    %v6479 = vsel %vm5199, %v6477, %v6478
    %v6640 = vrot.slane %v6080, 1
    %v6641 = vrot.slane %v6081, 1
    %v6642 = vsel %vm5199, %v6640, %v6641
    %v6643 = vrot.slane %v6082, 1
    %v6644 = vrot.slane %v6083, 1
    %v6645 = vsel %vm5199, %v6643, %v6644
    %v6646 = vrot.slane %v6084, 1
    %v6647 = vrot.slane %v6085, 1
    %v6648 = vsel %vm5199, %v6646, %v6647
    %v6649 = vrot.slane %v6086, 1
    %v6650 = vrot.slane %v6087, 1
    %v6651 = vsel %vm5199, %v6649, %v6650
    %v6652 = vrot.slane %v6088, 1
    %v6653 = vrot.slane %v6089, 1
    %v6654 = vsel %vm5199, %v6652, %v6653
    %v6655 = vrot.slane %v6090, 1
    %v6656 = vrot.slane %v6091, 1
    %v6657 = vsel %vm5199, %v6655, %v6656
    %v6658 = vrot.slane %v6092, 1
    %v6659 = vrot.slane %v6093, 1
    %v6660 = vsel %vm5199, %v6658, %v6659
    %v6661 = vrot.slane %v6094, 1
    %v6662 = vrot.slane %v6095, 1
    %v6663 = vsel %vm5199, %v6661, %v6662
    %v6664 = vrot.slane %v6096, 1
    %v6665 = vrot.slane %v6097, 1
    %v6666 = vsel %vm5199, %v6664, %v6665
    %v6667 = vrot.slane %v6098, 1
    %v6668 = vrot.slane %v6099, 1
    %v6669 = vsel %vm5199, %v6667, %v6668
    %v6670 = vrot.slane %v6100, 1
    %v6671 = vrot.slane %v6101, 1
    %v6672 = vsel %vm5199, %v6670, %v6671
    %v6673 = vrot.slane %v6102, 1
    %v6674 = vrot.slane %v6103, 1
    %v6675 = vsel %vm5199, %v6673, %v6674
    %v6676 = vrot.slane %v6104, 1
    %v6677 = vrot.slane %v6105, 1
    %v6678 = vsel %vm5199, %v6676, %v6677
    %v6679 = vrot.slane %v6106, 1
    %v6680 = vrot.slane %v6107, 1
    %v6681 = vsel %vm5199, %v6679, %v6680
    %v6682 = vrot.slane %v6108, 1
    %v6683 = vrot.slane %v6109, 1
    %v6684 = vsel %vm5199, %v6682, %v6683
    %v6685 = vrot.slane %v6110, 1
    %v6686 = vrot.slane %v6111, 1
    %v6687 = vsel %vm5199, %v6685, %v6686
    %v6688 = vrot.slane %v6112, 1
    %v6689 = vrot.slane %v6113, 1
    %v6690 = vsel %vm5199, %v6688, %v6689
    %v6691 = vrot.slane %v6114, 1
    %v6692 = vrot.slane %v6115, 1
    %v6693 = vsel %vm5199, %v6691, %v6692
    %v6694 = vrot.slane %v6116, 1
    %v6695 = vrot.slane %v6117, 1
    %v6696 = vsel %vm5199, %v6694, %v6695
    %v6697 = vrot.slane %v6118, 1
    %v6698 = vrot.slane %v6119, 1
    %v6699 = vsel %vm5199, %v6697, %v6698
    %v6700 = vrot.slane %v6120, 1
    %v6701 = vrot.slane %v6121, 1
    %v6702 = vsel %vm5199, %v6700, %v6701
    %v6703 = vrot.slane %v6122, 1
    %v6704 = vrot.slane %v6123, 1
    %v6705 = vsel %vm5199, %v6703, %v6704
    %v6706 = vrot.slane %v6124, 1
    %v6707 = vrot.slane %v6125, 1
    %v6708 = vsel %vm5199, %v6706, %v6707
    %v6709 = vrot.slane %v6126, 1
    %v6710 = vrot.slane %v6127, 1
    %v6711 = vsel %vm5199, %v6709, %v6710
    %v6712 = vrot.slane %v6128, 1
    %v6713 = vrot.slane %v6129, 1
    %v6714 = vsel %vm5199, %v6712, %v6713
    %v6715 = vrot.slane %v6130, 1
    %v6716 = vrot.slane %v6131, 1
    %v6717 = vsel %vm5199, %v6715, %v6716
    %v6718 = vrot.slane %v6132, 1
    %v6719 = vrot.slane %v6133, 1
    %v6720 = vsel %vm5199, %v6718, %v6719
    %v6721 = vrot.slane %v6134, 1
    %v6722 = vrot.slane %v6135, 1
    %v6723 = vsel %vm5199, %v6721, %v6722
    %v6724 = vrot.slane %v6136, 1
    %v6725 = vrot.slane %v6137, 1
    %v6726 = vsel %vm5199, %v6724, %v6725
    %v6727 = vrot.slane %v6138, 1
    %v6728 = vrot.slane %v6139, 1
    %v6729 = vsel %vm5199, %v6727, %v6728
    %v6730 = vrot.slane %v6140, 1
    %v6731 = vrot.slane %v6141, 1
    %v6732 = vsel %vm5199, %v6730, %v6731
    %v6733 = vrot.slane %v6142, 1
    %v6734 = vrot.slane %v6143, 1
    %v6735 = vsel %vm5199, %v6733, %v6734
    %v6736 = vrot.slane %v6144, 1
    %v6737 = vrot.slane %v6145, 1
    %v6738 = vsel %vm5199, %v6736, %v6737
    %v6739 = vrot.slane %v6146, 1
    %v6740 = vrot.slane %v6147, 1
    %v6741 = vsel %vm5199, %v6739, %v6740
    %v6742 = vrot.slane %v6148, 1
    %v6743 = vrot.slane %v6149, 1
    %v6744 = vsel %vm5199, %v6742, %v6743
    %v6745 = vrot.slane %v6150, 1
    %v6746 = vrot.slane %v6151, 1
    %v6747 = vsel %vm5199, %v6745, %v6746
    %v6748 = vrot.slane %v6152, 1
    %v6749 = vrot.slane %v6153, 1
    %v6750 = vsel %vm5199, %v6748, %v6749
    %v6751 = vrot.slane %v6154, 1
    %v6752 = vrot.slane %v6155, 1
    %v6753 = vsel %vm5199, %v6751, %v6752
    %v6754 = vrot.slane %v6156, 1
    %v6755 = vrot.slane %v6157, 1
    %v6756 = vsel %vm5199, %v6754, %v6755
    %v6757 = vrot.slane %v6158, 1
    %v6758 = vrot.slane %v6159, 1
    %v6759 = vsel %vm5199, %v6757, %v6758
    %v6880 = vrot.slane %v4879, 2
    %v6881 = vrot.slane %v4880, 2
    %v6882 = vsel %vm1677, %v6880, %v6881
    %v6883 = vrot.slane %v4881, 2
    %v6884 = vrot.slane %v4882, 2
    %v6885 = vsel %vm1677, %v6883, %v6884
    %v6886 = vrot.slane %v4883, 2
    %v6887 = vrot.slane %v4884, 2
    %v6888 = vsel %vm1677, %v6886, %v6887
    %v6889 = vrot.slane %v4885, 2
    %v6890 = vrot.slane %v4886, 2
    %v6891 = vsel %vm1677, %v6889, %v6890
    %v6892 = vrot.slane %v4887, 2
    %v6893 = vrot.slane %v4888, 2
    %v6894 = vsel %vm1677, %v6892, %v6893
    %v6895 = vrot.slane %v4889, 2
    %v6896 = vrot.slane %v4890, 2
    %v6897 = vsel %vm1677, %v6895, %v6896
    %v6898 = vrot.slane %v4891, 2
    %v6899 = vrot.slane %v4892, 2
    %v6900 = vsel %vm1677, %v6898, %v6899
    %v6901 = vrot.slane %v4893, 2
    %v6902 = vrot.slane %v4894, 2
    %v6903 = vsel %vm1677, %v6901, %v6902
    %v6904 = vrot.slane %v4895, 2
    %v6905 = vrot.slane %v4896, 2
    %v6906 = vsel %vm1677, %v6904, %v6905
    %v6907 = vrot.slane %v4897, 2
    %v6908 = vrot.slane %v4898, 2
    %v6909 = vsel %vm1677, %v6907, %v6908
    %v6910 = vrot.slane %v4899, 2
    %v6911 = vrot.slane %v4900, 2
    %v6912 = vsel %vm1677, %v6910, %v6911
    %v6913 = vrot.slane %v4901, 2
    %v6914 = vrot.slane %v4902, 2
    %v6915 = vsel %vm1677, %v6913, %v6914
    %v6916 = vrot.slane %v4903, 2
    %v6917 = vrot.slane %v4904, 2
    %v6918 = vsel %vm1677, %v6916, %v6917
    %v6919 = vrot.slane %v4905, 2
    %v6920 = vrot.slane %v4906, 2
    %v6921 = vsel %vm1677, %v6919, %v6920
    %v6922 = vrot.slane %v4907, 2
    %v6923 = vrot.slane %v4908, 2
    %v6924 = vsel %vm1677, %v6922, %v6923
    %v6925 = vrot.slane %v4909, 2
    %v6926 = vrot.slane %v4910, 2
    %v6927 = vsel %vm1677, %v6925, %v6926
    %v6928 = vrot.slane %v4911, 2
    %v6929 = vrot.slane %v4912, 2
    %v6930 = vsel %vm1677, %v6928, %v6929
    %v6931 = vrot.slane %v4913, 2
    %v6932 = vrot.slane %v4914, 2
    %v6933 = vsel %vm1677, %v6931, %v6932
    %v6934 = vrot.slane %v4915, 2
    %v6935 = vrot.slane %v4916, 2
    %v6936 = vsel %vm1677, %v6934, %v6935
    %v6937 = vrot.slane %v4917, 2
    %v6938 = vrot.slane %v4918, 2
    %v6939 = vsel %vm1677, %v6937, %v6938
    %v6940 = vrot.slane %v4919, 2
    %v6941 = vrot.slane %v4920, 2
    %v6942 = vsel %vm1677, %v6940, %v6941
    %v6943 = vrot.slane %v4921, 2
    %v6944 = vrot.slane %v4922, 2
    %v6945 = vsel %vm1677, %v6943, %v6944
    %v6946 = vrot.slane %v4923, 2
    %v6947 = vrot.slane %v4924, 2
    %v6948 = vsel %vm1677, %v6946, %v6947
    %v6949 = vrot.slane %v4925, 2
    %v6950 = vrot.slane %v4926, 2
    %v6951 = vsel %vm1677, %v6949, %v6950
    %v6952 = vrot.slane %v4927, 2
    %v6953 = vrot.slane %v4928, 2
    %v6954 = vsel %vm1677, %v6952, %v6953
    %v6955 = vrot.slane %v4929, 2
    %v6956 = vrot.slane %v4930, 2
    %v6957 = vsel %vm1677, %v6955, %v6956
    %v6958 = vrot.slane %v4931, 2
    %v6959 = vrot.slane %v4932, 2
    %v6960 = vsel %vm1677, %v6958, %v6959
    %v6961 = vrot.slane %v4933, 2
    %v6962 = vrot.slane %v4934, 2
    %v6963 = vsel %vm1677, %v6961, %v6962
    %v6964 = vrot.slane %v4935, 2
    %v6965 = vrot.slane %v4936, 2
    %v6966 = vsel %vm1677, %v6964, %v6965
    %v6967 = vrot.slane %v4937, 2
    %v6968 = vrot.slane %v4938, 2
    %v6969 = vsel %vm1677, %v6967, %v6968
    %v6970 = vrot.slane %v4939, 2
    %v6971 = vrot.slane %v4940, 2
    %v6972 = vsel %vm1677, %v6970, %v6971
    %v6973 = vrot.slane %v4941, 2
    %v6974 = vrot.slane %v4942, 2
    %v6975 = vsel %vm1677, %v6973, %v6974
    %v6976 = vrot.slane %v4943, 2
    %v6977 = vrot.slane %v4944, 2
    %v6978 = vsel %vm1677, %v6976, %v6977
    %v6979 = vrot.slane %v4945, 2
    %v6980 = vrot.slane %v4946, 2
    %v6981 = vsel %vm1677, %v6979, %v6980
    %v6982 = vrot.slane %v4947, 2
    %v6983 = vrot.slane %v4948, 2
    %v6984 = vsel %vm1677, %v6982, %v6983
    %v6985 = vrot.slane %v4949, 2
    %v6986 = vrot.slane %v4950, 2
    %v6987 = vsel %vm1677, %v6985, %v6986
    %v6988 = vrot.slane %v4951, 2
    %v6989 = vrot.slane %v4952, 2
    %v6990 = vsel %vm1677, %v6988, %v6989
    %v6991 = vrot.slane %v4953, 2
    %v6992 = vrot.slane %v4954, 2
    %v6993 = vsel %vm1677, %v6991, %v6992
    %v6994 = vrot.slane %v4955, 2
    %v6995 = vrot.slane %v4956, 2
    %v6996 = vsel %vm1677, %v6994, %v6995
    %v6997 = vrot.slane %v4957, 2
    %v6998 = vrot.slane %v4958, 2
    %v6999 = vsel %vm1677, %v6997, %v6998
    %vm7080 = vcmask 1044480
    %v7081 = vrot.slane %v4879, 3
    %v7082 = vrot.slane %v4880, 3
    %v7083 = vsel %vm7080, %v7081, %v7082
    %v7084 = vrot.slane %v4881, 3
    %v7085 = vrot.slane %v4882, 3
    %v7086 = vsel %vm7080, %v7084, %v7085
    %v7087 = vrot.slane %v4883, 3
    %v7088 = vrot.slane %v4884, 3
    %v7089 = vsel %vm7080, %v7087, %v7088
    %v7090 = vrot.slane %v4885, 3
    %v7091 = vrot.slane %v4886, 3
    %v7092 = vsel %vm7080, %v7090, %v7091
    %v7093 = vrot.slane %v4887, 3
    %v7094 = vrot.slane %v4888, 3
    %v7095 = vsel %vm7080, %v7093, %v7094
    %v7096 = vrot.slane %v4889, 3
    %v7097 = vrot.slane %v4890, 3
    %v7098 = vsel %vm7080, %v7096, %v7097
    %v7099 = vrot.slane %v4891, 3
    %v7100 = vrot.slane %v4892, 3
    %v7101 = vsel %vm7080, %v7099, %v7100
    %v7102 = vrot.slane %v4893, 3
    %v7103 = vrot.slane %v4894, 3
    %v7104 = vsel %vm7080, %v7102, %v7103
    %v7105 = vrot.slane %v4895, 3
    %v7106 = vrot.slane %v4896, 3
    %v7107 = vsel %vm7080, %v7105, %v7106
    %v7108 = vrot.slane %v4897, 3
    %v7109 = vrot.slane %v4898, 3
    %v7110 = vsel %vm7080, %v7108, %v7109
    %v7111 = vrot.slane %v4899, 3
    %v7112 = vrot.slane %v4900, 3
    %v7113 = vsel %vm7080, %v7111, %v7112
    %v7114 = vrot.slane %v4901, 3
    %v7115 = vrot.slane %v4902, 3
    %v7116 = vsel %vm7080, %v7114, %v7115
    %v7117 = vrot.slane %v4903, 3
    %v7118 = vrot.slane %v4904, 3
    %v7119 = vsel %vm7080, %v7117, %v7118
    %v7120 = vrot.slane %v4905, 3
    %v7121 = vrot.slane %v4906, 3
    %v7122 = vsel %vm7080, %v7120, %v7121
    %v7123 = vrot.slane %v4907, 3
    %v7124 = vrot.slane %v4908, 3
    %v7125 = vsel %vm7080, %v7123, %v7124
    %v7126 = vrot.slane %v4909, 3
    %v7127 = vrot.slane %v4910, 3
    %v7128 = vsel %vm7080, %v7126, %v7127
    %v7129 = vrot.slane %v4911, 3
    %v7130 = vrot.slane %v4912, 3
    %v7131 = vsel %vm7080, %v7129, %v7130
    %v7132 = vrot.slane %v4913, 3
    %v7133 = vrot.slane %v4914, 3
    %v7134 = vsel %vm7080, %v7132, %v7133
    %v7135 = vrot.slane %v4915, 3
    %v7136 = vrot.slane %v4916, 3
    %v7137 = vsel %vm7080, %v7135, %v7136
    %v7138 = vrot.slane %v4917, 3
    %v7139 = vrot.slane %v4918, 3
    %v7140 = vsel %vm7080, %v7138, %v7139
    %v7141 = vrot.slane %v4919, 3
    %v7142 = vrot.slane %v4920, 3
    %v7143 = vsel %vm7080, %v7141, %v7142
    %v7144 = vrot.slane %v4921, 3
    %v7145 = vrot.slane %v4922, 3
    %v7146 = vsel %vm7080, %v7144, %v7145
    %v7147 = vrot.slane %v4923, 3
    %v7148 = vrot.slane %v4924, 3
    %v7149 = vsel %vm7080, %v7147, %v7148
    %v7150 = vrot.slane %v4925, 3
    %v7151 = vrot.slane %v4926, 3
    %v7152 = vsel %vm7080, %v7150, %v7151
    %v7153 = vrot.slane %v4927, 3
    %v7154 = vrot.slane %v4928, 3
    %v7155 = vsel %vm7080, %v7153, %v7154
    %v7156 = vrot.slane %v4929, 3
    %v7157 = vrot.slane %v4930, 3
    %v7158 = vsel %vm7080, %v7156, %v7157
    %v7159 = vrot.slane %v4931, 3
    %v7160 = vrot.slane %v4932, 3
    %v7161 = vsel %vm7080, %v7159, %v7160
    %v7162 = vrot.slane %v4933, 3
    %v7163 = vrot.slane %v4934, 3
    %v7164 = vsel %vm7080, %v7162, %v7163
    %v7165 = vrot.slane %v4935, 3
    %v7166 = vrot.slane %v4936, 3
    %v7167 = vsel %vm7080, %v7165, %v7166
    %v7168 = vrot.slane %v4937, 3
    %v7169 = vrot.slane %v4938, 3
    %v7170 = vsel %vm7080, %v7168, %v7169
    %v7171 = vrot.slane %v4939, 3
    %v7172 = vrot.slane %v4940, 3
    %v7173 = vsel %vm7080, %v7171, %v7172
    %v7174 = vrot.slane %v4941, 3
    %v7175 = vrot.slane %v4942, 3
    %v7176 = vsel %vm7080, %v7174, %v7175
    %v7177 = vrot.slane %v4943, 3
    %v7178 = vrot.slane %v4944, 3
    %v7179 = vsel %vm7080, %v7177, %v7178
    %v7180 = vrot.slane %v4945, 3
    %v7181 = vrot.slane %v4946, 3
    %v7182 = vsel %vm7080, %v7180, %v7181
    %v7183 = vrot.slane %v4947, 3
    %v7184 = vrot.slane %v4948, 3
    %v7185 = vsel %vm7080, %v7183, %v7184
    %v7186 = vrot.slane %v4949, 3
    %v7187 = vrot.slane %v4950, 3
    %v7188 = vsel %vm7080, %v7186, %v7187
    %v7189 = vrot.slane %v4951, 3
    %v7190 = vrot.slane %v4952, 3
    %v7191 = vsel %vm7080, %v7189, %v7190
    %v7192 = vrot.slane %v4953, 3
    %v7193 = vrot.slane %v4954, 3
    %v7194 = vsel %vm7080, %v7192, %v7193
    %v7195 = vrot.slane %v4955, 3
    %v7196 = vrot.slane %v4956, 3
    %v7197 = vsel %vm7080, %v7195, %v7196
    %v7198 = vrot.slane %v4957, 3
    %v7199 = vrot.slane %v4958, 3
    %v7200 = vsel %vm7080, %v7198, %v7199
    %v7281 = vsel %vm2405, %v4879, %v6200
    %v7282 = vsel %vm2405, %v4880, %v6200
    %v7283 = vsel %vm2405, %v4881, %v6201
    %v7284 = vsel %vm2405, %v4882, %v6201
    %v7285 = vsel %vm2405, %v4883, %v6202
    %v7286 = vsel %vm2405, %v4884, %v6202
    %v7287 = vsel %vm2405, %v4885, %v6203
    %v7288 = vsel %vm2405, %v4886, %v6203
    %v7289 = vsel %vm2405, %v4887, %v6204
    %v7290 = vsel %vm2405, %v4888, %v6204
    %v7291 = vsel %vm2405, %v4889, %v6205
    %v7292 = vsel %vm2405, %v4890, %v6205
    %v7293 = vsel %vm2405, %v4891, %v6206
    %v7294 = vsel %vm2405, %v4892, %v6206
    %v7295 = vsel %vm2405, %v4893, %v6207
    %v7296 = vsel %vm2405, %v4894, %v6207
    %v7297 = vsel %vm2405, %v4895, %v6208
    %v7298 = vsel %vm2405, %v4896, %v6208
    %v7299 = vsel %vm2405, %v4897, %v6209
    %v7300 = vsel %vm2405, %v4898, %v6209
    %v7301 = vsel %vm2405, %v4899, %v6210
    %v7302 = vsel %vm2405, %v4900, %v6210
    %v7303 = vsel %vm2405, %v4901, %v6211
    %v7304 = vsel %vm2405, %v4902, %v6211
    %v7305 = vsel %vm2405, %v4903, %v6212
    %v7306 = vsel %vm2405, %v4904, %v6212
    %v7307 = vsel %vm2405, %v4905, %v6213
    %v7308 = vsel %vm2405, %v4906, %v6213
    %v7309 = vsel %vm2405, %v4907, %v6214
    %v7310 = vsel %vm2405, %v4908, %v6214
    %v7311 = vsel %vm2405, %v4909, %v6215
    %v7312 = vsel %vm2405, %v4910, %v6215
    %v7313 = vsel %vm2405, %v4911, %v6216
    %v7314 = vsel %vm2405, %v4912, %v6216
    %v7315 = vsel %vm2405, %v4913, %v6217
    %v7316 = vsel %vm2405, %v4914, %v6217
    %v7317 = vsel %vm2405, %v4915, %v6218
    %v7318 = vsel %vm2405, %v4916, %v6218
    %v7319 = vsel %vm2405, %v4917, %v6219
    %v7320 = vsel %vm2405, %v4918, %v6219
    %v7321 = vsel %vm2405, %v4919, %v6220
    %v7322 = vsel %vm2405, %v4920, %v6220
    %v7323 = vsel %vm2405, %v4921, %v6221
    %v7324 = vsel %vm2405, %v4922, %v6221
    %v7325 = vsel %vm2405, %v4923, %v6222
    %v7326 = vsel %vm2405, %v4924, %v6222
    %v7327 = vsel %vm2405, %v4925, %v6223
    %v7328 = vsel %vm2405, %v4926, %v6223
    %v7329 = vsel %vm2405, %v4927, %v6224
    %v7330 = vsel %vm2405, %v4928, %v6224
    %v7331 = vsel %vm2405, %v4929, %v6225
    %v7332 = vsel %vm2405, %v4930, %v6225
    %v7333 = vsel %vm2405, %v4931, %v6226
    %v7334 = vsel %vm2405, %v4932, %v6226
    %v7335 = vsel %vm2405, %v4933, %v6227
    %v7336 = vsel %vm2405, %v4934, %v6227
    %v7337 = vsel %vm2405, %v4935, %v6228
    %v7338 = vsel %vm2405, %v4936, %v6228
    %v7339 = vsel %vm2405, %v4937, %v6229
    %v7340 = vsel %vm2405, %v4938, %v6229
    %v7341 = vsel %vm2405, %v4939, %v6230
    %v7342 = vsel %vm2405, %v4940, %v6230
    %v7343 = vsel %vm2405, %v4941, %v6231
    %v7344 = vsel %vm2405, %v4942, %v6231
    %v7345 = vsel %vm2405, %v4943, %v6232
    %v7346 = vsel %vm2405, %v4944, %v6232
    %v7347 = vsel %vm2405, %v4945, %v6233
    %v7348 = vsel %vm2405, %v4946, %v6233
    %v7349 = vsel %vm2405, %v4947, %v6234
    %v7350 = vsel %vm2405, %v4948, %v6234
    %v7351 = vsel %vm2405, %v4949, %v6235
    %v7352 = vsel %vm2405, %v4950, %v6235
    %v7353 = vsel %vm2405, %v4951, %v6236
    %v7354 = vsel %vm2405, %v4952, %v6236
    %v7355 = vsel %vm2405, %v4953, %v6237
    %v7356 = vsel %vm2405, %v4954, %v6237
    %v7357 = vsel %vm2405, %v4955, %v6238
    %v7358 = vsel %vm2405, %v4956, %v6238
    %v7359 = vsel %vm2405, %v4957, %v6239
    %v7360 = vsel %vm2405, %v4958, %v6239
    %v7361 = vsel %vm2405, %v5400, %v5640
    %v7362 = vsel %vm2405, %v5401, %v5641
    %v7363 = vsel %vm2405, %v5402, %v5642
    %v7364 = vsel %vm2405, %v5403, %v5643
    %v7365 = vsel %vm2405, %v5404, %v5644
    %v7366 = vsel %vm2405, %v5405, %v5645
    %v7367 = vsel %vm2405, %v5406, %v5646
    %v7368 = vsel %vm2405, %v5407, %v5647
    %v7369 = vsel %vm2405, %v5408, %v5648
    %v7370 = vsel %vm2405, %v5409, %v5649
    %v7371 = vsel %vm2405, %v5410, %v5650
    %v7372 = vsel %vm2405, %v5411, %v5651
    %v7373 = vsel %vm2405, %v5412, %v5652
    %v7374 = vsel %vm2405, %v5413, %v5653
    %v7375 = vsel %vm2405, %v5414, %v5654
    %v7376 = vsel %vm2405, %v5415, %v5655
    %v7377 = vsel %vm2405, %v5416, %v5656
    %v7378 = vsel %vm2405, %v5417, %v5657
    %v7379 = vsel %vm2405, %v5418, %v5658
    %v7380 = vsel %vm2405, %v5419, %v5659
    %v7381 = vsel %vm2405, %v5420, %v5660
    %v7382 = vsel %vm2405, %v5421, %v5661
    %v7383 = vsel %vm2405, %v5422, %v5662
    %v7384 = vsel %vm2405, %v5423, %v5663
    %v7385 = vsel %vm2405, %v5424, %v5664
    %v7386 = vsel %vm2405, %v5425, %v5665
    %v7387 = vsel %vm2405, %v5426, %v5666
    %v7388 = vsel %vm2405, %v5427, %v5667
    %v7389 = vsel %vm2405, %v5428, %v5668
    %v7390 = vsel %vm2405, %v5429, %v5669
    %v7391 = vsel %vm2405, %v5430, %v5670
    %v7392 = vsel %vm2405, %v5431, %v5671
    %v7393 = vsel %vm2405, %v5432, %v5672
    %v7394 = vsel %vm2405, %v5433, %v5673
    %v7395 = vsel %vm2405, %v5434, %v5674
    %v7396 = vsel %vm2405, %v5435, %v5675
    %v7397 = vsel %vm2405, %v5436, %v5676
    %v7398 = vsel %vm2405, %v5437, %v5677
    %v7399 = vsel %vm2405, %v5438, %v5678
    %v7400 = vsel %vm2405, %v5439, %v5679
    %v7401 = vsel %vm2405, %v5440, %v5680
    %v7402 = vsel %vm2405, %v5441, %v5681
    %v7403 = vsel %vm2405, %v5442, %v5682
    %v7404 = vsel %vm2405, %v5443, %v5683
    %v7405 = vsel %vm2405, %v5444, %v5684
    %v7406 = vsel %vm2405, %v5445, %v5685
    %v7407 = vsel %vm2405, %v5446, %v5686
    %v7408 = vsel %vm2405, %v5447, %v5687
    %v7409 = vsel %vm2405, %v5448, %v5688
    %v7410 = vsel %vm2405, %v5449, %v5689
    %v7411 = vsel %vm2405, %v5450, %v5690
    %v7412 = vsel %vm2405, %v5451, %v5691
    %v7413 = vsel %vm2405, %v5452, %v5692
    %v7414 = vsel %vm2405, %v5453, %v5693
    %v7415 = vsel %vm2405, %v5454, %v5694
    %v7416 = vsel %vm2405, %v5455, %v5695
    %v7417 = vsel %vm2405, %v5456, %v5696
    %v7418 = vsel %vm2405, %v5457, %v5697
    %v7419 = vsel %vm2405, %v5458, %v5698
    %v7420 = vsel %vm2405, %v5459, %v5699
    %v7421 = vsel %vm2405, %v5460, %v5700
    %v7422 = vsel %vm2405, %v5461, %v5701
    %v7423 = vsel %vm2405, %v5462, %v5702
    %v7424 = vsel %vm2405, %v5463, %v5703
    %v7425 = vsel %vm2405, %v5464, %v5704
    %v7426 = vsel %vm2405, %v5465, %v5705
    %v7427 = vsel %vm2405, %v5466, %v5706
    %v7428 = vsel %vm2405, %v5467, %v5707
    %v7429 = vsel %vm2405, %v5468, %v5708
    %v7430 = vsel %vm2405, %v5469, %v5709
    %v7431 = vsel %vm2405, %v5470, %v5710
    %v7432 = vsel %vm2405, %v5471, %v5711
    %v7433 = vsel %vm2405, %v5472, %v5712
    %v7434 = vsel %vm2405, %v5473, %v5713
    %v7435 = vsel %vm2405, %v5474, %v5714
    %v7436 = vsel %vm2405, %v5475, %v5715
    %v7437 = vsel %vm2405, %v5476, %v5716
    %v7438 = vsel %vm2405, %v5477, %v5717
    %v7439 = vsel %vm2405, %v5478, %v5718
    %v7440 = vsel %vm2405, %v5479, %v5719
    %v7441 = vsel %vm2405, %v6362, %v6642
    %v7442 = vsel %vm2405, %v6361, %v6641
    %v7443 = vsel %vm2405, %v6365, %v6645
    %v7444 = vsel %vm2405, %v6364, %v6644
    %v7445 = vsel %vm2405, %v6368, %v6648
    %v7446 = vsel %vm2405, %v6367, %v6647
    %v7447 = vsel %vm2405, %v6371, %v6651
    %v7448 = vsel %vm2405, %v6370, %v6650
    %v7449 = vsel %vm2405, %v6374, %v6654
    %v7450 = vsel %vm2405, %v6373, %v6653
    %v7451 = vsel %vm2405, %v6377, %v6657
    %v7452 = vsel %vm2405, %v6376, %v6656
    %v7453 = vsel %vm2405, %v6380, %v6660
    %v7454 = vsel %vm2405, %v6379, %v6659
    %v7455 = vsel %vm2405, %v6383, %v6663
    %v7456 = vsel %vm2405, %v6382, %v6662
    %v7457 = vsel %vm2405, %v6386, %v6666
    %v7458 = vsel %vm2405, %v6385, %v6665
    %v7459 = vsel %vm2405, %v6389, %v6669
    %v7460 = vsel %vm2405, %v6388, %v6668
    %v7461 = vsel %vm2405, %v6392, %v6672
    %v7462 = vsel %vm2405, %v6391, %v6671
    %v7463 = vsel %vm2405, %v6395, %v6675
    %v7464 = vsel %vm2405, %v6394, %v6674
    %v7465 = vsel %vm2405, %v6398, %v6678
    %v7466 = vsel %vm2405, %v6397, %v6677
    %v7467 = vsel %vm2405, %v6401, %v6681
    %v7468 = vsel %vm2405, %v6400, %v6680
    %v7469 = vsel %vm2405, %v6404, %v6684
    %v7470 = vsel %vm2405, %v6403, %v6683
    %v7471 = vsel %vm2405, %v6407, %v6687
    %v7472 = vsel %vm2405, %v6406, %v6686
    %v7473 = vsel %vm2405, %v6410, %v6690
    %v7474 = vsel %vm2405, %v6409, %v6689
    %v7475 = vsel %vm2405, %v6413, %v6693
    %v7476 = vsel %vm2405, %v6412, %v6692
    %v7477 = vsel %vm2405, %v6416, %v6696
    %v7478 = vsel %vm2405, %v6415, %v6695
    %v7479 = vsel %vm2405, %v6419, %v6699
    %v7480 = vsel %vm2405, %v6418, %v6698
    %v7481 = vsel %vm2405, %v6422, %v6702
    %v7482 = vsel %vm2405, %v6421, %v6701
    %v7483 = vsel %vm2405, %v6425, %v6705
    %v7484 = vsel %vm2405, %v6424, %v6704
    %v7485 = vsel %vm2405, %v6428, %v6708
    %v7486 = vsel %vm2405, %v6427, %v6707
    %v7487 = vsel %vm2405, %v6431, %v6711
    %v7488 = vsel %vm2405, %v6430, %v6710
    %v7489 = vsel %vm2405, %v6434, %v6714
    %v7490 = vsel %vm2405, %v6433, %v6713
    %v7491 = vsel %vm2405, %v6437, %v6717
    %v7492 = vsel %vm2405, %v6436, %v6716
    %v7493 = vsel %vm2405, %v6440, %v6720
    %v7494 = vsel %vm2405, %v6439, %v6719
    %v7495 = vsel %vm2405, %v6443, %v6723
    %v7496 = vsel %vm2405, %v6442, %v6722
    %v7497 = vsel %vm2405, %v6446, %v6726
    %v7498 = vsel %vm2405, %v6445, %v6725
    %v7499 = vsel %vm2405, %v6449, %v6729
    %v7500 = vsel %vm2405, %v6448, %v6728
    %v7501 = vsel %vm2405, %v6452, %v6732
    %v7502 = vsel %vm2405, %v6451, %v6731
    %v7503 = vsel %vm2405, %v6455, %v6735
    %v7504 = vsel %vm2405, %v6454, %v6734
    %v7505 = vsel %vm2405, %v6458, %v6738
    %v7506 = vsel %vm2405, %v6457, %v6737
    %v7507 = vsel %vm2405, %v6461, %v6741
    %v7508 = vsel %vm2405, %v6460, %v6740
    %v7509 = vsel %vm2405, %v6464, %v6744
    %v7510 = vsel %vm2405, %v6463, %v6743
    %v7511 = vsel %vm2405, %v6467, %v6747
    %v7512 = vsel %vm2405, %v6466, %v6746
    %v7513 = vsel %vm2405, %v6470, %v6750
    %v7514 = vsel %vm2405, %v6469, %v6749
    %v7515 = vsel %vm2405, %v6473, %v6753
    %v7516 = vsel %vm2405, %v6472, %v6752
    %v7517 = vsel %vm2405, %v6476, %v6756
    %v7518 = vsel %vm2405, %v6475, %v6755
    %v7519 = vsel %vm2405, %v6479, %v6759
    %v7520 = vsel %vm2405, %v6478, %v6758
    %v7521 = vsel %vm2405, %v6882, %v7083
    %v7522 = vsel %vm2405, %v6881, %v7082
    %v7523 = vsel %vm2405, %v6885, %v7086
    %v7524 = vsel %vm2405, %v6884, %v7085
    %v7525 = vsel %vm2405, %v6888, %v7089
    %v7526 = vsel %vm2405, %v6887, %v7088
    %v7527 = vsel %vm2405, %v6891, %v7092
    %v7528 = vsel %vm2405, %v6890, %v7091
    %v7529 = vsel %vm2405, %v6894, %v7095
    %v7530 = vsel %vm2405, %v6893, %v7094
    %v7531 = vsel %vm2405, %v6897, %v7098
    %v7532 = vsel %vm2405, %v6896, %v7097
    %v7533 = vsel %vm2405, %v6900, %v7101
    %v7534 = vsel %vm2405, %v6899, %v7100
    %v7535 = vsel %vm2405, %v6903, %v7104
    %v7536 = vsel %vm2405, %v6902, %v7103
    %v7537 = vsel %vm2405, %v6906, %v7107
    %v7538 = vsel %vm2405, %v6905, %v7106
    %v7539 = vsel %vm2405, %v6909, %v7110
    %v7540 = vsel %vm2405, %v6908, %v7109
    %v7541 = vsel %vm2405, %v6912, %v7113
    %v7542 = vsel %vm2405, %v6911, %v7112
    %v7543 = vsel %vm2405, %v6915, %v7116
    %v7544 = vsel %vm2405, %v6914, %v7115
    %v7545 = vsel %vm2405, %v6918, %v7119
    %v7546 = vsel %vm2405, %v6917, %v7118
    %v7547 = vsel %vm2405, %v6921, %v7122
    %v7548 = vsel %vm2405, %v6920, %v7121
    %v7549 = vsel %vm2405, %v6924, %v7125
    %v7550 = vsel %vm2405, %v6923, %v7124
    %v7551 = vsel %vm2405, %v6927, %v7128
    %v7552 = vsel %vm2405, %v6926, %v7127
    %v7553 = vsel %vm2405, %v6930, %v7131
    %v7554 = vsel %vm2405, %v6929, %v7130
    %v7555 = vsel %vm2405, %v6933, %v7134
    %v7556 = vsel %vm2405, %v6932, %v7133
    %v7557 = vsel %vm2405, %v6936, %v7137
    %v7558 = vsel %vm2405, %v6935, %v7136
    %v7559 = vsel %vm2405, %v6939, %v7140
    %v7560 = vsel %vm2405, %v6938, %v7139
    %v7561 = vsel %vm2405, %v6942, %v7143
    %v7562 = vsel %vm2405, %v6941, %v7142
    %v7563 = vsel %vm2405, %v6945, %v7146
    %v7564 = vsel %vm2405, %v6944, %v7145
    %v7565 = vsel %vm2405, %v6948, %v7149
    %v7566 = vsel %vm2405, %v6947, %v7148
    %v7567 = vsel %vm2405, %v6951, %v7152
    %v7568 = vsel %vm2405, %v6950, %v7151
    %v7569 = vsel %vm2405, %v6954, %v7155
    %v7570 = vsel %vm2405, %v6953, %v7154
    %v7571 = vsel %vm2405, %v6957, %v7158
    %v7572 = vsel %vm2405, %v6956, %v7157
    %v7573 = vsel %vm2405, %v6960, %v7161
    %v7574 = vsel %vm2405, %v6959, %v7160
    %v7575 = vsel %vm2405, %v6963, %v7164
    %v7576 = vsel %vm2405, %v6962, %v7163
    %v7577 = vsel %vm2405, %v6966, %v7167
    %v7578 = vsel %vm2405, %v6965, %v7166
    %v7579 = vsel %vm2405, %v6969, %v7170
    %v7580 = vsel %vm2405, %v6968, %v7169
    %v7581 = vsel %vm2405, %v6972, %v7173
    %v7582 = vsel %vm2405, %v6971, %v7172
    %v7583 = vsel %vm2405, %v6975, %v7176
    %v7584 = vsel %vm2405, %v6974, %v7175
    %v7585 = vsel %vm2405, %v6978, %v7179
    %v7586 = vsel %vm2405, %v6977, %v7178
    %v7587 = vsel %vm2405, %v6981, %v7182
    %v7588 = vsel %vm2405, %v6980, %v7181
    %v7589 = vsel %vm2405, %v6984, %v7185
    %v7590 = vsel %vm2405, %v6983, %v7184
    %v7591 = vsel %vm2405, %v6987, %v7188
    %v7592 = vsel %vm2405, %v6986, %v7187
    %v7593 = vsel %vm2405, %v6990, %v7191
    %v7594 = vsel %vm2405, %v6989, %v7190
    %v7595 = vsel %vm2405, %v6993, %v7194
    %v7596 = vsel %vm2405, %v6992, %v7193
    %v7597 = vsel %vm2405, %v6996, %v7197
    %v7598 = vsel %vm2405, %v6995, %v7196
    %v7599 = vsel %vm2405, %v6999, %v7200
    %v7600 = vsel %vm2405, %v6998, %v7199
    %v7921 = vrot.slane %v7281, 1
    %v7922 = vrot.slane %v7282, 1
    %v7923 = vsel %vm5199, %v7921, %v7922
    %v7924 = vrot.slane %v7361, 1
    %v7925 = vrot.slane %v7362, 1
    %v7926 = vsel %vm5199, %v7924, %v7925
    %v7927 = vrot.slane %v7441, 1
    %v7928 = vrot.slane %v7442, 1
    %v7929 = vsel %vm5199, %v7927, %v7928
    %v7930 = vrot.slane %v7521, 1
    %v7931 = vrot.slane %v7522, 1
    %v7932 = vsel %vm5199, %v7930, %v7931
    %v7933 = vrot.slane %v7283, 1
    %v7934 = vrot.slane %v7284, 1
    %v7935 = vsel %vm5199, %v7933, %v7934
    %v7936 = vrot.slane %v7363, 1
    %v7937 = vrot.slane %v7364, 1
    %v7938 = vsel %vm5199, %v7936, %v7937
    %v7939 = vrot.slane %v7443, 1
    %v7940 = vrot.slane %v7444, 1
    %v7941 = vsel %vm5199, %v7939, %v7940
    %v7942 = vrot.slane %v7523, 1
    %v7943 = vrot.slane %v7524, 1
    %v7944 = vsel %vm5199, %v7942, %v7943
    %v7945 = vrot.slane %v7285, 1
    %v7946 = vrot.slane %v7286, 1
    %v7947 = vsel %vm5199, %v7945, %v7946
    %v7948 = vrot.slane %v7365, 1
    %v7949 = vrot.slane %v7366, 1
    %v7950 = vsel %vm5199, %v7948, %v7949
    %v7951 = vrot.slane %v7445, 1
    %v7952 = vrot.slane %v7446, 1
    %v7953 = vsel %vm5199, %v7951, %v7952
    %v7954 = vrot.slane %v7525, 1
    %v7955 = vrot.slane %v7526, 1
    %v7956 = vsel %vm5199, %v7954, %v7955
    %v7957 = vrot.slane %v7287, 1
    %v7958 = vrot.slane %v7288, 1
    %v7959 = vsel %vm5199, %v7957, %v7958
    %v7960 = vrot.slane %v7367, 1
    %v7961 = vrot.slane %v7368, 1
    %v7962 = vsel %vm5199, %v7960, %v7961
    %v7963 = vrot.slane %v7447, 1
    %v7964 = vrot.slane %v7448, 1
    %v7965 = vsel %vm5199, %v7963, %v7964
    %v7966 = vrot.slane %v7527, 1
    %v7967 = vrot.slane %v7528, 1
    %v7968 = vsel %vm5199, %v7966, %v7967
    %v7969 = vrot.slane %v7289, 1
    %v7970 = vrot.slane %v7290, 1
    %v7971 = vsel %vm5199, %v7969, %v7970
    %v7972 = vrot.slane %v7369, 1
    %v7973 = vrot.slane %v7370, 1
    %v7974 = vsel %vm5199, %v7972, %v7973
    %v7975 = vrot.slane %v7449, 1
    %v7976 = vrot.slane %v7450, 1
    %v7977 = vsel %vm5199, %v7975, %v7976
    %v7978 = vrot.slane %v7529, 1
    %v7979 = vrot.slane %v7530, 1
    %v7980 = vsel %vm5199, %v7978, %v7979
    %v7981 = vrot.slane %v7291, 1
    %v7982 = vrot.slane %v7292, 1
    %v7983 = vsel %vm5199, %v7981, %v7982
    %v7984 = vrot.slane %v7371, 1
    %v7985 = vrot.slane %v7372, 1
    %v7986 = vsel %vm5199, %v7984, %v7985
    %v7987 = vrot.slane %v7451, 1
    %v7988 = vrot.slane %v7452, 1
    %v7989 = vsel %vm5199, %v7987, %v7988
    %v7990 = vrot.slane %v7531, 1
    %v7991 = vrot.slane %v7532, 1
    %v7992 = vsel %vm5199, %v7990, %v7991
    %v7993 = vrot.slane %v7293, 1
    %v7994 = vrot.slane %v7294, 1
    %v7995 = vsel %vm5199, %v7993, %v7994
    %v7996 = vrot.slane %v7373, 1
    %v7997 = vrot.slane %v7374, 1
    %v7998 = vsel %vm5199, %v7996, %v7997
    %v7999 = vrot.slane %v7453, 1
    %v8000 = vrot.slane %v7454, 1
    %v8001 = vsel %vm5199, %v7999, %v8000
    %v8002 = vrot.slane %v7533, 1
    %v8003 = vrot.slane %v7534, 1
    %v8004 = vsel %vm5199, %v8002, %v8003
    %v8005 = vrot.slane %v7295, 1
    %v8006 = vrot.slane %v7296, 1
    %v8007 = vsel %vm5199, %v8005, %v8006
    %v8008 = vrot.slane %v7375, 1
    %v8009 = vrot.slane %v7376, 1
    %v8010 = vsel %vm5199, %v8008, %v8009
    %v8011 = vrot.slane %v7455, 1
    %v8012 = vrot.slane %v7456, 1
    %v8013 = vsel %vm5199, %v8011, %v8012
    %v8014 = vrot.slane %v7535, 1
    %v8015 = vrot.slane %v7536, 1
    %v8016 = vsel %vm5199, %v8014, %v8015
    %v8017 = vrot.slane %v7297, 1
    %v8018 = vrot.slane %v7298, 1
    %v8019 = vsel %vm5199, %v8017, %v8018
    %v8020 = vrot.slane %v7377, 1
    %v8021 = vrot.slane %v7378, 1
    %v8022 = vsel %vm5199, %v8020, %v8021
    %v8023 = vrot.slane %v7457, 1
    %v8024 = vrot.slane %v7458, 1
    %v8025 = vsel %vm5199, %v8023, %v8024
    %v8026 = vrot.slane %v7537, 1
    %v8027 = vrot.slane %v7538, 1
    %v8028 = vsel %vm5199, %v8026, %v8027
    %v8029 = vrot.slane %v7299, 1
    %v8030 = vrot.slane %v7300, 1
    %v8031 = vsel %vm5199, %v8029, %v8030
    %v8032 = vrot.slane %v7379, 1
    %v8033 = vrot.slane %v7380, 1
    %v8034 = vsel %vm5199, %v8032, %v8033
    %v8035 = vrot.slane %v7459, 1
    %v8036 = vrot.slane %v7460, 1
    %v8037 = vsel %vm5199, %v8035, %v8036
    %v8038 = vrot.slane %v7539, 1
    %v8039 = vrot.slane %v7540, 1
    %v8040 = vsel %vm5199, %v8038, %v8039
    %v8041 = vrot.slane %v7301, 1
    %v8042 = vrot.slane %v7302, 1
    %v8043 = vsel %vm5199, %v8041, %v8042
    %v8044 = vrot.slane %v7381, 1
    %v8045 = vrot.slane %v7382, 1
    %v8046 = vsel %vm5199, %v8044, %v8045
    %v8047 = vrot.slane %v7461, 1
    %v8048 = vrot.slane %v7462, 1
    %v8049 = vsel %vm5199, %v8047, %v8048
    %v8050 = vrot.slane %v7541, 1
    %v8051 = vrot.slane %v7542, 1
    %v8052 = vsel %vm5199, %v8050, %v8051
    %v8053 = vrot.slane %v7303, 1
    %v8054 = vrot.slane %v7304, 1
    %v8055 = vsel %vm5199, %v8053, %v8054
    %v8056 = vrot.slane %v7383, 1
    %v8057 = vrot.slane %v7384, 1
    %v8058 = vsel %vm5199, %v8056, %v8057
    %v8059 = vrot.slane %v7463, 1
    %v8060 = vrot.slane %v7464, 1
    %v8061 = vsel %vm5199, %v8059, %v8060
    %v8062 = vrot.slane %v7543, 1
    %v8063 = vrot.slane %v7544, 1
    %v8064 = vsel %vm5199, %v8062, %v8063
    %v8065 = vrot.slane %v7305, 1
    %v8066 = vrot.slane %v7306, 1
    %v8067 = vsel %vm5199, %v8065, %v8066
    %v8068 = vrot.slane %v7385, 1
    %v8069 = vrot.slane %v7386, 1
    %v8070 = vsel %vm5199, %v8068, %v8069
    %v8071 = vrot.slane %v7465, 1
    %v8072 = vrot.slane %v7466, 1
    %v8073 = vsel %vm5199, %v8071, %v8072
    %v8074 = vrot.slane %v7545, 1
    %v8075 = vrot.slane %v7546, 1
    %v8076 = vsel %vm5199, %v8074, %v8075
    %v8077 = vrot.slane %v7307, 1
    %v8078 = vrot.slane %v7308, 1
    %v8079 = vsel %vm5199, %v8077, %v8078
    %v8080 = vrot.slane %v7387, 1
    %v8081 = vrot.slane %v7388, 1
    %v8082 = vsel %vm5199, %v8080, %v8081
    %v8083 = vrot.slane %v7467, 1
    %v8084 = vrot.slane %v7468, 1
    %v8085 = vsel %vm5199, %v8083, %v8084
    %v8086 = vrot.slane %v7547, 1
    %v8087 = vrot.slane %v7548, 1
    %v8088 = vsel %vm5199, %v8086, %v8087
    %v8089 = vrot.slane %v7309, 1
    %v8090 = vrot.slane %v7310, 1
    %v8091 = vsel %vm5199, %v8089, %v8090
    %v8092 = vrot.slane %v7389, 1
    %v8093 = vrot.slane %v7390, 1
    %v8094 = vsel %vm5199, %v8092, %v8093
    %v8095 = vrot.slane %v7469, 1
    %v8096 = vrot.slane %v7470, 1
    %v8097 = vsel %vm5199, %v8095, %v8096
    %v8098 = vrot.slane %v7549, 1
    %v8099 = vrot.slane %v7550, 1
    %v8100 = vsel %vm5199, %v8098, %v8099
    %v8101 = vrot.slane %v7311, 1
    %v8102 = vrot.slane %v7312, 1
    %v8103 = vsel %vm5199, %v8101, %v8102
    %v8104 = vrot.slane %v7391, 1
    %v8105 = vrot.slane %v7392, 1
    %v8106 = vsel %vm5199, %v8104, %v8105
    %v8107 = vrot.slane %v7471, 1
    %v8108 = vrot.slane %v7472, 1
    %v8109 = vsel %vm5199, %v8107, %v8108
    %v8110 = vrot.slane %v7551, 1
    %v8111 = vrot.slane %v7552, 1
    %v8112 = vsel %vm5199, %v8110, %v8111
    %v8113 = vrot.slane %v7313, 1
    %v8114 = vrot.slane %v7314, 1
    %v8115 = vsel %vm5199, %v8113, %v8114
    %v8116 = vrot.slane %v7393, 1
    %v8117 = vrot.slane %v7394, 1
    %v8118 = vsel %vm5199, %v8116, %v8117
    %v8119 = vrot.slane %v7473, 1
    %v8120 = vrot.slane %v7474, 1
    %v8121 = vsel %vm5199, %v8119, %v8120
    %v8122 = vrot.slane %v7553, 1
    %v8123 = vrot.slane %v7554, 1
    %v8124 = vsel %vm5199, %v8122, %v8123
    %v8125 = vrot.slane %v7315, 1
    %v8126 = vrot.slane %v7316, 1
    %v8127 = vsel %vm5199, %v8125, %v8126
    %v8128 = vrot.slane %v7395, 1
    %v8129 = vrot.slane %v7396, 1
    %v8130 = vsel %vm5199, %v8128, %v8129
    %v8131 = vrot.slane %v7475, 1
    %v8132 = vrot.slane %v7476, 1
    %v8133 = vsel %vm5199, %v8131, %v8132
    %v8134 = vrot.slane %v7555, 1
    %v8135 = vrot.slane %v7556, 1
    %v8136 = vsel %vm5199, %v8134, %v8135
    %v8137 = vrot.slane %v7317, 1
    %v8138 = vrot.slane %v7318, 1
    %v8139 = vsel %vm5199, %v8137, %v8138
    %v8140 = vrot.slane %v7397, 1
    %v8141 = vrot.slane %v7398, 1
    %v8142 = vsel %vm5199, %v8140, %v8141
    %v8143 = vrot.slane %v7477, 1
    %v8144 = vrot.slane %v7478, 1
    %v8145 = vsel %vm5199, %v8143, %v8144
    %v8146 = vrot.slane %v7557, 1
    %v8147 = vrot.slane %v7558, 1
    %v8148 = vsel %vm5199, %v8146, %v8147
    %v8149 = vrot.slane %v7319, 1
    %v8150 = vrot.slane %v7320, 1
    %v8151 = vsel %vm5199, %v8149, %v8150
    %v8152 = vrot.slane %v7399, 1
    %v8153 = vrot.slane %v7400, 1
    %v8154 = vsel %vm5199, %v8152, %v8153
    %v8155 = vrot.slane %v7479, 1
    %v8156 = vrot.slane %v7480, 1
    %v8157 = vsel %vm5199, %v8155, %v8156
    %v8158 = vrot.slane %v7559, 1
    %v8159 = vrot.slane %v7560, 1
    %v8160 = vsel %vm5199, %v8158, %v8159
    %v8161 = vrot.slane %v7321, 1
    %v8162 = vrot.slane %v7322, 1
    %v8163 = vsel %vm5199, %v8161, %v8162
    %v8164 = vrot.slane %v7401, 1
    %v8165 = vrot.slane %v7402, 1
    %v8166 = vsel %vm5199, %v8164, %v8165
    %v8167 = vrot.slane %v7481, 1
    %v8168 = vrot.slane %v7482, 1
    %v8169 = vsel %vm5199, %v8167, %v8168
    %v8170 = vrot.slane %v7561, 1
    %v8171 = vrot.slane %v7562, 1
    %v8172 = vsel %vm5199, %v8170, %v8171
    %v8173 = vrot.slane %v7323, 1
    %v8174 = vrot.slane %v7324, 1
    %v8175 = vsel %vm5199, %v8173, %v8174
    %v8176 = vrot.slane %v7403, 1
    %v8177 = vrot.slane %v7404, 1
    %v8178 = vsel %vm5199, %v8176, %v8177
    %v8179 = vrot.slane %v7483, 1
    %v8180 = vrot.slane %v7484, 1
    %v8181 = vsel %vm5199, %v8179, %v8180
    %v8182 = vrot.slane %v7563, 1
    %v8183 = vrot.slane %v7564, 1
    %v8184 = vsel %vm5199, %v8182, %v8183
    %v8185 = vrot.slane %v7325, 1
    %v8186 = vrot.slane %v7326, 1
    %v8187 = vsel %vm5199, %v8185, %v8186
    %v8188 = vrot.slane %v7405, 1
    %v8189 = vrot.slane %v7406, 1
    %v8190 = vsel %vm5199, %v8188, %v8189
    %v8191 = vrot.slane %v7485, 1
    %v8192 = vrot.slane %v7486, 1
    %v8193 = vsel %vm5199, %v8191, %v8192
    %v8194 = vrot.slane %v7565, 1
    %v8195 = vrot.slane %v7566, 1
    %v8196 = vsel %vm5199, %v8194, %v8195
    %v8197 = vrot.slane %v7327, 1
    %v8198 = vrot.slane %v7328, 1
    %v8199 = vsel %vm5199, %v8197, %v8198
    %v8200 = vrot.slane %v7407, 1
    %v8201 = vrot.slane %v7408, 1
    %v8202 = vsel %vm5199, %v8200, %v8201
    %v8203 = vrot.slane %v7487, 1
    %v8204 = vrot.slane %v7488, 1
    %v8205 = vsel %vm5199, %v8203, %v8204
    %v8206 = vrot.slane %v7567, 1
    %v8207 = vrot.slane %v7568, 1
    %v8208 = vsel %vm5199, %v8206, %v8207
    %v8209 = vrot.slane %v7329, 1
    %v8210 = vrot.slane %v7330, 1
    %v8211 = vsel %vm5199, %v8209, %v8210
    %v8212 = vrot.slane %v7409, 1
    %v8213 = vrot.slane %v7410, 1
    %v8214 = vsel %vm5199, %v8212, %v8213
    %v8215 = vrot.slane %v7489, 1
    %v8216 = vrot.slane %v7490, 1
    %v8217 = vsel %vm5199, %v8215, %v8216
    %v8218 = vrot.slane %v7569, 1
    %v8219 = vrot.slane %v7570, 1
    %v8220 = vsel %vm5199, %v8218, %v8219
    %v8221 = vrot.slane %v7331, 1
    %v8222 = vrot.slane %v7332, 1
    %v8223 = vsel %vm5199, %v8221, %v8222
    %v8224 = vrot.slane %v7411, 1
    %v8225 = vrot.slane %v7412, 1
    %v8226 = vsel %vm5199, %v8224, %v8225
    %v8227 = vrot.slane %v7491, 1
    %v8228 = vrot.slane %v7492, 1
    %v8229 = vsel %vm5199, %v8227, %v8228
    %v8230 = vrot.slane %v7571, 1
    %v8231 = vrot.slane %v7572, 1
    %v8232 = vsel %vm5199, %v8230, %v8231
    %v8233 = vrot.slane %v7333, 1
    %v8234 = vrot.slane %v7334, 1
    %v8235 = vsel %vm5199, %v8233, %v8234
    %v8236 = vrot.slane %v7413, 1
    %v8237 = vrot.slane %v7414, 1
    %v8238 = vsel %vm5199, %v8236, %v8237
    %v8239 = vrot.slane %v7493, 1
    %v8240 = vrot.slane %v7494, 1
    %v8241 = vsel %vm5199, %v8239, %v8240
    %v8242 = vrot.slane %v7573, 1
    %v8243 = vrot.slane %v7574, 1
    %v8244 = vsel %vm5199, %v8242, %v8243
    %v8245 = vrot.slane %v7335, 1
    %v8246 = vrot.slane %v7336, 1
    %v8247 = vsel %vm5199, %v8245, %v8246
    %v8248 = vrot.slane %v7415, 1
    %v8249 = vrot.slane %v7416, 1
    %v8250 = vsel %vm5199, %v8248, %v8249
    %v8251 = vrot.slane %v7495, 1
    %v8252 = vrot.slane %v7496, 1
    %v8253 = vsel %vm5199, %v8251, %v8252
    %v8254 = vrot.slane %v7575, 1
    %v8255 = vrot.slane %v7576, 1
    %v8256 = vsel %vm5199, %v8254, %v8255
    %v8257 = vrot.slane %v7337, 1
    %v8258 = vrot.slane %v7338, 1
    %v8259 = vsel %vm5199, %v8257, %v8258
    %v8260 = vrot.slane %v7417, 1
    %v8261 = vrot.slane %v7418, 1
    %v8262 = vsel %vm5199, %v8260, %v8261
    %v8263 = vrot.slane %v7497, 1
    %v8264 = vrot.slane %v7498, 1
    %v8265 = vsel %vm5199, %v8263, %v8264
    %v8266 = vrot.slane %v7577, 1
    %v8267 = vrot.slane %v7578, 1
    %v8268 = vsel %vm5199, %v8266, %v8267
    %v8269 = vrot.slane %v7339, 1
    %v8270 = vrot.slane %v7340, 1
    %v8271 = vsel %vm5199, %v8269, %v8270
    %v8272 = vrot.slane %v7419, 1
    %v8273 = vrot.slane %v7420, 1
    %v8274 = vsel %vm5199, %v8272, %v8273
    %v8275 = vrot.slane %v7499, 1
    %v8276 = vrot.slane %v7500, 1
    %v8277 = vsel %vm5199, %v8275, %v8276
    %v8278 = vrot.slane %v7579, 1
    %v8279 = vrot.slane %v7580, 1
    %v8280 = vsel %vm5199, %v8278, %v8279
    %v8281 = vrot.slane %v7341, 1
    %v8282 = vrot.slane %v7342, 1
    %v8283 = vsel %vm5199, %v8281, %v8282
    %v8284 = vrot.slane %v7421, 1
    %v8285 = vrot.slane %v7422, 1
    %v8286 = vsel %vm5199, %v8284, %v8285
    %v8287 = vrot.slane %v7501, 1
    %v8288 = vrot.slane %v7502, 1
    %v8289 = vsel %vm5199, %v8287, %v8288
    %v8290 = vrot.slane %v7581, 1
    %v8291 = vrot.slane %v7582, 1
    %v8292 = vsel %vm5199, %v8290, %v8291
    %v8293 = vrot.slane %v7343, 1
    %v8294 = vrot.slane %v7344, 1
    %v8295 = vsel %vm5199, %v8293, %v8294
    %v8296 = vrot.slane %v7423, 1
    %v8297 = vrot.slane %v7424, 1
    %v8298 = vsel %vm5199, %v8296, %v8297
    %v8299 = vrot.slane %v7503, 1
    %v8300 = vrot.slane %v7504, 1
    %v8301 = vsel %vm5199, %v8299, %v8300
    %v8302 = vrot.slane %v7583, 1
    %v8303 = vrot.slane %v7584, 1
    %v8304 = vsel %vm5199, %v8302, %v8303
    %v8305 = vrot.slane %v7345, 1
    %v8306 = vrot.slane %v7346, 1
    %v8307 = vsel %vm5199, %v8305, %v8306
    %v8308 = vrot.slane %v7425, 1
    %v8309 = vrot.slane %v7426, 1
    %v8310 = vsel %vm5199, %v8308, %v8309
    %v8311 = vrot.slane %v7505, 1
    %v8312 = vrot.slane %v7506, 1
    %v8313 = vsel %vm5199, %v8311, %v8312
    %v8314 = vrot.slane %v7585, 1
    %v8315 = vrot.slane %v7586, 1
    %v8316 = vsel %vm5199, %v8314, %v8315
    %v8317 = vrot.slane %v7347, 1
    %v8318 = vrot.slane %v7348, 1
    %v8319 = vsel %vm5199, %v8317, %v8318
    %v8320 = vrot.slane %v7427, 1
    %v8321 = vrot.slane %v7428, 1
    %v8322 = vsel %vm5199, %v8320, %v8321
    %v8323 = vrot.slane %v7507, 1
    %v8324 = vrot.slane %v7508, 1
    %v8325 = vsel %vm5199, %v8323, %v8324
    %v8326 = vrot.slane %v7587, 1
    %v8327 = vrot.slane %v7588, 1
    %v8328 = vsel %vm5199, %v8326, %v8327
    %v8329 = vrot.slane %v7349, 1
    %v8330 = vrot.slane %v7350, 1
    %v8331 = vsel %vm5199, %v8329, %v8330
    %v8332 = vrot.slane %v7429, 1
    %v8333 = vrot.slane %v7430, 1
    %v8334 = vsel %vm5199, %v8332, %v8333
    %v8335 = vrot.slane %v7509, 1
    %v8336 = vrot.slane %v7510, 1
    %v8337 = vsel %vm5199, %v8335, %v8336
    %v8338 = vrot.slane %v7589, 1
    %v8339 = vrot.slane %v7590, 1
    %v8340 = vsel %vm5199, %v8338, %v8339
    %v8341 = vrot.slane %v7351, 1
    %v8342 = vrot.slane %v7352, 1
    %v8343 = vsel %vm5199, %v8341, %v8342
    %v8344 = vrot.slane %v7431, 1
    %v8345 = vrot.slane %v7432, 1
    %v8346 = vsel %vm5199, %v8344, %v8345
    %v8347 = vrot.slane %v7511, 1
    %v8348 = vrot.slane %v7512, 1
    %v8349 = vsel %vm5199, %v8347, %v8348
    %v8350 = vrot.slane %v7591, 1
    %v8351 = vrot.slane %v7592, 1
    %v8352 = vsel %vm5199, %v8350, %v8351
    %v8353 = vrot.slane %v7353, 1
    %v8354 = vrot.slane %v7354, 1
    %v8355 = vsel %vm5199, %v8353, %v8354
    %v8356 = vrot.slane %v7433, 1
    %v8357 = vrot.slane %v7434, 1
    %v8358 = vsel %vm5199, %v8356, %v8357
    %v8359 = vrot.slane %v7513, 1
    %v8360 = vrot.slane %v7514, 1
    %v8361 = vsel %vm5199, %v8359, %v8360
    %v8362 = vrot.slane %v7593, 1
    %v8363 = vrot.slane %v7594, 1
    %v8364 = vsel %vm5199, %v8362, %v8363
    %v8365 = vrot.slane %v7355, 1
    %v8366 = vrot.slane %v7356, 1
    %v8367 = vsel %vm5199, %v8365, %v8366
    %v8368 = vrot.slane %v7435, 1
    %v8369 = vrot.slane %v7436, 1
    %v8370 = vsel %vm5199, %v8368, %v8369
    %v8371 = vrot.slane %v7515, 1
    %v8372 = vrot.slane %v7516, 1
    %v8373 = vsel %vm5199, %v8371, %v8372
    %v8374 = vrot.slane %v7595, 1
    %v8375 = vrot.slane %v7596, 1
    %v8376 = vsel %vm5199, %v8374, %v8375
    %v8377 = vrot.slane %v7357, 1
    %v8378 = vrot.slane %v7358, 1
    %v8379 = vsel %vm5199, %v8377, %v8378
    %v8380 = vrot.slane %v7437, 1
    %v8381 = vrot.slane %v7438, 1
    %v8382 = vsel %vm5199, %v8380, %v8381
    %v8383 = vrot.slane %v7517, 1
    %v8384 = vrot.slane %v7518, 1
    %v8385 = vsel %vm5199, %v8383, %v8384
    %v8386 = vrot.slane %v7597, 1
    %v8387 = vrot.slane %v7598, 1
    %v8388 = vsel %vm5199, %v8386, %v8387
    %v8389 = vrot.slane %v7359, 1
    %v8390 = vrot.slane %v7360, 1
    %v8391 = vsel %vm5199, %v8389, %v8390
    %v8392 = vrot.slane %v7439, 1
    %v8393 = vrot.slane %v7440, 1
    %v8394 = vsel %vm5199, %v8392, %v8393
    %v8395 = vrot.slane %v7519, 1
    %v8396 = vrot.slane %v7520, 1
    %v8397 = vsel %vm5199, %v8395, %v8396
    %v8398 = vrot.slane %v7599, 1
    %v8399 = vrot.slane %v7600, 1
    %v8400 = vsel %vm5199, %v8398, %v8399
    %v8561 = vpack.c.bf16 %v7935, %v7923
    %v8562 = vpack.c.bf16 %v7938, %v7926
    %v8563 = vpack.c.bf16 %v7941, %v7929
    %v8564 = vpack.c.bf16 %v7944, %v7932
    %v8565 = vpack.c.bf16 %v7959, %v7947
    %v8566 = vpack.c.bf16 %v7962, %v7950
    %v8567 = vpack.c.bf16 %v7965, %v7953
    %v8568 = vpack.c.bf16 %v7968, %v7956
    %v8569 = vpack.c.bf16 %v7983, %v7971
    %v8570 = vpack.c.bf16 %v7986, %v7974
    %v8571 = vpack.c.bf16 %v7989, %v7977
    %v8572 = vpack.c.bf16 %v7992, %v7980
    %v8573 = vpack.c.bf16 %v8007, %v7995
    %v8574 = vpack.c.bf16 %v8010, %v7998
    %v8575 = vpack.c.bf16 %v8013, %v8001
    %v8576 = vpack.c.bf16 %v8016, %v8004
    %v8577 = vpack.c.bf16 %v8031, %v8019
    %v8578 = vpack.c.bf16 %v8034, %v8022
    %v8579 = vpack.c.bf16 %v8037, %v8025
    %v8580 = vpack.c.bf16 %v8040, %v8028
    %v8581 = vpack.c.bf16 %v8055, %v8043
    %v8582 = vpack.c.bf16 %v8058, %v8046
    %v8583 = vpack.c.bf16 %v8061, %v8049
    %v8584 = vpack.c.bf16 %v8064, %v8052
    %v8585 = vpack.c.bf16 %v8079, %v8067
    %v8586 = vpack.c.bf16 %v8082, %v8070
    %v8587 = vpack.c.bf16 %v8085, %v8073
    %v8588 = vpack.c.bf16 %v8088, %v8076
    %v8589 = vpack.c.bf16 %v8103, %v8091
    %v8590 = vpack.c.bf16 %v8106, %v8094
    %v8591 = vpack.c.bf16 %v8109, %v8097
    %v8592 = vpack.c.bf16 %v8112, %v8100
    %v8593 = vpack.c.bf16 %v8127, %v8115
    %v8594 = vpack.c.bf16 %v8130, %v8118
    %v8595 = vpack.c.bf16 %v8133, %v8121
    %v8596 = vpack.c.bf16 %v8136, %v8124
    %v8597 = vpack.c.bf16 %v8151, %v8139
    %v8598 = vpack.c.bf16 %v8154, %v8142
    %v8599 = vpack.c.bf16 %v8157, %v8145
    %v8600 = vpack.c.bf16 %v8160, %v8148
    %v8601 = vpack.c.bf16 %v8175, %v8163
    %v8602 = vpack.c.bf16 %v8178, %v8166
    %v8603 = vpack.c.bf16 %v8181, %v8169
    %v8604 = vpack.c.bf16 %v8184, %v8172
    %v8605 = vpack.c.bf16 %v8199, %v8187
    %v8606 = vpack.c.bf16 %v8202, %v8190
    %v8607 = vpack.c.bf16 %v8205, %v8193
    %v8608 = vpack.c.bf16 %v8208, %v8196
    %v8609 = vpack.c.bf16 %v8223, %v8211
    %v8610 = vpack.c.bf16 %v8226, %v8214
    %v8611 = vpack.c.bf16 %v8229, %v8217
    %v8612 = vpack.c.bf16 %v8232, %v8220
    %v8613 = vpack.c.bf16 %v8247, %v8235
    %v8614 = vpack.c.bf16 %v8250, %v8238
    %v8615 = vpack.c.bf16 %v8253, %v8241
    %v8616 = vpack.c.bf16 %v8256, %v8244
    %v8617 = vpack.c.bf16 %v8271, %v8259
    %v8618 = vpack.c.bf16 %v8274, %v8262
    %v8619 = vpack.c.bf16 %v8277, %v8265
    %v8620 = vpack.c.bf16 %v8280, %v8268
    %v8621 = vpack.c.bf16 %v8295, %v8283
    %v8622 = vpack.c.bf16 %v8298, %v8286
    %v8623 = vpack.c.bf16 %v8301, %v8289
    %v8624 = vpack.c.bf16 %v8304, %v8292
    %v8625 = vpack.c.bf16 %v8319, %v8307
    %v8626 = vpack.c.bf16 %v8322, %v8310
    %v8627 = vpack.c.bf16 %v8325, %v8313
    %v8628 = vpack.c.bf16 %v8328, %v8316
    %v8629 = vpack.c.bf16 %v8343, %v8331
    %v8630 = vpack.c.bf16 %v8346, %v8334
    %v8631 = vpack.c.bf16 %v8349, %v8337
    %v8632 = vpack.c.bf16 %v8352, %v8340
    %v8633 = vpack.c.bf16 %v8367, %v8355
    %v8634 = vpack.c.bf16 %v8370, %v8358
    %v8635 = vpack.c.bf16 %v8373, %v8361
    %v8636 = vpack.c.bf16 %v8376, %v8364
    %v8637 = vpack.c.bf16 %v8391, %v8379
    %v8638 = vpack.c.bf16 %v8394, %v8382
    %v8639 = vpack.c.bf16 %v8397, %v8385
    %v8640 = vpack.c.bf16 %v8400, %v8388
    %v8641 = vld [vmem:[%s5] sm:$0xf]
    %v8642 = vld [vmem:[%s5 + $0x4] sm:$0xf]
    %v8643 = vld [vmem:[%s5 + $0x8] sm:$0xf]
    %v8644 = vld [vmem:[%s5 + $0xc] sm:$0xf]
    %v8645 = vld [vmem:[%s5 + $0x10] sm:$0xf]
    %v8646 = vld [vmem:[%s5 + $0x14] sm:$0xf]
    %v8647 = vld [vmem:[%s5 + $0x18] sm:$0xf]
    %v8648 = vld [vmem:[%s5 + $0x1c] sm:$0xf]
    %v8649 = vld [vmem:[%s5 + $0x20] sm:$0xf]
    %v8650 = vld [vmem:[%s5 + $0x24] sm:$0xf]
    %v8651 = vld [vmem:[%s5 + $0x28] sm:$0xf]
    %v8652 = vld [vmem:[%s5 + $0x2c] sm:$0xf]
    %v8653 = vld [vmem:[%s5 + $0x30] sm:$0xf]
    %v8654 = vld [vmem:[%s5 + $0x34] sm:$0xf]
    %v8655 = vld [vmem:[%s5 + $0x38] sm:$0xf]
    %v8656 = vld [vmem:[%s5 + $0x3c] sm:$0xf]
    %v8657 = vld [vmem:[%s5 + $0x40] sm:$0xf]
    %v8658 = vld [vmem:[%s5 + $0x44] sm:$0xf]
    %v8659 = vld [vmem:[%s5 + $0x48] sm:$0xf]
    %v8660 = vld [vmem:[%s5 + $0x4c] sm:$0xf]
    %v8661 = vld [vmem:[%s5 + $0x50] sm:$0xf]
    %v8662 = vld [vmem:[%s5 + $0x54] sm:$0xf]
    %v8663 = vld [vmem:[%s5 + $0x58] sm:$0xf]
    %v8664 = vld [vmem:[%s5 + $0x5c] sm:$0xf]
    %v8665 = vld [vmem:[%s5 + $0x60] sm:$0xf]
    %v8666 = vld [vmem:[%s5 + $0x64] sm:$0xf]
    %v8667 = vld [vmem:[%s5 + $0x68] sm:$0xf]
    %v8668 = vld [vmem:[%s5 + $0x6c] sm:$0xf]
    %v8669 = vld [vmem:[%s5 + $0x70] sm:$0xf]
    %v8670 = vld [vmem:[%s5 + $0x74] sm:$0xf]
    %v8671 = vld [vmem:[%s5 + $0x78] sm:$0xf]
    %v8672 = vld [vmem:[%s5 + $0x7c] sm:$0xf]
    %v8673 = vld [vmem:[%s5 + $0x80] sm:$0xf]
    %v8674 = vld [vmem:[%s5 + $0x84] sm:$0xf]
    %v8675 = vld [vmem:[%s5 + $0x88] sm:$0xf]
    %v8676 = vld [vmem:[%s5 + $0x8c] sm:$0xf]
    %v8677 = vld [vmem:[%s5 + $0x90] sm:$0xf]
    %v8678 = vld [vmem:[%s5 + $0x94] sm:$0xf]
    %v8679 = vld [vmem:[%s5 + $0x98] sm:$0xf]
    %v8680 = vld [vmem:[%s5 + $0x9c] sm:$0xf]
    %v8681 = vld [vmem:[%s5 + $0xa0] sm:$0xf]
    %v8682 = vld [vmem:[%s5 + $0xa4] sm:$0xf]
    %v8683 = vld [vmem:[%s5 + $0xa8] sm:$0xf]
    %v8684 = vld [vmem:[%s5 + $0xac] sm:$0xf]
    %v8685 = vld [vmem:[%s5 + $0xb0] sm:$0xf]
    %v8686 = vld [vmem:[%s5 + $0xb4] sm:$0xf]
    %v8687 = vld [vmem:[%s5 + $0xb8] sm:$0xf]
    %v8688 = vld [vmem:[%s5 + $0xbc] sm:$0xf]
    %v8689 = vld [vmem:[%s5 + $0xc0] sm:$0xf]
    %v8690 = vld [vmem:[%s5 + $0xc4] sm:$0xf]
    %v8691 = vld [vmem:[%s5 + $0xc8] sm:$0xf]
    %v8692 = vld [vmem:[%s5 + $0xcc] sm:$0xf]
    %v8693 = vld [vmem:[%s5 + $0xd0] sm:$0xf]
    %v8694 = vld [vmem:[%s5 + $0xd4] sm:$0xf]
    %v8695 = vld [vmem:[%s5 + $0xd8] sm:$0xf]
    %v8696 = vld [vmem:[%s5 + $0xdc] sm:$0xf]
    %v8697 = vld [vmem:[%s5 + $0xe0] sm:$0xf]
    %v8698 = vld [vmem:[%s5 + $0xe4] sm:$0xf]
    %v8699 = vld [vmem:[%s5 + $0xe8] sm:$0xf]
    %v8700 = vld [vmem:[%s5 + $0xec] sm:$0xf]
    %v8701 = vld [vmem:[%s5 + $0xf0] sm:$0xf]
    %v8702 = vld [vmem:[%s5 + $0xf4] sm:$0xf]
    %v8703 = vld [vmem:[%s5 + $0xf8] sm:$0xf]
    %v8704 = vld [vmem:[%s5 + $0xfc] sm:$0xf]
    %v8705 = vld [vmem:[%s6] sm:$0x1]
    %v8707 = vperm.slane %v8705, 0
    %v8773 = vunpack.c.l.b16 %v8641
    %v8774 = vunpack.c.l.b16 %v8642
    %v8775 = vunpack.c.l.b16 %v8643
    %v8776 = vunpack.c.l.b16 %v8644
    %v8777 = vunpack.c.l.b16 %v8645
    %v8778 = vunpack.c.l.b16 %v8646
    %v8779 = vunpack.c.l.b16 %v8647
    %v8780 = vunpack.c.l.b16 %v8648
    %v8781 = vunpack.c.l.b16 %v8649
    %v8782 = vunpack.c.l.b16 %v8650
    %v8783 = vunpack.c.l.b16 %v8651
    %v8784 = vunpack.c.l.b16 %v8652
    %v8785 = vunpack.c.l.b16 %v8653
    %v8786 = vunpack.c.l.b16 %v8654
    %v8787 = vunpack.c.l.b16 %v8655
    %v8788 = vunpack.c.l.b16 %v8656
    %v8789 = vunpack.c.l.b16 %v8657
    %v8790 = vunpack.c.l.b16 %v8658
    %v8791 = vunpack.c.l.b16 %v8659
    %v8792 = vunpack.c.l.b16 %v8660
    %v8793 = vunpack.c.l.b16 %v8661
    %v8794 = vunpack.c.l.b16 %v8662
    %v8795 = vunpack.c.l.b16 %v8663
    %v8796 = vunpack.c.l.b16 %v8664
    %v8797 = vunpack.c.l.b16 %v8665
    %v8798 = vunpack.c.l.b16 %v8666
    %v8799 = vunpack.c.l.b16 %v8667
    %v8800 = vunpack.c.l.b16 %v8668
    %v8801 = vunpack.c.l.b16 %v8669
    %v8802 = vunpack.c.l.b16 %v8670
    %v8803 = vunpack.c.l.b16 %v8671
    %v8804 = vunpack.c.l.b16 %v8672
    %v8805 = vunpack.c.l.b16 %v8673
    %v8806 = vunpack.c.l.b16 %v8674
    %v8807 = vunpack.c.l.b16 %v8675
    %v8808 = vunpack.c.l.b16 %v8676
    %v8809 = vunpack.c.l.b16 %v8677
    %v8810 = vunpack.c.l.b16 %v8678
    %v8811 = vunpack.c.l.b16 %v8679
    %v8812 = vunpack.c.l.b16 %v8680
    %v8813 = vunpack.c.l.b16 %v8681
    %v8814 = vunpack.c.l.b16 %v8682
    %v8815 = vunpack.c.l.b16 %v8683
    %v8816 = vunpack.c.l.b16 %v8684
    %v8817 = vunpack.c.l.b16 %v8685
    %v8818 = vunpack.c.l.b16 %v8686
    %v8819 = vunpack.c.l.b16 %v8687
    %v8820 = vunpack.c.l.b16 %v8688
    %v8821 = vunpack.c.l.b16 %v8689
    %v8822 = vunpack.c.l.b16 %v8690
    %v8823 = vunpack.c.l.b16 %v8691
    %v8824 = vunpack.c.l.b16 %v8692
    %v8825 = vunpack.c.l.b16 %v8693
    %v8826 = vunpack.c.l.b16 %v8694
    %v8827 = vunpack.c.l.b16 %v8695
    %v8828 = vunpack.c.l.b16 %v8696
    %v8829 = vunpack.c.l.b16 %v8697
    %v8830 = vunpack.c.l.b16 %v8698
    %v8831 = vunpack.c.l.b16 %v8699
    %v8832 = vunpack.c.l.b16 %v8700
    %v8833 = vunpack.c.l.b16 %v8701
    %v8834 = vunpack.c.l.b16 %v8702
    %v8835 = vunpack.c.l.b16 %v8703
    %v8836 = vunpack.c.l.b16 %v8704
    %v8837 = vpack.c.b16 %v8774, %v8773
    %v8838 = vpack.c.b16 %v8776, %v8775
    %v8839 = vpack.c.b16 %v8778, %v8777
    %v8840 = vpack.c.b16 %v8780, %v8779
    %v8841 = vpack.c.b16 %v8782, %v8781
    %v8842 = vpack.c.b16 %v8784, %v8783
    %v8843 = vpack.c.b16 %v8786, %v8785
    %v8844 = vpack.c.b16 %v8788, %v8787
    %v8845 = vpack.c.b16 %v8790, %v8789
    %v8846 = vpack.c.b16 %v8792, %v8791
    %v8847 = vpack.c.b16 %v8794, %v8793
    %v8848 = vpack.c.b16 %v8796, %v8795
    %v8849 = vpack.c.b16 %v8798, %v8797
    %v8850 = vpack.c.b16 %v8800, %v8799
    %v8851 = vpack.c.b16 %v8802, %v8801
    %v8852 = vpack.c.b16 %v8804, %v8803
    %v8853 = vpack.c.b16 %v8806, %v8805
    %v8854 = vpack.c.b16 %v8808, %v8807
    %v8855 = vpack.c.b16 %v8810, %v8809
    %v8856 = vpack.c.b16 %v8812, %v8811
    %v8857 = vpack.c.b16 %v8814, %v8813
    %v8858 = vpack.c.b16 %v8816, %v8815
    %v8859 = vpack.c.b16 %v8818, %v8817
    %v8860 = vpack.c.b16 %v8820, %v8819
    %v8861 = vpack.c.b16 %v8822, %v8821
    %v8862 = vpack.c.b16 %v8824, %v8823
    %v8863 = vpack.c.b16 %v8826, %v8825
    %v8864 = vpack.c.b16 %v8828, %v8827
    %v8865 = vpack.c.b16 %v8830, %v8829
    %v8866 = vpack.c.b16 %v8832, %v8831
    %v8867 = vpack.c.b16 %v8834, %v8833
    %v8868 = vpack.c.b16 %v8836, %v8835
    %8901 = vmatpush.bf16.msra.mxu0 %v8844
    %8902 = vmatpush.bf16.msra.mxu0 %v8843
    %8903 = vmatpush.bf16.msra.mxu0 %v8842
    %8904 = vmatpush.bf16.msra.mxu0 %v8841
    %8905 = vmatpush.bf16.msra.mxu0 %v8840
    %8906 = vmatpush.bf16.msra.mxu0 %v8839
    %8907 = vmatpush.bf16.msra.mxu0 %v8838
    %8908 = vmatpush.bf16.msra.mxu0 %v8837
    %8909 = vmatmul.bf16.gmra.mxu0 %v8561
    %v8910 = vpop.f32.mrf.mxu0
    %v8911 = vadd.f32 %v8707, %v8910
    %v8912 = vpop.f32.mrf.mxu0
    %v8913 = vadd.f32 %v8707, %v8912
    %8914 = vmatmul.bf16.gmra.mxu0 %v8565
    %v8915 = vpop.f32.mrf.mxu0
    %v8916 = vadd.f32 %v8707, %v8915
    %v8917 = vpop.f32.mrf.mxu0
    %v8918 = vadd.f32 %v8707, %v8917
    %8919 = vmatmul.bf16.gmra.mxu0 %v8569
    %v8920 = vpop.f32.mrf.mxu0
    %v8921 = vadd.f32 %v8707, %v8920
    %v8922 = vpop.f32.mrf.mxu0
    %v8923 = vadd.f32 %v8707, %v8922
    %8924 = vmatmul.bf16.gmra.mxu0 %v8573
    %v8925 = vpop.f32.mrf.mxu0
    %v8926 = vadd.f32 %v8707, %v8925
    %v8927 = vpop.f32.mrf.mxu0
    %v8928 = vadd.f32 %v8707, %v8927
    %8929 = vmatmul.bf16.gmra.mxu0 %v8577
    %v8930 = vpop.f32.mrf.mxu0
    %v8931 = vadd.f32 %v8707, %v8930
    %v8932 = vpop.f32.mrf.mxu0
    %v8933 = vadd.f32 %v8707, %v8932
    %8934 = vmatmul.bf16.gmra.mxu0 %v8581
    %v8935 = vpop.f32.mrf.mxu0
    %v8936 = vadd.f32 %v8707, %v8935
    %v8937 = vpop.f32.mrf.mxu0
    %v8938 = vadd.f32 %v8707, %v8937
    %8939 = vmatmul.bf16.gmra.mxu0 %v8585
    %v8940 = vpop.f32.mrf.mxu0
    %v8941 = vadd.f32 %v8707, %v8940
    %v8942 = vpop.f32.mrf.mxu0
    %v8943 = vadd.f32 %v8707, %v8942
    %8944 = vmatmul.bf16.gmra.mxu0 %v8589
    %v8945 = vpop.f32.mrf.mxu0
    %v8946 = vadd.f32 %v8707, %v8945
    %v8947 = vpop.f32.mrf.mxu0
    %v8948 = vadd.f32 %v8707, %v8947
    %8949 = vmatmul.bf16.gmra.mxu0 %v8593
    %v8950 = vpop.f32.mrf.mxu0
    %v8951 = vadd.f32 %v8707, %v8950
    %v8952 = vpop.f32.mrf.mxu0
    %v8953 = vadd.f32 %v8707, %v8952
    %8954 = vmatmul.bf16.gmra.mxu0 %v8597
    %v8955 = vpop.f32.mrf.mxu0
    %v8956 = vadd.f32 %v8707, %v8955
    %v8957 = vpop.f32.mrf.mxu0
    %v8958 = vadd.f32 %v8707, %v8957
    %8959 = vmatmul.bf16.gmra.mxu0 %v8601
    %v8960 = vpop.f32.mrf.mxu0
    %v8961 = vadd.f32 %v8707, %v8960
    %v8962 = vpop.f32.mrf.mxu0
    %v8963 = vadd.f32 %v8707, %v8962
    %8964 = vmatmul.bf16.gmra.mxu0 %v8605
    %v8965 = vpop.f32.mrf.mxu0
    %v8966 = vadd.f32 %v8707, %v8965
    %v8967 = vpop.f32.mrf.mxu0
    %v8968 = vadd.f32 %v8707, %v8967
    %8969 = vmatmul.bf16.gmra.mxu0 %v8609
    %v8970 = vpop.f32.mrf.mxu0
    %v8971 = vadd.f32 %v8707, %v8970
    %v8972 = vpop.f32.mrf.mxu0
    %v8973 = vadd.f32 %v8707, %v8972
    %8974 = vmatmul.bf16.gmra.mxu0 %v8613
    %v8975 = vpop.f32.mrf.mxu0
    %v8976 = vadd.f32 %v8707, %v8975
    %v8977 = vpop.f32.mrf.mxu0
    %v8978 = vadd.f32 %v8707, %v8977
    %8979 = vmatmul.bf16.gmra.mxu0 %v8617
    %v8980 = vpop.f32.mrf.mxu0
    %v8981 = vadd.f32 %v8707, %v8980
    %v8982 = vpop.f32.mrf.mxu0
    %v8983 = vadd.f32 %v8707, %v8982
    %8984 = vmatmul.bf16.gmra.mxu0 %v8621
    %v8985 = vpop.f32.mrf.mxu0
    %v8986 = vadd.f32 %v8707, %v8985
    %v8987 = vpop.f32.mrf.mxu0
    %v8988 = vadd.f32 %v8707, %v8987
    %8989 = vmatmul.bf16.gmra.mxu0 %v8625
    %v8990 = vpop.f32.mrf.mxu0
    %v8991 = vadd.f32 %v8707, %v8990
    %v8992 = vpop.f32.mrf.mxu0
    %v8993 = vadd.f32 %v8707, %v8992
    %8994 = vmatmul.bf16.gmra.mxu0 %v8629
    %v8995 = vpop.f32.mrf.mxu0
    %v8996 = vadd.f32 %v8707, %v8995
    %v8997 = vpop.f32.mrf.mxu0
    %v8998 = vadd.f32 %v8707, %v8997
    %8999 = vmatmul.bf16.gmra.mxu0 %v8633
    %v9000 = vpop.f32.mrf.mxu0
    %v9001 = vadd.f32 %v8707, %v9000
    %v9002 = vpop.f32.mrf.mxu0
    %v9003 = vadd.f32 %v8707, %v9002
    %9004 = vmatmul.bf16.gmra.mxu0 %v8637
    %v9005 = vpop.f32.mrf.mxu0
    %v9006 = vadd.f32 %v8707, %v9005
    %v9007 = vpop.f32.mrf.mxu0
    %v9008 = vadd.f32 %v8707, %v9007
    %9009 = vdwg.mxu0
    %9010 = vmatpush.bf16.msra.mxu0 %v8852
    %9011 = vmatpush.bf16.msra.mxu0 %v8851
    %9012 = vmatpush.bf16.msra.mxu0 %v8850
    %9013 = vmatpush.bf16.msra.mxu0 %v8849
    %9014 = vmatpush.bf16.msra.mxu0 %v8848
    %9015 = vmatpush.bf16.msra.mxu0 %v8847
    %9016 = vmatpush.bf16.msra.mxu0 %v8846
    %9017 = vmatpush.bf16.msra.mxu0 %v8845
    %9018 = vmatmul.bf16.gmra.mxu0 %v8562
    %v9019 = vpop.f32.mrf.mxu0
    %v9020 = vadd.f32 %v8911, %v9019
    %v9021 = vpop.f32.mrf.mxu0
    %v9022 = vadd.f32 %v8913, %v9021
    %9023 = vmatmul.bf16.gmra.mxu0 %v8566
    %v9024 = vpop.f32.mrf.mxu0
    %v9025 = vadd.f32 %v8916, %v9024
    %v9026 = vpop.f32.mrf.mxu0
    %v9027 = vadd.f32 %v8918, %v9026
    %9028 = vmatmul.bf16.gmra.mxu0 %v8570
    %v9029 = vpop.f32.mrf.mxu0
    %v9030 = vadd.f32 %v8921, %v9029
    %v9031 = vpop.f32.mrf.mxu0
    %v9032 = vadd.f32 %v8923, %v9031
    %9033 = vmatmul.bf16.gmra.mxu0 %v8574
    %v9034 = vpop.f32.mrf.mxu0
    %v9035 = vadd.f32 %v8926, %v9034
    %v9036 = vpop.f32.mrf.mxu0
    %v9037 = vadd.f32 %v8928, %v9036
    %9038 = vmatmul.bf16.gmra.mxu0 %v8578
    %v9039 = vpop.f32.mrf.mxu0
    %v9040 = vadd.f32 %v8931, %v9039
    %v9041 = vpop.f32.mrf.mxu0
    %v9042 = vadd.f32 %v8933, %v9041
    %9043 = vmatmul.bf16.gmra.mxu0 %v8582
    %v9044 = vpop.f32.mrf.mxu0
    %v9045 = vadd.f32 %v8936, %v9044
    %v9046 = vpop.f32.mrf.mxu0
    %v9047 = vadd.f32 %v8938, %v9046
    %9048 = vmatmul.bf16.gmra.mxu0 %v8586
    %v9049 = vpop.f32.mrf.mxu0
    %v9050 = vadd.f32 %v8941, %v9049
    %v9051 = vpop.f32.mrf.mxu0
    %v9052 = vadd.f32 %v8943, %v9051
    %9053 = vmatmul.bf16.gmra.mxu0 %v8590
    %v9054 = vpop.f32.mrf.mxu0
    %v9055 = vadd.f32 %v8946, %v9054
    %v9056 = vpop.f32.mrf.mxu0
    %v9057 = vadd.f32 %v8948, %v9056
    %9058 = vmatmul.bf16.gmra.mxu0 %v8594
    %v9059 = vpop.f32.mrf.mxu0
    %v9060 = vadd.f32 %v8951, %v9059
    %v9061 = vpop.f32.mrf.mxu0
    %v9062 = vadd.f32 %v8953, %v9061
    %9063 = vmatmul.bf16.gmra.mxu0 %v8598
    %v9064 = vpop.f32.mrf.mxu0
    %v9065 = vadd.f32 %v8956, %v9064
    %v9066 = vpop.f32.mrf.mxu0
    %v9067 = vadd.f32 %v8958, %v9066
    %9068 = vmatmul.bf16.gmra.mxu0 %v8602
    %v9069 = vpop.f32.mrf.mxu0
    %v9070 = vadd.f32 %v8961, %v9069
    %v9071 = vpop.f32.mrf.mxu0
    %v9072 = vadd.f32 %v8963, %v9071
    %9073 = vmatmul.bf16.gmra.mxu0 %v8606
    %v9074 = vpop.f32.mrf.mxu0
    %v9075 = vadd.f32 %v8966, %v9074
    %v9076 = vpop.f32.mrf.mxu0
    %v9077 = vadd.f32 %v8968, %v9076
    %9078 = vmatmul.bf16.gmra.mxu0 %v8610
    %v9079 = vpop.f32.mrf.mxu0
    %v9080 = vadd.f32 %v8971, %v9079
    %v9081 = vpop.f32.mrf.mxu0
    %v9082 = vadd.f32 %v8973, %v9081
    %9083 = vmatmul.bf16.gmra.mxu0 %v8614
    %v9084 = vpop.f32.mrf.mxu0
    %v9085 = vadd.f32 %v8976, %v9084
    %v9086 = vpop.f32.mrf.mxu0
    %v9087 = vadd.f32 %v8978, %v9086
    %9088 = vmatmul.bf16.gmra.mxu0 %v8618
    %v9089 = vpop.f32.mrf.mxu0
    %v9090 = vadd.f32 %v8981, %v9089
    %v9091 = vpop.f32.mrf.mxu0
    %v9092 = vadd.f32 %v8983, %v9091
    %9093 = vmatmul.bf16.gmra.mxu0 %v8622
    %v9094 = vpop.f32.mrf.mxu0
    %v9095 = vadd.f32 %v8986, %v9094
    %v9096 = vpop.f32.mrf.mxu0
    %v9097 = vadd.f32 %v8988, %v9096
    %9098 = vmatmul.bf16.gmra.mxu0 %v8626
    %v9099 = vpop.f32.mrf.mxu0
    %v9100 = vadd.f32 %v8991, %v9099
    %v9101 = vpop.f32.mrf.mxu0
    %v9102 = vadd.f32 %v8993, %v9101
    %9103 = vmatmul.bf16.gmra.mxu0 %v8630
    %v9104 = vpop.f32.mrf.mxu0
    %v9105 = vadd.f32 %v8996, %v9104
    %v9106 = vpop.f32.mrf.mxu0
    %v9107 = vadd.f32 %v8998, %v9106
    %9108 = vmatmul.bf16.gmra.mxu0 %v8634
    %v9109 = vpop.f32.mrf.mxu0
    %v9110 = vadd.f32 %v9001, %v9109
    %v9111 = vpop.f32.mrf.mxu0
    %v9112 = vadd.f32 %v9003, %v9111
    %9113 = vmatmul.bf16.gmra.mxu0 %v8638
    %v9114 = vpop.f32.mrf.mxu0
    %v9115 = vadd.f32 %v9006, %v9114
    %v9116 = vpop.f32.mrf.mxu0
    %v9117 = vadd.f32 %v9008, %v9116
    %9118 = vdwg.mxu0
    %9119 = vmatpush.bf16.msra.mxu0 %v8860
    %9120 = vmatpush.bf16.msra.mxu0 %v8859
    %9121 = vmatpush.bf16.msra.mxu0 %v8858
    %9122 = vmatpush.bf16.msra.mxu0 %v8857
    %9123 = vmatpush.bf16.msra.mxu0 %v8856
    %9124 = vmatpush.bf16.msra.mxu0 %v8855
    %9125 = vmatpush.bf16.msra.mxu0 %v8854
    %9126 = vmatpush.bf16.msra.mxu0 %v8853
    %9127 = vmatmul.bf16.gmra.mxu0 %v8563
    %v9128 = vpop.f32.mrf.mxu0
    %v9129 = vadd.f32 %v9020, %v9128
    %v9130 = vpop.f32.mrf.mxu0
    %v9131 = vadd.f32 %v9022, %v9130
    %9132 = vmatmul.bf16.gmra.mxu0 %v8567
    %v9133 = vpop.f32.mrf.mxu0
    %v9134 = vadd.f32 %v9025, %v9133
    %v9135 = vpop.f32.mrf.mxu0
    %v9136 = vadd.f32 %v9027, %v9135
    %9137 = vmatmul.bf16.gmra.mxu0 %v8571
    %v9138 = vpop.f32.mrf.mxu0
    %v9139 = vadd.f32 %v9030, %v9138
    %v9140 = vpop.f32.mrf.mxu0
    %v9141 = vadd.f32 %v9032, %v9140
    %9142 = vmatmul.bf16.gmra.mxu0 %v8575
    %v9143 = vpop.f32.mrf.mxu0
    %v9144 = vadd.f32 %v9035, %v9143
    %v9145 = vpop.f32.mrf.mxu0
    %v9146 = vadd.f32 %v9037, %v9145
    %9147 = vmatmul.bf16.gmra.mxu0 %v8579
    %v9148 = vpop.f32.mrf.mxu0
    %v9149 = vadd.f32 %v9040, %v9148
    %v9150 = vpop.f32.mrf.mxu0
    %v9151 = vadd.f32 %v9042, %v9150
    %9152 = vmatmul.bf16.gmra.mxu0 %v8583
    %v9153 = vpop.f32.mrf.mxu0
    %v9154 = vadd.f32 %v9045, %v9153
    %v9155 = vpop.f32.mrf.mxu0
    %v9156 = vadd.f32 %v9047, %v9155
    %9157 = vmatmul.bf16.gmra.mxu0 %v8587
    %v9158 = vpop.f32.mrf.mxu0
    %v9159 = vadd.f32 %v9050, %v9158
    %v9160 = vpop.f32.mrf.mxu0
    %v9161 = vadd.f32 %v9052, %v9160
    %9162 = vmatmul.bf16.gmra.mxu0 %v8591
    %v9163 = vpop.f32.mrf.mxu0
    %v9164 = vadd.f32 %v9055, %v9163
    %v9165 = vpop.f32.mrf.mxu0
    %v9166 = vadd.f32 %v9057, %v9165
    %9167 = vmatmul.bf16.gmra.mxu0 %v8595
    %v9168 = vpop.f32.mrf.mxu0
    %v9169 = vadd.f32 %v9060, %v9168
    %v9170 = vpop.f32.mrf.mxu0
    %v9171 = vadd.f32 %v9062, %v9170
    %9172 = vmatmul.bf16.gmra.mxu0 %v8599
    %v9173 = vpop.f32.mrf.mxu0
    %v9174 = vadd.f32 %v9065, %v9173
    %v9175 = vpop.f32.mrf.mxu0
    %v9176 = vadd.f32 %v9067, %v9175
    %9177 = vmatmul.bf16.gmra.mxu0 %v8603
    %v9178 = vpop.f32.mrf.mxu0
    %v9179 = vadd.f32 %v9070, %v9178
    %v9180 = vpop.f32.mrf.mxu0
    %v9181 = vadd.f32 %v9072, %v9180
    %9182 = vmatmul.bf16.gmra.mxu0 %v8607
    %v9183 = vpop.f32.mrf.mxu0
    %v9184 = vadd.f32 %v9075, %v9183
    %v9185 = vpop.f32.mrf.mxu0
    %v9186 = vadd.f32 %v9077, %v9185
    %9187 = vmatmul.bf16.gmra.mxu0 %v8611
    %v9188 = vpop.f32.mrf.mxu0
    %v9189 = vadd.f32 %v9080, %v9188
    %v9190 = vpop.f32.mrf.mxu0
    %v9191 = vadd.f32 %v9082, %v9190
    %9192 = vmatmul.bf16.gmra.mxu0 %v8615
    %v9193 = vpop.f32.mrf.mxu0
    %v9194 = vadd.f32 %v9085, %v9193
    %v9195 = vpop.f32.mrf.mxu0
    %v9196 = vadd.f32 %v9087, %v9195
    %9197 = vmatmul.bf16.gmra.mxu0 %v8619
    %v9198 = vpop.f32.mrf.mxu0
    %v9199 = vadd.f32 %v9090, %v9198
    %v9200 = vpop.f32.mrf.mxu0
    %v9201 = vadd.f32 %v9092, %v9200
    %9202 = vmatmul.bf16.gmra.mxu0 %v8623
    %v9203 = vpop.f32.mrf.mxu0
    %v9204 = vadd.f32 %v9095, %v9203
    %v9205 = vpop.f32.mrf.mxu0
    %v9206 = vadd.f32 %v9097, %v9205
    %9207 = vmatmul.bf16.gmra.mxu0 %v8627
    %v9208 = vpop.f32.mrf.mxu0
    %v9209 = vadd.f32 %v9100, %v9208
    %v9210 = vpop.f32.mrf.mxu0
    %v9211 = vadd.f32 %v9102, %v9210
    %9212 = vmatmul.bf16.gmra.mxu0 %v8631
    %v9213 = vpop.f32.mrf.mxu0
    %v9214 = vadd.f32 %v9105, %v9213
    %v9215 = vpop.f32.mrf.mxu0
    %v9216 = vadd.f32 %v9107, %v9215
    %9217 = vmatmul.bf16.gmra.mxu0 %v8635
    %v9218 = vpop.f32.mrf.mxu0
    %v9219 = vadd.f32 %v9110, %v9218
    %v9220 = vpop.f32.mrf.mxu0
    %v9221 = vadd.f32 %v9112, %v9220
    %9222 = vmatmul.bf16.gmra.mxu0 %v8639
    %v9223 = vpop.f32.mrf.mxu0
    %v9224 = vadd.f32 %v9115, %v9223
    %v9225 = vpop.f32.mrf.mxu0
    %v9226 = vadd.f32 %v9117, %v9225
    %9227 = vdwg.mxu0
    %9228 = vmatpush.bf16.msra.mxu0 %v8868
    %9229 = vmatpush.bf16.msra.mxu0 %v8867
    %9230 = vmatpush.bf16.msra.mxu0 %v8866
    %9231 = vmatpush.bf16.msra.mxu0 %v8865
    %9232 = vmatpush.bf16.msra.mxu0 %v8864
    %9233 = vmatpush.bf16.msra.mxu0 %v8863
    %9234 = vmatpush.bf16.msra.mxu0 %v8862
    %9235 = vmatpush.bf16.msra.mxu0 %v8861
    %9236 = vmatmul.bf16.gmra.mxu0 %v8564
    %v9237 = vpop.f32.mrf.mxu0
    %v9238 = vadd.f32 %v9129, %v9237
    %v9239 = vpop.f32.mrf.mxu0
    %v9240 = vadd.f32 %v9131, %v9239
    %9241 = vmatmul.bf16.gmra.mxu0 %v8568
    %v9242 = vpop.f32.mrf.mxu0
    %v9243 = vadd.f32 %v9134, %v9242
    %v9244 = vpop.f32.mrf.mxu0
    %v9245 = vadd.f32 %v9136, %v9244
    %9246 = vmatmul.bf16.gmra.mxu0 %v8572
    %v9247 = vpop.f32.mrf.mxu0
    %v9248 = vadd.f32 %v9139, %v9247
    %v9249 = vpop.f32.mrf.mxu0
    %v9250 = vadd.f32 %v9141, %v9249
    %9251 = vmatmul.bf16.gmra.mxu0 %v8576
    %v9252 = vpop.f32.mrf.mxu0
    %v9253 = vadd.f32 %v9144, %v9252
    %v9254 = vpop.f32.mrf.mxu0
    %v9255 = vadd.f32 %v9146, %v9254
    %9256 = vmatmul.bf16.gmra.mxu0 %v8580
    %v9257 = vpop.f32.mrf.mxu0
    %v9258 = vadd.f32 %v9149, %v9257
    %v9259 = vpop.f32.mrf.mxu0
    %v9260 = vadd.f32 %v9151, %v9259
    %9261 = vmatmul.bf16.gmra.mxu0 %v8584
    %v9262 = vpop.f32.mrf.mxu0
    %v9263 = vadd.f32 %v9154, %v9262
    %v9264 = vpop.f32.mrf.mxu0
    %v9265 = vadd.f32 %v9156, %v9264
    %9266 = vmatmul.bf16.gmra.mxu0 %v8588
    %v9267 = vpop.f32.mrf.mxu0
    %v9268 = vadd.f32 %v9159, %v9267
    %v9269 = vpop.f32.mrf.mxu0
    %v9270 = vadd.f32 %v9161, %v9269
    %9271 = vmatmul.bf16.gmra.mxu0 %v8592
    %v9272 = vpop.f32.mrf.mxu0
    %v9273 = vadd.f32 %v9164, %v9272
    %v9274 = vpop.f32.mrf.mxu0
    %v9275 = vadd.f32 %v9166, %v9274
    %9276 = vmatmul.bf16.gmra.mxu0 %v8596
    %v9277 = vpop.f32.mrf.mxu0
    %v9278 = vadd.f32 %v9169, %v9277
    %v9279 = vpop.f32.mrf.mxu0
    %v9280 = vadd.f32 %v9171, %v9279
    %9281 = vmatmul.bf16.gmra.mxu0 %v8600
    %v9282 = vpop.f32.mrf.mxu0
    %v9283 = vadd.f32 %v9174, %v9282
    %v9284 = vpop.f32.mrf.mxu0
    %v9285 = vadd.f32 %v9176, %v9284
    %9286 = vmatmul.bf16.gmra.mxu0 %v8604
    %v9287 = vpop.f32.mrf.mxu0
    %v9288 = vadd.f32 %v9179, %v9287
    %v9289 = vpop.f32.mrf.mxu0
    %v9290 = vadd.f32 %v9181, %v9289
    %9291 = vmatmul.bf16.gmra.mxu0 %v8608
    %v9292 = vpop.f32.mrf.mxu0
    %v9293 = vadd.f32 %v9184, %v9292
    %v9294 = vpop.f32.mrf.mxu0
    %v9295 = vadd.f32 %v9186, %v9294
    %9296 = vmatmul.bf16.gmra.mxu0 %v8612
    %v9297 = vpop.f32.mrf.mxu0
    %v9298 = vadd.f32 %v9189, %v9297
    %v9299 = vpop.f32.mrf.mxu0
    %v9300 = vadd.f32 %v9191, %v9299
    %9301 = vmatmul.bf16.gmra.mxu0 %v8616
    %v9302 = vpop.f32.mrf.mxu0
    %v9303 = vadd.f32 %v9194, %v9302
    %v9304 = vpop.f32.mrf.mxu0
    %v9305 = vadd.f32 %v9196, %v9304
    %9306 = vmatmul.bf16.gmra.mxu0 %v8620
    %v9307 = vpop.f32.mrf.mxu0
    %v9308 = vadd.f32 %v9199, %v9307
    %v9309 = vpop.f32.mrf.mxu0
    %v9310 = vadd.f32 %v9201, %v9309
    %9311 = vmatmul.bf16.gmra.mxu0 %v8624
    %v9312 = vpop.f32.mrf.mxu0
    %v9313 = vadd.f32 %v9204, %v9312
    %v9314 = vpop.f32.mrf.mxu0
    %v9315 = vadd.f32 %v9206, %v9314
    %9316 = vmatmul.bf16.gmra.mxu0 %v8628
    %v9317 = vpop.f32.mrf.mxu0
    %v9318 = vadd.f32 %v9209, %v9317
    %v9319 = vpop.f32.mrf.mxu0
    %v9320 = vadd.f32 %v9211, %v9319
    %9321 = vmatmul.bf16.gmra.mxu0 %v8632
    %v9322 = vpop.f32.mrf.mxu0
    %v9323 = vadd.f32 %v9214, %v9322
    %v9324 = vpop.f32.mrf.mxu0
    %v9325 = vadd.f32 %v9216, %v9324
    %9326 = vmatmul.bf16.gmra.mxu0 %v8636
    %v9327 = vpop.f32.mrf.mxu0
    %v9328 = vadd.f32 %v9219, %v9327
    %v9329 = vpop.f32.mrf.mxu0
    %v9330 = vadd.f32 %v9221, %v9329
    %9331 = vmatmul.bf16.gmra.mxu0 %v8640
    %v9332 = vpop.f32.mrf.mxu0
    %v9333 = vadd.f32 %v9224, %v9332
    %v9334 = vpop.f32.mrf.mxu0
    %v9335 = vadd.f32 %v9226, %v9334
    %9336 = vdwg.mxu0
    %v9337 = vld [vmem:[%s7] sm:$0x1]
    %v9338 = vld [vmem:[%s8] sm:$0x1]
    %v9339 = vadd.f32 %v9238, %v9240
    %v9340 = vadd.f32 %v9339, %v9243
    %v9341 = vadd.f32 %v9340, %v9245
    %v9342 = vadd.f32 %v9341, %v9248
    %v9343 = vadd.f32 %v9342, %v9250
    %v9344 = vadd.f32 %v9343, %v9253
    %v9345 = vadd.f32 %v9344, %v9255
    %v9346 = vadd.f32 %v9345, %v9258
    %v9347 = vadd.f32 %v9346, %v9260
    %v9348 = vadd.f32 %v9347, %v9263
    %v9349 = vadd.f32 %v9348, %v9265
    %v9350 = vadd.f32 %v9349, %v9268
    %v9351 = vadd.f32 %v9350, %v9270
    %v9352 = vadd.f32 %v9351, %v9273
    %v9353 = vadd.f32 %v9352, %v9275
    %v9354 = vadd.f32 %v9353, %v9278
    %v9355 = vadd.f32 %v9354, %v9280
    %v9356 = vadd.f32 %v9355, %v9283
    %v9357 = vadd.f32 %v9356, %v9285
    %v9358 = vadd.f32 %v9357, %v9288
    %v9359 = vadd.f32 %v9358, %v9290
    %v9360 = vadd.f32 %v9359, %v9293
    %v9361 = vadd.f32 %v9360, %v9295
    %v9362 = vadd.f32 %v9361, %v9298
    %v9363 = vadd.f32 %v9362, %v9300
    %v9364 = vadd.f32 %v9363, %v9303
    %v9365 = vadd.f32 %v9364, %v9305
    %v9366 = vadd.f32 %v9365, %v9308
    %v9367 = vadd.f32 %v9366, %v9310
    %v9368 = vadd.f32 %v9367, %v9313
    %v9369 = vadd.f32 %v9368, %v9315
    %v9370 = vadd.f32 %v9369, %v9318
    %v9371 = vadd.f32 %v9370, %v9320
    %v9372 = vadd.f32 %v9371, %v9323
    %v9373 = vadd.f32 %v9372, %v9325
    %v9374 = vadd.f32 %v9373, %v9328
    %v9375 = vadd.f32 %v9374, %v9330
    %v9376 = vadd.f32 %v9375, %v9333
    %v9377 = vadd.f32 %v9376, %v9335
    %v9378 = vrot.slane %v9377, 4
    %v9379 = vadd.f32 %v9377, %v9378
    %v9380 = vrot.slane %v9379, 2
    %v9381 = vadd.f32 %v9379, %v9380
    %v9382 = vrot.slane %v9381, 1
    %v9383 = vadd.f32 %v9381, %v9382
    %v9384 = vrcp.pop 320.0
    %v9385 = vmul.f32 320.0, %v9384
    %v9386 = vsub.f32 1.0, %v9385
    %v9387 = vmul.f32 %v9384, %v9386
    %v9388 = vadd.f32 %v9384, %v9387
    %vm9389 = vweird.f32 %v9384
    %v9390 = vsel %vm9389, %v9384, %v9388
    %v9391 = vmul.f32 %v9383, %v9390
    %v9392 = vsub.f32 %v9238, %v9391
    %v9393 = vsub.f32 %v9240, %v9391
    %v9394 = vsub.f32 %v9243, %v9391
    %v9395 = vsub.f32 %v9245, %v9391
    %v9396 = vsub.f32 %v9248, %v9391
    %v9397 = vsub.f32 %v9250, %v9391
    %v9398 = vsub.f32 %v9253, %v9391
    %v9399 = vsub.f32 %v9255, %v9391
    %v9400 = vsub.f32 %v9258, %v9391
    %v9401 = vsub.f32 %v9260, %v9391
    %v9402 = vsub.f32 %v9263, %v9391
    %v9403 = vsub.f32 %v9265, %v9391
    %v9404 = vsub.f32 %v9268, %v9391
    %v9405 = vsub.f32 %v9270, %v9391
    %v9406 = vsub.f32 %v9273, %v9391
    %v9407 = vsub.f32 %v9275, %v9391
    %v9408 = vsub.f32 %v9278, %v9391
    %v9409 = vsub.f32 %v9280, %v9391
    %v9410 = vsub.f32 %v9283, %v9391
    %v9411 = vsub.f32 %v9285, %v9391
    %v9412 = vsub.f32 %v9288, %v9391
    %v9413 = vsub.f32 %v9290, %v9391
    %v9414 = vsub.f32 %v9293, %v9391
    %v9415 = vsub.f32 %v9295, %v9391
    %v9416 = vsub.f32 %v9298, %v9391
    %v9417 = vsub.f32 %v9300, %v9391
    %v9418 = vsub.f32 %v9303, %v9391
    %v9419 = vsub.f32 %v9305, %v9391
    %v9420 = vsub.f32 %v9308, %v9391
    %v9421 = vsub.f32 %v9310, %v9391
    %v9422 = vsub.f32 %v9313, %v9391
    %v9423 = vsub.f32 %v9315, %v9391
    %v9424 = vsub.f32 %v9318, %v9391
    %v9425 = vsub.f32 %v9320, %v9391
    %v9426 = vsub.f32 %v9323, %v9391
    %v9427 = vsub.f32 %v9325, %v9391
    %v9428 = vsub.f32 %v9328, %v9391
    %v9429 = vsub.f32 %v9330, %v9391
    %v9430 = vsub.f32 %v9333, %v9391
    %v9431 = vsub.f32 %v9335, %v9391
    %v9432 = vmul.f32 %v9392, %v9392
    %v9433 = vmul.f32 %v9393, %v9393
    %v9434 = vmul.f32 %v9394, %v9394
    %v9435 = vmul.f32 %v9395, %v9395
    %v9436 = vmul.f32 %v9396, %v9396
    %v9437 = vmul.f32 %v9397, %v9397
    %v9438 = vmul.f32 %v9398, %v9398
    %v9439 = vmul.f32 %v9399, %v9399
    %v9440 = vmul.f32 %v9400, %v9400
    %v9441 = vmul.f32 %v9401, %v9401
    %v9442 = vmul.f32 %v9402, %v9402
    %v9443 = vmul.f32 %v9403, %v9403
    %v9444 = vmul.f32 %v9404, %v9404
    %v9445 = vmul.f32 %v9405, %v9405
    %v9446 = vmul.f32 %v9406, %v9406
    %v9447 = vmul.f32 %v9407, %v9407
    %v9448 = vmul.f32 %v9408, %v9408
    %v9449 = vmul.f32 %v9409, %v9409
    %v9450 = vmul.f32 %v9410, %v9410
    %v9451 = vmul.f32 %v9411, %v9411
    %v9452 = vmul.f32 %v9412, %v9412
    %v9453 = vmul.f32 %v9413, %v9413
    %v9454 = vmul.f32 %v9414, %v9414
    %v9455 = vmul.f32 %v9415, %v9415
    %v9456 = vmul.f32 %v9416, %v9416
    %v9457 = vmul.f32 %v9417, %v9417
    %v9458 = vmul.f32 %v9418, %v9418
    %v9459 = vmul.f32 %v9419, %v9419
    %v9460 = vmul.f32 %v9420, %v9420
    %v9461 = vmul.f32 %v9421, %v9421
    %v9462 = vmul.f32 %v9422, %v9422
    %v9463 = vmul.f32 %v9423, %v9423
    %v9464 = vmul.f32 %v9424, %v9424
    %v9465 = vmul.f32 %v9425, %v9425
    %v9466 = vmul.f32 %v9426, %v9426
    %v9467 = vmul.f32 %v9427, %v9427
    %v9468 = vmul.f32 %v9428, %v9428
    %v9469 = vmul.f32 %v9429, %v9429
    %v9470 = vmul.f32 %v9430, %v9430
    %v9471 = vmul.f32 %v9431, %v9431
    %v9472 = vadd.f32 %v9432, %v9433
    %v9473 = vadd.f32 %v9472, %v9434
    %v9474 = vadd.f32 %v9473, %v9435
    %v9475 = vadd.f32 %v9474, %v9436
    %v9476 = vadd.f32 %v9475, %v9437
    %v9477 = vadd.f32 %v9476, %v9438
    %v9478 = vadd.f32 %v9477, %v9439
    %v9479 = vadd.f32 %v9478, %v9440
    %v9480 = vadd.f32 %v9479, %v9441
    %v9481 = vadd.f32 %v9480, %v9442
    %v9482 = vadd.f32 %v9481, %v9443
    %v9483 = vadd.f32 %v9482, %v9444
    %v9484 = vadd.f32 %v9483, %v9445
    %v9485 = vadd.f32 %v9484, %v9446
    %v9486 = vadd.f32 %v9485, %v9447
    %v9487 = vadd.f32 %v9486, %v9448
    %v9488 = vadd.f32 %v9487, %v9449
    %v9489 = vadd.f32 %v9488, %v9450
    %v9490 = vadd.f32 %v9489, %v9451
    %v9491 = vadd.f32 %v9490, %v9452
    %v9492 = vadd.f32 %v9491, %v9453
    %v9493 = vadd.f32 %v9492, %v9454
    %v9494 = vadd.f32 %v9493, %v9455
    %v9495 = vadd.f32 %v9494, %v9456
    %v9496 = vadd.f32 %v9495, %v9457
    %v9497 = vadd.f32 %v9496, %v9458
    %v9498 = vadd.f32 %v9497, %v9459
    %v9499 = vadd.f32 %v9498, %v9460
    %v9500 = vadd.f32 %v9499, %v9461
    %v9501 = vadd.f32 %v9500, %v9462
    %v9502 = vadd.f32 %v9501, %v9463
    %v9503 = vadd.f32 %v9502, %v9464
    %v9504 = vadd.f32 %v9503, %v9465
    %v9505 = vadd.f32 %v9504, %v9466
    %v9506 = vadd.f32 %v9505, %v9467
    %v9507 = vadd.f32 %v9506, %v9468
    %v9508 = vadd.f32 %v9507, %v9469
    %v9509 = vadd.f32 %v9508, %v9470
    %v9510 = vadd.f32 %v9509, %v9471
    %v9511 = vrot.slane %v9510, 4
    %v9512 = vadd.f32 %v9510, %v9511
    %v9513 = vrot.slane %v9512, 2
    %v9514 = vadd.f32 %v9512, %v9513
    %v9515 = vrot.slane %v9514, 1
    %v9516 = vadd.f32 %v9514, %v9515
    %v9517 = vmul.f32 %v9516, %v9390
    %v9518 = vadd.f32 %v9517, 1e-05
    %v9519 = vrsqrt.pop %v9518
    %v9520 = vmul.f32 %v9519, %v9518
    %v9521 = vmul.f32 %v9520, %v9519
    %v9522 = vmul.f32 0.5, %v9521
    %v9523 = vsub.f32 1.5, %v9522
    %v9524 = vmul.f32 %v9519, %v9523
    %vm9525 = vweird.f32 %v9518
    %vm9526 = vweird.f32 %v9519
    %vm9527 = vmor %vm9525, %vm9526
    %v9528 = vsel %vm9527, %v9519, %v9524
    %v9529 = vmul.f32 %v9337, %v9528
    %v9530 = vmul.f32 %v9391, %v9529
    %v9531 = vsub.f32 %v9338, %v9530
    %v9533 = vperm.slane %v9529, 0
    %v9535 = vmul.f32 %v9238, %v9533
    %v9536 = vmul.f32 %v9240, %v9533
    %v9537 = vmul.f32 %v9243, %v9533
    %v9538 = vmul.f32 %v9245, %v9533
    %v9539 = vmul.f32 %v9248, %v9533
    %v9540 = vmul.f32 %v9250, %v9533
    %v9541 = vmul.f32 %v9253, %v9533
    %v9542 = vmul.f32 %v9255, %v9533
    %v9543 = vmul.f32 %v9258, %v9533
    %v9544 = vmul.f32 %v9260, %v9533
    %v9545 = vmul.f32 %v9263, %v9533
    %v9546 = vmul.f32 %v9265, %v9533
    %v9547 = vmul.f32 %v9268, %v9533
    %v9548 = vmul.f32 %v9270, %v9533
    %v9549 = vmul.f32 %v9273, %v9533
    %v9550 = vmul.f32 %v9275, %v9533
    %v9551 = vmul.f32 %v9278, %v9533
    %v9552 = vmul.f32 %v9280, %v9533
    %v9553 = vmul.f32 %v9283, %v9533
    %v9554 = vmul.f32 %v9285, %v9533
    %v9555 = vmul.f32 %v9288, %v9533
    %v9556 = vmul.f32 %v9290, %v9533
    %v9557 = vmul.f32 %v9293, %v9533
    %v9558 = vmul.f32 %v9295, %v9533
    %v9559 = vmul.f32 %v9298, %v9533
    %v9560 = vmul.f32 %v9300, %v9533
    %v9561 = vmul.f32 %v9303, %v9533
    %v9562 = vmul.f32 %v9305, %v9533
    %v9563 = vmul.f32 %v9308, %v9533
    %v9564 = vmul.f32 %v9310, %v9533
    %v9565 = vmul.f32 %v9313, %v9533
    %v9566 = vmul.f32 %v9315, %v9533
    %v9567 = vmul.f32 %v9318, %v9533
    %v9568 = vmul.f32 %v9320, %v9533
    %v9569 = vmul.f32 %v9323, %v9533
    %v9570 = vmul.f32 %v9325, %v9533
    %v9571 = vmul.f32 %v9328, %v9533
    %v9572 = vmul.f32 %v9330, %v9533
    %v9573 = vmul.f32 %v9333, %v9533
    %v9574 = vmul.f32 %v9335, %v9533
    %v9576 = vperm.slane %v9531, 0
    %v9578 = vadd.f32 %v9535, %v9576
    %v9579 = vadd.f32 %v9536, %v9576
    %v9580 = vadd.f32 %v9537, %v9576
    %v9581 = vadd.f32 %v9538, %v9576
    %v9582 = vadd.f32 %v9539, %v9576
    %v9583 = vadd.f32 %v9540, %v9576
    %v9584 = vadd.f32 %v9541, %v9576
    %v9585 = vadd.f32 %v9542, %v9576
    %v9586 = vadd.f32 %v9543, %v9576
    %v9587 = vadd.f32 %v9544, %v9576
    %v9588 = vadd.f32 %v9545, %v9576
    %v9589 = vadd.f32 %v9546, %v9576
    %v9590 = vadd.f32 %v9547, %v9576
    %v9591 = vadd.f32 %v9548, %v9576
    %v9592 = vadd.f32 %v9549, %v9576
    %v9593 = vadd.f32 %v9550, %v9576
    %v9594 = vadd.f32 %v9551, %v9576
    %v9595 = vadd.f32 %v9552, %v9576
    %v9596 = vadd.f32 %v9553, %v9576
    %v9597 = vadd.f32 %v9554, %v9576
    %v9598 = vadd.f32 %v9555, %v9576
    %v9599 = vadd.f32 %v9556, %v9576
    %v9600 = vadd.f32 %v9557, %v9576
    %v9601 = vadd.f32 %v9558, %v9576
    %v9602 = vadd.f32 %v9559, %v9576
    %v9603 = vadd.f32 %v9560, %v9576
    %v9604 = vadd.f32 %v9561, %v9576
    %v9605 = vadd.f32 %v9562, %v9576
    %v9606 = vadd.f32 %v9563, %v9576
    %v9607 = vadd.f32 %v9564, %v9576
    %v9608 = vadd.f32 %v9565, %v9576
    %v9609 = vadd.f32 %v9566, %v9576
    %v9610 = vadd.f32 %v9567, %v9576
    %v9611 = vadd.f32 %v9568, %v9576
    %v9612 = vadd.f32 %v9569, %v9576
    %v9613 = vadd.f32 %v9570, %v9576
    %v9614 = vadd.f32 %v9571, %v9576
    %v9615 = vadd.f32 %v9572, %v9576
    %v9616 = vadd.f32 %v9573, %v9576
    %v9617 = vadd.f32 %v9574, %v9576
    %v9698 = vrot.slane %v4480, 1
    %v9699 = vrot.slane %v4482, 1
    %v9700 = vsel %vm5199, %v9698, %v9699
    %v9701 = vrot.slane %v4484, 1
    %v9702 = vrot.slane %v4486, 1
    %v9703 = vsel %vm5199, %v9701, %v9702
    %v9704 = vrot.slane %v4488, 1
    %v9705 = vrot.slane %v4490, 1
    %v9706 = vsel %vm5199, %v9704, %v9705
    %v9707 = vrot.slane %v4492, 1
    %v9708 = vrot.slane %v4494, 1
    %v9709 = vsel %vm5199, %v9707, %v9708
    %v9710 = vrot.slane %v4496, 1
    %v9711 = vrot.slane %v4498, 1
    %v9712 = vsel %vm5199, %v9710, %v9711
    %v9713 = vrot.slane %v4500, 1
    %v9714 = vrot.slane %v4502, 1
    %v9715 = vsel %vm5199, %v9713, %v9714
    %v9716 = vrot.slane %v4504, 1
    %v9717 = vrot.slane %v4506, 1
    %v9718 = vsel %vm5199, %v9716, %v9717
    %v9719 = vrot.slane %v4508, 1
    %v9720 = vrot.slane %v4510, 1
    %v9721 = vsel %vm5199, %v9719, %v9720
    %v9722 = vrot.slane %v4512, 1
    %v9723 = vrot.slane %v4514, 1
    %v9724 = vsel %vm5199, %v9722, %v9723
    %v9725 = vrot.slane %v4516, 1
    %v9726 = vrot.slane %v4518, 1
    %v9727 = vsel %vm5199, %v9725, %v9726
    %v9728 = vrot.slane %v4520, 1
    %v9729 = vrot.slane %v4522, 1
    %v9730 = vsel %vm5199, %v9728, %v9729
    %v9731 = vrot.slane %v4524, 1
    %v9732 = vrot.slane %v4526, 1
    %v9733 = vsel %vm5199, %v9731, %v9732
    %v9734 = vrot.slane %v4528, 1
    %v9735 = vrot.slane %v4530, 1
    %v9736 = vsel %vm5199, %v9734, %v9735
    %v9737 = vrot.slane %v4532, 1
    %v9738 = vrot.slane %v4534, 1
    %v9739 = vsel %vm5199, %v9737, %v9738
    %v9740 = vrot.slane %v4536, 1
    %v9741 = vrot.slane %v4538, 1
    %v9742 = vsel %vm5199, %v9740, %v9741
    %v9743 = vrot.slane %v4540, 1
    %v9744 = vrot.slane %v4542, 1
    %v9745 = vsel %vm5199, %v9743, %v9744
    %v9746 = vrot.slane %v4544, 1
    %v9747 = vrot.slane %v4546, 1
    %v9748 = vsel %vm5199, %v9746, %v9747
    %v9749 = vrot.slane %v4548, 1
    %v9750 = vrot.slane %v4550, 1
    %v9751 = vsel %vm5199, %v9749, %v9750
    %v9752 = vrot.slane %v4552, 1
    %v9753 = vrot.slane %v4554, 1
    %v9754 = vsel %vm5199, %v9752, %v9753
    %v9755 = vrot.slane %v4556, 1
    %v9756 = vrot.slane %v4558, 1
    %v9757 = vsel %vm5199, %v9755, %v9756
    %v9758 = vrot.slane %v4560, 1
    %v9759 = vrot.slane %v4562, 1
    %v9760 = vsel %vm5199, %v9758, %v9759
    %v9761 = vrot.slane %v4564, 1
    %v9762 = vrot.slane %v4566, 1
    %v9763 = vsel %vm5199, %v9761, %v9762
    %v9764 = vrot.slane %v4568, 1
    %v9765 = vrot.slane %v4570, 1
    %v9766 = vsel %vm5199, %v9764, %v9765
    %v9767 = vrot.slane %v4572, 1
    %v9768 = vrot.slane %v4574, 1
    %v9769 = vsel %vm5199, %v9767, %v9768
    %v9770 = vrot.slane %v4576, 1
    %v9771 = vrot.slane %v4578, 1
    %v9772 = vsel %vm5199, %v9770, %v9771
    %v9773 = vrot.slane %v4580, 1
    %v9774 = vrot.slane %v4582, 1
    %v9775 = vsel %vm5199, %v9773, %v9774
    %v9776 = vrot.slane %v4584, 1
    %v9777 = vrot.slane %v4586, 1
    %v9778 = vsel %vm5199, %v9776, %v9777
    %v9779 = vrot.slane %v4588, 1
    %v9780 = vrot.slane %v4590, 1
    %v9781 = vsel %vm5199, %v9779, %v9780
    %v9782 = vrot.slane %v4592, 1
    %v9783 = vrot.slane %v4594, 1
    %v9784 = vsel %vm5199, %v9782, %v9783
    %v9785 = vrot.slane %v4596, 1
    %v9786 = vrot.slane %v4598, 1
    %v9787 = vsel %vm5199, %v9785, %v9786
    %v9788 = vrot.slane %v4600, 1
    %v9789 = vrot.slane %v4602, 1
    %v9790 = vsel %vm5199, %v9788, %v9789
    %v9791 = vrot.slane %v4604, 1
    %v9792 = vrot.slane %v4606, 1
    %v9793 = vsel %vm5199, %v9791, %v9792
    %v9794 = vrot.slane %v4608, 1
    %v9795 = vrot.slane %v4610, 1
    %v9796 = vsel %vm5199, %v9794, %v9795
    %v9797 = vrot.slane %v4612, 1
    %v9798 = vrot.slane %v4614, 1
    %v9799 = vsel %vm5199, %v9797, %v9798
    %v9800 = vrot.slane %v4616, 1
    %v9801 = vrot.slane %v4618, 1
    %v9802 = vsel %vm5199, %v9800, %v9801
    %v9803 = vrot.slane %v4620, 1
    %v9804 = vrot.slane %v4622, 1
    %v9805 = vsel %vm5199, %v9803, %v9804
    %v9806 = vrot.slane %v4624, 1
    %v9807 = vrot.slane %v4626, 1
    %v9808 = vsel %vm5199, %v9806, %v9807
    %v9809 = vrot.slane %v4628, 1
    %v9810 = vrot.slane %v4630, 1
    %v9811 = vsel %vm5199, %v9809, %v9810
    %v9812 = vrot.slane %v4632, 1
    %v9813 = vrot.slane %v4634, 1
    %v9814 = vsel %vm5199, %v9812, %v9813
    %v9815 = vrot.slane %v4636, 1
    %v9816 = vrot.slane %v4638, 1
    %v9817 = vsel %vm5199, %v9815, %v9816
    %v9898 = vmax.f32 %v4640, %v9700
    %v9899 = vmax.f32 %v4642, %v9699
    %v9900 = vmax.f32 %v4644, %v9703
    %v9901 = vmax.f32 %v4646, %v9702
    %v9902 = vmax.f32 %v4648, %v9706
    %v9903 = vmax.f32 %v4650, %v9705
    %v9904 = vmax.f32 %v4652, %v9709
    %v9905 = vmax.f32 %v4654, %v9708
    %v9906 = vmax.f32 %v4656, %v9712
    %v9907 = vmax.f32 %v4658, %v9711
    %v9908 = vmax.f32 %v4660, %v9715
    %v9909 = vmax.f32 %v4662, %v9714
    %v9910 = vmax.f32 %v4664, %v9718
    %v9911 = vmax.f32 %v4666, %v9717
    %v9912 = vmax.f32 %v4668, %v9721
    %v9913 = vmax.f32 %v4670, %v9720
    %v9914 = vmax.f32 %v4672, %v9724
    %v9915 = vmax.f32 %v4674, %v9723
    %v9916 = vmax.f32 %v4676, %v9727
    %v9917 = vmax.f32 %v4678, %v9726
    %v9918 = vmax.f32 %v4680, %v9730
    %v9919 = vmax.f32 %v4682, %v9729
    %v9920 = vmax.f32 %v4684, %v9733
    %v9921 = vmax.f32 %v4686, %v9732
    %v9922 = vmax.f32 %v4688, %v9736
    %v9923 = vmax.f32 %v4690, %v9735
    %v9924 = vmax.f32 %v4692, %v9739
    %v9925 = vmax.f32 %v4694, %v9738
    %v9926 = vmax.f32 %v4696, %v9742
    %v9927 = vmax.f32 %v4698, %v9741
    %v9928 = vmax.f32 %v4700, %v9745
    %v9929 = vmax.f32 %v4702, %v9744
    %v9930 = vmax.f32 %v4704, %v9748
    %v9931 = vmax.f32 %v4706, %v9747
    %v9932 = vmax.f32 %v4708, %v9751
    %v9933 = vmax.f32 %v4710, %v9750
    %v9934 = vmax.f32 %v4712, %v9754
    %v9935 = vmax.f32 %v4714, %v9753
    %v9936 = vmax.f32 %v4716, %v9757
    %v9937 = vmax.f32 %v4718, %v9756
    %v9938 = vmax.f32 %v4720, %v9760
    %v9939 = vmax.f32 %v4722, %v9759
    %v9940 = vmax.f32 %v4724, %v9763
    %v9941 = vmax.f32 %v4726, %v9762
    %v9942 = vmax.f32 %v4728, %v9766
    %v9943 = vmax.f32 %v4730, %v9765
    %v9944 = vmax.f32 %v4732, %v9769
    %v9945 = vmax.f32 %v4734, %v9768
    %v9946 = vmax.f32 %v4736, %v9772
    %v9947 = vmax.f32 %v4738, %v9771
    %v9948 = vmax.f32 %v4740, %v9775
    %v9949 = vmax.f32 %v4742, %v9774
    %v9950 = vmax.f32 %v4744, %v9778
    %v9951 = vmax.f32 %v4746, %v9777
    %v9952 = vmax.f32 %v4748, %v9781
    %v9953 = vmax.f32 %v4750, %v9780
    %v9954 = vmax.f32 %v4752, %v9784
    %v9955 = vmax.f32 %v4754, %v9783
    %v9956 = vmax.f32 %v4756, %v9787
    %v9957 = vmax.f32 %v4758, %v9786
    %v9958 = vmax.f32 %v4760, %v9790
    %v9959 = vmax.f32 %v4762, %v9789
    %v9960 = vmax.f32 %v4764, %v9793
    %v9961 = vmax.f32 %v4766, %v9792
    %v9962 = vmax.f32 %v4768, %v9796
    %v9963 = vmax.f32 %v4770, %v9795
    %v9964 = vmax.f32 %v4772, %v9799
    %v9965 = vmax.f32 %v4774, %v9798
    %v9966 = vmax.f32 %v4776, %v9802
    %v9967 = vmax.f32 %v4778, %v9801
    %v9968 = vmax.f32 %v4780, %v9805
    %v9969 = vmax.f32 %v4782, %v9804
    %v9970 = vmax.f32 %v4784, %v9808
    %v9971 = vmax.f32 %v4786, %v9807
    %v9972 = vmax.f32 %v4788, %v9811
    %v9973 = vmax.f32 %v4790, %v9810
    %v9974 = vmax.f32 %v4792, %v9814
    %v9975 = vmax.f32 %v4794, %v9813
    %v9976 = vmax.f32 %v4796, %v9817
    %v9977 = vmax.f32 %v4798, %v9816
    %v10058 = vrot.slane %v4640, 1
    %v10059 = vrot.slane %v4642, 1
    %v10060 = vsel %vm5199, %v10058, %v10059
    %v10061 = vrot.slane %v4644, 1
    %v10062 = vrot.slane %v4646, 1
    %v10063 = vsel %vm5199, %v10061, %v10062
    %v10064 = vrot.slane %v4648, 1
    %v10065 = vrot.slane %v4650, 1
    %v10066 = vsel %vm5199, %v10064, %v10065
    %v10067 = vrot.slane %v4652, 1
    %v10068 = vrot.slane %v4654, 1
    %v10069 = vsel %vm5199, %v10067, %v10068
    %v10070 = vrot.slane %v4656, 1
    %v10071 = vrot.slane %v4658, 1
    %v10072 = vsel %vm5199, %v10070, %v10071
    %v10073 = vrot.slane %v4660, 1
    %v10074 = vrot.slane %v4662, 1
    %v10075 = vsel %vm5199, %v10073, %v10074
    %v10076 = vrot.slane %v4664, 1
    %v10077 = vrot.slane %v4666, 1
    %v10078 = vsel %vm5199, %v10076, %v10077
    %v10079 = vrot.slane %v4668, 1
    %v10080 = vrot.slane %v4670, 1
    %v10081 = vsel %vm5199, %v10079, %v10080
    %v10082 = vrot.slane %v4672, 1
    %v10083 = vrot.slane %v4674, 1
    %v10084 = vsel %vm5199, %v10082, %v10083
    %v10085 = vrot.slane %v4676, 1
    %v10086 = vrot.slane %v4678, 1
    %v10087 = vsel %vm5199, %v10085, %v10086
    %v10088 = vrot.slane %v4680, 1
    %v10089 = vrot.slane %v4682, 1
    %v10090 = vsel %vm5199, %v10088, %v10089
    %v10091 = vrot.slane %v4684, 1
    %v10092 = vrot.slane %v4686, 1
    %v10093 = vsel %vm5199, %v10091, %v10092
    %v10094 = vrot.slane %v4688, 1
    %v10095 = vrot.slane %v4690, 1
    %v10096 = vsel %vm5199, %v10094, %v10095
    %v10097 = vrot.slane %v4692, 1
    %v10098 = vrot.slane %v4694, 1
    %v10099 = vsel %vm5199, %v10097, %v10098
    %v10100 = vrot.slane %v4696, 1
    %v10101 = vrot.slane %v4698, 1
    %v10102 = vsel %vm5199, %v10100, %v10101
    %v10103 = vrot.slane %v4700, 1
    %v10104 = vrot.slane %v4702, 1
    %v10105 = vsel %vm5199, %v10103, %v10104
    %v10106 = vrot.slane %v4704, 1
    %v10107 = vrot.slane %v4706, 1
    %v10108 = vsel %vm5199, %v10106, %v10107
    %v10109 = vrot.slane %v4708, 1
    %v10110 = vrot.slane %v4710, 1
    %v10111 = vsel %vm5199, %v10109, %v10110
    %v10112 = vrot.slane %v4712, 1
    %v10113 = vrot.slane %v4714, 1
    %v10114 = vsel %vm5199, %v10112, %v10113
    %v10115 = vrot.slane %v4716, 1
    %v10116 = vrot.slane %v4718, 1
    %v10117 = vsel %vm5199, %v10115, %v10116
    %v10118 = vrot.slane %v4720, 1
    %v10119 = vrot.slane %v4722, 1
    %v10120 = vsel %vm5199, %v10118, %v10119
    %v10121 = vrot.slane %v4724, 1
    %v10122 = vrot.slane %v4726, 1
    %v10123 = vsel %vm5199, %v10121, %v10122
    %v10124 = vrot.slane %v4728, 1
    %v10125 = vrot.slane %v4730, 1
    %v10126 = vsel %vm5199, %v10124, %v10125
    %v10127 = vrot.slane %v4732, 1
    %v10128 = vrot.slane %v4734, 1
    %v10129 = vsel %vm5199, %v10127, %v10128
    %v10130 = vrot.slane %v4736, 1
    %v10131 = vrot.slane %v4738, 1
    %v10132 = vsel %vm5199, %v10130, %v10131
    %v10133 = vrot.slane %v4740, 1
    %v10134 = vrot.slane %v4742, 1
    %v10135 = vsel %vm5199, %v10133, %v10134
    %v10136 = vrot.slane %v4744, 1
    %v10137 = vrot.slane %v4746, 1
    %v10138 = vsel %vm5199, %v10136, %v10137
    %v10139 = vrot.slane %v4748, 1
    %v10140 = vrot.slane %v4750, 1
    %v10141 = vsel %vm5199, %v10139, %v10140
    %v10142 = vrot.slane %v4752, 1
    %v10143 = vrot.slane %v4754, 1
    %v10144 = vsel %vm5199, %v10142, %v10143
    %v10145 = vrot.slane %v4756, 1
    %v10146 = vrot.slane %v4758, 1
    %v10147 = vsel %vm5199, %v10145, %v10146
    %v10148 = vrot.slane %v4760, 1
    %v10149 = vrot.slane %v4762, 1
    %v10150 = vsel %vm5199, %v10148, %v10149
    %v10151 = vrot.slane %v4764, 1
    %v10152 = vrot.slane %v4766, 1
    %v10153 = vsel %vm5199, %v10151, %v10152
    %v10154 = vrot.slane %v4768, 1
    %v10155 = vrot.slane %v4770, 1
    %v10156 = vsel %vm5199, %v10154, %v10155
    %v10157 = vrot.slane %v4772, 1
    %v10158 = vrot.slane %v4774, 1
    %v10159 = vsel %vm5199, %v10157, %v10158
    %v10160 = vrot.slane %v4776, 1
    %v10161 = vrot.slane %v4778, 1
    %v10162 = vsel %vm5199, %v10160, %v10161
    %v10163 = vrot.slane %v4780, 1
    %v10164 = vrot.slane %v4782, 1
    %v10165 = vsel %vm5199, %v10163, %v10164
    %v10166 = vrot.slane %v4784, 1
    %v10167 = vrot.slane %v4786, 1
    %v10168 = vsel %vm5199, %v10166, %v10167
    %v10169 = vrot.slane %v4788, 1
    %v10170 = vrot.slane %v4790, 1
    %v10171 = vsel %vm5199, %v10169, %v10170
    %v10172 = vrot.slane %v4792, 1
    %v10173 = vrot.slane %v4794, 1
    %v10174 = vsel %vm5199, %v10172, %v10173
    %v10175 = vrot.slane %v4796, 1
    %v10176 = vrot.slane %v4798, 1
    %v10177 = vsel %vm5199, %v10175, %v10176
    %v10258 = vmax.f32 %v9898, %v10060
    %v10259 = vmax.f32 %v9899, %v10059
    %v10260 = vmax.f32 %v9900, %v10063
    %v10261 = vmax.f32 %v9901, %v10062
    %v10262 = vmax.f32 %v9902, %v10066
    %v10263 = vmax.f32 %v9903, %v10065
    %v10264 = vmax.f32 %v9904, %v10069
    %v10265 = vmax.f32 %v9905, %v10068
    %v10266 = vmax.f32 %v9906, %v10072
    %v10267 = vmax.f32 %v9907, %v10071
    %v10268 = vmax.f32 %v9908, %v10075
    %v10269 = vmax.f32 %v9909, %v10074
    %v10270 = vmax.f32 %v9910, %v10078
    %v10271 = vmax.f32 %v9911, %v10077
    %v10272 = vmax.f32 %v9912, %v10081
    %v10273 = vmax.f32 %v9913, %v10080
    %v10274 = vmax.f32 %v9914, %v10084
    %v10275 = vmax.f32 %v9915, %v10083
    %v10276 = vmax.f32 %v9916, %v10087
    %v10277 = vmax.f32 %v9917, %v10086
    %v10278 = vmax.f32 %v9918, %v10090
    %v10279 = vmax.f32 %v9919, %v10089
    %v10280 = vmax.f32 %v9920, %v10093
    %v10281 = vmax.f32 %v9921, %v10092
    %v10282 = vmax.f32 %v9922, %v10096
    %v10283 = vmax.f32 %v9923, %v10095
    %v10284 = vmax.f32 %v9924, %v10099
    %v10285 = vmax.f32 %v9925, %v10098
    %v10286 = vmax.f32 %v9926, %v10102
    %v10287 = vmax.f32 %v9927, %v10101
    %v10288 = vmax.f32 %v9928, %v10105
    %v10289 = vmax.f32 %v9929, %v10104
    %v10290 = vmax.f32 %v9930, %v10108
    %v10291 = vmax.f32 %v9931, %v10107
    %v10292 = vmax.f32 %v9932, %v10111
    %v10293 = vmax.f32 %v9933, %v10110
    %v10294 = vmax.f32 %v9934, %v10114
    %v10295 = vmax.f32 %v9935, %v10113
    %v10296 = vmax.f32 %v9936, %v10117
    %v10297 = vmax.f32 %v9937, %v10116
    %v10298 = vmax.f32 %v9938, %v10120
    %v10299 = vmax.f32 %v9939, %v10119
    %v10300 = vmax.f32 %v9940, %v10123
    %v10301 = vmax.f32 %v9941, %v10122
    %v10302 = vmax.f32 %v9942, %v10126
    %v10303 = vmax.f32 %v9943, %v10125
    %v10304 = vmax.f32 %v9944, %v10129
    %v10305 = vmax.f32 %v9945, %v10128
    %v10306 = vmax.f32 %v9946, %v10132
    %v10307 = vmax.f32 %v9947, %v10131
    %v10308 = vmax.f32 %v9948, %v10135
    %v10309 = vmax.f32 %v9949, %v10134
    %v10310 = vmax.f32 %v9950, %v10138
    %v10311 = vmax.f32 %v9951, %v10137
    %v10312 = vmax.f32 %v9952, %v10141
    %v10313 = vmax.f32 %v9953, %v10140
    %v10314 = vmax.f32 %v9954, %v10144
    %v10315 = vmax.f32 %v9955, %v10143
    %v10316 = vmax.f32 %v9956, %v10147
    %v10317 = vmax.f32 %v9957, %v10146
    %v10318 = vmax.f32 %v9958, %v10150
    %v10319 = vmax.f32 %v9959, %v10149
    %v10320 = vmax.f32 %v9960, %v10153
    %v10321 = vmax.f32 %v9961, %v10152
    %v10322 = vmax.f32 %v9962, %v10156
    %v10323 = vmax.f32 %v9963, %v10155
    %v10324 = vmax.f32 %v9964, %v10159
    %v10325 = vmax.f32 %v9965, %v10158
    %v10326 = vmax.f32 %v9966, %v10162
    %v10327 = vmax.f32 %v9967, %v10161
    %v10328 = vmax.f32 %v9968, %v10165
    %v10329 = vmax.f32 %v9969, %v10164
    %v10330 = vmax.f32 %v9970, %v10168
    %v10331 = vmax.f32 %v9971, %v10167
    %v10332 = vmax.f32 %v9972, %v10171
    %v10333 = vmax.f32 %v9973, %v10170
    %v10334 = vmax.f32 %v9974, %v10174
    %v10335 = vmax.f32 %v9975, %v10173
    %v10336 = vmax.f32 %v9976, %v10177
    %v10337 = vmax.f32 %v9977, %v10176
    %v10418 = vrot.slane %v10258, 1
    %v10419 = vrot.slane %v10259, 1
    %v10420 = vsel %vm5199, %v10418, %v10419
    %v10421 = vrot.slane %v10260, 1
    %v10422 = vrot.slane %v10261, 1
    %v10423 = vsel %vm5199, %v10421, %v10422
    %v10424 = vrot.slane %v10262, 1
    %v10425 = vrot.slane %v10263, 1
    %v10426 = vsel %vm5199, %v10424, %v10425
    %v10427 = vrot.slane %v10264, 1
    %v10428 = vrot.slane %v10265, 1
    %v10429 = vsel %vm5199, %v10427, %v10428
    %v10430 = vrot.slane %v10266, 1
    %v10431 = vrot.slane %v10267, 1
    %v10432 = vsel %vm5199, %v10430, %v10431
    %v10433 = vrot.slane %v10268, 1
    %v10434 = vrot.slane %v10269, 1
    %v10435 = vsel %vm5199, %v10433, %v10434
    %v10436 = vrot.slane %v10270, 1
    %v10437 = vrot.slane %v10271, 1
    %v10438 = vsel %vm5199, %v10436, %v10437
    %v10439 = vrot.slane %v10272, 1
    %v10440 = vrot.slane %v10273, 1
    %v10441 = vsel %vm5199, %v10439, %v10440
    %v10442 = vrot.slane %v10274, 1
    %v10443 = vrot.slane %v10275, 1
    %v10444 = vsel %vm5199, %v10442, %v10443
    %v10445 = vrot.slane %v10276, 1
    %v10446 = vrot.slane %v10277, 1
    %v10447 = vsel %vm5199, %v10445, %v10446
    %v10448 = vrot.slane %v10278, 1
    %v10449 = vrot.slane %v10279, 1
    %v10450 = vsel %vm5199, %v10448, %v10449
    %v10451 = vrot.slane %v10280, 1
    %v10452 = vrot.slane %v10281, 1
    %v10453 = vsel %vm5199, %v10451, %v10452
    %v10454 = vrot.slane %v10282, 1
    %v10455 = vrot.slane %v10283, 1
    %v10456 = vsel %vm5199, %v10454, %v10455
    %v10457 = vrot.slane %v10284, 1
    %v10458 = vrot.slane %v10285, 1
    %v10459 = vsel %vm5199, %v10457, %v10458
    %v10460 = vrot.slane %v10286, 1
    %v10461 = vrot.slane %v10287, 1
    %v10462 = vsel %vm5199, %v10460, %v10461
    %v10463 = vrot.slane %v10288, 1
    %v10464 = vrot.slane %v10289, 1
    %v10465 = vsel %vm5199, %v10463, %v10464
    %v10466 = vrot.slane %v10290, 1
    %v10467 = vrot.slane %v10291, 1
    %v10468 = vsel %vm5199, %v10466, %v10467
    %v10469 = vrot.slane %v10292, 1
    %v10470 = vrot.slane %v10293, 1
    %v10471 = vsel %vm5199, %v10469, %v10470
    %v10472 = vrot.slane %v10294, 1
    %v10473 = vrot.slane %v10295, 1
    %v10474 = vsel %vm5199, %v10472, %v10473
    %v10475 = vrot.slane %v10296, 1
    %v10476 = vrot.slane %v10297, 1
    %v10477 = vsel %vm5199, %v10475, %v10476
    %v10478 = vrot.slane %v10298, 1
    %v10479 = vrot.slane %v10299, 1
    %v10480 = vsel %vm5199, %v10478, %v10479
    %v10481 = vrot.slane %v10300, 1
    %v10482 = vrot.slane %v10301, 1
    %v10483 = vsel %vm5199, %v10481, %v10482
    %v10484 = vrot.slane %v10302, 1
    %v10485 = vrot.slane %v10303, 1
    %v10486 = vsel %vm5199, %v10484, %v10485
    %v10487 = vrot.slane %v10304, 1
    %v10488 = vrot.slane %v10305, 1
    %v10489 = vsel %vm5199, %v10487, %v10488
    %v10490 = vrot.slane %v10306, 1
    %v10491 = vrot.slane %v10307, 1
    %v10492 = vsel %vm5199, %v10490, %v10491
    %v10493 = vrot.slane %v10308, 1
    %v10494 = vrot.slane %v10309, 1
    %v10495 = vsel %vm5199, %v10493, %v10494
    %v10496 = vrot.slane %v10310, 1
    %v10497 = vrot.slane %v10311, 1
    %v10498 = vsel %vm5199, %v10496, %v10497
    %v10499 = vrot.slane %v10312, 1
    %v10500 = vrot.slane %v10313, 1
    %v10501 = vsel %vm5199, %v10499, %v10500
    %v10502 = vrot.slane %v10314, 1
    %v10503 = vrot.slane %v10315, 1
    %v10504 = vsel %vm5199, %v10502, %v10503
    %v10505 = vrot.slane %v10316, 1
    %v10506 = vrot.slane %v10317, 1
    %v10507 = vsel %vm5199, %v10505, %v10506
    %v10508 = vrot.slane %v10318, 1
    %v10509 = vrot.slane %v10319, 1
    %v10510 = vsel %vm5199, %v10508, %v10509
    %v10511 = vrot.slane %v10320, 1
    %v10512 = vrot.slane %v10321, 1
    %v10513 = vsel %vm5199, %v10511, %v10512
    %v10514 = vrot.slane %v10322, 1
    %v10515 = vrot.slane %v10323, 1
    %v10516 = vsel %vm5199, %v10514, %v10515
    %v10517 = vrot.slane %v10324, 1
    %v10518 = vrot.slane %v10325, 1
    %v10519 = vsel %vm5199, %v10517, %v10518
    %v10520 = vrot.slane %v10326, 1
    %v10521 = vrot.slane %v10327, 1
    %v10522 = vsel %vm5199, %v10520, %v10521
    %v10523 = vrot.slane %v10328, 1
    %v10524 = vrot.slane %v10329, 1
    %v10525 = vsel %vm5199, %v10523, %v10524
    %v10526 = vrot.slane %v10330, 1
    %v10527 = vrot.slane %v10331, 1
    %v10528 = vsel %vm5199, %v10526, %v10527
    %v10529 = vrot.slane %v10332, 1
    %v10530 = vrot.slane %v10333, 1
    %v10531 = vsel %vm5199, %v10529, %v10530
    %v10532 = vrot.slane %v10334, 1
    %v10533 = vrot.slane %v10335, 1
    %v10534 = vsel %vm5199, %v10532, %v10533
    %v10535 = vrot.slane %v10336, 1
    %v10536 = vrot.slane %v10337, 1
    %v10537 = vsel %vm5199, %v10535, %v10536
    %v10578 = vld [vmem:[%s9] sm:$0x1]
    %v10579 = vld [vmem:[%s10] sm:$0x1]
    %v10580 = vsel %vm2405, %v10420, 0.0
    %v10581 = vsel %vm2405, %v10423, 0.0
    %v10582 = vadd.f32 %v10580, %v10581
    %v10583 = vsel %vm2405, %v10426, 0.0
    %v10584 = vadd.f32 %v10582, %v10583
    %v10585 = vsel %vm2405, %v10429, 0.0
    %v10586 = vadd.f32 %v10584, %v10585
    %v10587 = vsel %vm2405, %v10432, 0.0
    %v10588 = vadd.f32 %v10586, %v10587
    %v10589 = vsel %vm2405, %v10435, 0.0
    %v10590 = vadd.f32 %v10588, %v10589
    %v10591 = vsel %vm2405, %v10438, 0.0
    %v10592 = vadd.f32 %v10590, %v10591
    %v10593 = vsel %vm2405, %v10441, 0.0
    %v10594 = vadd.f32 %v10592, %v10593
    %v10595 = vsel %vm2405, %v10444, 0.0
    %v10596 = vadd.f32 %v10594, %v10595
    %v10597 = vsel %vm2405, %v10447, 0.0
    %v10598 = vadd.f32 %v10596, %v10597
    %v10599 = vsel %vm2405, %v10450, 0.0
    %v10600 = vadd.f32 %v10598, %v10599
    %v10601 = vsel %vm2405, %v10453, 0.0
    %v10602 = vadd.f32 %v10600, %v10601
    %v10603 = vsel %vm2405, %v10456, 0.0
    %v10604 = vadd.f32 %v10602, %v10603
    %v10605 = vsel %vm2405, %v10459, 0.0
    %v10606 = vadd.f32 %v10604, %v10605
    %v10607 = vsel %vm2405, %v10462, 0.0
    %v10608 = vadd.f32 %v10606, %v10607
    %v10609 = vsel %vm2405, %v10465, 0.0
    %v10610 = vadd.f32 %v10608, %v10609
    %v10611 = vsel %vm2405, %v10468, 0.0
    %v10612 = vadd.f32 %v10610, %v10611
    %v10613 = vsel %vm2405, %v10471, 0.0
    %v10614 = vadd.f32 %v10612, %v10613
    %v10615 = vsel %vm2405, %v10474, 0.0
    %v10616 = vadd.f32 %v10614, %v10615
    %v10617 = vsel %vm2405, %v10477, 0.0
    %v10618 = vadd.f32 %v10616, %v10617
    %v10619 = vsel %vm2405, %v10480, 0.0
    %v10620 = vadd.f32 %v10618, %v10619
    %v10621 = vsel %vm2405, %v10483, 0.0
    %v10622 = vadd.f32 %v10620, %v10621
    %v10623 = vsel %vm2405, %v10486, 0.0
    %v10624 = vadd.f32 %v10622, %v10623
    %v10625 = vsel %vm2405, %v10489, 0.0
    %v10626 = vadd.f32 %v10624, %v10625
    %v10627 = vsel %vm2405, %v10492, 0.0
    %v10628 = vadd.f32 %v10626, %v10627
    %v10629 = vsel %vm2405, %v10495, 0.0
    %v10630 = vadd.f32 %v10628, %v10629
    %v10631 = vsel %vm2405, %v10498, 0.0
    %v10632 = vadd.f32 %v10630, %v10631
    %v10633 = vsel %vm2405, %v10501, 0.0
    %v10634 = vadd.f32 %v10632, %v10633
    %v10635 = vsel %vm2405, %v10504, 0.0
    %v10636 = vadd.f32 %v10634, %v10635
    %v10637 = vsel %vm2405, %v10507, 0.0
    %v10638 = vadd.f32 %v10636, %v10637
    %v10639 = vsel %vm2405, %v10510, 0.0
    %v10640 = vadd.f32 %v10638, %v10639
    %v10641 = vsel %vm2405, %v10513, 0.0
    %v10642 = vadd.f32 %v10640, %v10641
    %v10643 = vsel %vm2405, %v10516, 0.0
    %v10644 = vadd.f32 %v10642, %v10643
    %v10645 = vsel %vm2405, %v10519, 0.0
    %v10646 = vadd.f32 %v10644, %v10645
    %v10647 = vsel %vm2405, %v10522, 0.0
    %v10648 = vadd.f32 %v10646, %v10647
    %v10649 = vsel %vm2405, %v10525, 0.0
    %v10650 = vadd.f32 %v10648, %v10649
    %v10651 = vsel %vm2405, %v10528, 0.0
    %v10652 = vadd.f32 %v10650, %v10651
    %v10653 = vsel %vm2405, %v10531, 0.0
    %v10654 = vadd.f32 %v10652, %v10653
    %v10655 = vsel %vm2405, %v10534, 0.0
    %v10656 = vadd.f32 %v10654, %v10655
    %v10657 = vsel %vm2405, %v10537, 0.0
    %v10658 = vadd.f32 %v10656, %v10657
    %v10659 = vrot.slane %v10658, 4
    %v10660 = vadd.f32 %v10658, %v10659
    %v10661 = vrot.slane %v10660, 2
    %v10662 = vadd.f32 %v10660, %v10661
    %v10663 = vrot.slane %v10662, 1
    %v10664 = vadd.f32 %v10662, %v10663
    %v10665 = vmul.f32 %v10664, %v9390
    %v10666 = vsub.f32 %v10420, %v10665
    %v10667 = vsub.f32 %v10423, %v10665
    %v10668 = vsub.f32 %v10426, %v10665
    %v10669 = vsub.f32 %v10429, %v10665
    %v10670 = vsub.f32 %v10432, %v10665
    %v10671 = vsub.f32 %v10435, %v10665
    %v10672 = vsub.f32 %v10438, %v10665
    %v10673 = vsub.f32 %v10441, %v10665
    %v10674 = vsub.f32 %v10444, %v10665
    %v10675 = vsub.f32 %v10447, %v10665
    %v10676 = vsub.f32 %v10450, %v10665
    %v10677 = vsub.f32 %v10453, %v10665
    %v10678 = vsub.f32 %v10456, %v10665
    %v10679 = vsub.f32 %v10459, %v10665
    %v10680 = vsub.f32 %v10462, %v10665
    %v10681 = vsub.f32 %v10465, %v10665
    %v10682 = vsub.f32 %v10468, %v10665
    %v10683 = vsub.f32 %v10471, %v10665
    %v10684 = vsub.f32 %v10474, %v10665
    %v10685 = vsub.f32 %v10477, %v10665
    %v10686 = vsub.f32 %v10480, %v10665
    %v10687 = vsub.f32 %v10483, %v10665
    %v10688 = vsub.f32 %v10486, %v10665
    %v10689 = vsub.f32 %v10489, %v10665
    %v10690 = vsub.f32 %v10492, %v10665
    %v10691 = vsub.f32 %v10495, %v10665
    %v10692 = vsub.f32 %v10498, %v10665
    %v10693 = vsub.f32 %v10501, %v10665
    %v10694 = vsub.f32 %v10504, %v10665
    %v10695 = vsub.f32 %v10507, %v10665
    %v10696 = vsub.f32 %v10510, %v10665
    %v10697 = vsub.f32 %v10513, %v10665
    %v10698 = vsub.f32 %v10516, %v10665
    %v10699 = vsub.f32 %v10519, %v10665
    %v10700 = vsub.f32 %v10522, %v10665
    %v10701 = vsub.f32 %v10525, %v10665
    %v10702 = vsub.f32 %v10528, %v10665
    %v10703 = vsub.f32 %v10531, %v10665
    %v10704 = vsub.f32 %v10534, %v10665
    %v10705 = vsub.f32 %v10537, %v10665
    %v10706 = vmul.f32 %v10666, %v10666
    %v10707 = vmul.f32 %v10667, %v10667
    %v10708 = vmul.f32 %v10668, %v10668
    %v10709 = vmul.f32 %v10669, %v10669
    %v10710 = vmul.f32 %v10670, %v10670
    %v10711 = vmul.f32 %v10671, %v10671
    %v10712 = vmul.f32 %v10672, %v10672
    %v10713 = vmul.f32 %v10673, %v10673
    %v10714 = vmul.f32 %v10674, %v10674
    %v10715 = vmul.f32 %v10675, %v10675
    %v10716 = vmul.f32 %v10676, %v10676
    %v10717 = vmul.f32 %v10677, %v10677
    %v10718 = vmul.f32 %v10678, %v10678
    %v10719 = vmul.f32 %v10679, %v10679
    %v10720 = vmul.f32 %v10680, %v10680
    %v10721 = vmul.f32 %v10681, %v10681
    %v10722 = vmul.f32 %v10682, %v10682
    %v10723 = vmul.f32 %v10683, %v10683
    %v10724 = vmul.f32 %v10684, %v10684
    %v10725 = vmul.f32 %v10685, %v10685
    %v10726 = vmul.f32 %v10686, %v10686
    %v10727 = vmul.f32 %v10687, %v10687
    %v10728 = vmul.f32 %v10688, %v10688
    %v10729 = vmul.f32 %v10689, %v10689
    %v10730 = vmul.f32 %v10690, %v10690
    %v10731 = vmul.f32 %v10691, %v10691
    %v10732 = vmul.f32 %v10692, %v10692
    %v10733 = vmul.f32 %v10693, %v10693
    %v10734 = vmul.f32 %v10694, %v10694
    %v10735 = vmul.f32 %v10695, %v10695
    %v10736 = vmul.f32 %v10696, %v10696
    %v10737 = vmul.f32 %v10697, %v10697
    %v10738 = vmul.f32 %v10698, %v10698
    %v10739 = vmul.f32 %v10699, %v10699
    %v10740 = vmul.f32 %v10700, %v10700
    %v10741 = vmul.f32 %v10701, %v10701
    %v10742 = vmul.f32 %v10702, %v10702
    %v10743 = vmul.f32 %v10703, %v10703
    %v10744 = vmul.f32 %v10704, %v10704
    %v10745 = vmul.f32 %v10705, %v10705
    %v10746 = vsel %vm2405, %v10706, 0.0
    %v10747 = vsel %vm2405, %v10707, 0.0
    %v10748 = vadd.f32 %v10746, %v10747
    %v10749 = vsel %vm2405, %v10708, 0.0
    %v10750 = vadd.f32 %v10748, %v10749
    %v10751 = vsel %vm2405, %v10709, 0.0
    %v10752 = vadd.f32 %v10750, %v10751
    %v10753 = vsel %vm2405, %v10710, 0.0
    %v10754 = vadd.f32 %v10752, %v10753
    %v10755 = vsel %vm2405, %v10711, 0.0
    %v10756 = vadd.f32 %v10754, %v10755
    %v10757 = vsel %vm2405, %v10712, 0.0
    %v10758 = vadd.f32 %v10756, %v10757
    %v10759 = vsel %vm2405, %v10713, 0.0
    %v10760 = vadd.f32 %v10758, %v10759
    %v10761 = vsel %vm2405, %v10714, 0.0
    %v10762 = vadd.f32 %v10760, %v10761
    %v10763 = vsel %vm2405, %v10715, 0.0
    %v10764 = vadd.f32 %v10762, %v10763
    %v10765 = vsel %vm2405, %v10716, 0.0
    %v10766 = vadd.f32 %v10764, %v10765
    %v10767 = vsel %vm2405, %v10717, 0.0
    %v10768 = vadd.f32 %v10766, %v10767
    %v10769 = vsel %vm2405, %v10718, 0.0
    %v10770 = vadd.f32 %v10768, %v10769
    %v10771 = vsel %vm2405, %v10719, 0.0
    %v10772 = vadd.f32 %v10770, %v10771
    %v10773 = vsel %vm2405, %v10720, 0.0
    %v10774 = vadd.f32 %v10772, %v10773
    %v10775 = vsel %vm2405, %v10721, 0.0
    %v10776 = vadd.f32 %v10774, %v10775
    %v10777 = vsel %vm2405, %v10722, 0.0
    %v10778 = vadd.f32 %v10776, %v10777
    %v10779 = vsel %vm2405, %v10723, 0.0
    %v10780 = vadd.f32 %v10778, %v10779
    %v10781 = vsel %vm2405, %v10724, 0.0
    %v10782 = vadd.f32 %v10780, %v10781
    %v10783 = vsel %vm2405, %v10725, 0.0
    %v10784 = vadd.f32 %v10782, %v10783
    %v10785 = vsel %vm2405, %v10726, 0.0
    %v10786 = vadd.f32 %v10784, %v10785
    %v10787 = vsel %vm2405, %v10727, 0.0
    %v10788 = vadd.f32 %v10786, %v10787
    %v10789 = vsel %vm2405, %v10728, 0.0
    %v10790 = vadd.f32 %v10788, %v10789
    %v10791 = vsel %vm2405, %v10729, 0.0
    %v10792 = vadd.f32 %v10790, %v10791
    %v10793 = vsel %vm2405, %v10730, 0.0
    %v10794 = vadd.f32 %v10792, %v10793
    %v10795 = vsel %vm2405, %v10731, 0.0
    %v10796 = vadd.f32 %v10794, %v10795
    %v10797 = vsel %vm2405, %v10732, 0.0
    %v10798 = vadd.f32 %v10796, %v10797
    %v10799 = vsel %vm2405, %v10733, 0.0
    %v10800 = vadd.f32 %v10798, %v10799
    %v10801 = vsel %vm2405, %v10734, 0.0
    %v10802 = vadd.f32 %v10800, %v10801
    %v10803 = vsel %vm2405, %v10735, 0.0
    %v10804 = vadd.f32 %v10802, %v10803
    %v10805 = vsel %vm2405, %v10736, 0.0
    %v10806 = vadd.f32 %v10804, %v10805
    %v10807 = vsel %vm2405, %v10737, 0.0
    %v10808 = vadd.f32 %v10806, %v10807
    %v10809 = vsel %vm2405, %v10738, 0.0
    %v10810 = vadd.f32 %v10808, %v10809
    %v10811 = vsel %vm2405, %v10739, 0.0
    %v10812 = vadd.f32 %v10810, %v10811
    %v10813 = vsel %vm2405, %v10740, 0.0
    %v10814 = vadd.f32 %v10812, %v10813
    %v10815 = vsel %vm2405, %v10741, 0.0
    %v10816 = vadd.f32 %v10814, %v10815
    %v10817 = vsel %vm2405, %v10742, 0.0
    %v10818 = vadd.f32 %v10816, %v10817
    %v10819 = vsel %vm2405, %v10743, 0.0
    %v10820 = vadd.f32 %v10818, %v10819
    %v10821 = vsel %vm2405, %v10744, 0.0
    %v10822 = vadd.f32 %v10820, %v10821
    %v10823 = vsel %vm2405, %v10745, 0.0
    %v10824 = vadd.f32 %v10822, %v10823
    %v10825 = vrot.slane %v10824, 4
    %v10826 = vadd.f32 %v10824, %v10825
    %v10827 = vrot.slane %v10826, 2
    %v10828 = vadd.f32 %v10826, %v10827
    %v10829 = vrot.slane %v10828, 1
    %v10830 = vadd.f32 %v10828, %v10829
    %v10831 = vmul.f32 %v10830, %v9390
    %v10832 = vadd.f32 %v10831, 1e-05
    %v10833 = vrsqrt.pop %v10832
    %v10834 = vmul.f32 %v10833, %v10832
    %v10835 = vmul.f32 %v10834, %v10833
    %v10836 = vmul.f32 0.5, %v10835
    %v10837 = vsub.f32 1.5, %v10836
    %v10838 = vmul.f32 %v10833, %v10837
    %vm10839 = vweird.f32 %v10832
    %vm10840 = vweird.f32 %v10833
    %vm10841 = vmor %vm10839, %vm10840
    %v10842 = vsel %vm10841, %v10833, %v10838
    %v10843 = vmul.f32 %v10578, %v10842
    %v10844 = vmul.f32 %v10665, %v10843
    %v10845 = vsub.f32 %v10579, %v10844
    %v10847 = vperm.slane %v10843, 0
    %v10849 = vmul.f32 %v10420, %v10847
    %v10850 = vmul.f32 %v10423, %v10847
    %v10851 = vmul.f32 %v10426, %v10847
    %v10852 = vmul.f32 %v10429, %v10847
    %v10853 = vmul.f32 %v10432, %v10847
    %v10854 = vmul.f32 %v10435, %v10847
    %v10855 = vmul.f32 %v10438, %v10847
    %v10856 = vmul.f32 %v10441, %v10847
    %v10857 = vmul.f32 %v10444, %v10847
    %v10858 = vmul.f32 %v10447, %v10847
    %v10859 = vmul.f32 %v10450, %v10847
    %v10860 = vmul.f32 %v10453, %v10847
    %v10861 = vmul.f32 %v10456, %v10847
    %v10862 = vmul.f32 %v10459, %v10847
    %v10863 = vmul.f32 %v10462, %v10847
    %v10864 = vmul.f32 %v10465, %v10847
    %v10865 = vmul.f32 %v10468, %v10847
    %v10866 = vmul.f32 %v10471, %v10847
    %v10867 = vmul.f32 %v10474, %v10847
    %v10868 = vmul.f32 %v10477, %v10847
    %v10869 = vmul.f32 %v10480, %v10847
    %v10870 = vmul.f32 %v10483, %v10847
    %v10871 = vmul.f32 %v10486, %v10847
    %v10872 = vmul.f32 %v10489, %v10847
    %v10873 = vmul.f32 %v10492, %v10847
    %v10874 = vmul.f32 %v10495, %v10847
    %v10875 = vmul.f32 %v10498, %v10847
    %v10876 = vmul.f32 %v10501, %v10847
    %v10877 = vmul.f32 %v10504, %v10847
    %v10878 = vmul.f32 %v10507, %v10847
    %v10879 = vmul.f32 %v10510, %v10847
    %v10880 = vmul.f32 %v10513, %v10847
    %v10881 = vmul.f32 %v10516, %v10847
    %v10882 = vmul.f32 %v10519, %v10847
    %v10883 = vmul.f32 %v10522, %v10847
    %v10884 = vmul.f32 %v10525, %v10847
    %v10885 = vmul.f32 %v10528, %v10847
    %v10886 = vmul.f32 %v10531, %v10847
    %v10887 = vmul.f32 %v10534, %v10847
    %v10888 = vmul.f32 %v10537, %v10847
    %v10890 = vperm.slane %v10845, 0
    %v10892 = vadd.f32 %v10849, %v10890
    %v10893 = vadd.f32 %v10850, %v10890
    %v10894 = vadd.f32 %v10851, %v10890
    %v10895 = vadd.f32 %v10852, %v10890
    %v10896 = vadd.f32 %v10853, %v10890
    %v10897 = vadd.f32 %v10854, %v10890
    %v10898 = vadd.f32 %v10855, %v10890
    %v10899 = vadd.f32 %v10856, %v10890
    %v10900 = vadd.f32 %v10857, %v10890
    %v10901 = vadd.f32 %v10858, %v10890
    %v10902 = vadd.f32 %v10859, %v10890
    %v10903 = vadd.f32 %v10860, %v10890
    %v10904 = vadd.f32 %v10861, %v10890
    %v10905 = vadd.f32 %v10862, %v10890
    %v10906 = vadd.f32 %v10863, %v10890
    %v10907 = vadd.f32 %v10864, %v10890
    %v10908 = vadd.f32 %v10865, %v10890
    %v10909 = vadd.f32 %v10866, %v10890
    %v10910 = vadd.f32 %v10867, %v10890
    %v10911 = vadd.f32 %v10868, %v10890
    %v10912 = vadd.f32 %v10869, %v10890
    %v10913 = vadd.f32 %v10870, %v10890
    %v10914 = vadd.f32 %v10871, %v10890
    %v10915 = vadd.f32 %v10872, %v10890
    %v10916 = vadd.f32 %v10873, %v10890
    %v10917 = vadd.f32 %v10874, %v10890
    %v10918 = vadd.f32 %v10875, %v10890
    %v10919 = vadd.f32 %v10876, %v10890
    %v10920 = vadd.f32 %v10877, %v10890
    %v10921 = vadd.f32 %v10878, %v10890
    %v10922 = vadd.f32 %v10879, %v10890
    %v10923 = vadd.f32 %v10880, %v10890
    %v10924 = vadd.f32 %v10881, %v10890
    %v10925 = vadd.f32 %v10882, %v10890
    %v10926 = vadd.f32 %v10883, %v10890
    %v10927 = vadd.f32 %v10884, %v10890
    %v10928 = vadd.f32 %v10885, %v10890
    %v10929 = vadd.f32 %v10886, %v10890
    %v10930 = vadd.f32 %v10887, %v10890
    %v10931 = vadd.f32 %v10888, %v10890
    %vm10932 = vcmask 1048064
    %v10933 = vsel %vm10932, %v1683, 0.0
    %v10934 = vsel %vm10932, %v1689, 0.0
    %v10935 = vadd.f32 %v10933, %v10934
    %v10936 = vsel %vm10932, %v1695, 0.0
    %v10937 = vadd.f32 %v10935, %v10936
    %v10938 = vsel %vm10932, %v1701, 0.0
    %v10939 = vadd.f32 %v10937, %v10938
    %v10940 = vsel %vm10932, %v1707, 0.0
    %v10941 = vadd.f32 %v10939, %v10940
    %v10942 = vsel %vm10932, %v1713, 0.0
    %v10943 = vadd.f32 %v10941, %v10942
    %v10944 = vsel %vm10932, %v1719, 0.0
    %v10945 = vadd.f32 %v10943, %v10944
    %v10946 = vsel %vm10932, %v1725, 0.0
    %v10947 = vadd.f32 %v10945, %v10946
    %v10948 = vsel %vm10932, %v1731, 0.0
    %v10949 = vadd.f32 %v10947, %v10948
    %v10950 = vsel %vm10932, %v1737, 0.0
    %v10951 = vadd.f32 %v10949, %v10950
    %v10952 = vsel %vm10932, %v1743, 0.0
    %v10953 = vadd.f32 %v10951, %v10952
    %v10954 = vsel %vm10932, %v1749, 0.0
    %v10955 = vadd.f32 %v10953, %v10954
    %v10956 = vsel %vm10932, %v1755, 0.0
    %v10957 = vadd.f32 %v10955, %v10956
    %v10958 = vsel %vm10932, %v1761, 0.0
    %v10959 = vadd.f32 %v10957, %v10958
    %v10960 = vsel %vm10932, %v1767, 0.0
    %v10961 = vadd.f32 %v10959, %v10960
    %v10962 = vsel %vm10932, %v1773, 0.0
    %v10963 = vadd.f32 %v10961, %v10962
    %v10964 = vsel %vm10932, %v1779, 0.0
    %v10965 = vadd.f32 %v10963, %v10964
    %v10966 = vsel %vm10932, %v1785, 0.0
    %v10967 = vadd.f32 %v10965, %v10966
    %v10968 = vsel %vm10932, %v1791, 0.0
    %v10969 = vadd.f32 %v10967, %v10968
    %v10970 = vsel %vm10932, %v1797, 0.0
    %v10971 = vadd.f32 %v10969, %v10970
    %v10972 = vsel %vm10932, %v1803, 0.0
    %v10973 = vadd.f32 %v10971, %v10972
    %v10974 = vsel %vm10932, %v1809, 0.0
    %v10975 = vadd.f32 %v10973, %v10974
    %v10976 = vsel %vm10932, %v1815, 0.0
    %v10977 = vadd.f32 %v10975, %v10976
    %v10978 = vsel %vm10932, %v1821, 0.0
    %v10979 = vadd.f32 %v10977, %v10978
    %v10980 = vsel %vm10932, %v1827, 0.0
    %v10981 = vadd.f32 %v10979, %v10980
    %v10982 = vsel %vm10932, %v1833, 0.0
    %v10983 = vadd.f32 %v10981, %v10982
    %v10984 = vsel %vm10932, %v1839, 0.0
    %v10985 = vadd.f32 %v10983, %v10984
    %v10986 = vsel %vm10932, %v1845, 0.0
    %v10987 = vadd.f32 %v10985, %v10986
    %v10988 = vsel %vm10932, %v1851, 0.0
    %v10989 = vadd.f32 %v10987, %v10988
    %v10990 = vsel %vm10932, %v1857, 0.0
    %v10991 = vadd.f32 %v10989, %v10990
    %v10992 = vsel %vm10932, %v1863, 0.0
    %v10993 = vadd.f32 %v10991, %v10992
    %v10994 = vsel %vm10932, %v1869, 0.0
    %v10995 = vadd.f32 %v10993, %v10994
    %v10996 = vsel %vm10932, %v1875, 0.0
    %v10997 = vadd.f32 %v10995, %v10996
    %v10998 = vsel %vm10932, %v1881, 0.0
    %v10999 = vadd.f32 %v10997, %v10998
    %v11000 = vsel %vm10932, %v1887, 0.0
    %v11001 = vadd.f32 %v10999, %v11000
    %v11002 = vsel %vm10932, %v1893, 0.0
    %v11003 = vadd.f32 %v11001, %v11002
    %v11004 = vsel %vm10932, %v1899, 0.0
    %v11005 = vadd.f32 %v11003, %v11004
    %v11006 = vsel %vm10932, %v1905, 0.0
    %v11007 = vadd.f32 %v11005, %v11006
    %v11008 = vsel %vm10932, %v1911, 0.0
    %v11009 = vadd.f32 %v11007, %v11008
    %v11010 = vsel %vm10932, %v1917, 0.0
    %v11011 = vadd.f32 %v11009, %v11010
    %v11012 = vrot.slane %v11011, 4
    %v11013 = vadd.f32 %v11011, %v11012
    %v11014 = vrot.slane %v11013, 2
    %v11015 = vadd.f32 %v11013, %v11014
    %v11016 = vrot.slane %v11015, 1
    %v11017 = vadd.f32 %v11015, %v11016
    %v11018 = vmul.f32 %v11017, %v9390
    %v11019 = vsub.f32 %v1683, %v11018
    %v11020 = vsub.f32 %v1689, %v11018
    %v11021 = vsub.f32 %v1695, %v11018
    %v11022 = vsub.f32 %v1701, %v11018
    %v11023 = vsub.f32 %v1707, %v11018
    %v11024 = vsub.f32 %v1713, %v11018
    %v11025 = vsub.f32 %v1719, %v11018
    %v11026 = vsub.f32 %v1725, %v11018
    %v11027 = vsub.f32 %v1731, %v11018
    %v11028 = vsub.f32 %v1737, %v11018
    %v11029 = vsub.f32 %v1743, %v11018
    %v11030 = vsub.f32 %v1749, %v11018
    %v11031 = vsub.f32 %v1755, %v11018
    %v11032 = vsub.f32 %v1761, %v11018
    %v11033 = vsub.f32 %v1767, %v11018
    %v11034 = vsub.f32 %v1773, %v11018
    %v11035 = vsub.f32 %v1779, %v11018
    %v11036 = vsub.f32 %v1785, %v11018
    %v11037 = vsub.f32 %v1791, %v11018
    %v11038 = vsub.f32 %v1797, %v11018
    %v11039 = vsub.f32 %v1803, %v11018
    %v11040 = vsub.f32 %v1809, %v11018
    %v11041 = vsub.f32 %v1815, %v11018
    %v11042 = vsub.f32 %v1821, %v11018
    %v11043 = vsub.f32 %v1827, %v11018
    %v11044 = vsub.f32 %v1833, %v11018
    %v11045 = vsub.f32 %v1839, %v11018
    %v11046 = vsub.f32 %v1845, %v11018
    %v11047 = vsub.f32 %v1851, %v11018
    %v11048 = vsub.f32 %v1857, %v11018
    %v11049 = vsub.f32 %v1863, %v11018
    %v11050 = vsub.f32 %v1869, %v11018
    %v11051 = vsub.f32 %v1875, %v11018
    %v11052 = vsub.f32 %v1881, %v11018
    %v11053 = vsub.f32 %v1887, %v11018
    %v11054 = vsub.f32 %v1893, %v11018
    %v11055 = vsub.f32 %v1899, %v11018
    %v11056 = vsub.f32 %v1905, %v11018
    %v11057 = vsub.f32 %v1911, %v11018
    %v11058 = vsub.f32 %v1917, %v11018
    %v11059 = vmul.f32 %v11019, %v11019
    %v11060 = vmul.f32 %v11020, %v11020
    %v11061 = vmul.f32 %v11021, %v11021
    %v11062 = vmul.f32 %v11022, %v11022
    %v11063 = vmul.f32 %v11023, %v11023
    %v11064 = vmul.f32 %v11024, %v11024
    %v11065 = vmul.f32 %v11025, %v11025
    %v11066 = vmul.f32 %v11026, %v11026
    %v11067 = vmul.f32 %v11027, %v11027
    %v11068 = vmul.f32 %v11028, %v11028
    %v11069 = vmul.f32 %v11029, %v11029
    %v11070 = vmul.f32 %v11030, %v11030
    %v11071 = vmul.f32 %v11031, %v11031
    %v11072 = vmul.f32 %v11032, %v11032
    %v11073 = vmul.f32 %v11033, %v11033
    %v11074 = vmul.f32 %v11034, %v11034
    %v11075 = vmul.f32 %v11035, %v11035
    %v11076 = vmul.f32 %v11036, %v11036
    %v11077 = vmul.f32 %v11037, %v11037
    %v11078 = vmul.f32 %v11038, %v11038
    %v11079 = vmul.f32 %v11039, %v11039
    %v11080 = vmul.f32 %v11040, %v11040
    %v11081 = vmul.f32 %v11041, %v11041
    %v11082 = vmul.f32 %v11042, %v11042
    %v11083 = vmul.f32 %v11043, %v11043
    %v11084 = vmul.f32 %v11044, %v11044
    %v11085 = vmul.f32 %v11045, %v11045
    %v11086 = vmul.f32 %v11046, %v11046
    %v11087 = vmul.f32 %v11047, %v11047
    %v11088 = vmul.f32 %v11048, %v11048
    %v11089 = vmul.f32 %v11049, %v11049
    %v11090 = vmul.f32 %v11050, %v11050
    %v11091 = vmul.f32 %v11051, %v11051
    %v11092 = vmul.f32 %v11052, %v11052
    %v11093 = vmul.f32 %v11053, %v11053
    %v11094 = vmul.f32 %v11054, %v11054
    %v11095 = vmul.f32 %v11055, %v11055
    %v11096 = vmul.f32 %v11056, %v11056
    %v11097 = vmul.f32 %v11057, %v11057
    %v11098 = vmul.f32 %v11058, %v11058
    %v11099 = vsel %vm10932, %v11059, 0.0
    %v11100 = vsel %vm10932, %v11060, 0.0
    %v11101 = vadd.f32 %v11099, %v11100
    %v11102 = vsel %vm10932, %v11061, 0.0
    %v11103 = vadd.f32 %v11101, %v11102
    %v11104 = vsel %vm10932, %v11062, 0.0
    %v11105 = vadd.f32 %v11103, %v11104
    %v11106 = vsel %vm10932, %v11063, 0.0
    %v11107 = vadd.f32 %v11105, %v11106
    %v11108 = vsel %vm10932, %v11064, 0.0
    %v11109 = vadd.f32 %v11107, %v11108
    %v11110 = vsel %vm10932, %v11065, 0.0
    %v11111 = vadd.f32 %v11109, %v11110
    %v11112 = vsel %vm10932, %v11066, 0.0
    %v11113 = vadd.f32 %v11111, %v11112
    %v11114 = vsel %vm10932, %v11067, 0.0
    %v11115 = vadd.f32 %v11113, %v11114
    %v11116 = vsel %vm10932, %v11068, 0.0
    %v11117 = vadd.f32 %v11115, %v11116
    %v11118 = vsel %vm10932, %v11069, 0.0
    %v11119 = vadd.f32 %v11117, %v11118
    %v11120 = vsel %vm10932, %v11070, 0.0
    %v11121 = vadd.f32 %v11119, %v11120
    %v11122 = vsel %vm10932, %v11071, 0.0
    %v11123 = vadd.f32 %v11121, %v11122
    %v11124 = vsel %vm10932, %v11072, 0.0
    %v11125 = vadd.f32 %v11123, %v11124
    %v11126 = vsel %vm10932, %v11073, 0.0
    %v11127 = vadd.f32 %v11125, %v11126
    %v11128 = vsel %vm10932, %v11074, 0.0
    %v11129 = vadd.f32 %v11127, %v11128
    %v11130 = vsel %vm10932, %v11075, 0.0
    %v11131 = vadd.f32 %v11129, %v11130
    %v11132 = vsel %vm10932, %v11076, 0.0
    %v11133 = vadd.f32 %v11131, %v11132
    %v11134 = vsel %vm10932, %v11077, 0.0
    %v11135 = vadd.f32 %v11133, %v11134
    %v11136 = vsel %vm10932, %v11078, 0.0
    %v11137 = vadd.f32 %v11135, %v11136
    %v11138 = vsel %vm10932, %v11079, 0.0
    %v11139 = vadd.f32 %v11137, %v11138
    %v11140 = vsel %vm10932, %v11080, 0.0
    %v11141 = vadd.f32 %v11139, %v11140
    %v11142 = vsel %vm10932, %v11081, 0.0
    %v11143 = vadd.f32 %v11141, %v11142
    %v11144 = vsel %vm10932, %v11082, 0.0
    %v11145 = vadd.f32 %v11143, %v11144
    %v11146 = vsel %vm10932, %v11083, 0.0
    %v11147 = vadd.f32 %v11145, %v11146
    %v11148 = vsel %vm10932, %v11084, 0.0
    %v11149 = vadd.f32 %v11147, %v11148
    %v11150 = vsel %vm10932, %v11085, 0.0
    %v11151 = vadd.f32 %v11149, %v11150
    %v11152 = vsel %vm10932, %v11086, 0.0
    %v11153 = vadd.f32 %v11151, %v11152
    %v11154 = vsel %vm10932, %v11087, 0.0
    %v11155 = vadd.f32 %v11153, %v11154
    %v11156 = vsel %vm10932, %v11088, 0.0
    %v11157 = vadd.f32 %v11155, %v11156
    %v11158 = vsel %vm10932, %v11089, 0.0
    %v11159 = vadd.f32 %v11157, %v11158
    %v11160 = vsel %vm10932, %v11090, 0.0
    %v11161 = vadd.f32 %v11159, %v11160
    %v11162 = vsel %vm10932, %v11091, 0.0
    %v11163 = vadd.f32 %v11161, %v11162
    %v11164 = vsel %vm10932, %v11092, 0.0
    %v11165 = vadd.f32 %v11163, %v11164
    %v11166 = vsel %vm10932, %v11093, 0.0
    %v11167 = vadd.f32 %v11165, %v11166
    %v11168 = vsel %vm10932, %v11094, 0.0
    %v11169 = vadd.f32 %v11167, %v11168
    %v11170 = vsel %vm10932, %v11095, 0.0
    %v11171 = vadd.f32 %v11169, %v11170
    %v11172 = vsel %vm10932, %v11096, 0.0
    %v11173 = vadd.f32 %v11171, %v11172
    %v11174 = vsel %vm10932, %v11097, 0.0
    %v11175 = vadd.f32 %v11173, %v11174
    %v11176 = vsel %vm10932, %v11098, 0.0
    %v11177 = vadd.f32 %v11175, %v11176
    %v11178 = vrot.slane %v11177, 4
    %v11179 = vadd.f32 %v11177, %v11178
    %v11180 = vrot.slane %v11179, 2
    %v11181 = vadd.f32 %v11179, %v11180
    %v11182 = vrot.slane %v11181, 1
    %v11183 = vadd.f32 %v11181, %v11182
    %v11184 = vmul.f32 %v11183, %v9390
    %v11185 = vadd.f32 %v11184, 1e-05
    %v11186 = vrsqrt.pop %v11185
    %v11187 = vmul.f32 %v11186, %v11185
    %v11188 = vmul.f32 %v11187, %v11186
    %v11189 = vmul.f32 0.5, %v11188
    %v11190 = vsub.f32 1.5, %v11189
    %v11191 = vmul.f32 %v11186, %v11190
    %vm11192 = vweird.f32 %v11185
    %vm11193 = vweird.f32 %v11186
    %vm11194 = vmor %vm11192, %vm11193
    %v11195 = vsel %vm11194, %v11186, %v11191
    %11197 = vrot.lane.b32.xlu0 %v2318, 64
    %v11198 = vpop.permute.xlu0 %11197
    %v11199 = vrot.slane %v11198, 1
    %11202 = vrot.lane.b32.xlu0 %v11195, 64
    %v11203 = vpop.permute.xlu0 %11202
    %v11205 = vmul.f32 %v11199, %v11203
    %v11207 = vperm.slane %v11205, 0
    %11208 = vrot.lane.b32.xlu0 %v11207, 64
    %v11209 = vpop.permute.xlu0 %11208
    %v11211 = vmul.f32 %v11018, %v11209
    %11213 = vrot.lane.b32.xlu0 %v2319, 64
    %v11214 = vpop.permute.xlu0 %11213
    %v11215 = vrot.slane %v11214, 1
    %11218 = vrot.lane.b32.xlu0 %v11211, 64
    %v11219 = vpop.permute.xlu0 %11218
    %v11221 = vsub.f32 %v11215, %v11219
    %v11222 = vmul.f32 %v1683, %v11209
    %v11223 = vmul.f32 %v1689, %v11209
    %v11224 = vmul.f32 %v1695, %v11209
    %v11225 = vmul.f32 %v1701, %v11209
    %v11226 = vmul.f32 %v1707, %v11209
    %v11227 = vmul.f32 %v1713, %v11209
    %v11228 = vmul.f32 %v1719, %v11209
    %v11229 = vmul.f32 %v1725, %v11209
    %v11230 = vmul.f32 %v1731, %v11209
    %v11231 = vmul.f32 %v1737, %v11209
    %v11232 = vmul.f32 %v1743, %v11209
    %v11233 = vmul.f32 %v1749, %v11209
    %v11234 = vmul.f32 %v1755, %v11209
    %v11235 = vmul.f32 %v1761, %v11209
    %v11236 = vmul.f32 %v1767, %v11209
    %v11237 = vmul.f32 %v1773, %v11209
    %v11238 = vmul.f32 %v1779, %v11209
    %v11239 = vmul.f32 %v1785, %v11209
    %v11240 = vmul.f32 %v1791, %v11209
    %v11241 = vmul.f32 %v1797, %v11209
    %v11242 = vmul.f32 %v1803, %v11209
    %v11243 = vmul.f32 %v1809, %v11209
    %v11244 = vmul.f32 %v1815, %v11209
    %v11245 = vmul.f32 %v1821, %v11209
    %v11246 = vmul.f32 %v1827, %v11209
    %v11247 = vmul.f32 %v1833, %v11209
    %v11248 = vmul.f32 %v1839, %v11209
    %v11249 = vmul.f32 %v1845, %v11209
    %v11250 = vmul.f32 %v1851, %v11209
    %v11251 = vmul.f32 %v1857, %v11209
    %v11252 = vmul.f32 %v1863, %v11209
    %v11253 = vmul.f32 %v1869, %v11209
    %v11254 = vmul.f32 %v1875, %v11209
    %v11255 = vmul.f32 %v1881, %v11209
    %v11256 = vmul.f32 %v1887, %v11209
    %v11257 = vmul.f32 %v1893, %v11209
    %v11258 = vmul.f32 %v1899, %v11209
    %v11259 = vmul.f32 %v1905, %v11209
    %v11260 = vmul.f32 %v1911, %v11209
    %v11261 = vmul.f32 %v1917, %v11209
    %v11263 = vperm.slane %v11221, 0
    %11264 = vrot.lane.b32.xlu0 %v11263, 64
    %v11265 = vpop.permute.xlu0 %11264
    %v11267 = vadd.f32 %v11222, %v11265
    %v11268 = vadd.f32 %v11223, %v11265
    %v11269 = vadd.f32 %v11224, %v11265
    %v11270 = vadd.f32 %v11225, %v11265
    %v11271 = vadd.f32 %v11226, %v11265
    %v11272 = vadd.f32 %v11227, %v11265
    %v11273 = vadd.f32 %v11228, %v11265
    %v11274 = vadd.f32 %v11229, %v11265
    %v11275 = vadd.f32 %v11230, %v11265
    %v11276 = vadd.f32 %v11231, %v11265
    %v11277 = vadd.f32 %v11232, %v11265
    %v11278 = vadd.f32 %v11233, %v11265
    %v11279 = vadd.f32 %v11234, %v11265
    %v11280 = vadd.f32 %v11235, %v11265
    %v11281 = vadd.f32 %v11236, %v11265
    %v11282 = vadd.f32 %v11237, %v11265
    %v11283 = vadd.f32 %v11238, %v11265
    %v11284 = vadd.f32 %v11239, %v11265
    %v11285 = vadd.f32 %v11240, %v11265
    %v11286 = vadd.f32 %v11241, %v11265
    %v11287 = vadd.f32 %v11242, %v11265
    %v11288 = vadd.f32 %v11243, %v11265
    %v11289 = vadd.f32 %v11244, %v11265
    %v11290 = vadd.f32 %v11245, %v11265
    %v11291 = vadd.f32 %v11246, %v11265
    %v11292 = vadd.f32 %v11247, %v11265
    %v11293 = vadd.f32 %v11248, %v11265
    %v11294 = vadd.f32 %v11249, %v11265
    %v11295 = vadd.f32 %v11250, %v11265
    %v11296 = vadd.f32 %v11251, %v11265
    %v11297 = vadd.f32 %v11252, %v11265
    %v11298 = vadd.f32 %v11253, %v11265
    %v11299 = vadd.f32 %v11254, %v11265
    %v11300 = vadd.f32 %v11255, %v11265
    %v11301 = vadd.f32 %v11256, %v11265
    %v11302 = vadd.f32 %v11257, %v11265
    %v11303 = vadd.f32 %v11258, %v11265
    %v11304 = vadd.f32 %v11259, %v11265
    %v11305 = vadd.f32 %v11260, %v11265
    %v11306 = vadd.f32 %v11261, %v11265
    %v11307 = vsel %vm2405, %v10892, %v11267
    %v11308 = vsel %vm2405, %v10893, %v11268
    %v11309 = vsel %vm2405, %v10894, %v11269
    %v11310 = vsel %vm2405, %v10895, %v11270
    %v11311 = vsel %vm2405, %v10896, %v11271
    %v11312 = vsel %vm2405, %v10897, %v11272
    %v11313 = vsel %vm2405, %v10898, %v11273
    %v11314 = vsel %vm2405, %v10899, %v11274
    %v11315 = vsel %vm2405, %v10900, %v11275
    %v11316 = vsel %vm2405, %v10901, %v11276
    %v11317 = vsel %vm2405, %v10902, %v11277
    %v11318 = vsel %vm2405, %v10903, %v11278
    %v11319 = vsel %vm2405, %v10904, %v11279
    %v11320 = vsel %vm2405, %v10905, %v11280
    %v11321 = vsel %vm2405, %v10906, %v11281
    %v11322 = vsel %vm2405, %v10907, %v11282
    %v11323 = vsel %vm2405, %v10908, %v11283
    %v11324 = vsel %vm2405, %v10909, %v11284
    %v11325 = vsel %vm2405, %v10910, %v11285
    %v11326 = vsel %vm2405, %v10911, %v11286
    %v11327 = vsel %vm2405, %v10912, %v11287
    %v11328 = vsel %vm2405, %v10913, %v11288
    %v11329 = vsel %vm2405, %v10914, %v11289
    %v11330 = vsel %vm2405, %v10915, %v11290
    %v11331 = vsel %vm2405, %v10916, %v11291
    %v11332 = vsel %vm2405, %v10917, %v11292
    %v11333 = vsel %vm2405, %v10918, %v11293
    %v11334 = vsel %vm2405, %v10919, %v11294
    %v11335 = vsel %vm2405, %v10920, %v11295
    %v11336 = vsel %vm2405, %v10921, %v11296
    %v11337 = vsel %vm2405, %v10922, %v11297
    %v11338 = vsel %vm2405, %v10923, %v11298
    %v11339 = vsel %vm2405, %v10924, %v11299
    %v11340 = vsel %vm2405, %v10925, %v11300
    %v11341 = vsel %vm2405, %v10926, %v11301
    %v11342 = vsel %vm2405, %v10927, %v11302
    %v11343 = vsel %vm2405, %v10928, %v11303
    %v11344 = vsel %vm2405, %v10929, %v11304
    %v11345 = vsel %vm2405, %v10930, %v11305
    %v11346 = vsel %vm2405, %v10931, %v11306
    %11347 = vst [vmem:[#allocation2] sm:$0xff] %v9578
    %11348 = vst [vmem:[#allocation2 + $0x8] sm:$0xff] %v11307
    %11349 = vst [vmem:[#allocation2 + $0x10] sm:$0xff] %v9579
    %11350 = vst [vmem:[#allocation2 + $0x18] sm:$0xff] %v11308
    %11351 = vst [vmem:[#allocation2 + $0x20] sm:$0xff] %v9580
    %11352 = vst [vmem:[#allocation2 + $0x28] sm:$0xff] %v11309
    %11353 = vst [vmem:[#allocation2 + $0x30] sm:$0xff] %v9581
    %11354 = vst [vmem:[#allocation2 + $0x38] sm:$0xff] %v11310
    %11355 = vst [vmem:[#allocation2 + $0x40] sm:$0xff] %v9582
    %11356 = vst [vmem:[#allocation2 + $0x48] sm:$0xff] %v11311
    %11357 = vst [vmem:[#allocation2 + $0x50] sm:$0xff] %v9583
    %11358 = vst [vmem:[#allocation2 + $0x58] sm:$0xff] %v11312
    %11359 = vst [vmem:[#allocation2 + $0x60] sm:$0xff] %v9584
    %11360 = vst [vmem:[#allocation2 + $0x68] sm:$0xff] %v11313
    %11361 = vst [vmem:[#allocation2 + $0x70] sm:$0xff] %v9585
    %11362 = vst [vmem:[#allocation2 + $0x78] sm:$0xff] %v11314
    %11363 = vst [vmem:[#allocation2 + $0x80] sm:$0xff] %v9586
    %11364 = vst [vmem:[#allocation2 + $0x88] sm:$0xff] %v11315
    %11365 = vst [vmem:[#allocation2 + $0x90] sm:$0xff] %v9587
    %11366 = vst [vmem:[#allocation2 + $0x98] sm:$0xff] %v11316
    %11367 = vst [vmem:[#allocation2 + $0xa0] sm:$0xff] %v9588
    %11368 = vst [vmem:[#allocation2 + $0xa8] sm:$0xff] %v11317
    %11369 = vst [vmem:[#allocation2 + $0xb0] sm:$0xff] %v9589
    %11370 = vst [vmem:[#allocation2 + $0xb8] sm:$0xff] %v11318
    %11371 = vst [vmem:[#allocation2 + $0xc0] sm:$0xff] %v9590
    %11372 = vst [vmem:[#allocation2 + $0xc8] sm:$0xff] %v11319
    %11373 = vst [vmem:[#allocation2 + $0xd0] sm:$0xff] %v9591
    %11374 = vst [vmem:[#allocation2 + $0xd8] sm:$0xff] %v11320
    %11375 = vst [vmem:[#allocation2 + $0xe0] sm:$0xff] %v9592
    %11376 = vst [vmem:[#allocation2 + $0xe8] sm:$0xff] %v11321
    %11377 = vst [vmem:[#allocation2 + $0xf0] sm:$0xff] %v9593
    %11378 = vst [vmem:[#allocation2 + $0xf8] sm:$0xff] %v11322
    %11379 = vst [vmem:[#allocation2 + $0x100] sm:$0xff] %v9594
    %11380 = vst [vmem:[#allocation2 + $0x108] sm:$0xff] %v11323
    %11381 = vst [vmem:[#allocation2 + $0x110] sm:$0xff] %v9595
    %11382 = vst [vmem:[#allocation2 + $0x118] sm:$0xff] %v11324
    %11383 = vst [vmem:[#allocation2 + $0x120] sm:$0xff] %v9596
    %11384 = vst [vmem:[#allocation2 + $0x128] sm:$0xff] %v11325
    %11385 = vst [vmem:[#allocation2 + $0x130] sm:$0xff] %v9597
    %11386 = vst [vmem:[#allocation2 + $0x138] sm:$0xff] %v11326
    %11387 = vst [vmem:[#allocation2 + $0x140] sm:$0xff] %v9598
    %11388 = vst [vmem:[#allocation2 + $0x148] sm:$0xff] %v11327
    %11389 = vst [vmem:[#allocation2 + $0x150] sm:$0xff] %v9599
    %11390 = vst [vmem:[#allocation2 + $0x158] sm:$0xff] %v11328
    %11391 = vst [vmem:[#allocation2 + $0x160] sm:$0xff] %v9600
    %11392 = vst [vmem:[#allocation2 + $0x168] sm:$0xff] %v11329
    %11393 = vst [vmem:[#allocation2 + $0x170] sm:$0xff] %v9601
    %11394 = vst [vmem:[#allocation2 + $0x178] sm:$0xff] %v11330
    %11395 = vst [vmem:[#allocation2 + $0x180] sm:$0xff] %v9602
    %11396 = vst [vmem:[#allocation2 + $0x188] sm:$0xff] %v11331
    %11397 = vst [vmem:[#allocation2 + $0x190] sm:$0xff] %v9603
    %11398 = vst [vmem:[#allocation2 + $0x198] sm:$0xff] %v11332
    %11399 = vst [vmem:[#allocation2 + $0x1a0] sm:$0xff] %v9604
    %11400 = vst [vmem:[#allocation2 + $0x1a8] sm:$0xff] %v11333
    %11401 = vst [vmem:[#allocation2 + $0x1b0] sm:$0xff] %v9605
    %11402 = vst [vmem:[#allocation2 + $0x1b8] sm:$0xff] %v11334
    %11403 = vst [vmem:[#allocation2 + $0x1c0] sm:$0xff] %v9606
    %11404 = vst [vmem:[#allocation2 + $0x1c8] sm:$0xff] %v11335
    %11405 = vst [vmem:[#allocation2 + $0x1d0] sm:$0xff] %v9607
    %11406 = vst [vmem:[#allocation2 + $0x1d8] sm:$0xff] %v11336
    %11407 = vst [vmem:[#allocation2 + $0x1e0] sm:$0xff] %v9608
    %11408 = vst [vmem:[#allocation2 + $0x1e8] sm:$0xff] %v11337
    %11409 = vst [vmem:[#allocation2 + $0x1f0] sm:$0xff] %v9609
    %11410 = vst [vmem:[#allocation2 + $0x1f8] sm:$0xff] %v11338
    %11411 = vst [vmem:[#allocation2 + $0x200] sm:$0xff] %v9610
    %11412 = vst [vmem:[#allocation2 + $0x208] sm:$0xff] %v11339
    %11413 = vst [vmem:[#allocation2 + $0x210] sm:$0xff] %v9611
    %11414 = vst [vmem:[#allocation2 + $0x218] sm:$0xff] %v11340
    %11415 = vst [vmem:[#allocation2 + $0x220] sm:$0xff] %v9612
    %11416 = vst [vmem:[#allocation2 + $0x228] sm:$0xff] %v11341
    %11417 = vst [vmem:[#allocation2 + $0x230] sm:$0xff] %v9613
    %11418 = vst [vmem:[#allocation2 + $0x238] sm:$0xff] %v11342
    %11419 = vst [vmem:[#allocation2 + $0x240] sm:$0xff] %v9614
    %11420 = vst [vmem:[#allocation2 + $0x248] sm:$0xff] %v11343
    %11421 = vst [vmem:[#allocation2 + $0x250] sm:$0xff] %v9615
    %11422 = vst [vmem:[#allocation2 + $0x258] sm:$0xff] %v11344
    %11423 = vst [vmem:[#allocation2 + $0x260] sm:$0xff] %v9616
    %11424 = vst [vmem:[#allocation2 + $0x268] sm:$0xff] %v11345
    %11425 = vst [vmem:[#allocation2 + $0x270] sm:$0xff] %v9617
    %11426 = vst [vmem:[#allocation2 + $0x278] sm:$0xff] %v11346
    // Predicated region
    $region46: #{multiscale_forward.1} parent=1 // pred_check
      _
    $region47: #{multiscale_forward.1} parent=1 // pred_check_branch
      %11428 = sbr.rel (0) target = $region49
    $region48: #{multiscale_forward.1} parent=1 // pred_region
      %11430 = vsyncadd [#allocation3], 0
      %s11431 = sshll.u32 [#allocation2], 4
      %s11432 = int_to_ptr.vmem [resolvable:$true] %s11431
      %s11433 = sshll.u32 %s11, 4
      %s11434 = int_to_ptr.hbm [resolvable:$true] %s11433
      %11439 = dma.vmem_to_hbm [thread:$0]  %s11432, 10240, %s11434, [#allocation3], 256, 256, 16
    $region49: #{multiscale_forward.1} parent=1 // pred_fallthru
      _
    // Predicated region
    $region50: #{multiscale_forward.1} parent=1 // pred_check
      _
    $region51: #{multiscale_forward.1} parent=1 // pred_check_branch
      %11441 = sbr.rel (0) target = $region53
    $region52: #{multiscale_forward.1} parent=1 // pred_region
      %11443 = dma.done [#allocation3], 10240
    $region53: #{multiscale_forward.1} parent=1 // pred_fallthru
      _
    %11444 = vsyncpa [#allocation3], 1

</llo_original>
